<compile_context>
chip_gen: v6e
topology: v6e:2x2x1
jax: 0.10.0
libtpu: 0.0.40
codegen_flags: <defaults>
</compile_context>

<pallas_src>
import numpy as np
import jax
import jax.numpy as jnp
from jax import lax
from jax.experimental import pallas as pl
from jax.experimental.pallas import tpu as pltpu

# ---------------------------- model dimensions -----------------------------
IM = 16            # im_size
C_IN = 3
C1 = 8             # first conv width   (cfg.critic[1])
C2 = 16            # second conv width  (cfg.critic[-1])
H2 = W2 = IM // 2  # spatial size after the 2x2 maxpool
PSZ = 2            # critic_psize
HID = 32           # critic_hidden
BN_EPS = 1e-5

F_IN = C_IN * IM * IM       # 768   raw input features per image (NCHW flatten)
F_P = C1 * H2 * W2          # 512   pooled conv1 features
F_1 = 4 * F_P               # 2048  conv1 output for the 4 maxpool candidates
F_2 = C2 * H2 * W2          # 1024  conv2 output features
MAX_BLK = 128               # images per grid step (sublane dim of the tiles)


# ------------------------------- the kernel --------------------------------
def critic_kernel(x_ref, w1_ref, s1_ref, b1_ref, w2_ref, s2_ref, b2_ref,
                  wf1_ref, bf1_ref, wf2_ref, bf2_ref, out_ref):
    """One batch block per grid step.

    x_ref   : (B, 768)   raw NCHW image block, flattened
    w1_ref  : (768, 2048) bf16  conv1 folded for the 4 maxpool candidates
    s1/b1   : (1, 2048)  fused (conv bias + BN eval) affine, expanded
    w2_ref  : (512, 1024) bf16  conv2 folded (input = pooled 8x8 map)
    s2/b2   : (1, 1024)
    wf1_ref : (1024, 32) fc1 with AdaptiveAvgPool(2,2)+Flatten folded in
    bf1_ref : (1, 32)
    wf2_ref : (8, 32)    fc2 weight padded to 8 output rows (row 0 is real)
    bf2_ref : (8, 1)
    out_ref : (1, 1, B)  lane-dense output row for this block
    """
    # ---- conv1 (+ implicit zero pad) + BN(eval) + ReLU --------------------
    xb = x_ref[...].astype(jnp.bfloat16)                               # (B, 768)
    y1 = jnp.dot(xb, w1_ref[...], preferred_element_type=jnp.float32)  # (B, 2048)
    y1 = jnp.maximum(y1 * s1_ref[...] + b1_ref[...], 0.0)

    # ---- MaxPool2d(2, 2): elementwise max over the 4 candidate groups -----
    p = jnp.maximum(
        jnp.maximum(y1[:, 0 * F_P:1 * F_P], y1[:, 1 * F_P:2 * F_P]),
        jnp.maximum(y1[:, 2 * F_P:3 * F_P], y1[:, 3 * F_P:4 * F_P]))   # (B, 512)

    # ---- conv2 (+ implicit zero pad) + BN(eval) + ReLU --------------------
    y2 = jnp.dot(p.astype(jnp.bfloat16), w2_ref[...],
                 preferred_element_type=jnp.float32)                   # (B, 1024)
    y2 = jnp.maximum(y2 * s2_ref[...] + b2_ref[...], 0.0)

    # ---- AdaptiveAvgPool2d((2,2)) + Flatten folded into fc1; ReLU ---------
    h1 = jnp.maximum(
        jnp.dot(y2, wf1_ref[...], preferred_element_type=jnp.float32)
        + bf1_ref[...], 0.0)                                           # (B, 32)
    # TODO(synk): Dropout(p=critic_dropout) is modeled in eval mode (identity).

    # ---- fc2 + Sigmoid, emitted as a lane-dense (1, B) row ----------------
    logits = jnp.dot(wf2_ref[...], h1.T,
                     preferred_element_type=jnp.float32) + bf2_ref[...]  # (8, B)
    logit = logits[0:1, :]                                               # (1, B)
    e = jnp.exp(-jnp.abs(logit))                     # numerically stable sigmoid
    sig = jnp.where(logit >= 0.0, 1.0 / (1.0 + e), e / (1.0 + e))
    out_ref[...] = sig[None]                                             # (1,1,B)


# ------------------------------ the wrapper ---------------------------------
@jax.jit
def critic_forward(x_nchw, params):
    """x_nchw: (N, 3, IM, IM) float32 (same layout as the PyTorch module)."""
    (w1, s1, b1, w2, s2, b2, wf1, bf1, wf2, bf2) = params
    n = x_nchw.shape[0]
    x2d = x_nchw.astype(jnp.float32).reshape(n, F_IN)   # free view of raw NCHW

    blk = MAX_BLK if n >= MAX_BLK else max(8, -(-n // 8) * 8)
    g = -(-n // blk)
    n_pad = g * blk
    if n_pad != n:
        x2d = jnp.pad(x2d, ((0, n_pad - n), (0, 0)))

    out = pl.pallas_call(
        critic_kernel,
        out_shape=jax.ShapeDtypeStruct((g, 1, blk), jnp.float32),
        grid=(g,),
        in_specs=[
            pl.BlockSpec((blk, F_IN), lambda i: (i, 0)),
            pl.BlockSpec((F_IN, F_1), lambda i: (0, 0)),
            pl.BlockSpec((1, F_1), lambda i: (0, 0)),
            pl.BlockSpec((1, F_1), lambda i: (0, 0)),
            pl.BlockSpec((F_P, F_2), lambda i: (0, 0)),
            pl.BlockSpec((1, F_2), lambda i: (0, 0)),
            pl.BlockSpec((1, F_2), lambda i: (0, 0)),
            pl.BlockSpec((F_2, HID), lambda i: (0, 0)),
            pl.BlockSpec((1, HID), lambda i: (0, 0)),
            pl.BlockSpec((8, HID), lambda i: (0, 0)),
            pl.BlockSpec((8, 1), lambda i: (0, 0)),
        ],
        out_specs=pl.BlockSpec((1, 1, blk), lambda i: (i, 0, 0)),
        compiler_params=pltpu.CompilerParams(
            dimension_semantics=("parallel",),
            vmem_limit_bytes=40 * 1024 * 1024),
    )(x2d, w1, s1, b1, w2, s2, b2, wf1, bf1, wf2, bf2)

    return out.reshape(n_pad, 1)[:n]


# ------------------------- deterministic parameters -------------------------
def init_torch_params(key):
    """Random parameters in the PyTorch layouts of the original module."""
    ks = jax.random.split(key, 16)

    def unif(k, shape, scale):
        return jax.random.uniform(k, shape, jnp.float32, -scale, scale)

    return dict(
        w1=unif(ks[0], (C1, C_IN, 3, 3), 0.3),
        cb1=unif(ks[1], (C1,), 0.1),
        g1=1.0 + 0.1 * jax.random.normal(ks[2], (C1,), jnp.float32),
        be1=0.1 * jax.random.normal(ks[3], (C1,), jnp.float32),
        rm1=0.1 * jax.random.normal(ks[4], (C1,), jnp.float32),
        rv1=jax.random.uniform(ks[5], (C1,), jnp.float32, 0.5, 1.5),
        w2=unif(ks[6], (C2, C1, 3, 3), 0.2),
        cb2=unif(ks[7], (C2,), 0.1),
        g2=1.0 + 0.1 * jax.random.normal(ks[8], (C2,), jnp.float32),
        be2=0.1 * jax.random.normal(ks[9], (C2,), jnp.float32),
        rm2=0.1 * jax.random.normal(ks[10], (C2,), jnp.float32),
        rv2=jax.random.uniform(ks[11], (C2,), jnp.float32, 0.5, 1.5),
        fc1_w=unif(ks[12], (HID, C2 * PSZ * PSZ), 0.15),
        fc1_b=unif(ks[13], (HID,), 0.1),
        fc2_w=unif(ks[14], (1, HID), 0.2),
        fc2_b=unif(ks[15], (1,), 0.1),
    )


def fold_params(tp):
    """Fold convs/padding/pool selection/avgpool into the kernel's matrices."""
    w1 = np.asarray(tp['w1']); cb1 = np.asarray(tp['cb1'])
    g1 = np.asarray(tp['g1']); be1 = np.asarray(tp['be1'])
    rm1 = np.asarray(tp['rm1']); rv1 = np.asarray(tp['rv1'])
    w2 = np.asarray(tp['w2']); cb2 = np.asarray(tp['cb2'])
    g2 = np.asarray(tp['g2']); be2 = np.asarray(tp['be2'])
    rm2 = np.asarray(tp['rm2']); rv2 = np.asarray(tp['rv2'])
    fc1_w = np.asarray(tp['fc1_w']); fc1_b = np.asarray(tp['fc1_b'])
    fc2_w = np.asarray(tp['fc2_w']); fc2_b = np.asarray(tp['fc2_b'])

    # Fused eval-mode BatchNorm affines (conv bias folded in).
    s1 = g1 / np.sqrt(rv1 + BN_EPS)
    b1 = be1 + (cb1 - rm1) * s1
    s2 = g2 / np.sqrt(rv2 + BN_EPS)
    b2 = be2 + (cb2 - rm2) * s2

    # conv1 as a dense matrix: rows = raw input (c, hi, wi); columns =
    # (q = maxpool candidate, c1, hp, wp).  Zero-padding handled by omission.
    w1m = np.zeros((C_IN, IM, IM, 2, 2, C1, H2, W2), np.float32)
    for hp in range(H2):
        for wp in range(W2):
            for qy in range(2):
                for qx in range(2):
                    ho, wo = 2 * hp + qy, 2 * wp + qx
                    for ky in range(3):
                        for kx in range(3):
                            hi, wi = ho + ky - 1, wo + kx - 1
                            if 0 <= hi < IM and 0 <= wi < IM:
                                w1m[:, hi, wi, qy, qx, :, hp, wp] += w1[:, :, ky, kx].T
    w1m = w1m.reshape(F_IN, F_1)
    s1e = np.tile(np.repeat(s1, H2 * W2), 4).reshape(1, F_1)
    b1e = np.tile(np.repeat(b1, H2 * W2), 4).reshape(1, F_1)

    # conv2 as a dense matrix on the pooled 8x8 map.
    w2m = np.zeros((C1, H2, W2, C2, H2, W2), np.float32)
    for h in range(H2):
        for w in range(W2):
            for ky in range(3):
                for kx in range(3):
                    hp, wp = h + ky - 1, w + kx - 1
                    if 0 <= hp < H2 and 0 <= wp < W2:
                        w2m[:, hp, wp, :, h, w] += w2[:, :, ky, kx].T
    w2m = w2m.reshape(F_P, F_2)
    s2e = np.repeat(s2, H2 * W2).reshape(1, F_2)
    b2e = np.repeat(b2, H2 * W2).reshape(1, F_2)

    # fc1 with AdaptiveAvgPool2d((2,2)) + Flatten folded in.
    # PyTorch flatten index = c2*4 + ph*2 + pw; pool bin area = 4*4 = 16.
    wf1 = np.zeros((C2, H2, W2, HID), np.float32)
    for h in range(H2):
        for w in range(W2):
            q = (h // (H2 // PSZ)) * PSZ + (w // (W2 // PSZ))
            wf1[:, h, w, :] = fc1_w[:, q::PSZ * PSZ].T / 16.0
    wf1 = wf1.reshape(F_2, HID)

    # fc2 padded to 8 output rows (row 0 is the real one).
    wf2p = np.zeros((8, HID), np.float32)
    wf2p[0] = fc2_w[0]
    bf2p = np.zeros((8, 1), np.float32)
    bf2p[0, 0] = fc2_b[0]

    return (jnp.asarray(w1m, jnp.bfloat16),
            jnp.asarray(s1e), jnp.asarray(b1e),
            jnp.asarray(w2m, jnp.bfloat16),
            jnp.asarray(s2e), jnp.asarray(b2e),
            jnp.asarray(wf1),
            jnp.asarray(fc1_b.reshape(1, HID)),
            jnp.asarray(wf2p),
            jnp.asarray(bf2p))


# ------------------------- pure-JAX reference (checking) --------------------
def critic_reference(x, tp):
    def conv(x, w, b):
        y = lax.conv_general_dilated(
            x, w, (1, 1), ((1, 1), (1, 1)),
            dimension_numbers=('NCHW', 'OIHW', 'NCHW'))
        return y + b[None, :, None, None]

    def bn(x, g, be, rm, rv):
        return ((x - rm[None, :, None, None])
                * (g[None, :, None, None]
                   / jnp.sqrt(rv[None, :, None, None] + BN_EPS))
                + be[None, :, None, None])

    y = jax.nn.relu(bn(conv(x, tp['w1'], tp['cb1']),
                       tp['g1'], tp['be1'], tp['rm1'], tp['rv1']))
    y = lax.reduce_window(y, -jnp.inf, lax.max, (1, 1, 2, 2), (1, 1, 2, 2),
                          'VALID')
    y = jax.nn.relu(bn(conv(y, tp['w2'], tp['cb2']),
                       tp['g2'], tp['be2'], tp['rm2'], tp['rv2']))
    nb, c = y.shape[0], y.shape[1]
    y = y.reshape(nb, c, PSZ, H2 // PSZ, PSZ, W2 // PSZ).mean(axis=(3, 5))
    f = y.reshape(nb, c * PSZ * PSZ)
    h = jax.nn.relu(f @ tp['fc1_w'].T + tp['fc1_b'])
    return jax.nn.sigmoid(h @ tp['fc2_w'].T + tp['fc2_b'])


# ----------------------------------- main -----------------------------------
if __name__ == "__main__":
    key = jax.random.PRNGKey(0)
    k_params, k_x = jax.random.split(key)
    torch_params = init_torch_params(k_params)
    params = fold_params(torch_params)
    x = jax.random.normal(k_x, (2, C_IN, IM, IM), jnp.float32)  # NCHW like torch

    out = critic_forward(x, params)
    jax.block_until_ready(out)
    assert out.shape == (2, 1)

    ref = critic_reference(x, torch_params)
    err = float(jnp.max(jnp.abs(out - ref)))
    assert err < 2e-2, f"kernel/reference mismatch: {err}"
    print("KERNEL_OK")
</pallas_src>

<mosaic_0001>
module attributes {stable_mosaic.version = 11 : i64} {
  func.func @critic_kernel(%arg0: i32, %arg1: memref<8x768xf32, #tpu.memory_space<vmem>>, %arg2: memref<768x2048xbf16, #tpu.memory_space<vmem>>, %arg3: memref<1x2048xf32, #tpu.memory_space<vmem>>, %arg4: memref<1x2048xf32, #tpu.memory_space<vmem>>, %arg5: memref<512x1024xbf16, #tpu.memory_space<vmem>>, %arg6: memref<1x1024xf32, #tpu.memory_space<vmem>>, %arg7: memref<1x1024xf32, #tpu.memory_space<vmem>>, %arg8: memref<1024x32xf32, #tpu.memory_space<vmem>>, %arg9: memref<1x32xf32, #tpu.memory_space<vmem>>, %arg10: memref<8x32xf32, #tpu.memory_space<vmem>>, %arg11: memref<8x1xf32, #tpu.memory_space<vmem>>, %arg12: memref<1x1x8xf32, #tpu.memory_space<vmem>>) attributes {dimension_semantics = [#tpu.dimension_semantics<parallel>], iteration_bounds = array<i64: 1>, scalar_prefetch = 0 : i64, scratch_operands = 0 : i64, tpu.core_type = #tpu.core_type<tc>, window_params = [{transform_indices = @transform_0, window_bounds = array<i64: 8, 768>}, {pipeline_mode = #tpu.pipeline_mode<synchronous>, transform_indices = @transform_1, window_bounds = array<i64: 768, 2048>}, {pipeline_mode = #tpu.pipeline_mode<synchronous>, transform_indices = @transform_2, window_bounds = array<i64: 1, 2048>}, {pipeline_mode = #tpu.pipeline_mode<synchronous>, transform_indices = @transform_3, window_bounds = array<i64: 1, 2048>}, {pipeline_mode = #tpu.pipeline_mode<synchronous>, transform_indices = @transform_4, window_bounds = array<i64: 512, 1024>}, {pipeline_mode = #tpu.pipeline_mode<synchronous>, transform_indices = @transform_5, window_bounds = array<i64: 1, 1024>}, {pipeline_mode = #tpu.pipeline_mode<synchronous>, transform_indices = @transform_6, window_bounds = array<i64: 1, 1024>}, {pipeline_mode = #tpu.pipeline_mode<synchronous>, transform_indices = @transform_7, window_bounds = array<i64: 1024, 32>}, {pipeline_mode = #tpu.pipeline_mode<synchronous>, transform_indices = @transform_8, window_bounds = array<i64: 1, 32>}, {pipeline_mode = #tpu.pipeline_mode<synchronous>, transform_indices = @transform_9, window_bounds = array<i64: 8, 32>}, {pipeline_mode = #tpu.pipeline_mode<synchronous>, transform_indices = @transform_10, window_bounds = array<i64: 8, 1>}, {transform_indices = @transform_11, window_bounds = array<i64: 1, 1, 8>}]} {
    %c0 = arith.constant 0 : index
    %c0_0 = arith.constant 0 : index
    %0 = vector.load %arg1[%c0, %c0_0] : memref<8x768xf32, #tpu.memory_space<vmem>>, vector<8x768xf32>
    %1 = arith.truncf %0 : vector<8x768xf32> to vector<8x768xbf16>
    %c0_1 = arith.constant 0 : index
    %c0_2 = arith.constant 0 : index
    %2 = vector.load %arg2[%c0_1, %c0_2] : memref<768x2048xbf16, #tpu.memory_space<vmem>>, vector<768x2048xbf16>
    %cst = arith.constant dense<0.000000e+00> : vector<8x2048xf32>
    %3 = tpu.matmul %1, %2, %cst {dimension_numbers = #tpu.dot_dimension_numbers<[1], [0], [0], [1], [0, 0, 1, 1], [], []>} : vector<8x768xbf16>, vector<768x2048xbf16>, vector<8x2048xf32> -> vector<8x2048xf32>
    %c0_3 = arith.constant 0 : index
    %c0_4 = arith.constant 0 : index
    %4 = vector.load %arg3[%c0_3, %c0_4] : memref<1x2048xf32, #tpu.memory_space<vmem>>, vector<1x2048xf32>
    %5 = vector.broadcast %4 : vector<1x2048xf32> to vector<8x2048xf32>
    %6 = arith.mulf %3, %5 : vector<8x2048xf32>
    %c0_5 = arith.constant 0 : index
    %c0_6 = arith.constant 0 : index
    %7 = vector.load %arg4[%c0_5, %c0_6] : memref<1x2048xf32, #tpu.memory_space<vmem>>, vector<1x2048xf32>
    %8 = vector.broadcast %7 : vector<1x2048xf32> to vector<8x2048xf32>
    %9 = arith.addf %6, %8 : vector<8x2048xf32>
    %cst_7 = arith.constant 0.000000e+00 : f32
    %10 = vector.broadcast %cst_7 : f32 to vector<8x2048xf32>
    %11 = arith.maximumf %9, %10 : vector<8x2048xf32>
    %12 = vector.extract_strided_slice %11 {offsets = [0, 0], sizes = [8, 512], strides = [1, 1]} : vector<8x2048xf32> to vector<8x512xf32>
    %13 = vector.extract_strided_slice %11 {offsets = [0, 512], sizes = [8, 512], strides = [1, 1]} : vector<8x2048xf32> to vector<8x512xf32>
    %14 = arith.maximumf %12, %13 : vector<8x512xf32>
    %15 = vector.extract_strided_slice %11 {offsets = [0, 1024], sizes = [8, 512], strides = [1, 1]} : vector<8x2048xf32> to vector<8x512xf32>
    %16 = vector.extract_strided_slice %11 {offsets = [0, 1536], sizes = [8, 512], strides = [1, 1]} : vector<8x2048xf32> to vector<8x512xf32>
    %17 = arith.maximumf %15, %16 : vector<8x512xf32>
    %18 = arith.maximumf %14, %17 : vector<8x512xf32>
    %19 = arith.truncf %18 : vector<8x512xf32> to vector<8x512xbf16>
    %c0_8 = arith.constant 0 : index
    %c0_9 = arith.constant 0 : index
    %20 = vector.load %arg5[%c0_8, %c0_9] : memref<512x1024xbf16, #tpu.memory_space<vmem>>, vector<512x1024xbf16>
    %cst_10 = arith.constant dense<0.000000e+00> : vector<8x1024xf32>
    %21 = tpu.matmul %19, %20, %cst_10 {dimension_numbers = #tpu.dot_dimension_numbers<[1], [0], [0], [1], [0, 0, 1, 1], [], []>} : vector<8x512xbf16>, vector<512x1024xbf16>, vector<8x1024xf32> -> vector<8x1024xf32>
    %c0_11 = arith.constant 0 : index
    %c0_12 = arith.constant 0 : index
    %22 = vector.load %arg6[%c0_11, %c0_12] : memref<1x1024xf32, #tpu.memory_space<vmem>>, vector<1x1024xf32>
    %23 = vector.broadcast %22 : vector<1x1024xf32> to vector<8x1024xf32>
    %24 = arith.mulf %21, %23 : vector<8x1024xf32>
    %c0_13 = arith.constant 0 : index
    %c0_14 = arith.constant 0 : index
    %25 = vector.load %arg7[%c0_13, %c0_14] : memref<1x1024xf32, #tpu.memory_space<vmem>>, vector<1x1024xf32>
    %26 = vector.broadcast %25 : vector<1x1024xf32> to vector<8x1024xf32>
    %27 = arith.addf %24, %26 : vector<8x1024xf32>
    %cst_15 = arith.constant 0.000000e+00 : f32
    %28 = vector.broadcast %cst_15 : f32 to vector<8x1024xf32>
    %29 = arith.maximumf %27, %28 : vector<8x1024xf32>
    %c0_16 = arith.constant 0 : index
    %c0_17 = arith.constant 0 : index
    %30 = vector.load %arg8[%c0_16, %c0_17] : memref<1024x32xf32, #tpu.memory_space<vmem>>, vector<1024x32xf32>
    %cst_18 = arith.constant dense<0.000000e+00> : vector<8x32xf32>
    %31 = tpu.matmul %29, %30, %cst_18 {dimension_numbers = #tpu.dot_dimension_numbers<[1], [0], [0], [1], [0, 0, 1, 1], [], []>} : vector<8x1024xf32>, vector<1024x32xf32>, vector<8x32xf32> -> vector<8x32xf32>
    %c0_19 = arith.constant 0 : index
    %c0_20 = arith.constant 0 : index
    %32 = vector.load %arg9[%c0_19, %c0_20] : memref<1x32xf32, #tpu.memory_space<vmem>>, vector<1x32xf32>
    %33 = vector.broadcast %32 : vector<1x32xf32> to vector<8x32xf32>
    %34 = arith.addf %31, %33 : vector<8x32xf32>
    %cst_21 = arith.constant 0.000000e+00 : f32
    %35 = vector.broadcast %cst_21 : f32 to vector<8x32xf32>
    %36 = arith.maximumf %34, %35 : vector<8x32xf32>
    %c0_22 = arith.constant 0 : index
    %c0_23 = arith.constant 0 : index
    %37 = vector.load %arg10[%c0_22, %c0_23] : memref<8x32xf32, #tpu.memory_space<vmem>>, vector<8x32xf32>
    %38 = tpu.transpose %36, [1, 0] : vector<8x32xf32> -> vector<32x8xf32>
    %cst_24 = arith.constant dense<0.000000e+00> : vector<8x8xf32>
    %39 = tpu.matmul %37, %38, %cst_24 {dimension_numbers = #tpu.dot_dimension_numbers<[1], [0], [0], [1], [0, 0, 1, 1], [], []>} : vector<8x32xf32>, vector<32x8xf32>, vector<8x8xf32> -> vector<8x8xf32>
    %c0_25 = arith.constant 0 : index
    %c0_26 = arith.constant 0 : index
    %40 = vector.load %arg11[%c0_25, %c0_26] : memref<8x1xf32, #tpu.memory_space<vmem>>, vector<8x1xf32>
    %41 = vector.broadcast %40 : vector<8x1xf32> to vector<8x8xf32>
    %42 = arith.addf %39, %41 : vector<8x8xf32>
    %43 = vector.extract_strided_slice %42 {offsets = [0, 0], sizes = [1, 8], strides = [1, 1]} : vector<8x8xf32> to vector<1x8xf32>
    %44 = math.absf %43 : vector<1x8xf32>
    %cst_27 = arith.constant 0.000000e+00 : f32
    %45 = vector.broadcast %cst_27 : f32 to vector<1x8xf32>
    %46 = arith.subf %45, %44 : vector<1x8xf32>
    %47 = math.exp %46 : vector<1x8xf32>
    %cst_28 = arith.constant 0.000000e+00 : f32
    %48 = vector.broadcast %cst_28 : f32 to vector<1x8xf32>
    %49 = arith.cmpf oge, %43, %48 : vector<1x8xf32>
    %cst_29 = arith.constant 1.000000e+00 : f32
    %50 = vector.broadcast %cst_29 : f32 to vector<1x8xf32>
    %51 = arith.addf %50, %47 : vector<1x8xf32>
    %cst_30 = arith.constant 1.000000e+00 : f32
    %52 = vector.broadcast %cst_30 : f32 to vector<1x8xf32>
    %53 = arith.divf %52, %51 : vector<1x8xf32>
    %cst_31 = arith.constant 1.000000e+00 : f32
    %54 = vector.broadcast %cst_31 : f32 to vector<1x8xf32>
    %55 = arith.addf %54, %47 : vector<1x8xf32>
    %56 = arith.divf %47, %55 : vector<1x8xf32>
    %57 = arith.select %49, %53, %56 : vector<1x8xi1>, vector<1x8xf32>
    %58 = vector.shape_cast %57 : vector<1x8xf32> to vector<1x1x8xf32>
    %c0_32 = arith.constant 0 : index
    %c0_33 = arith.constant 0 : index
    %c0_34 = arith.constant 0 : index
    %59 = vector.load %arg12[%c0_32, %c0_33, %c0_34] : memref<1x1x8xf32, #tpu.memory_space<vmem>>, vector<1x1x8xf32>
    tpu.vector_store %arg12[%c0_32, %c0_33, %c0_34], %58 {strides = array<i32>} : memref<1x1x8xf32, #tpu.memory_space<vmem>>, vector<1x1x8xf32>,
    return
  }
  func.func @transform_0(%arg0: i32) -> (i32, i32) {
    %c0_i32 = arith.constant 0 : i32
    %c0_i32_0 = arith.constant 0 : i32
    return %arg0, %c0_i32 : i32, i32
  }
  func.func @transform_1(%arg0: i32) -> (i32, i32) {
    %c0_i32 = arith.constant 0 : i32
    %c0_i32_0 = arith.constant 0 : i32
    %c0_i32_1 = arith.constant 0 : i32
    return %c0_i32, %c0_i32_0 : i32, i32
  }
  func.func @transform_2(%arg0: i32) -> (i32, i32) {
    %c0_i32 = arith.constant 0 : i32
    %c0_i32_0 = arith.constant 0 : i32
    %c0_i32_1 = arith.constant 0 : i32
    return %c0_i32, %c0_i32_0 : i32, i32
  }
  func.func @transform_3(%arg0: i32) -> (i32, i32) {
    %c0_i32 = arith.constant 0 : i32
    %c0_i32_0 = arith.constant 0 : i32
    %c0_i32_1 = arith.constant 0 : i32
    return %c0_i32, %c0_i32_0 : i32, i32
  }
  func.func @transform_4(%arg0: i32) -> (i32, i32) {
    %c0_i32 = arith.constant 0 : i32
    %c0_i32_0 = arith.constant 0 : i32
    %c0_i32_1 = arith.constant 0 : i32
    return %c0_i32, %c0_i32_0 : i32, i32
  }
  func.func @transform_5(%arg0: i32) -> (i32, i32) {
    %c0_i32 = arith.constant 0 : i32
    %c0_i32_0 = arith.constant 0 : i32
    %c0_i32_1 = arith.constant 0 : i32
    return %c0_i32, %c0_i32_0 : i32, i32
  }
  func.func @transform_6(%arg0: i32) -> (i32, i32) {
    %c0_i32 = arith.constant 0 : i32
    %c0_i32_0 = arith.constant 0 : i32
    %c0_i32_1 = arith.constant 0 : i32
    return %c0_i32, %c0_i32_0 : i32, i32
  }
  func.func @transform_7(%arg0: i32) -> (i32, i32) {
    %c0_i32 = arith.constant 0 : i32
    %c0_i32_0 = arith.constant 0 : i32
    %c0_i32_1 = arith.constant 0 : i32
    return %c0_i32, %c0_i32_0 : i32, i32
  }
  func.func @transform_8(%arg0: i32) -> (i32, i32) {
    %c0_i32 = arith.constant 0 : i32
    %c0_i32_0 = arith.constant 0 : i32
    %c0_i32_1 = arith.constant 0 : i32
    return %c0_i32, %c0_i32_0 : i32, i32
  }
  func.func @transform_9(%arg0: i32) -> (i32, i32) {
    %c0_i32 = arith.constant 0 : i32
    %c0_i32_0 = arith.constant 0 : i32
    %c0_i32_1 = arith.constant 0 : i32
    return %c0_i32, %c0_i32_0 : i32, i32
  }
  func.func @transform_10(%arg0: i32) -> (i32, i32) {
    %c0_i32 = arith.constant 0 : i32
    %c0_i32_0 = arith.constant 0 : i32
    %c0_i32_1 = arith.constant 0 : i32
    return %c0_i32, %c0_i32_0 : i32, i32
  }
  func.func @transform_11(%arg0: i32) -> (i32, i32, i32) {
    %c0_i32 = arith.constant 0 : i32
    %c0_i32_0 = arith.constant 0 : i32
    %c0_i32_1 = arith.constant 0 : i32
    return %arg0, %c0_i32, %c0_i32_0 : i32, i32, i32
  }
}

</mosaic_0001>

<llo_original>
// kernel: critic_forward.1
$region0: #{critic_forward.1}
  #allocation0 [shape = 'u32[]', space=smem, size = 0x4, offset = 0x4, fixed_abs, tag = 'smem constant byte address 0x4 - core index']
  #allocation1 [shape = 'u32[144,128]{1,0:T(1,128)}', space=vmem, size = 0x12000, scoped, tag = 'internal scratch']
  %s0 = inlined_call_operand.vmem [shape: f32[8,768], index: 0, kind: input, shape index: {}]
  %s1 = inlined_call_operand.hbm [shape: bf16[768,2048], index: 1, kind: input, shape index: {}]
  %s2 = inlined_call_operand.hbm [shape: f32[1,2048], index: 2, kind: input, shape index: {}]
  %s3 = inlined_call_operand.hbm [shape: f32[1,2048], index: 3, kind: input, shape index: {}]
  %s4 = inlined_call_operand.hbm [shape: bf16[512,1024], index: 4, kind: input, shape index: {}]
  %s5 = inlined_call_operand.hbm [shape: f32[1,1024], index: 5, kind: input, shape index: {}]
  %s6 = inlined_call_operand.hbm [shape: f32[1,1024], index: 6, kind: input, shape index: {}]
  %s7 = inlined_call_operand.vmem [shape: f32[1024,32], index: 7, kind: input, shape index: {}]
  %s8 = inlined_call_operand.hbm [shape: f32[1,32], index: 8, kind: input, shape index: {}]
  %s9 = inlined_call_operand.hbm [shape: f32[8,32], index: 9, kind: input, shape index: {}]
  %s10 = inlined_call_operand.vmem [shape: f32[8,1], index: 10, kind: input, shape index: {}]
  %s11 = inlined_call_operand.vmem [shape: f32[1,1,8], index: 11, kind: output, shape index: {}]
  %s12 = sld [smem:[#allocation0]]
  $region86: #{critic_forward.1} parent=0
    _
  %s14 = ssub.s32 1, %s12
  %s15 = scalar_select 0, %s14, %s12
  $region1: #{critic_forward.1} parent=0
    #allocation2 [shape = 'u8[3145728]{0}', space=vmem, size = 0x300000, scoped, tag = 'input window, operand 1, single buffered']
    #allocation3 [shape = 's32[1]{0}', space=sflag, size = 0x4, scoped, tag = 'scoped memory for critic_forward.1']
    #allocation4 [shape = 'u8[8192]{0}', space=vmem, size = 0x2000, scoped, tag = 'input window, operand 2, single buffered']
    #allocation5 [shape = 's32[1]{0}', space=sflag, size = 0x4, scoped, tag = 'scoped memory for critic_forward.1']
    #allocation6 [shape = 'u8[8192]{0}', space=vmem, size = 0x2000, scoped, tag = 'input window, operand 3, single buffered']
    #allocation7 [shape = 'u8[1048576]{0}', space=vmem, size = 0x100000, scoped, tag = 'input window, operand 4, single buffered']
    #allocation8 [shape = 's32[1]{0}', space=sflag, size = 0x4, scoped, tag = 'scoped memory for critic_forward.1']
    #allocation9 [shape = 'u8[4096]{0}', space=vmem, size = 0x1000, scoped, tag = 'input window, operand 5, single buffered']
    #allocation10 [shape = 'u8[4096]{0}', space=vmem, size = 0x1000, scoped, tag = 'input window, operand 6, single buffered']
    #allocation11 [shape = 's32[1]{0}', space=sflag, size = 0x4, scoped, tag = 'scoped memory for critic_forward.1']
    #allocation12 [shape = 'u8[512]{0}', space=vmem, size = 0x400, scoped, tag = 'input window, operand 8, single buffered']
    #allocation13 [shape = 'u8[4096]{0}', space=vmem, size = 0x1000, scoped, tag = 'input window, operand 9, single buffered']
    #allocation14 [shape = 's32[1]{0}', space=sflag, size = 0x4, scoped, tag = 'scoped memory for critic_forward.1']
    %16 = vsyncpa [#allocation3], 0
    %17 = vsyncpa [#allocation5], 0
    %18 = vsyncpa [#allocation8], 0
    %19 = vsyncpa [#allocation11], 0
    %20 = vsyncpa [#allocation14], 0
    // Predicated region
    $region2: #{critic_forward.1} parent=1 // pred_check
      _
    $region3: #{critic_forward.1} parent=1 // pred_check_branch
      %22 = sbr.rel (0) target = $region5
    $region4: #{critic_forward.1} parent=1 // pred_region
      _
    $region5: #{critic_forward.1} parent=1 // pred_fallthru
      _
    // Predicated region
    $region6: #{critic_forward.1} parent=1 // pred_check
      _
    $region7: #{critic_forward.1} parent=1 // pred_check_branch
      %24 = sbr.rel (0) target = $region9
    $region8: #{critic_forward.1} parent=1 // pred_region
      %s26 = ssub.s32 98304, 98304
      %27 = vsyncadd [#allocation3], %s26
      %s28 = sshll.u32 [#allocation2], 4
      %s29 = int_to_ptr.vmem [resolvable:$true] %s28
      %34 = dma.hbm_to_vmem [thread:$0]  %s1, 98304, %s29, [#allocation3], 1024, 1024, 64
    $region9: #{critic_forward.1} parent=1 // pred_fallthru
      _
    // Predicated region
    $region10: #{critic_forward.1} parent=1 // pred_check
      _
    $region11: #{critic_forward.1} parent=1 // pred_check_branch
      %36 = sbr.rel (0) target = $region13
    $region12: #{critic_forward.1} parent=1 // pred_region
      %s38 = ssub.s32 256, 256
      %39 = vsyncadd [#allocation5], %s38
      %s41 = sshll.u32 [#allocation4], 4
      %s42 = int_to_ptr.vmem [resolvable:$true] %s41
      %44 = dma.hbm_to_vmem [thread:$0]  %s2, 256, %s42, [#allocation5]
    $region13: #{critic_forward.1} parent=1 // pred_fallthru
      _
    // Predicated region
    $region14: #{critic_forward.1} parent=1 // pred_check
      _
    $region15: #{critic_forward.1} parent=1 // pred_check_branch
      %46 = sbr.rel (0) target = $region17
    $region16: #{critic_forward.1} parent=1 // pred_region
      %s48 = ssub.s32 256, 256
      %49 = vsyncadd [#allocation5], %s48
      %s51 = sshll.u32 [#allocation6], 4
      %s52 = int_to_ptr.vmem [resolvable:$true] %s51
      %54 = dma.hbm_to_vmem [thread:$0]  %s3, 256, %s52, [#allocation5]
    $region17: #{critic_forward.1} parent=1 // pred_fallthru
      _
    // Predicated region
    $region18: #{critic_forward.1} parent=1 // pred_check
      _
    $region19: #{critic_forward.1} parent=1 // pred_check_branch
      %56 = sbr.rel (0) target = $region21
    $region20: #{critic_forward.1} parent=1 // pred_region
      %s58 = ssub.s32 32768, 32768
      %59 = vsyncadd [#allocation8], %s58
      %s60 = sshll.u32 [#allocation7], 4
      %s61 = int_to_ptr.vmem [resolvable:$true] %s60
      %66 = dma.hbm_to_vmem [thread:$0]  %s4, 32768, %s61, [#allocation8], 512, 512, 32
    $region21: #{critic_forward.1} parent=1 // pred_fallthru
      _
    // Predicated region
    $region22: #{critic_forward.1} parent=1 // pred_check
      _
    $region23: #{critic_forward.1} parent=1 // pred_check_branch
      %68 = sbr.rel (0) target = $region25
    $region24: #{critic_forward.1} parent=1 // pred_region
      %s70 = ssub.s32 128, 128
      %71 = vsyncadd [#allocation8], %s70
      %s73 = sshll.u32 [#allocation9], 4
      %s74 = int_to_ptr.vmem [resolvable:$true] %s73
      %76 = dma.hbm_to_vmem [thread:$0]  %s5, 128, %s74, [#allocation8]
    $region25: #{critic_forward.1} parent=1 // pred_fallthru
      _
    // Predicated region
    $region26: #{critic_forward.1} parent=1 // pred_check
      _
    $region27: #{critic_forward.1} parent=1 // pred_check_branch
      %78 = sbr.rel (0) target = $region29
    $region28: #{critic_forward.1} parent=1 // pred_region
      %s80 = ssub.s32 128, 128
      %81 = vsyncadd [#allocation11], %s80
      %s83 = sshll.u32 [#allocation10], 4
      %s84 = int_to_ptr.vmem [resolvable:$true] %s83
      %86 = dma.hbm_to_vmem [thread:$0]  %s6, 128, %s84, [#allocation11]
    $region29: #{critic_forward.1} parent=1 // pred_fallthru
      _
    // Predicated region
    $region30: #{critic_forward.1} parent=1 // pred_check
      _
    $region31: #{critic_forward.1} parent=1 // pred_check_branch
      %88 = sbr.rel (0) target = $region33
    $region32: #{critic_forward.1} parent=1 // pred_region
      _
    $region33: #{critic_forward.1} parent=1 // pred_fallthru
      _
    // Predicated region
    $region34: #{critic_forward.1} parent=1 // pred_check
      _
    $region35: #{critic_forward.1} parent=1 // pred_check_branch
      %90 = sbr.rel (0) target = $region37
    $region36: #{critic_forward.1} parent=1 // pred_region
      %s92 = ssub.s32 16, 16
      %93 = vsyncadd [#allocation11], %s92
      %s95 = sshll.u32 [#allocation12], 4
      %s96 = int_to_ptr.vmem [resolvable:$true] %s95
      %98 = dma.hbm_to_vmem [thread:$0]  %s8, 16, %s96, [#allocation11]
    $region37: #{critic_forward.1} parent=1 // pred_fallthru
      _
    // Predicated region
    $region38: #{critic_forward.1} parent=1 // pred_check
      _
    $region39: #{critic_forward.1} parent=1 // pred_check_branch
      %100 = sbr.rel (0) target = $region41
    $region40: #{critic_forward.1} parent=1 // pred_region
      %s102 = ssub.s32 128, 128
      %103 = vsyncadd [#allocation14], %s102
      %s105 = sshll.u32 [#allocation13], 4
      %s106 = int_to_ptr.vmem [resolvable:$true] %s105
      %108 = dma.hbm_to_vmem [thread:$0]  %s9, 128, %s106, [#allocation14]
    $region41: #{critic_forward.1} parent=1 // pred_fallthru
      _
    // Predicated region
    $region42: #{critic_forward.1} parent=1 // pred_check
      _
    $region43: #{critic_forward.1} parent=1 // pred_check_branch
      %110 = sbr.rel (0) target = $region45
    $region44: #{critic_forward.1} parent=1 // pred_region
      _
    $region45: #{critic_forward.1} parent=1 // pred_fallthru
      _
    // Predicated region
    $region46: #{critic_forward.1} parent=1 // pred_check
      _
    $region47: #{critic_forward.1} parent=1 // pred_check_branch
      %112 = sbr.rel (0) target = $region49
    $region48: #{critic_forward.1} parent=1 // pred_region
      %113 = dma.done [#allocation3], 98304
    $region49: #{critic_forward.1} parent=1 // pred_fallthru
      _
    // Predicated region
    $region50: #{critic_forward.1} parent=1 // pred_check
      _
    $region51: #{critic_forward.1} parent=1 // pred_check_branch
      %115 = sbr.rel (0) target = $region53
    $region52: #{critic_forward.1} parent=1 // pred_region
      %116 = dma.done [#allocation5], 256
    $region53: #{critic_forward.1} parent=1 // pred_fallthru
      _
    // Predicated region
    $region54: #{critic_forward.1} parent=1 // pred_check
      _
    $region55: #{critic_forward.1} parent=1 // pred_check_branch
      %118 = sbr.rel (0) target = $region57
    $region56: #{critic_forward.1} parent=1 // pred_region
      %119 = dma.done [#allocation5], 256
    $region57: #{critic_forward.1} parent=1 // pred_fallthru
      _
    // Predicated region
    $region58: #{critic_forward.1} parent=1 // pred_check
      _
    $region59: #{critic_forward.1} parent=1 // pred_check_branch
      %121 = sbr.rel (0) target = $region61
    $region60: #{critic_forward.1} parent=1 // pred_region
      %122 = dma.done [#allocation8], 32768
    $region61: #{critic_forward.1} parent=1 // pred_fallthru
      _
    // Predicated region
    $region62: #{critic_forward.1} parent=1 // pred_check
      _
    $region63: #{critic_forward.1} parent=1 // pred_check_branch
      %124 = sbr.rel (0) target = $region65
    $region64: #{critic_forward.1} parent=1 // pred_region
      %125 = dma.done [#allocation8], 128
    $region65: #{critic_forward.1} parent=1 // pred_fallthru
      _
    // Predicated region
    $region66: #{critic_forward.1} parent=1 // pred_check
      _
    $region67: #{critic_forward.1} parent=1 // pred_check_branch
      %127 = sbr.rel (0) target = $region69
    $region68: #{critic_forward.1} parent=1 // pred_region
      %128 = dma.done [#allocation11], 128
    $region69: #{critic_forward.1} parent=1 // pred_fallthru
      _
    // Predicated region
    $region70: #{critic_forward.1} parent=1 // pred_check
      _
    $region71: #{critic_forward.1} parent=1 // pred_check_branch
      %130 = sbr.rel (0) target = $region73
    $region72: #{critic_forward.1} parent=1 // pred_region
      %131 = dma.done [#allocation11], 16
    $region73: #{critic_forward.1} parent=1 // pred_fallthru
      _
    // Predicated region
    $region74: #{critic_forward.1} parent=1 // pred_check
      _
    $region75: #{critic_forward.1} parent=1 // pred_check_branch
      %133 = sbr.rel (0) target = $region77
    $region76: #{critic_forward.1} parent=1 // pred_region
      %134 = dma.done [#allocation14], 128
    $region77: #{critic_forward.1} parent=1 // pred_fallthru
      _
    %v135 = vld [vmem:[%s0] sm:$0xff]
    %v136 = vld [vmem:[%s0 + $0x8] sm:$0xff]
    %v137 = vld [vmem:[%s0 + $0x10] sm:$0xff]
    %v138 = vld [vmem:[%s0 + $0x18] sm:$0xff]
    %v139 = vld [vmem:[%s0 + $0x20] sm:$0xff]
    %v140 = vld [vmem:[%s0 + $0x28] sm:$0xff]
    %v141 = vpack.c.bf16 %v135, %v135
    %v142 = vpack.c.bf16 %v136, %v136
    %v143 = vpack.c.bf16 %v137, %v137
    %v144 = vpack.c.bf16 %v138, %v138
    %v145 = vpack.c.bf16 %v139, %v139
    %v146 = vpack.c.bf16 %v140, %v140
    %v147 = vld [vmem:[#allocation2] sm:$0xff]
    %v148 = vld [vmem:[#allocation2 + $0x8] sm:$0xff]
    %v149 = vld [vmem:[#allocation2 + $0x10] sm:$0xff]
    %v150 = vld [vmem:[#allocation2 + $0x18] sm:$0xff]
    %v151 = vld [vmem:[#allocation2 + $0x20] sm:$0xff]
    %v152 = vld [vmem:[#allocation2 + $0x28] sm:$0xff]
    %v153 = vld [vmem:[#allocation2 + $0x30] sm:$0xff]
    %v154 = vld [vmem:[#allocation2 + $0x38] sm:$0xff]
    %v155 = vld [vmem:[#allocation2 + $0x40] sm:$0xff]
    %v156 = vld [vmem:[#allocation2 + $0x48] sm:$0xff]
    %v157 = vld [vmem:[#allocation2 + $0x50] sm:$0xff]
    %v158 = vld [vmem:[#allocation2 + $0x58] sm:$0xff]
    %v159 = vld [vmem:[#allocation2 + $0x60] sm:$0xff]
    %v160 = vld [vmem:[#allocation2 + $0x68] sm:$0xff]
    %v161 = vld [vmem:[#allocation2 + $0x70] sm:$0xff]
    %v162 = vld [vmem:[#allocation2 + $0x78] sm:$0xff]
    %v163 = vld [vmem:[#allocation2 + $0x80] sm:$0xff]
    %v164 = vld [vmem:[#allocation2 + $0x88] sm:$0xff]
    %v165 = vld [vmem:[#allocation2 + $0x90] sm:$0xff]
    %v166 = vld [vmem:[#allocation2 + $0x98] sm:$0xff]
    %v167 = vld [vmem:[#allocation2 + $0xa0] sm:$0xff]
    %v168 = vld [vmem:[#allocation2 + $0xa8] sm:$0xff]
    %v169 = vld [vmem:[#allocation2 + $0xb0] sm:$0xff]
    %v170 = vld [vmem:[#allocation2 + $0xb8] sm:$0xff]
    %v171 = vld [vmem:[#allocation2 + $0xc0] sm:$0xff]
    %v172 = vld [vmem:[#allocation2 + $0xc8] sm:$0xff]
    %v173 = vld [vmem:[#allocation2 + $0xd0] sm:$0xff]
    %v174 = vld [vmem:[#allocation2 + $0xd8] sm:$0xff]
    %v175 = vld [vmem:[#allocation2 + $0xe0] sm:$0xff]
    %v176 = vld [vmem:[#allocation2 + $0xe8] sm:$0xff]
    %v177 = vld [vmem:[#allocation2 + $0xf0] sm:$0xff]
    %v178 = vld [vmem:[#allocation2 + $0xf8] sm:$0xff]
    %v179 = vld [vmem:[#allocation2 + $0x100] sm:$0xff]
    %v180 = vld [vmem:[#allocation2 + $0x108] sm:$0xff]
    %v181 = vld [vmem:[#allocation2 + $0x110] sm:$0xff]
    %v182 = vld [vmem:[#allocation2 + $0x118] sm:$0xff]
    %v183 = vld [vmem:[#allocation2 + $0x120] sm:$0xff]
    %v184 = vld [vmem:[#allocation2 + $0x128] sm:$0xff]
    %v185 = vld [vmem:[#allocation2 + $0x130] sm:$0xff]
    %v186 = vld [vmem:[#allocation2 + $0x138] sm:$0xff]
    %v187 = vld [vmem:[#allocation2 + $0x140] sm:$0xff]
    %v188 = vld [vmem:[#allocation2 + $0x148] sm:$0xff]
    %v189 = vld [vmem:[#allocation2 + $0x150] sm:$0xff]
    %v190 = vld [vmem:[#allocation2 + $0x158] sm:$0xff]
    %v191 = vld [vmem:[#allocation2 + $0x160] sm:$0xff]
    %v192 = vld [vmem:[#allocation2 + $0x168] sm:$0xff]
    %v193 = vld [vmem:[#allocation2 + $0x170] sm:$0xff]
    %v194 = vld [vmem:[#allocation2 + $0x178] sm:$0xff]
    %v195 = vld [vmem:[#allocation2 + $0x180] sm:$0xff]
    %v196 = vld [vmem:[#allocation2 + $0x188] sm:$0xff]
    %v197 = vld [vmem:[#allocation2 + $0x190] sm:$0xff]
    %v198 = vld [vmem:[#allocation2 + $0x198] sm:$0xff]
    %v199 = vld [vmem:[#allocation2 + $0x1a0] sm:$0xff]
    %v200 = vld [vmem:[#allocation2 + $0x1a8] sm:$0xff]
    %v201 = vld [vmem:[#allocation2 + $0x1b0] sm:$0xff]
    %v202 = vld [vmem:[#allocation2 + $0x1b8] sm:$0xff]
    %v203 = vld [vmem:[#allocation2 + $0x1c0] sm:$0xff]
    %v204 = vld [vmem:[#allocation2 + $0x1c8] sm:$0xff]
    %v205 = vld [vmem:[#allocation2 + $0x1d0] sm:$0xff]
    %v206 = vld [vmem:[#allocation2 + $0x1d8] sm:$0xff]
    %v207 = vld [vmem:[#allocation2 + $0x1e0] sm:$0xff]
    %v208 = vld [vmem:[#allocation2 + $0x1e8] sm:$0xff]
    %v209 = vld [vmem:[#allocation2 + $0x1f0] sm:$0xff]
    %v210 = vld [vmem:[#allocation2 + $0x1f8] sm:$0xff]
    %v211 = vld [vmem:[#allocation2 + $0x200] sm:$0xff]
    %v212 = vld [vmem:[#allocation2 + $0x208] sm:$0xff]
    %v213 = vld [vmem:[#allocation2 + $0x210] sm:$0xff]
    %v214 = vld [vmem:[#allocation2 + $0x218] sm:$0xff]
    %v215 = vld [vmem:[#allocation2 + $0x220] sm:$0xff]
    %v216 = vld [vmem:[#allocation2 + $0x228] sm:$0xff]
    %v217 = vld [vmem:[#allocation2 + $0x230] sm:$0xff]
    %v218 = vld [vmem:[#allocation2 + $0x238] sm:$0xff]
    %v219 = vld [vmem:[#allocation2 + $0x240] sm:$0xff]
    %v220 = vld [vmem:[#allocation2 + $0x248] sm:$0xff]
    %v221 = vld [vmem:[#allocation2 + $0x250] sm:$0xff]
    %v222 = vld [vmem:[#allocation2 + $0x258] sm:$0xff]
    %v223 = vld [vmem:[#allocation2 + $0x260] sm:$0xff]
    %v224 = vld [vmem:[#allocation2 + $0x268] sm:$0xff]
    %v225 = vld [vmem:[#allocation2 + $0x270] sm:$0xff]
    %v226 = vld [vmem:[#allocation2 + $0x278] sm:$0xff]
    %v227 = vld [vmem:[#allocation2 + $0x280] sm:$0xff]
    %v228 = vld [vmem:[#allocation2 + $0x288] sm:$0xff]
    %v229 = vld [vmem:[#allocation2 + $0x290] sm:$0xff]
    %v230 = vld [vmem:[#allocation2 + $0x298] sm:$0xff]
    %v231 = vld [vmem:[#allocation2 + $0x2a0] sm:$0xff]
    %v232 = vld [vmem:[#allocation2 + $0x2a8] sm:$0xff]
    %v233 = vld [vmem:[#allocation2 + $0x2b0] sm:$0xff]
    %v234 = vld [vmem:[#allocation2 + $0x2b8] sm:$0xff]
    %v235 = vld [vmem:[#allocation2 + $0x2c0] sm:$0xff]
    %v236 = vld [vmem:[#allocation2 + $0x2c8] sm:$0xff]
    %v237 = vld [vmem:[#allocation2 + $0x2d0] sm:$0xff]
    %v238 = vld [vmem:[#allocation2 + $0x2d8] sm:$0xff]
    %v239 = vld [vmem:[#allocation2 + $0x2e0] sm:$0xff]
    %v240 = vld [vmem:[#allocation2 + $0x2e8] sm:$0xff]
    %v241 = vld [vmem:[#allocation2 + $0x2f0] sm:$0xff]
    %v242 = vld [vmem:[#allocation2 + $0x2f8] sm:$0xff]
    %v243 = vld [vmem:[#allocation2 + $0x300] sm:$0xff]
    %v244 = vld [vmem:[#allocation2 + $0x308] sm:$0xff]
    %v245 = vld [vmem:[#allocation2 + $0x310] sm:$0xff]
    %v246 = vld [vmem:[#allocation2 + $0x318] sm:$0xff]
    %v247 = vld [vmem:[#allocation2 + $0x320] sm:$0xff]
    %v248 = vld [vmem:[#allocation2 + $0x328] sm:$0xff]
    %v249 = vld [vmem:[#allocation2 + $0x330] sm:$0xff]
    %v250 = vld [vmem:[#allocation2 + $0x338] sm:$0xff]
    %v251 = vld [vmem:[#allocation2 + $0x340] sm:$0xff]
    %v252 = vld [vmem:[#allocation2 + $0x348] sm:$0xff]
    %v253 = vld [vmem:[#allocation2 + $0x350] sm:$0xff]
    %v254 = vld [vmem:[#allocation2 + $0x358] sm:$0xff]
    %v255 = vld [vmem:[#allocation2 + $0x360] sm:$0xff]
    %v256 = vld [vmem:[#allocation2 + $0x368] sm:$0xff]
    %v257 = vld [vmem:[#allocation2 + $0x370] sm:$0xff]
    %v258 = vld [vmem:[#allocation2 + $0x378] sm:$0xff]
    %v259 = vld [vmem:[#allocation2 + $0x380] sm:$0xff]
    %v260 = vld [vmem:[#allocation2 + $0x388] sm:$0xff]
    %v261 = vld [vmem:[#allocation2 + $0x390] sm:$0xff]
    %v262 = vld [vmem:[#allocation2 + $0x398] sm:$0xff]
    %v263 = vld [vmem:[#allocation2 + $0x3a0] sm:$0xff]
    %v264 = vld [vmem:[#allocation2 + $0x3a8] sm:$0xff]
    %v265 = vld [vmem:[#allocation2 + $0x3b0] sm:$0xff]
    %v266 = vld [vmem:[#allocation2 + $0x3b8] sm:$0xff]
    %v267 = vld [vmem:[#allocation2 + $0x3c0] sm:$0xff]
    %v268 = vld [vmem:[#allocation2 + $0x3c8] sm:$0xff]
    %v269 = vld [vmem:[#allocation2 + $0x3d0] sm:$0xff]
    %v270 = vld [vmem:[#allocation2 + $0x3d8] sm:$0xff]
    %v271 = vld [vmem:[#allocation2 + $0x3e0] sm:$0xff]
    %v272 = vld [vmem:[#allocation2 + $0x3e8] sm:$0xff]
    %v273 = vld [vmem:[#allocation2 + $0x3f0] sm:$0xff]
    %v274 = vld [vmem:[#allocation2 + $0x3f8] sm:$0xff]
    %v275 = vld [vmem:[#allocation2 + $0x400] sm:$0xff]
    %v276 = vld [vmem:[#allocation2 + $0x408] sm:$0xff]
    %v277 = vld [vmem:[#allocation2 + $0x410] sm:$0xff]
    %v278 = vld [vmem:[#allocation2 + $0x418] sm:$0xff]
    %v279 = vld [vmem:[#allocation2 + $0x420] sm:$0xff]
    %v280 = vld [vmem:[#allocation2 + $0x428] sm:$0xff]
    %v281 = vld [vmem:[#allocation2 + $0x430] sm:$0xff]
    %v282 = vld [vmem:[#allocation2 + $0x438] sm:$0xff]
    %v283 = vld [vmem:[#allocation2 + $0x440] sm:$0xff]
    %v284 = vld [vmem:[#allocation2 + $0x448] sm:$0xff]
    %v285 = vld [vmem:[#allocation2 + $0x450] sm:$0xff]
    %v286 = vld [vmem:[#allocation2 + $0x458] sm:$0xff]
    %v287 = vld [vmem:[#allocation2 + $0x460] sm:$0xff]
    %v288 = vld [vmem:[#allocation2 + $0x468] sm:$0xff]
    %v289 = vld [vmem:[#allocation2 + $0x470] sm:$0xff]
    %v290 = vld [vmem:[#allocation2 + $0x478] sm:$0xff]
    %v291 = vld [vmem:[#allocation2 + $0x480] sm:$0xff]
    %v292 = vld [vmem:[#allocation2 + $0x488] sm:$0xff]
    %v293 = vld [vmem:[#allocation2 + $0x490] sm:$0xff]
    %v294 = vld [vmem:[#allocation2 + $0x498] sm:$0xff]
    %v295 = vld [vmem:[#allocation2 + $0x4a0] sm:$0xff]
    %v296 = vld [vmem:[#allocation2 + $0x4a8] sm:$0xff]
    %v297 = vld [vmem:[#allocation2 + $0x4b0] sm:$0xff]
    %v298 = vld [vmem:[#allocation2 + $0x4b8] sm:$0xff]
    %v299 = vld [vmem:[#allocation2 + $0x4c0] sm:$0xff]
    %v300 = vld [vmem:[#allocation2 + $0x4c8] sm:$0xff]
    %v301 = vld [vmem:[#allocation2 + $0x4d0] sm:$0xff]
    %v302 = vld [vmem:[#allocation2 + $0x4d8] sm:$0xff]
    %v303 = vld [vmem:[#allocation2 + $0x4e0] sm:$0xff]
    %v304 = vld [vmem:[#allocation2 + $0x4e8] sm:$0xff]
    %v305 = vld [vmem:[#allocation2 + $0x4f0] sm:$0xff]
    %v306 = vld [vmem:[#allocation2 + $0x4f8] sm:$0xff]
    %v307 = vld [vmem:[#allocation2 + $0x500] sm:$0xff]
    %v308 = vld [vmem:[#allocation2 + $0x508] sm:$0xff]
    %v309 = vld [vmem:[#allocation2 + $0x510] sm:$0xff]
    %v310 = vld [vmem:[#allocation2 + $0x518] sm:$0xff]
    %v311 = vld [vmem:[#allocation2 + $0x520] sm:$0xff]
    %v312 = vld [vmem:[#allocation2 + $0x528] sm:$0xff]
    %v313 = vld [vmem:[#allocation2 + $0x530] sm:$0xff]
    %v314 = vld [vmem:[#allocation2 + $0x538] sm:$0xff]
    %v315 = vld [vmem:[#allocation2 + $0x540] sm:$0xff]
    %v316 = vld [vmem:[#allocation2 + $0x548] sm:$0xff]
    %v317 = vld [vmem:[#allocation2 + $0x550] sm:$0xff]
    %v318 = vld [vmem:[#allocation2 + $0x558] sm:$0xff]
    %v319 = vld [vmem:[#allocation2 + $0x560] sm:$0xff]
    %v320 = vld [vmem:[#allocation2 + $0x568] sm:$0xff]
    %v321 = vld [vmem:[#allocation2 + $0x570] sm:$0xff]
    %v322 = vld [vmem:[#allocation2 + $0x578] sm:$0xff]
    %v323 = vld [vmem:[#allocation2 + $0x580] sm:$0xff]
    %v324 = vld [vmem:[#allocation2 + $0x588] sm:$0xff]
    %v325 = vld [vmem:[#allocation2 + $0x590] sm:$0xff]
    %v326 = vld [vmem:[#allocation2 + $0x598] sm:$0xff]
    %v327 = vld [vmem:[#allocation2 + $0x5a0] sm:$0xff]
    %v328 = vld [vmem:[#allocation2 + $0x5a8] sm:$0xff]
    %v329 = vld [vmem:[#allocation2 + $0x5b0] sm:$0xff]
    %v330 = vld [vmem:[#allocation2 + $0x5b8] sm:$0xff]
    %v331 = vld [vmem:[#allocation2 + $0x5c0] sm:$0xff]
    %v332 = vld [vmem:[#allocation2 + $0x5c8] sm:$0xff]
    %v333 = vld [vmem:[#allocation2 + $0x5d0] sm:$0xff]
    %v334 = vld [vmem:[#allocation2 + $0x5d8] sm:$0xff]
    %v335 = vld [vmem:[#allocation2 + $0x5e0] sm:$0xff]
    %v336 = vld [vmem:[#allocation2 + $0x5e8] sm:$0xff]
    %v337 = vld [vmem:[#allocation2 + $0x5f0] sm:$0xff]
    %v338 = vld [vmem:[#allocation2 + $0x5f8] sm:$0xff]
    %v339 = vld [vmem:[#allocation2 + $0x600] sm:$0xff]
    %v340 = vld [vmem:[#allocation2 + $0x608] sm:$0xff]
    %v341 = vld [vmem:[#allocation2 + $0x610] sm:$0xff]
    %v342 = vld [vmem:[#allocation2 + $0x618] sm:$0xff]
    %v343 = vld [vmem:[#allocation2 + $0x620] sm:$0xff]
    %v344 = vld [vmem:[#allocation2 + $0x628] sm:$0xff]
    %v345 = vld [vmem:[#allocation2 + $0x630] sm:$0xff]
    %v346 = vld [vmem:[#allocation2 + $0x638] sm:$0xff]
    %v347 = vld [vmem:[#allocation2 + $0x640] sm:$0xff]
    %v348 = vld [vmem:[#allocation2 + $0x648] sm:$0xff]
    %v349 = vld [vmem:[#allocation2 + $0x650] sm:$0xff]
    %v350 = vld [vmem:[#allocation2 + $0x658] sm:$0xff]
    %v351 = vld [vmem:[#allocation2 + $0x660] sm:$0xff]
    %v352 = vld [vmem:[#allocation2 + $0x668] sm:$0xff]
    %v353 = vld [vmem:[#allocation2 + $0x670] sm:$0xff]
    %v354 = vld [vmem:[#allocation2 + $0x678] sm:$0xff]
    %v355 = vld [vmem:[#allocation2 + $0x680] sm:$0xff]
    %v356 = vld [vmem:[#allocation2 + $0x688] sm:$0xff]
    %v357 = vld [vmem:[#allocation2 + $0x690] sm:$0xff]
    %v358 = vld [vmem:[#allocation2 + $0x698] sm:$0xff]
    %v359 = vld [vmem:[#allocation2 + $0x6a0] sm:$0xff]
    %v360 = vld [vmem:[#allocation2 + $0x6a8] sm:$0xff]
    %v361 = vld [vmem:[#allocation2 + $0x6b0] sm:$0xff]
    %v362 = vld [vmem:[#allocation2 + $0x6b8] sm:$0xff]
    %v363 = vld [vmem:[#allocation2 + $0x6c0] sm:$0xff]
    %v364 = vld [vmem:[#allocation2 + $0x6c8] sm:$0xff]
    %v365 = vld [vmem:[#allocation2 + $0x6d0] sm:$0xff]
    %v366 = vld [vmem:[#allocation2 + $0x6d8] sm:$0xff]
    %v367 = vld [vmem:[#allocation2 + $0x6e0] sm:$0xff]
    %v368 = vld [vmem:[#allocation2 + $0x6e8] sm:$0xff]
    %v369 = vld [vmem:[#allocation2 + $0x6f0] sm:$0xff]
    %v370 = vld [vmem:[#allocation2 + $0x6f8] sm:$0xff]
    %v371 = vld [vmem:[#allocation2 + $0x700] sm:$0xff]
    %v372 = vld [vmem:[#allocation2 + $0x708] sm:$0xff]
    %v373 = vld [vmem:[#allocation2 + $0x710] sm:$0xff]
    %v374 = vld [vmem:[#allocation2 + $0x718] sm:$0xff]
    %v375 = vld [vmem:[#allocation2 + $0x720] sm:$0xff]
    %v376 = vld [vmem:[#allocation2 + $0x728] sm:$0xff]
    %v377 = vld [vmem:[#allocation2 + $0x730] sm:$0xff]
    %v378 = vld [vmem:[#allocation2 + $0x738] sm:$0xff]
    %v379 = vld [vmem:[#allocation2 + $0x740] sm:$0xff]
    %v380 = vld [vmem:[#allocation2 + $0x748] sm:$0xff]
    %v381 = vld [vmem:[#allocation2 + $0x750] sm:$0xff]
    %v382 = vld [vmem:[#allocation2 + $0x758] sm:$0xff]
    %v383 = vld [vmem:[#allocation2 + $0x760] sm:$0xff]
    %v384 = vld [vmem:[#allocation2 + $0x768] sm:$0xff]
    %v385 = vld [vmem:[#allocation2 + $0x770] sm:$0xff]
    %v386 = vld [vmem:[#allocation2 + $0x778] sm:$0xff]
    %v387 = vld [vmem:[#allocation2 + $0x780] sm:$0xff]
    %v388 = vld [vmem:[#allocation2 + $0x788] sm:$0xff]
    %v389 = vld [vmem:[#allocation2 + $0x790] sm:$0xff]
    %v390 = vld [vmem:[#allocation2 + $0x798] sm:$0xff]
    %v391 = vld [vmem:[#allocation2 + $0x7a0] sm:$0xff]
    %v392 = vld [vmem:[#allocation2 + $0x7a8] sm:$0xff]
    %v393 = vld [vmem:[#allocation2 + $0x7b0] sm:$0xff]
    %v394 = vld [vmem:[#allocation2 + $0x7b8] sm:$0xff]
    %v395 = vld [vmem:[#allocation2 + $0x7c0] sm:$0xff]
    %v396 = vld [vmem:[#allocation2 + $0x7c8] sm:$0xff]
    %v397 = vld [vmem:[#allocation2 + $0x7d0] sm:$0xff]
    %v398 = vld [vmem:[#allocation2 + $0x7d8] sm:$0xff]
    %v399 = vld [vmem:[#allocation2 + $0x7e0] sm:$0xff]
    %v400 = vld [vmem:[#allocation2 + $0x7e8] sm:$0xff]
    %v401 = vld [vmem:[#allocation2 + $0x7f0] sm:$0xff]
    %v402 = vld [vmem:[#allocation2 + $0x7f8] sm:$0xff]
    %v403 = vld [vmem:[#allocation2 + $0x800] sm:$0xff]
    %v404 = vld [vmem:[#allocation2 + $0x808] sm:$0xff]
    %v405 = vld [vmem:[#allocation2 + $0x810] sm:$0xff]
    %v406 = vld [vmem:[#allocation2 + $0x818] sm:$0xff]
    %v407 = vld [vmem:[#allocation2 + $0x820] sm:$0xff]
    %v408 = vld [vmem:[#allocation2 + $0x828] sm:$0xff]
    %v409 = vld [vmem:[#allocation2 + $0x830] sm:$0xff]
    %v410 = vld [vmem:[#allocation2 + $0x838] sm:$0xff]
    %v411 = vld [vmem:[#allocation2 + $0x840] sm:$0xff]
    %v412 = vld [vmem:[#allocation2 + $0x848] sm:$0xff]
    %v413 = vld [vmem:[#allocation2 + $0x850] sm:$0xff]
    %v414 = vld [vmem:[#allocation2 + $0x858] sm:$0xff]
    %v415 = vld [vmem:[#allocation2 + $0x860] sm:$0xff]
    %v416 = vld [vmem:[#allocation2 + $0x868] sm:$0xff]
    %v417 = vld [vmem:[#allocation2 + $0x870] sm:$0xff]
    %v418 = vld [vmem:[#allocation2 + $0x878] sm:$0xff]
    %v419 = vld [vmem:[#allocation2 + $0x880] sm:$0xff]
    %v420 = vld [vmem:[#allocation2 + $0x888] sm:$0xff]
    %v421 = vld [vmem:[#allocation2 + $0x890] sm:$0xff]
    %v422 = vld [vmem:[#allocation2 + $0x898] sm:$0xff]
    %v423 = vld [vmem:[#allocation2 + $0x8a0] sm:$0xff]
    %v424 = vld [vmem:[#allocation2 + $0x8a8] sm:$0xff]
    %v425 = vld [vmem:[#allocation2 + $0x8b0] sm:$0xff]
    %v426 = vld [vmem:[#allocation2 + $0x8b8] sm:$0xff]
    %v427 = vld [vmem:[#allocation2 + $0x8c0] sm:$0xff]
    %v428 = vld [vmem:[#allocation2 + $0x8c8] sm:$0xff]
    %v429 = vld [vmem:[#allocation2 + $0x8d0] sm:$0xff]
    %v430 = vld [vmem:[#allocation2 + $0x8d8] sm:$0xff]
    %v431 = vld [vmem:[#allocation2 + $0x8e0] sm:$0xff]
    %v432 = vld [vmem:[#allocation2 + $0x8e8] sm:$0xff]
    %v433 = vld [vmem:[#allocation2 + $0x8f0] sm:$0xff]
    %v434 = vld [vmem:[#allocation2 + $0x8f8] sm:$0xff]
    %v435 = vld [vmem:[#allocation2 + $0x900] sm:$0xff]
    %v436 = vld [vmem:[#allocation2 + $0x908] sm:$0xff]
    %v437 = vld [vmem:[#allocation2 + $0x910] sm:$0xff]
    %v438 = vld [vmem:[#allocation2 + $0x918] sm:$0xff]
    %v439 = vld [vmem:[#allocation2 + $0x920] sm:$0xff]
    %v440 = vld [vmem:[#allocation2 + $0x928] sm:$0xff]
    %v441 = vld [vmem:[#allocation2 + $0x930] sm:$0xff]
    %v442 = vld [vmem:[#allocation2 + $0x938] sm:$0xff]
    %v443 = vld [vmem:[#allocation2 + $0x940] sm:$0xff]
    %v444 = vld [vmem:[#allocation2 + $0x948] sm:$0xff]
    %v445 = vld [vmem:[#allocation2 + $0x950] sm:$0xff]
    %v446 = vld [vmem:[#allocation2 + $0x958] sm:$0xff]
    %v447 = vld [vmem:[#allocation2 + $0x960] sm:$0xff]
    %v448 = vld [vmem:[#allocation2 + $0x968] sm:$0xff]
    %v449 = vld [vmem:[#allocation2 + $0x970] sm:$0xff]
    %v450 = vld [vmem:[#allocation2 + $0x978] sm:$0xff]
    %v451 = vld [vmem:[#allocation2 + $0x980] sm:$0xff]
    %v452 = vld [vmem:[#allocation2 + $0x988] sm:$0xff]
    %v453 = vld [vmem:[#allocation2 + $0x990] sm:$0xff]
    %v454 = vld [vmem:[#allocation2 + $0x998] sm:$0xff]
    %v455 = vld [vmem:[#allocation2 + $0x9a0] sm:$0xff]
    %v456 = vld [vmem:[#allocation2 + $0x9a8] sm:$0xff]
    %v457 = vld [vmem:[#allocation2 + $0x9b0] sm:$0xff]
    %v458 = vld [vmem:[#allocation2 + $0x9b8] sm:$0xff]
    %v459 = vld [vmem:[#allocation2 + $0x9c0] sm:$0xff]
    %v460 = vld [vmem:[#allocation2 + $0x9c8] sm:$0xff]
    %v461 = vld [vmem:[#allocation2 + $0x9d0] sm:$0xff]
    %v462 = vld [vmem:[#allocation2 + $0x9d8] sm:$0xff]
    %v463 = vld [vmem:[#allocation2 + $0x9e0] sm:$0xff]
    %v464 = vld [vmem:[#allocation2 + $0x9e8] sm:$0xff]
    %v465 = vld [vmem:[#allocation2 + $0x9f0] sm:$0xff]
    %v466 = vld [vmem:[#allocation2 + $0x9f8] sm:$0xff]
    %v467 = vld [vmem:[#allocation2 + $0xa00] sm:$0xff]
    %v468 = vld [vmem:[#allocation2 + $0xa08] sm:$0xff]
    %v469 = vld [vmem:[#allocation2 + $0xa10] sm:$0xff]
    %v470 = vld [vmem:[#allocation2 + $0xa18] sm:$0xff]
    %v471 = vld [vmem:[#allocation2 + $0xa20] sm:$0xff]
    %v472 = vld [vmem:[#allocation2 + $0xa28] sm:$0xff]
    %v473 = vld [vmem:[#allocation2 + $0xa30] sm:$0xff]
    %v474 = vld [vmem:[#allocation2 + $0xa38] sm:$0xff]
    %v475 = vld [vmem:[#allocation2 + $0xa40] sm:$0xff]
    %v476 = vld [vmem:[#allocation2 + $0xa48] sm:$0xff]
    %v477 = vld [vmem:[#allocation2 + $0xa50] sm:$0xff]
    %v478 = vld [vmem:[#allocation2 + $0xa58] sm:$0xff]
    %v479 = vld [vmem:[#allocation2 + $0xa60] sm:$0xff]
    %v480 = vld [vmem:[#allocation2 + $0xa68] sm:$0xff]
    %v481 = vld [vmem:[#allocation2 + $0xa70] sm:$0xff]
    %v482 = vld [vmem:[#allocation2 + $0xa78] sm:$0xff]
    %v483 = vld [vmem:[#allocation2 + $0xa80] sm:$0xff]
    %v484 = vld [vmem:[#allocation2 + $0xa88] sm:$0xff]
    %v485 = vld [vmem:[#allocation2 + $0xa90] sm:$0xff]
    %v486 = vld [vmem:[#allocation2 + $0xa98] sm:$0xff]
    %v487 = vld [vmem:[#allocation2 + $0xaa0] sm:$0xff]
    %v488 = vld [vmem:[#allocation2 + $0xaa8] sm:$0xff]
    %v489 = vld [vmem:[#allocation2 + $0xab0] sm:$0xff]
    %v490 = vld [vmem:[#allocation2 + $0xab8] sm:$0xff]
    %v491 = vld [vmem:[#allocation2 + $0xac0] sm:$0xff]
    %v492 = vld [vmem:[#allocation2 + $0xac8] sm:$0xff]
    %v493 = vld [vmem:[#allocation2 + $0xad0] sm:$0xff]
    %v494 = vld [vmem:[#allocation2 + $0xad8] sm:$0xff]
    %v495 = vld [vmem:[#allocation2 + $0xae0] sm:$0xff]
    %v496 = vld [vmem:[#allocation2 + $0xae8] sm:$0xff]
    %v497 = vld [vmem:[#allocation2 + $0xaf0] sm:$0xff]
    %v498 = vld [vmem:[#allocation2 + $0xaf8] sm:$0xff]
    %v499 = vld [vmem:[#allocation2 + $0xb00] sm:$0xff]
    %v500 = vld [vmem:[#allocation2 + $0xb08] sm:$0xff]
    %v501 = vld [vmem:[#allocation2 + $0xb10] sm:$0xff]
    %v502 = vld [vmem:[#allocation2 + $0xb18] sm:$0xff]
    %v503 = vld [vmem:[#allocation2 + $0xb20] sm:$0xff]
    %v504 = vld [vmem:[#allocation2 + $0xb28] sm:$0xff]
    %v505 = vld [vmem:[#allocation2 + $0xb30] sm:$0xff]
    %v506 = vld [vmem:[#allocation2 + $0xb38] sm:$0xff]
    %v507 = vld [vmem:[#allocation2 + $0xb40] sm:$0xff]
    %v508 = vld [vmem:[#allocation2 + $0xb48] sm:$0xff]
    %v509 = vld [vmem:[#allocation2 + $0xb50] sm:$0xff]
    %v510 = vld [vmem:[#allocation2 + $0xb58] sm:$0xff]
    %v511 = vld [vmem:[#allocation2 + $0xb60] sm:$0xff]
    %v512 = vld [vmem:[#allocation2 + $0xb68] sm:$0xff]
    %v513 = vld [vmem:[#allocation2 + $0xb70] sm:$0xff]
    %v514 = vld [vmem:[#allocation2 + $0xb78] sm:$0xff]
    %v515 = vld [vmem:[#allocation2 + $0xb80] sm:$0xff]
    %v516 = vld [vmem:[#allocation2 + $0xb88] sm:$0xff]
    %v517 = vld [vmem:[#allocation2 + $0xb90] sm:$0xff]
    %v518 = vld [vmem:[#allocation2 + $0xb98] sm:$0xff]
    %v519 = vld [vmem:[#allocation2 + $0xba0] sm:$0xff]
    %v520 = vld [vmem:[#allocation2 + $0xba8] sm:$0xff]
    %v521 = vld [vmem:[#allocation2 + $0xbb0] sm:$0xff]
    %v522 = vld [vmem:[#allocation2 + $0xbb8] sm:$0xff]
    %v523 = vld [vmem:[#allocation2 + $0xbc0] sm:$0xff]
    %v524 = vld [vmem:[#allocation2 + $0xbc8] sm:$0xff]
    %v525 = vld [vmem:[#allocation2 + $0xbd0] sm:$0xff]
    %v526 = vld [vmem:[#allocation2 + $0xbd8] sm:$0xff]
    %v527 = vld [vmem:[#allocation2 + $0xbe0] sm:$0xff]
    %v528 = vld [vmem:[#allocation2 + $0xbe8] sm:$0xff]
    %v529 = vld [vmem:[#allocation2 + $0xbf0] sm:$0xff]
    %v530 = vld [vmem:[#allocation2 + $0xbf8] sm:$0xff]
    %v531 = vld [vmem:[#allocation2 + $0xc00] sm:$0xff]
    %v532 = vld [vmem:[#allocation2 + $0xc08] sm:$0xff]
    %v533 = vld [vmem:[#allocation2 + $0xc10] sm:$0xff]
    %v534 = vld [vmem:[#allocation2 + $0xc18] sm:$0xff]
    %v535 = vld [vmem:[#allocation2 + $0xc20] sm:$0xff]
    %v536 = vld [vmem:[#allocation2 + $0xc28] sm:$0xff]
    %v537 = vld [vmem:[#allocation2 + $0xc30] sm:$0xff]
    %v538 = vld [vmem:[#allocation2 + $0xc38] sm:$0xff]
    %v539 = vld [vmem:[#allocation2 + $0xc40] sm:$0xff]
    %v540 = vld [vmem:[#allocation2 + $0xc48] sm:$0xff]
    %v541 = vld [vmem:[#allocation2 + $0xc50] sm:$0xff]
    %v542 = vld [vmem:[#allocation2 + $0xc58] sm:$0xff]
    %v543 = vld [vmem:[#allocation2 + $0xc60] sm:$0xff]
    %v544 = vld [vmem:[#allocation2 + $0xc68] sm:$0xff]
    %v545 = vld [vmem:[#allocation2 + $0xc70] sm:$0xff]
    %v546 = vld [vmem:[#allocation2 + $0xc78] sm:$0xff]
    %v547 = vld [vmem:[#allocation2 + $0xc80] sm:$0xff]
    %v548 = vld [vmem:[#allocation2 + $0xc88] sm:$0xff]
    %v549 = vld [vmem:[#allocation2 + $0xc90] sm:$0xff]
    %v550 = vld [vmem:[#allocation2 + $0xc98] sm:$0xff]
    %v551 = vld [vmem:[#allocation2 + $0xca0] sm:$0xff]
    %v552 = vld [vmem:[#allocation2 + $0xca8] sm:$0xff]
    %v553 = vld [vmem:[#allocation2 + $0xcb0] sm:$0xff]
    %v554 = vld [vmem:[#allocation2 + $0xcb8] sm:$0xff]
    %v555 = vld [vmem:[#allocation2 + $0xcc0] sm:$0xff]
    %v556 = vld [vmem:[#allocation2 + $0xcc8] sm:$0xff]
    %v557 = vld [vmem:[#allocation2 + $0xcd0] sm:$0xff]
    %v558 = vld [vmem:[#allocation2 + $0xcd8] sm:$0xff]
    %v559 = vld [vmem:[#allocation2 + $0xce0] sm:$0xff]
    %v560 = vld [vmem:[#allocation2 + $0xce8] sm:$0xff]
    %v561 = vld [vmem:[#allocation2 + $0xcf0] sm:$0xff]
    %v562 = vld [vmem:[#allocation2 + $0xcf8] sm:$0xff]
    %v563 = vld [vmem:[#allocation2 + $0xd00] sm:$0xff]
    %v564 = vld [vmem:[#allocation2 + $0xd08] sm:$0xff]
    %v565 = vld [vmem:[#allocation2 + $0xd10] sm:$0xff]
    %v566 = vld [vmem:[#allocation2 + $0xd18] sm:$0xff]
    %v567 = vld [vmem:[#allocation2 + $0xd20] sm:$0xff]
    %v568 = vld [vmem:[#allocation2 + $0xd28] sm:$0xff]
    %v569 = vld [vmem:[#allocation2 + $0xd30] sm:$0xff]
    %v570 = vld [vmem:[#allocation2 + $0xd38] sm:$0xff]
    %v571 = vld [vmem:[#allocation2 + $0xd40] sm:$0xff]
    %v572 = vld [vmem:[#allocation2 + $0xd48] sm:$0xff]
    %v573 = vld [vmem:[#allocation2 + $0xd50] sm:$0xff]
    %v574 = vld [vmem:[#allocation2 + $0xd58] sm:$0xff]
    %v575 = vld [vmem:[#allocation2 + $0xd60] sm:$0xff]
    %v576 = vld [vmem:[#allocation2 + $0xd68] sm:$0xff]
    %v577 = vld [vmem:[#allocation2 + $0xd70] sm:$0xff]
    %v578 = vld [vmem:[#allocation2 + $0xd78] sm:$0xff]
    %v579 = vld [vmem:[#allocation2 + $0xd80] sm:$0xff]
    %v580 = vld [vmem:[#allocation2 + $0xd88] sm:$0xff]
    %v581 = vld [vmem:[#allocation2 + $0xd90] sm:$0xff]
    %v582 = vld [vmem:[#allocation2 + $0xd98] sm:$0xff]
    %v583 = vld [vmem:[#allocation2 + $0xda0] sm:$0xff]
    %v584 = vld [vmem:[#allocation2 + $0xda8] sm:$0xff]
    %v585 = vld [vmem:[#allocation2 + $0xdb0] sm:$0xff]
    %v586 = vld [vmem:[#allocation2 + $0xdb8] sm:$0xff]
    %v587 = vld [vmem:[#allocation2 + $0xdc0] sm:$0xff]
    %v588 = vld [vmem:[#allocation2 + $0xdc8] sm:$0xff]
    %v589 = vld [vmem:[#allocation2 + $0xdd0] sm:$0xff]
    %v590 = vld [vmem:[#allocation2 + $0xdd8] sm:$0xff]
    %v591 = vld [vmem:[#allocation2 + $0xde0] sm:$0xff]
    %v592 = vld [vmem:[#allocation2 + $0xde8] sm:$0xff]
    %v593 = vld [vmem:[#allocation2 + $0xdf0] sm:$0xff]
    %v594 = vld [vmem:[#allocation2 + $0xdf8] sm:$0xff]
    %v595 = vld [vmem:[#allocation2 + $0xe00] sm:$0xff]
    %v596 = vld [vmem:[#allocation2 + $0xe08] sm:$0xff]
    %v597 = vld [vmem:[#allocation2 + $0xe10] sm:$0xff]
    %v598 = vld [vmem:[#allocation2 + $0xe18] sm:$0xff]
    %v599 = vld [vmem:[#allocation2 + $0xe20] sm:$0xff]
    %v600 = vld [vmem:[#allocation2 + $0xe28] sm:$0xff]
    %v601 = vld [vmem:[#allocation2 + $0xe30] sm:$0xff]
    %v602 = vld [vmem:[#allocation2 + $0xe38] sm:$0xff]
    %v603 = vld [vmem:[#allocation2 + $0xe40] sm:$0xff]
    %v604 = vld [vmem:[#allocation2 + $0xe48] sm:$0xff]
    %v605 = vld [vmem:[#allocation2 + $0xe50] sm:$0xff]
    %v606 = vld [vmem:[#allocation2 + $0xe58] sm:$0xff]
    %v607 = vld [vmem:[#allocation2 + $0xe60] sm:$0xff]
    %v608 = vld [vmem:[#allocation2 + $0xe68] sm:$0xff]
    %v609 = vld [vmem:[#allocation2 + $0xe70] sm:$0xff]
    %v610 = vld [vmem:[#allocation2 + $0xe78] sm:$0xff]
    %v611 = vld [vmem:[#allocation2 + $0xe80] sm:$0xff]
    %v612 = vld [vmem:[#allocation2 + $0xe88] sm:$0xff]
    %v613 = vld [vmem:[#allocation2 + $0xe90] sm:$0xff]
    %v614 = vld [vmem:[#allocation2 + $0xe98] sm:$0xff]
    %v615 = vld [vmem:[#allocation2 + $0xea0] sm:$0xff]
    %v616 = vld [vmem:[#allocation2 + $0xea8] sm:$0xff]
    %v617 = vld [vmem:[#allocation2 + $0xeb0] sm:$0xff]
    %v618 = vld [vmem:[#allocation2 + $0xeb8] sm:$0xff]
    %v619 = vld [vmem:[#allocation2 + $0xec0] sm:$0xff]
    %v620 = vld [vmem:[#allocation2 + $0xec8] sm:$0xff]
    %v621 = vld [vmem:[#allocation2 + $0xed0] sm:$0xff]
    %v622 = vld [vmem:[#allocation2 + $0xed8] sm:$0xff]
    %v623 = vld [vmem:[#allocation2 + $0xee0] sm:$0xff]
    %v624 = vld [vmem:[#allocation2 + $0xee8] sm:$0xff]
    %v625 = vld [vmem:[#allocation2 + $0xef0] sm:$0xff]
    %v626 = vld [vmem:[#allocation2 + $0xef8] sm:$0xff]
    %v627 = vld [vmem:[#allocation2 + $0xf00] sm:$0xff]
    %v628 = vld [vmem:[#allocation2 + $0xf08] sm:$0xff]
    %v629 = vld [vmem:[#allocation2 + $0xf10] sm:$0xff]
    %v630 = vld [vmem:[#allocation2 + $0xf18] sm:$0xff]
    %v631 = vld [vmem:[#allocation2 + $0xf20] sm:$0xff]
    %v632 = vld [vmem:[#allocation2 + $0xf28] sm:$0xff]
    %v633 = vld [vmem:[#allocation2 + $0xf30] sm:$0xff]
    %v634 = vld [vmem:[#allocation2 + $0xf38] sm:$0xff]
    %v635 = vld [vmem:[#allocation2 + $0xf40] sm:$0xff]
    %v636 = vld [vmem:[#allocation2 + $0xf48] sm:$0xff]
    %v637 = vld [vmem:[#allocation2 + $0xf50] sm:$0xff]
    %v638 = vld [vmem:[#allocation2 + $0xf58] sm:$0xff]
    %v639 = vld [vmem:[#allocation2 + $0xf60] sm:$0xff]
    %v640 = vld [vmem:[#allocation2 + $0xf68] sm:$0xff]
    %v641 = vld [vmem:[#allocation2 + $0xf70] sm:$0xff]
    %v642 = vld [vmem:[#allocation2 + $0xf78] sm:$0xff]
    %v643 = vld [vmem:[#allocation2 + $0xf80] sm:$0xff]
    %v644 = vld [vmem:[#allocation2 + $0xf88] sm:$0xff]
    %v645 = vld [vmem:[#allocation2 + $0xf90] sm:$0xff]
    %v646 = vld [vmem:[#allocation2 + $0xf98] sm:$0xff]
    %v647 = vld [vmem:[#allocation2 + $0xfa0] sm:$0xff]
    %v648 = vld [vmem:[#allocation2 + $0xfa8] sm:$0xff]
    %v649 = vld [vmem:[#allocation2 + $0xfb0] sm:$0xff]
    %v650 = vld [vmem:[#allocation2 + $0xfb8] sm:$0xff]
    %v651 = vld [vmem:[#allocation2 + $0xfc0] sm:$0xff]
    %v652 = vld [vmem:[#allocation2 + $0xfc8] sm:$0xff]
    %v653 = vld [vmem:[#allocation2 + $0xfd0] sm:$0xff]
    %v654 = vld [vmem:[#allocation2 + $0xfd8] sm:$0xff]
    %v655 = vld [vmem:[#allocation2 + $0xfe0] sm:$0xff]
    %v656 = vld [vmem:[#allocation2 + $0xfe8] sm:$0xff]
    %v657 = vld [vmem:[#allocation2 + $0xff0] sm:$0xff]
    %v658 = vld [vmem:[#allocation2 + $0xff8] sm:$0xff]
    %v659 = vld [vmem:[#allocation2 + $0x1000] sm:$0xff]
    %v660 = vld [vmem:[#allocation2 + $0x1008] sm:$0xff]
    %v661 = vld [vmem:[#allocation2 + $0x1010] sm:$0xff]
    %v662 = vld [vmem:[#allocation2 + $0x1018] sm:$0xff]
    %v663 = vld [vmem:[#allocation2 + $0x1020] sm:$0xff]
    %v664 = vld [vmem:[#allocation2 + $0x1028] sm:$0xff]
    %v665 = vld [vmem:[#allocation2 + $0x1030] sm:$0xff]
    %v666 = vld [vmem:[#allocation2 + $0x1038] sm:$0xff]
    %v667 = vld [vmem:[#allocation2 + $0x1040] sm:$0xff]
    %v668 = vld [vmem:[#allocation2 + $0x1048] sm:$0xff]
    %v669 = vld [vmem:[#allocation2 + $0x1050] sm:$0xff]
    %v670 = vld [vmem:[#allocation2 + $0x1058] sm:$0xff]
    %v671 = vld [vmem:[#allocation2 + $0x1060] sm:$0xff]
    %v672 = vld [vmem:[#allocation2 + $0x1068] sm:$0xff]
    %v673 = vld [vmem:[#allocation2 + $0x1070] sm:$0xff]
    %v674 = vld [vmem:[#allocation2 + $0x1078] sm:$0xff]
    %v675 = vld [vmem:[#allocation2 + $0x1080] sm:$0xff]
    %v676 = vld [vmem:[#allocation2 + $0x1088] sm:$0xff]
    %v677 = vld [vmem:[#allocation2 + $0x1090] sm:$0xff]
    %v678 = vld [vmem:[#allocation2 + $0x1098] sm:$0xff]
    %v679 = vld [vmem:[#allocation2 + $0x10a0] sm:$0xff]
    %v680 = vld [vmem:[#allocation2 + $0x10a8] sm:$0xff]
    %v681 = vld [vmem:[#allocation2 + $0x10b0] sm:$0xff]
    %v682 = vld [vmem:[#allocation2 + $0x10b8] sm:$0xff]
    %v683 = vld [vmem:[#allocation2 + $0x10c0] sm:$0xff]
    %v684 = vld [vmem:[#allocation2 + $0x10c8] sm:$0xff]
    %v685 = vld [vmem:[#allocation2 + $0x10d0] sm:$0xff]
    %v686 = vld [vmem:[#allocation2 + $0x10d8] sm:$0xff]
    %v687 = vld [vmem:[#allocation2 + $0x10e0] sm:$0xff]
    %v688 = vld [vmem:[#allocation2 + $0x10e8] sm:$0xff]
    %v689 = vld [vmem:[#allocation2 + $0x10f0] sm:$0xff]
    %v690 = vld [vmem:[#allocation2 + $0x10f8] sm:$0xff]
    %v691 = vld [vmem:[#allocation2 + $0x1100] sm:$0xff]
    %v692 = vld [vmem:[#allocation2 + $0x1108] sm:$0xff]
    %v693 = vld [vmem:[#allocation2 + $0x1110] sm:$0xff]
    %v694 = vld [vmem:[#allocation2 + $0x1118] sm:$0xff]
    %v695 = vld [vmem:[#allocation2 + $0x1120] sm:$0xff]
    %v696 = vld [vmem:[#allocation2 + $0x1128] sm:$0xff]
    %v697 = vld [vmem:[#allocation2 + $0x1130] sm:$0xff]
    %v698 = vld [vmem:[#allocation2 + $0x1138] sm:$0xff]
    %v699 = vld [vmem:[#allocation2 + $0x1140] sm:$0xff]
    %v700 = vld [vmem:[#allocation2 + $0x1148] sm:$0xff]
    %v701 = vld [vmem:[#allocation2 + $0x1150] sm:$0xff]
    %v702 = vld [vmem:[#allocation2 + $0x1158] sm:$0xff]
    %v703 = vld [vmem:[#allocation2 + $0x1160] sm:$0xff]
    %v704 = vld [vmem:[#allocation2 + $0x1168] sm:$0xff]
    %v705 = vld [vmem:[#allocation2 + $0x1170] sm:$0xff]
    %v706 = vld [vmem:[#allocation2 + $0x1178] sm:$0xff]
    %v707 = vld [vmem:[#allocation2 + $0x1180] sm:$0xff]
    %v708 = vld [vmem:[#allocation2 + $0x1188] sm:$0xff]
    %v709 = vld [vmem:[#allocation2 + $0x1190] sm:$0xff]
    %v710 = vld [vmem:[#allocation2 + $0x1198] sm:$0xff]
    %v711 = vld [vmem:[#allocation2 + $0x11a0] sm:$0xff]
    %v712 = vld [vmem:[#allocation2 + $0x11a8] sm:$0xff]
    %v713 = vld [vmem:[#allocation2 + $0x11b0] sm:$0xff]
    %v714 = vld [vmem:[#allocation2 + $0x11b8] sm:$0xff]
    %v715 = vld [vmem:[#allocation2 + $0x11c0] sm:$0xff]
    %v716 = vld [vmem:[#allocation2 + $0x11c8] sm:$0xff]
    %v717 = vld [vmem:[#allocation2 + $0x11d0] sm:$0xff]
    %v718 = vld [vmem:[#allocation2 + $0x11d8] sm:$0xff]
    %v719 = vld [vmem:[#allocation2 + $0x11e0] sm:$0xff]
    %v720 = vld [vmem:[#allocation2 + $0x11e8] sm:$0xff]
    %v721 = vld [vmem:[#allocation2 + $0x11f0] sm:$0xff]
    %v722 = vld [vmem:[#allocation2 + $0x11f8] sm:$0xff]
    %v723 = vld [vmem:[#allocation2 + $0x1200] sm:$0xff]
    %v724 = vld [vmem:[#allocation2 + $0x1208] sm:$0xff]
    %v725 = vld [vmem:[#allocation2 + $0x1210] sm:$0xff]
    %v726 = vld [vmem:[#allocation2 + $0x1218] sm:$0xff]
    %v727 = vld [vmem:[#allocation2 + $0x1220] sm:$0xff]
    %v728 = vld [vmem:[#allocation2 + $0x1228] sm:$0xff]
    %v729 = vld [vmem:[#allocation2 + $0x1230] sm:$0xff]
    %v730 = vld [vmem:[#allocation2 + $0x1238] sm:$0xff]
    %v731 = vld [vmem:[#allocation2 + $0x1240] sm:$0xff]
    %v732 = vld [vmem:[#allocation2 + $0x1248] sm:$0xff]
    %v733 = vld [vmem:[#allocation2 + $0x1250] sm:$0xff]
    %v734 = vld [vmem:[#allocation2 + $0x1258] sm:$0xff]
    %v735 = vld [vmem:[#allocation2 + $0x1260] sm:$0xff]
    %v736 = vld [vmem:[#allocation2 + $0x1268] sm:$0xff]
    %v737 = vld [vmem:[#allocation2 + $0x1270] sm:$0xff]
    %v738 = vld [vmem:[#allocation2 + $0x1278] sm:$0xff]
    %v739 = vld [vmem:[#allocation2 + $0x1280] sm:$0xff]
    %v740 = vld [vmem:[#allocation2 + $0x1288] sm:$0xff]
    %v741 = vld [vmem:[#allocation2 + $0x1290] sm:$0xff]
    %v742 = vld [vmem:[#allocation2 + $0x1298] sm:$0xff]
    %v743 = vld [vmem:[#allocation2 + $0x12a0] sm:$0xff]
    %v744 = vld [vmem:[#allocation2 + $0x12a8] sm:$0xff]
    %v745 = vld [vmem:[#allocation2 + $0x12b0] sm:$0xff]
    %v746 = vld [vmem:[#allocation2 + $0x12b8] sm:$0xff]
    %v747 = vld [vmem:[#allocation2 + $0x12c0] sm:$0xff]
    %v748 = vld [vmem:[#allocation2 + $0x12c8] sm:$0xff]
    %v749 = vld [vmem:[#allocation2 + $0x12d0] sm:$0xff]
    %v750 = vld [vmem:[#allocation2 + $0x12d8] sm:$0xff]
    %v751 = vld [vmem:[#allocation2 + $0x12e0] sm:$0xff]
    %v752 = vld [vmem:[#allocation2 + $0x12e8] sm:$0xff]
    %v753 = vld [vmem:[#allocation2 + $0x12f0] sm:$0xff]
    %v754 = vld [vmem:[#allocation2 + $0x12f8] sm:$0xff]
    %v755 = vld [vmem:[#allocation2 + $0x1300] sm:$0xff]
    %v756 = vld [vmem:[#allocation2 + $0x1308] sm:$0xff]
    %v757 = vld [vmem:[#allocation2 + $0x1310] sm:$0xff]
    %v758 = vld [vmem:[#allocation2 + $0x1318] sm:$0xff]
    %v759 = vld [vmem:[#allocation2 + $0x1320] sm:$0xff]
    %v760 = vld [vmem:[#allocation2 + $0x1328] sm:$0xff]
    %v761 = vld [vmem:[#allocation2 + $0x1330] sm:$0xff]
    %v762 = vld [vmem:[#allocation2 + $0x1338] sm:$0xff]
    %v763 = vld [vmem:[#allocation2 + $0x1340] sm:$0xff]
    %v764 = vld [vmem:[#allocation2 + $0x1348] sm:$0xff]
    %v765 = vld [vmem:[#allocation2 + $0x1350] sm:$0xff]
    %v766 = vld [vmem:[#allocation2 + $0x1358] sm:$0xff]
    %v767 = vld [vmem:[#allocation2 + $0x1360] sm:$0xff]
    %v768 = vld [vmem:[#allocation2 + $0x1368] sm:$0xff]
    %v769 = vld [vmem:[#allocation2 + $0x1370] sm:$0xff]
    %v770 = vld [vmem:[#allocation2 + $0x1378] sm:$0xff]
    %v771 = vld [vmem:[#allocation2 + $0x1380] sm:$0xff]
    %v772 = vld [vmem:[#allocation2 + $0x1388] sm:$0xff]
    %v773 = vld [vmem:[#allocation2 + $0x1390] sm:$0xff]
    %v774 = vld [vmem:[#allocation2 + $0x1398] sm:$0xff]
    %v775 = vld [vmem:[#allocation2 + $0x13a0] sm:$0xff]
    %v776 = vld [vmem:[#allocation2 + $0x13a8] sm:$0xff]
    %v777 = vld [vmem:[#allocation2 + $0x13b0] sm:$0xff]
    %v778 = vld [vmem:[#allocation2 + $0x13b8] sm:$0xff]
    %v779 = vld [vmem:[#allocation2 + $0x13c0] sm:$0xff]
    %v780 = vld [vmem:[#allocation2 + $0x13c8] sm:$0xff]
    %v781 = vld [vmem:[#allocation2 + $0x13d0] sm:$0xff]
    %v782 = vld [vmem:[#allocation2 + $0x13d8] sm:$0xff]
    %v783 = vld [vmem:[#allocation2 + $0x13e0] sm:$0xff]
    %v784 = vld [vmem:[#allocation2 + $0x13e8] sm:$0xff]
    %v785 = vld [vmem:[#allocation2 + $0x13f0] sm:$0xff]
    %v786 = vld [vmem:[#allocation2 + $0x13f8] sm:$0xff]
    %v787 = vld [vmem:[#allocation2 + $0x1400] sm:$0xff]
    %v788 = vld [vmem:[#allocation2 + $0x1408] sm:$0xff]
    %v789 = vld [vmem:[#allocation2 + $0x1410] sm:$0xff]
    %v790 = vld [vmem:[#allocation2 + $0x1418] sm:$0xff]
    %v791 = vld [vmem:[#allocation2 + $0x1420] sm:$0xff]
    %v792 = vld [vmem:[#allocation2 + $0x1428] sm:$0xff]
    %v793 = vld [vmem:[#allocation2 + $0x1430] sm:$0xff]
    %v794 = vld [vmem:[#allocation2 + $0x1438] sm:$0xff]
    %v795 = vld [vmem:[#allocation2 + $0x1440] sm:$0xff]
    %v796 = vld [vmem:[#allocation2 + $0x1448] sm:$0xff]
    %v797 = vld [vmem:[#allocation2 + $0x1450] sm:$0xff]
    %v798 = vld [vmem:[#allocation2 + $0x1458] sm:$0xff]
    %v799 = vld [vmem:[#allocation2 + $0x1460] sm:$0xff]
    %v800 = vld [vmem:[#allocation2 + $0x1468] sm:$0xff]
    %v801 = vld [vmem:[#allocation2 + $0x1470] sm:$0xff]
    %v802 = vld [vmem:[#allocation2 + $0x1478] sm:$0xff]
    %v803 = vld [vmem:[#allocation2 + $0x1480] sm:$0xff]
    %v804 = vld [vmem:[#allocation2 + $0x1488] sm:$0xff]
    %v805 = vld [vmem:[#allocation2 + $0x1490] sm:$0xff]
    %v806 = vld [vmem:[#allocation2 + $0x1498] sm:$0xff]
    %v807 = vld [vmem:[#allocation2 + $0x14a0] sm:$0xff]
    %v808 = vld [vmem:[#allocation2 + $0x14a8] sm:$0xff]
    %v809 = vld [vmem:[#allocation2 + $0x14b0] sm:$0xff]
    %v810 = vld [vmem:[#allocation2 + $0x14b8] sm:$0xff]
    %v811 = vld [vmem:[#allocation2 + $0x14c0] sm:$0xff]
    %v812 = vld [vmem:[#allocation2 + $0x14c8] sm:$0xff]
    %v813 = vld [vmem:[#allocation2 + $0x14d0] sm:$0xff]
    %v814 = vld [vmem:[#allocation2 + $0x14d8] sm:$0xff]
    %v815 = vld [vmem:[#allocation2 + $0x14e0] sm:$0xff]
    %v816 = vld [vmem:[#allocation2 + $0x14e8] sm:$0xff]
    %v817 = vld [vmem:[#allocation2 + $0x14f0] sm:$0xff]
    %v818 = vld [vmem:[#allocation2 + $0x14f8] sm:$0xff]
    %v819 = vld [vmem:[#allocation2 + $0x1500] sm:$0xff]
    %v820 = vld [vmem:[#allocation2 + $0x1508] sm:$0xff]
    %v821 = vld [vmem:[#allocation2 + $0x1510] sm:$0xff]
    %v822 = vld [vmem:[#allocation2 + $0x1518] sm:$0xff]
    %v823 = vld [vmem:[#allocation2 + $0x1520] sm:$0xff]
    %v824 = vld [vmem:[#allocation2 + $0x1528] sm:$0xff]
    %v825 = vld [vmem:[#allocation2 + $0x1530] sm:$0xff]
    %v826 = vld [vmem:[#allocation2 + $0x1538] sm:$0xff]
    %v827 = vld [vmem:[#allocation2 + $0x1540] sm:$0xff]
    %v828 = vld [vmem:[#allocation2 + $0x1548] sm:$0xff]
    %v829 = vld [vmem:[#allocation2 + $0x1550] sm:$0xff]
    %v830 = vld [vmem:[#allocation2 + $0x1558] sm:$0xff]
    %v831 = vld [vmem:[#allocation2 + $0x1560] sm:$0xff]
    %v832 = vld [vmem:[#allocation2 + $0x1568] sm:$0xff]
    %v833 = vld [vmem:[#allocation2 + $0x1570] sm:$0xff]
    %v834 = vld [vmem:[#allocation2 + $0x1578] sm:$0xff]
    %v835 = vld [vmem:[#allocation2 + $0x1580] sm:$0xff]
    %v836 = vld [vmem:[#allocation2 + $0x1588] sm:$0xff]
    %v837 = vld [vmem:[#allocation2 + $0x1590] sm:$0xff]
    %v838 = vld [vmem:[#allocation2 + $0x1598] sm:$0xff]
    %v839 = vld [vmem:[#allocation2 + $0x15a0] sm:$0xff]
    %v840 = vld [vmem:[#allocation2 + $0x15a8] sm:$0xff]
    %v841 = vld [vmem:[#allocation2 + $0x15b0] sm:$0xff]
    %v842 = vld [vmem:[#allocation2 + $0x15b8] sm:$0xff]
    %v843 = vld [vmem:[#allocation2 + $0x15c0] sm:$0xff]
    %v844 = vld [vmem:[#allocation2 + $0x15c8] sm:$0xff]
    %v845 = vld [vmem:[#allocation2 + $0x15d0] sm:$0xff]
    %v846 = vld [vmem:[#allocation2 + $0x15d8] sm:$0xff]
    %v847 = vld [vmem:[#allocation2 + $0x15e0] sm:$0xff]
    %v848 = vld [vmem:[#allocation2 + $0x15e8] sm:$0xff]
    %v849 = vld [vmem:[#allocation2 + $0x15f0] sm:$0xff]
    %v850 = vld [vmem:[#allocation2 + $0x15f8] sm:$0xff]
    %v851 = vld [vmem:[#allocation2 + $0x1600] sm:$0xff]
    %v852 = vld [vmem:[#allocation2 + $0x1608] sm:$0xff]
    %v853 = vld [vmem:[#allocation2 + $0x1610] sm:$0xff]
    %v854 = vld [vmem:[#allocation2 + $0x1618] sm:$0xff]
    %v855 = vld [vmem:[#allocation2 + $0x1620] sm:$0xff]
    %v856 = vld [vmem:[#allocation2 + $0x1628] sm:$0xff]
    %v857 = vld [vmem:[#allocation2 + $0x1630] sm:$0xff]
    %v858 = vld [vmem:[#allocation2 + $0x1638] sm:$0xff]
    %v859 = vld [vmem:[#allocation2 + $0x1640] sm:$0xff]
    %v860 = vld [vmem:[#allocation2 + $0x1648] sm:$0xff]
    %v861 = vld [vmem:[#allocation2 + $0x1650] sm:$0xff]
    %v862 = vld [vmem:[#allocation2 + $0x1658] sm:$0xff]
    %v863 = vld [vmem:[#allocation2 + $0x1660] sm:$0xff]
    %v864 = vld [vmem:[#allocation2 + $0x1668] sm:$0xff]
    %v865 = vld [vmem:[#allocation2 + $0x1670] sm:$0xff]
    %v866 = vld [vmem:[#allocation2 + $0x1678] sm:$0xff]
    %v867 = vld [vmem:[#allocation2 + $0x1680] sm:$0xff]
    %v868 = vld [vmem:[#allocation2 + $0x1688] sm:$0xff]
    %v869 = vld [vmem:[#allocation2 + $0x1690] sm:$0xff]
    %v870 = vld [vmem:[#allocation2 + $0x1698] sm:$0xff]
    %v871 = vld [vmem:[#allocation2 + $0x16a0] sm:$0xff]
    %v872 = vld [vmem:[#allocation2 + $0x16a8] sm:$0xff]
    %v873 = vld [vmem:[#allocation2 + $0x16b0] sm:$0xff]
    %v874 = vld [vmem:[#allocation2 + $0x16b8] sm:$0xff]
    %v875 = vld [vmem:[#allocation2 + $0x16c0] sm:$0xff]
    %v876 = vld [vmem:[#allocation2 + $0x16c8] sm:$0xff]
    %v877 = vld [vmem:[#allocation2 + $0x16d0] sm:$0xff]
    %v878 = vld [vmem:[#allocation2 + $0x16d8] sm:$0xff]
    %v879 = vld [vmem:[#allocation2 + $0x16e0] sm:$0xff]
    %v880 = vld [vmem:[#allocation2 + $0x16e8] sm:$0xff]
    %v881 = vld [vmem:[#allocation2 + $0x16f0] sm:$0xff]
    %v882 = vld [vmem:[#allocation2 + $0x16f8] sm:$0xff]
    %v883 = vld [vmem:[#allocation2 + $0x1700] sm:$0xff]
    %v884 = vld [vmem:[#allocation2 + $0x1708] sm:$0xff]
    %v885 = vld [vmem:[#allocation2 + $0x1710] sm:$0xff]
    %v886 = vld [vmem:[#allocation2 + $0x1718] sm:$0xff]
    %v887 = vld [vmem:[#allocation2 + $0x1720] sm:$0xff]
    %v888 = vld [vmem:[#allocation2 + $0x1728] sm:$0xff]
    %v889 = vld [vmem:[#allocation2 + $0x1730] sm:$0xff]
    %v890 = vld [vmem:[#allocation2 + $0x1738] sm:$0xff]
    %v891 = vld [vmem:[#allocation2 + $0x1740] sm:$0xff]
    %v892 = vld [vmem:[#allocation2 + $0x1748] sm:$0xff]
    %v893 = vld [vmem:[#allocation2 + $0x1750] sm:$0xff]
    %v894 = vld [vmem:[#allocation2 + $0x1758] sm:$0xff]
    %v895 = vld [vmem:[#allocation2 + $0x1760] sm:$0xff]
    %v896 = vld [vmem:[#allocation2 + $0x1768] sm:$0xff]
    %v897 = vld [vmem:[#allocation2 + $0x1770] sm:$0xff]
    %v898 = vld [vmem:[#allocation2 + $0x1778] sm:$0xff]
    %v899 = vld [vmem:[#allocation2 + $0x1780] sm:$0xff]
    %v900 = vld [vmem:[#allocation2 + $0x1788] sm:$0xff]
    %v901 = vld [vmem:[#allocation2 + $0x1790] sm:$0xff]
    %v902 = vld [vmem:[#allocation2 + $0x1798] sm:$0xff]
    %v903 = vld [vmem:[#allocation2 + $0x17a0] sm:$0xff]
    %v904 = vld [vmem:[#allocation2 + $0x17a8] sm:$0xff]
    %v905 = vld [vmem:[#allocation2 + $0x17b0] sm:$0xff]
    %v906 = vld [vmem:[#allocation2 + $0x17b8] sm:$0xff]
    %v907 = vld [vmem:[#allocation2 + $0x17c0] sm:$0xff]
    %v908 = vld [vmem:[#allocation2 + $0x17c8] sm:$0xff]
    %v909 = vld [vmem:[#allocation2 + $0x17d0] sm:$0xff]
    %v910 = vld [vmem:[#allocation2 + $0x17d8] sm:$0xff]
    %v911 = vld [vmem:[#allocation2 + $0x17e0] sm:$0xff]
    %v912 = vld [vmem:[#allocation2 + $0x17e8] sm:$0xff]
    %v913 = vld [vmem:[#allocation2 + $0x17f0] sm:$0xff]
    %v914 = vld [vmem:[#allocation2 + $0x17f8] sm:$0xff]
    %v1683 = vunpack.c.l.b16 %v147
    %v1684 = vunpack.c.h.b16 %v147
    %v1685 = vunpack.c.l.b16 %v148
    %v1686 = vunpack.c.h.b16 %v148
    %v1687 = vunpack.c.l.b16 %v149
    %v1688 = vunpack.c.h.b16 %v149
    %v1689 = vunpack.c.l.b16 %v150
    %v1690 = vunpack.c.h.b16 %v150
    %v1691 = vunpack.c.l.b16 %v151
    %v1692 = vunpack.c.h.b16 %v151
    %v1693 = vunpack.c.l.b16 %v152
    %v1694 = vunpack.c.h.b16 %v152
    %v1695 = vunpack.c.l.b16 %v153
    %v1696 = vunpack.c.h.b16 %v153
    %v1697 = vunpack.c.l.b16 %v154
    %v1698 = vunpack.c.h.b16 %v154
    %v1699 = vunpack.c.l.b16 %v155
    %v1700 = vunpack.c.h.b16 %v155
    %v1701 = vunpack.c.l.b16 %v156
    %v1702 = vunpack.c.h.b16 %v156
    %v1703 = vunpack.c.l.b16 %v157
    %v1704 = vunpack.c.h.b16 %v157
    %v1705 = vunpack.c.l.b16 %v158
    %v1706 = vunpack.c.h.b16 %v158
    %v1707 = vunpack.c.l.b16 %v159
    %v1708 = vunpack.c.h.b16 %v159
    %v1709 = vunpack.c.l.b16 %v160
    %v1710 = vunpack.c.h.b16 %v160
    %v1711 = vunpack.c.l.b16 %v161
    %v1712 = vunpack.c.h.b16 %v161
    %v1713 = vunpack.c.l.b16 %v162
    %v1714 = vunpack.c.h.b16 %v162
    %v1715 = vunpack.c.l.b16 %v163
    %v1716 = vunpack.c.h.b16 %v163
    %v1717 = vunpack.c.l.b16 %v164
    %v1718 = vunpack.c.h.b16 %v164
    %v1719 = vunpack.c.l.b16 %v165
    %v1720 = vunpack.c.h.b16 %v165
    %v1721 = vunpack.c.l.b16 %v166
    %v1722 = vunpack.c.h.b16 %v166
    %v1723 = vunpack.c.l.b16 %v167
    %v1724 = vunpack.c.h.b16 %v167
    %v1725 = vunpack.c.l.b16 %v168
    %v1726 = vunpack.c.h.b16 %v168
    %v1727 = vunpack.c.l.b16 %v169
    %v1728 = vunpack.c.h.b16 %v169
    %v1729 = vunpack.c.l.b16 %v170
    %v1730 = vunpack.c.h.b16 %v170
    %v1731 = vunpack.c.l.b16 %v171
    %v1732 = vunpack.c.h.b16 %v171
    %v1733 = vunpack.c.l.b16 %v172
    %v1734 = vunpack.c.h.b16 %v172
    %v1735 = vunpack.c.l.b16 %v173
    %v1736 = vunpack.c.h.b16 %v173
    %v1737 = vunpack.c.l.b16 %v174
    %v1738 = vunpack.c.h.b16 %v174
    %v1739 = vunpack.c.l.b16 %v175
    %v1740 = vunpack.c.h.b16 %v175
    %v1741 = vunpack.c.l.b16 %v176
    %v1742 = vunpack.c.h.b16 %v176
    %v1743 = vunpack.c.l.b16 %v177
    %v1744 = vunpack.c.h.b16 %v177
    %v1745 = vunpack.c.l.b16 %v178
    %v1746 = vunpack.c.h.b16 %v178
    %v1747 = vunpack.c.l.b16 %v179
    %v1748 = vunpack.c.h.b16 %v179
    %v1749 = vunpack.c.l.b16 %v180
    %v1750 = vunpack.c.h.b16 %v180
    %v1751 = vunpack.c.l.b16 %v181
    %v1752 = vunpack.c.h.b16 %v181
    %v1753 = vunpack.c.l.b16 %v182
    %v1754 = vunpack.c.h.b16 %v182
    %v1755 = vunpack.c.l.b16 %v183
    %v1756 = vunpack.c.h.b16 %v183
    %v1757 = vunpack.c.l.b16 %v184
    %v1758 = vunpack.c.h.b16 %v184
    %v1759 = vunpack.c.l.b16 %v185
    %v1760 = vunpack.c.h.b16 %v185
    %v1761 = vunpack.c.l.b16 %v186
    %v1762 = vunpack.c.h.b16 %v186
    %v1763 = vunpack.c.l.b16 %v187
    %v1764 = vunpack.c.h.b16 %v187
    %v1765 = vunpack.c.l.b16 %v188
    %v1766 = vunpack.c.h.b16 %v188
    %v1767 = vunpack.c.l.b16 %v189
    %v1768 = vunpack.c.h.b16 %v189
    %v1769 = vunpack.c.l.b16 %v190
    %v1770 = vunpack.c.h.b16 %v190
    %v1771 = vunpack.c.l.b16 %v191
    %v1772 = vunpack.c.h.b16 %v191
    %v1773 = vunpack.c.l.b16 %v192
    %v1774 = vunpack.c.h.b16 %v192
    %v1775 = vunpack.c.l.b16 %v193
    %v1776 = vunpack.c.h.b16 %v193
    %v1777 = vunpack.c.l.b16 %v194
    %v1778 = vunpack.c.h.b16 %v194
    %v1779 = vunpack.c.l.b16 %v195
    %v1780 = vunpack.c.h.b16 %v195
    %v1781 = vunpack.c.l.b16 %v196
    %v1782 = vunpack.c.h.b16 %v196
    %v1783 = vunpack.c.l.b16 %v197
    %v1784 = vunpack.c.h.b16 %v197
    %v1785 = vunpack.c.l.b16 %v198
    %v1786 = vunpack.c.h.b16 %v198
    %v1787 = vunpack.c.l.b16 %v199
    %v1788 = vunpack.c.h.b16 %v199
    %v1789 = vunpack.c.l.b16 %v200
    %v1790 = vunpack.c.h.b16 %v200
    %v1791 = vunpack.c.l.b16 %v201
    %v1792 = vunpack.c.h.b16 %v201
    %v1793 = vunpack.c.l.b16 %v202
    %v1794 = vunpack.c.h.b16 %v202
    %v1795 = vunpack.c.l.b16 %v203
    %v1796 = vunpack.c.h.b16 %v203
    %v1797 = vunpack.c.l.b16 %v204
    %v1798 = vunpack.c.h.b16 %v204
    %v1799 = vunpack.c.l.b16 %v205
    %v1800 = vunpack.c.h.b16 %v205
    %v1801 = vunpack.c.l.b16 %v206
    %v1802 = vunpack.c.h.b16 %v206
    %v1803 = vunpack.c.l.b16 %v207
    %v1804 = vunpack.c.h.b16 %v207
    %v1805 = vunpack.c.l.b16 %v208
    %v1806 = vunpack.c.h.b16 %v208
    %v1807 = vunpack.c.l.b16 %v209
    %v1808 = vunpack.c.h.b16 %v209
    %v1809 = vunpack.c.l.b16 %v210
    %v1810 = vunpack.c.h.b16 %v210
    %v1811 = vunpack.c.l.b16 %v211
    %v1812 = vunpack.c.h.b16 %v211
    %v1813 = vunpack.c.l.b16 %v212
    %v1814 = vunpack.c.h.b16 %v212
    %v1815 = vunpack.c.l.b16 %v213
    %v1816 = vunpack.c.h.b16 %v213
    %v1817 = vunpack.c.l.b16 %v214
    %v1818 = vunpack.c.h.b16 %v214
    %v1819 = vunpack.c.l.b16 %v215
    %v1820 = vunpack.c.h.b16 %v215
    %v1821 = vunpack.c.l.b16 %v216
    %v1822 = vunpack.c.h.b16 %v216
    %v1823 = vunpack.c.l.b16 %v217
    %v1824 = vunpack.c.h.b16 %v217
    %v1825 = vunpack.c.l.b16 %v218
    %v1826 = vunpack.c.h.b16 %v218
    %v1827 = vunpack.c.l.b16 %v219
    %v1828 = vunpack.c.h.b16 %v219
    %v1829 = vunpack.c.l.b16 %v220
    %v1830 = vunpack.c.h.b16 %v220
    %v1831 = vunpack.c.l.b16 %v221
    %v1832 = vunpack.c.h.b16 %v221
    %v1833 = vunpack.c.l.b16 %v222
    %v1834 = vunpack.c.h.b16 %v222
    %v1835 = vunpack.c.l.b16 %v223
    %v1836 = vunpack.c.h.b16 %v223
    %v1837 = vunpack.c.l.b16 %v224
    %v1838 = vunpack.c.h.b16 %v224
    %v1839 = vunpack.c.l.b16 %v225
    %v1840 = vunpack.c.h.b16 %v225
    %v1841 = vunpack.c.l.b16 %v226
    %v1842 = vunpack.c.h.b16 %v226
    %v1843 = vunpack.c.l.b16 %v227
    %v1844 = vunpack.c.h.b16 %v227
    %v1845 = vunpack.c.l.b16 %v228
    %v1846 = vunpack.c.h.b16 %v228
    %v1847 = vunpack.c.l.b16 %v229
    %v1848 = vunpack.c.h.b16 %v229
    %v1849 = vunpack.c.l.b16 %v230
    %v1850 = vunpack.c.h.b16 %v230
    %v1851 = vunpack.c.l.b16 %v231
    %v1852 = vunpack.c.h.b16 %v231
    %v1853 = vunpack.c.l.b16 %v232
    %v1854 = vunpack.c.h.b16 %v232
    %v1855 = vunpack.c.l.b16 %v233
    %v1856 = vunpack.c.h.b16 %v233
    %v1857 = vunpack.c.l.b16 %v234
    %v1858 = vunpack.c.h.b16 %v234
    %v1859 = vunpack.c.l.b16 %v235
    %v1860 = vunpack.c.h.b16 %v235
    %v1861 = vunpack.c.l.b16 %v236
    %v1862 = vunpack.c.h.b16 %v236
    %v1863 = vunpack.c.l.b16 %v237
    %v1864 = vunpack.c.h.b16 %v237
    %v1865 = vunpack.c.l.b16 %v238
    %v1866 = vunpack.c.h.b16 %v238
    %v1867 = vunpack.c.l.b16 %v239
    %v1868 = vunpack.c.h.b16 %v239
    %v1869 = vunpack.c.l.b16 %v240
    %v1870 = vunpack.c.h.b16 %v240
    %v1871 = vunpack.c.l.b16 %v241
    %v1872 = vunpack.c.h.b16 %v241
    %v1873 = vunpack.c.l.b16 %v242
    %v1874 = vunpack.c.h.b16 %v242
    %v1875 = vunpack.c.l.b16 %v243
    %v1876 = vunpack.c.h.b16 %v243
    %v1877 = vunpack.c.l.b16 %v244
    %v1878 = vunpack.c.h.b16 %v244
    %v1879 = vunpack.c.l.b16 %v245
    %v1880 = vunpack.c.h.b16 %v245
    %v1881 = vunpack.c.l.b16 %v246
    %v1882 = vunpack.c.h.b16 %v246
    %v1883 = vunpack.c.l.b16 %v247
    %v1884 = vunpack.c.h.b16 %v247
    %v1885 = vunpack.c.l.b16 %v248
    %v1886 = vunpack.c.h.b16 %v248
    %v1887 = vunpack.c.l.b16 %v249
    %v1888 = vunpack.c.h.b16 %v249
    %v1889 = vunpack.c.l.b16 %v250
    %v1890 = vunpack.c.h.b16 %v250
    %v1891 = vunpack.c.l.b16 %v251
    %v1892 = vunpack.c.h.b16 %v251
    %v1893 = vunpack.c.l.b16 %v252
    %v1894 = vunpack.c.h.b16 %v252
    %v1895 = vunpack.c.l.b16 %v253
    %v1896 = vunpack.c.h.b16 %v253
    %v1897 = vunpack.c.l.b16 %v254
    %v1898 = vunpack.c.h.b16 %v254
    %v1899 = vunpack.c.l.b16 %v255
    %v1900 = vunpack.c.h.b16 %v255
    %v1901 = vunpack.c.l.b16 %v256
    %v1902 = vunpack.c.h.b16 %v256
    %v1903 = vunpack.c.l.b16 %v257
    %v1904 = vunpack.c.h.b16 %v257
    %v1905 = vunpack.c.l.b16 %v258
    %v1906 = vunpack.c.h.b16 %v258
    %v1907 = vunpack.c.l.b16 %v259
    %v1908 = vunpack.c.h.b16 %v259
    %v1909 = vunpack.c.l.b16 %v260
    %v1910 = vunpack.c.h.b16 %v260
    %v1911 = vunpack.c.l.b16 %v261
    %v1912 = vunpack.c.h.b16 %v261
    %v1913 = vunpack.c.l.b16 %v262
    %v1914 = vunpack.c.h.b16 %v262
    %v1915 = vunpack.c.l.b16 %v263
    %v1916 = vunpack.c.h.b16 %v263
    %v1917 = vunpack.c.l.b16 %v264
    %v1918 = vunpack.c.h.b16 %v264
    %v1919 = vunpack.c.l.b16 %v265
    %v1920 = vunpack.c.h.b16 %v265
    %v1921 = vunpack.c.l.b16 %v266
    %v1922 = vunpack.c.h.b16 %v266
    %v1923 = vunpack.c.l.b16 %v267
    %v1924 = vunpack.c.h.b16 %v267
    %v1925 = vunpack.c.l.b16 %v268
    %v1926 = vunpack.c.h.b16 %v268
    %v1927 = vunpack.c.l.b16 %v269
    %v1928 = vunpack.c.h.b16 %v269
    %v1929 = vunpack.c.l.b16 %v270
    %v1930 = vunpack.c.h.b16 %v270
    %v1931 = vunpack.c.l.b16 %v271
    %v1932 = vunpack.c.h.b16 %v271
    %v1933 = vunpack.c.l.b16 %v272
    %v1934 = vunpack.c.h.b16 %v272
    %v1935 = vunpack.c.l.b16 %v273
    %v1936 = vunpack.c.h.b16 %v273
    %v1937 = vunpack.c.l.b16 %v274
    %v1938 = vunpack.c.h.b16 %v274
    %v1939 = vunpack.c.l.b16 %v275
    %v1940 = vunpack.c.h.b16 %v275
    %v1941 = vunpack.c.l.b16 %v276
    %v1942 = vunpack.c.h.b16 %v276
    %v1943 = vunpack.c.l.b16 %v277
    %v1944 = vunpack.c.h.b16 %v277
    %v1945 = vunpack.c.l.b16 %v278
    %v1946 = vunpack.c.h.b16 %v278
    %v1947 = vunpack.c.l.b16 %v279
    %v1948 = vunpack.c.h.b16 %v279
    %v1949 = vunpack.c.l.b16 %v280
    %v1950 = vunpack.c.h.b16 %v280
    %v1951 = vunpack.c.l.b16 %v281
    %v1952 = vunpack.c.h.b16 %v281
    %v1953 = vunpack.c.l.b16 %v282
    %v1954 = vunpack.c.h.b16 %v282
    %v1955 = vunpack.c.l.b16 %v283
    %v1956 = vunpack.c.h.b16 %v283
    %v1957 = vunpack.c.l.b16 %v284
    %v1958 = vunpack.c.h.b16 %v284
    %v1959 = vunpack.c.l.b16 %v285
    %v1960 = vunpack.c.h.b16 %v285
    %v1961 = vunpack.c.l.b16 %v286
    %v1962 = vunpack.c.h.b16 %v286
    %v1963 = vunpack.c.l.b16 %v287
    %v1964 = vunpack.c.h.b16 %v287
    %v1965 = vunpack.c.l.b16 %v288
    %v1966 = vunpack.c.h.b16 %v288
    %v1967 = vunpack.c.l.b16 %v289
    %v1968 = vunpack.c.h.b16 %v289
    %v1969 = vunpack.c.l.b16 %v290
    %v1970 = vunpack.c.h.b16 %v290
    %v1971 = vunpack.c.l.b16 %v291
    %v1972 = vunpack.c.h.b16 %v291
    %v1973 = vunpack.c.l.b16 %v292
    %v1974 = vunpack.c.h.b16 %v292
    %v1975 = vunpack.c.l.b16 %v293
    %v1976 = vunpack.c.h.b16 %v293
    %v1977 = vunpack.c.l.b16 %v294
    %v1978 = vunpack.c.h.b16 %v294
    %v1979 = vunpack.c.l.b16 %v295
    %v1980 = vunpack.c.h.b16 %v295
    %v1981 = vunpack.c.l.b16 %v296
    %v1982 = vunpack.c.h.b16 %v296
    %v1983 = vunpack.c.l.b16 %v297
    %v1984 = vunpack.c.h.b16 %v297
    %v1985 = vunpack.c.l.b16 %v298
    %v1986 = vunpack.c.h.b16 %v298
    %v1987 = vunpack.c.l.b16 %v299
    %v1988 = vunpack.c.h.b16 %v299
    %v1989 = vunpack.c.l.b16 %v300
    %v1990 = vunpack.c.h.b16 %v300
    %v1991 = vunpack.c.l.b16 %v301
    %v1992 = vunpack.c.h.b16 %v301
    %v1993 = vunpack.c.l.b16 %v302
    %v1994 = vunpack.c.h.b16 %v302
    %v1995 = vunpack.c.l.b16 %v303
    %v1996 = vunpack.c.h.b16 %v303
    %v1997 = vunpack.c.l.b16 %v304
    %v1998 = vunpack.c.h.b16 %v304
    %v1999 = vunpack.c.l.b16 %v305
    %v2000 = vunpack.c.h.b16 %v305
    %v2001 = vunpack.c.l.b16 %v306
    %v2002 = vunpack.c.h.b16 %v306
    %v2003 = vunpack.c.l.b16 %v307
    %v2004 = vunpack.c.h.b16 %v307
    %v2005 = vunpack.c.l.b16 %v308
    %v2006 = vunpack.c.h.b16 %v308
    %v2007 = vunpack.c.l.b16 %v309
    %v2008 = vunpack.c.h.b16 %v309
    %v2009 = vunpack.c.l.b16 %v310
    %v2010 = vunpack.c.h.b16 %v310
    %v2011 = vunpack.c.l.b16 %v311
    %v2012 = vunpack.c.h.b16 %v311
    %v2013 = vunpack.c.l.b16 %v312
    %v2014 = vunpack.c.h.b16 %v312
    %v2015 = vunpack.c.l.b16 %v313
    %v2016 = vunpack.c.h.b16 %v313
    %v2017 = vunpack.c.l.b16 %v314
    %v2018 = vunpack.c.h.b16 %v314
    %v2019 = vunpack.c.l.b16 %v315
    %v2020 = vunpack.c.h.b16 %v315
    %v2021 = vunpack.c.l.b16 %v316
    %v2022 = vunpack.c.h.b16 %v316
    %v2023 = vunpack.c.l.b16 %v317
    %v2024 = vunpack.c.h.b16 %v317
    %v2025 = vunpack.c.l.b16 %v318
    %v2026 = vunpack.c.h.b16 %v318
    %v2027 = vunpack.c.l.b16 %v319
    %v2028 = vunpack.c.h.b16 %v319
    %v2029 = vunpack.c.l.b16 %v320
    %v2030 = vunpack.c.h.b16 %v320
    %v2031 = vunpack.c.l.b16 %v321
    %v2032 = vunpack.c.h.b16 %v321
    %v2033 = vunpack.c.l.b16 %v322
    %v2034 = vunpack.c.h.b16 %v322
    %v2035 = vunpack.c.l.b16 %v323
    %v2036 = vunpack.c.h.b16 %v323
    %v2037 = vunpack.c.l.b16 %v324
    %v2038 = vunpack.c.h.b16 %v324
    %v2039 = vunpack.c.l.b16 %v325
    %v2040 = vunpack.c.h.b16 %v325
    %v2041 = vunpack.c.l.b16 %v326
    %v2042 = vunpack.c.h.b16 %v326
    %v2043 = vunpack.c.l.b16 %v327
    %v2044 = vunpack.c.h.b16 %v327
    %v2045 = vunpack.c.l.b16 %v328
    %v2046 = vunpack.c.h.b16 %v328
    %v2047 = vunpack.c.l.b16 %v329
    %v2048 = vunpack.c.h.b16 %v329
    %v2049 = vunpack.c.l.b16 %v330
    %v2050 = vunpack.c.h.b16 %v330
    %v2051 = vunpack.c.l.b16 %v331
    %v2052 = vunpack.c.h.b16 %v331
    %v2053 = vunpack.c.l.b16 %v332
    %v2054 = vunpack.c.h.b16 %v332
    %v2055 = vunpack.c.l.b16 %v333
    %v2056 = vunpack.c.h.b16 %v333
    %v2057 = vunpack.c.l.b16 %v334
    %v2058 = vunpack.c.h.b16 %v334
    %v2059 = vunpack.c.l.b16 %v335
    %v2060 = vunpack.c.h.b16 %v335
    %v2061 = vunpack.c.l.b16 %v336
    %v2062 = vunpack.c.h.b16 %v336
    %v2063 = vunpack.c.l.b16 %v337
    %v2064 = vunpack.c.h.b16 %v337
    %v2065 = vunpack.c.l.b16 %v338
    %v2066 = vunpack.c.h.b16 %v338
    %v2067 = vunpack.c.l.b16 %v339
    %v2068 = vunpack.c.h.b16 %v339
    %v2069 = vunpack.c.l.b16 %v340
    %v2070 = vunpack.c.h.b16 %v340
    %v2071 = vunpack.c.l.b16 %v341
    %v2072 = vunpack.c.h.b16 %v341
    %v2073 = vunpack.c.l.b16 %v342
    %v2074 = vunpack.c.h.b16 %v342
    %v2075 = vunpack.c.l.b16 %v343
    %v2076 = vunpack.c.h.b16 %v343
    %v2077 = vunpack.c.l.b16 %v344
    %v2078 = vunpack.c.h.b16 %v344
    %v2079 = vunpack.c.l.b16 %v345
    %v2080 = vunpack.c.h.b16 %v345
    %v2081 = vunpack.c.l.b16 %v346
    %v2082 = vunpack.c.h.b16 %v346
    %v2083 = vunpack.c.l.b16 %v347
    %v2084 = vunpack.c.h.b16 %v347
    %v2085 = vunpack.c.l.b16 %v348
    %v2086 = vunpack.c.h.b16 %v348
    %v2087 = vunpack.c.l.b16 %v349
    %v2088 = vunpack.c.h.b16 %v349
    %v2089 = vunpack.c.l.b16 %v350
    %v2090 = vunpack.c.h.b16 %v350
    %v2091 = vunpack.c.l.b16 %v351
    %v2092 = vunpack.c.h.b16 %v351
    %v2093 = vunpack.c.l.b16 %v352
    %v2094 = vunpack.c.h.b16 %v352
    %v2095 = vunpack.c.l.b16 %v353
    %v2096 = vunpack.c.h.b16 %v353
    %v2097 = vunpack.c.l.b16 %v354
    %v2098 = vunpack.c.h.b16 %v354
    %v2099 = vunpack.c.l.b16 %v355
    %v2100 = vunpack.c.h.b16 %v355
    %v2101 = vunpack.c.l.b16 %v356
    %v2102 = vunpack.c.h.b16 %v356
    %v2103 = vunpack.c.l.b16 %v357
    %v2104 = vunpack.c.h.b16 %v357
    %v2105 = vunpack.c.l.b16 %v358
    %v2106 = vunpack.c.h.b16 %v358
    %v2107 = vunpack.c.l.b16 %v359
    %v2108 = vunpack.c.h.b16 %v359
    %v2109 = vunpack.c.l.b16 %v360
    %v2110 = vunpack.c.h.b16 %v360
    %v2111 = vunpack.c.l.b16 %v361
    %v2112 = vunpack.c.h.b16 %v361
    %v2113 = vunpack.c.l.b16 %v362
    %v2114 = vunpack.c.h.b16 %v362
    %v2115 = vunpack.c.l.b16 %v363
    %v2116 = vunpack.c.h.b16 %v363
    %v2117 = vunpack.c.l.b16 %v364
    %v2118 = vunpack.c.h.b16 %v364
    %v2119 = vunpack.c.l.b16 %v365
    %v2120 = vunpack.c.h.b16 %v365
    %v2121 = vunpack.c.l.b16 %v366
    %v2122 = vunpack.c.h.b16 %v366
    %v2123 = vunpack.c.l.b16 %v367
    %v2124 = vunpack.c.h.b16 %v367
    %v2125 = vunpack.c.l.b16 %v368
    %v2126 = vunpack.c.h.b16 %v368
    %v2127 = vunpack.c.l.b16 %v369
    %v2128 = vunpack.c.h.b16 %v369
    %v2129 = vunpack.c.l.b16 %v370
    %v2130 = vunpack.c.h.b16 %v370
    %v2131 = vunpack.c.l.b16 %v371
    %v2132 = vunpack.c.h.b16 %v371
    %v2133 = vunpack.c.l.b16 %v372
    %v2134 = vunpack.c.h.b16 %v372
    %v2135 = vunpack.c.l.b16 %v373
    %v2136 = vunpack.c.h.b16 %v373
    %v2137 = vunpack.c.l.b16 %v374
    %v2138 = vunpack.c.h.b16 %v374
    %v2139 = vunpack.c.l.b16 %v375
    %v2140 = vunpack.c.h.b16 %v375
    %v2141 = vunpack.c.l.b16 %v376
    %v2142 = vunpack.c.h.b16 %v376
    %v2143 = vunpack.c.l.b16 %v377
    %v2144 = vunpack.c.h.b16 %v377
    %v2145 = vunpack.c.l.b16 %v378
    %v2146 = vunpack.c.h.b16 %v378
    %v2147 = vunpack.c.l.b16 %v379
    %v2148 = vunpack.c.h.b16 %v379
    %v2149 = vunpack.c.l.b16 %v380
    %v2150 = vunpack.c.h.b16 %v380
    %v2151 = vunpack.c.l.b16 %v381
    %v2152 = vunpack.c.h.b16 %v381
    %v2153 = vunpack.c.l.b16 %v382
    %v2154 = vunpack.c.h.b16 %v382
    %v2155 = vunpack.c.l.b16 %v383
    %v2156 = vunpack.c.h.b16 %v383
    %v2157 = vunpack.c.l.b16 %v384
    %v2158 = vunpack.c.h.b16 %v384
    %v2159 = vunpack.c.l.b16 %v385
    %v2160 = vunpack.c.h.b16 %v385
    %v2161 = vunpack.c.l.b16 %v386
    %v2162 = vunpack.c.h.b16 %v386
    %v2163 = vunpack.c.l.b16 %v387
    %v2164 = vunpack.c.h.b16 %v387
    %v2165 = vunpack.c.l.b16 %v388
    %v2166 = vunpack.c.h.b16 %v388
    %v2167 = vunpack.c.l.b16 %v389
    %v2168 = vunpack.c.h.b16 %v389
    %v2169 = vunpack.c.l.b16 %v390
    %v2170 = vunpack.c.h.b16 %v390
    %v2171 = vunpack.c.l.b16 %v391
    %v2172 = vunpack.c.h.b16 %v391
    %v2173 = vunpack.c.l.b16 %v392
    %v2174 = vunpack.c.h.b16 %v392
    %v2175 = vunpack.c.l.b16 %v393
    %v2176 = vunpack.c.h.b16 %v393
    %v2177 = vunpack.c.l.b16 %v394
    %v2178 = vunpack.c.h.b16 %v394
    %v2179 = vunpack.c.l.b16 %v395
    %v2180 = vunpack.c.h.b16 %v395
    %v2181 = vunpack.c.l.b16 %v396
    %v2182 = vunpack.c.h.b16 %v396
    %v2183 = vunpack.c.l.b16 %v397
    %v2184 = vunpack.c.h.b16 %v397
    %v2185 = vunpack.c.l.b16 %v398
    %v2186 = vunpack.c.h.b16 %v398
    %v2187 = vunpack.c.l.b16 %v399
    %v2188 = vunpack.c.h.b16 %v399
    %v2189 = vunpack.c.l.b16 %v400
    %v2190 = vunpack.c.h.b16 %v400
    %v2191 = vunpack.c.l.b16 %v401
    %v2192 = vunpack.c.h.b16 %v401
    %v2193 = vunpack.c.l.b16 %v402
    %v2194 = vunpack.c.h.b16 %v402
    %v2195 = vunpack.c.l.b16 %v403
    %v2196 = vunpack.c.h.b16 %v403
    %v2197 = vunpack.c.l.b16 %v404
    %v2198 = vunpack.c.h.b16 %v404
    %v2199 = vunpack.c.l.b16 %v405
    %v2200 = vunpack.c.h.b16 %v405
    %v2201 = vunpack.c.l.b16 %v406
    %v2202 = vunpack.c.h.b16 %v406
    %v2203 = vunpack.c.l.b16 %v407
    %v2204 = vunpack.c.h.b16 %v407
    %v2205 = vunpack.c.l.b16 %v408
    %v2206 = vunpack.c.h.b16 %v408
    %v2207 = vunpack.c.l.b16 %v409
    %v2208 = vunpack.c.h.b16 %v409
    %v2209 = vunpack.c.l.b16 %v410
    %v2210 = vunpack.c.h.b16 %v410
    %v2211 = vunpack.c.l.b16 %v411
    %v2212 = vunpack.c.h.b16 %v411
    %v2213 = vunpack.c.l.b16 %v412
    %v2214 = vunpack.c.h.b16 %v412
    %v2215 = vunpack.c.l.b16 %v413
    %v2216 = vunpack.c.h.b16 %v413
    %v2217 = vunpack.c.l.b16 %v414
    %v2218 = vunpack.c.h.b16 %v414
    %v2219 = vunpack.c.l.b16 %v415
    %v2220 = vunpack.c.h.b16 %v415
    %v2221 = vunpack.c.l.b16 %v416
    %v2222 = vunpack.c.h.b16 %v416
    %v2223 = vunpack.c.l.b16 %v417
    %v2224 = vunpack.c.h.b16 %v417
    %v2225 = vunpack.c.l.b16 %v418
    %v2226 = vunpack.c.h.b16 %v418
    %v2227 = vunpack.c.l.b16 %v419
    %v2228 = vunpack.c.h.b16 %v419
    %v2229 = vunpack.c.l.b16 %v420
    %v2230 = vunpack.c.h.b16 %v420
    %v2231 = vunpack.c.l.b16 %v421
    %v2232 = vunpack.c.h.b16 %v421
    %v2233 = vunpack.c.l.b16 %v422
    %v2234 = vunpack.c.h.b16 %v422
    %v2235 = vunpack.c.l.b16 %v423
    %v2236 = vunpack.c.h.b16 %v423
    %v2237 = vunpack.c.l.b16 %v424
    %v2238 = vunpack.c.h.b16 %v424
    %v2239 = vunpack.c.l.b16 %v425
    %v2240 = vunpack.c.h.b16 %v425
    %v2241 = vunpack.c.l.b16 %v426
    %v2242 = vunpack.c.h.b16 %v426
    %v2243 = vunpack.c.l.b16 %v427
    %v2244 = vunpack.c.h.b16 %v427
    %v2245 = vunpack.c.l.b16 %v428
    %v2246 = vunpack.c.h.b16 %v428
    %v2247 = vunpack.c.l.b16 %v429
    %v2248 = vunpack.c.h.b16 %v429
    %v2249 = vunpack.c.l.b16 %v430
    %v2250 = vunpack.c.h.b16 %v430
    %v2251 = vunpack.c.l.b16 %v431
    %v2252 = vunpack.c.h.b16 %v431
    %v2253 = vunpack.c.l.b16 %v432
    %v2254 = vunpack.c.h.b16 %v432
    %v2255 = vunpack.c.l.b16 %v433
    %v2256 = vunpack.c.h.b16 %v433
    %v2257 = vunpack.c.l.b16 %v434
    %v2258 = vunpack.c.h.b16 %v434
    %v2259 = vunpack.c.l.b16 %v435
    %v2260 = vunpack.c.h.b16 %v435
    %v2261 = vunpack.c.l.b16 %v436
    %v2262 = vunpack.c.h.b16 %v436
    %v2263 = vunpack.c.l.b16 %v437
    %v2264 = vunpack.c.h.b16 %v437
    %v2265 = vunpack.c.l.b16 %v438
    %v2266 = vunpack.c.h.b16 %v438
    %v2267 = vunpack.c.l.b16 %v439
    %v2268 = vunpack.c.h.b16 %v439
    %v2269 = vunpack.c.l.b16 %v440
    %v2270 = vunpack.c.h.b16 %v440
    %v2271 = vunpack.c.l.b16 %v441
    %v2272 = vunpack.c.h.b16 %v441
    %v2273 = vunpack.c.l.b16 %v442
    %v2274 = vunpack.c.h.b16 %v442
    %v2275 = vunpack.c.l.b16 %v443
    %v2276 = vunpack.c.h.b16 %v443
    %v2277 = vunpack.c.l.b16 %v444
    %v2278 = vunpack.c.h.b16 %v444
    %v2279 = vunpack.c.l.b16 %v445
    %v2280 = vunpack.c.h.b16 %v445
    %v2281 = vunpack.c.l.b16 %v446
    %v2282 = vunpack.c.h.b16 %v446
    %v2283 = vunpack.c.l.b16 %v447
    %v2284 = vunpack.c.h.b16 %v447
    %v2285 = vunpack.c.l.b16 %v448
    %v2286 = vunpack.c.h.b16 %v448
    %v2287 = vunpack.c.l.b16 %v449
    %v2288 = vunpack.c.h.b16 %v449
    %v2289 = vunpack.c.l.b16 %v450
    %v2290 = vunpack.c.h.b16 %v450
    %v2291 = vunpack.c.l.b16 %v451
    %v2292 = vunpack.c.h.b16 %v451
    %v2293 = vunpack.c.l.b16 %v452
    %v2294 = vunpack.c.h.b16 %v452
    %v2295 = vunpack.c.l.b16 %v453
    %v2296 = vunpack.c.h.b16 %v453
    %v2297 = vunpack.c.l.b16 %v454
    %v2298 = vunpack.c.h.b16 %v454
    %v2299 = vunpack.c.l.b16 %v455
    %v2300 = vunpack.c.h.b16 %v455
    %v2301 = vunpack.c.l.b16 %v456
    %v2302 = vunpack.c.h.b16 %v456
    %v2303 = vunpack.c.l.b16 %v457
    %v2304 = vunpack.c.h.b16 %v457
    %v2305 = vunpack.c.l.b16 %v458
    %v2306 = vunpack.c.h.b16 %v458
    %v2307 = vunpack.c.l.b16 %v459
    %v2308 = vunpack.c.h.b16 %v459
    %v2309 = vunpack.c.l.b16 %v460
    %v2310 = vunpack.c.h.b16 %v460
    %v2311 = vunpack.c.l.b16 %v461
    %v2312 = vunpack.c.h.b16 %v461
    %v2313 = vunpack.c.l.b16 %v462
    %v2314 = vunpack.c.h.b16 %v462
    %v2315 = vunpack.c.l.b16 %v463
    %v2316 = vunpack.c.h.b16 %v463
    %v2317 = vunpack.c.l.b16 %v464
    %v2318 = vunpack.c.h.b16 %v464
    %v2319 = vunpack.c.l.b16 %v465
    %v2320 = vunpack.c.h.b16 %v465
    %v2321 = vunpack.c.l.b16 %v466
    %v2322 = vunpack.c.h.b16 %v466
    %v2323 = vunpack.c.l.b16 %v467
    %v2324 = vunpack.c.h.b16 %v467
    %v2325 = vunpack.c.l.b16 %v468
    %v2326 = vunpack.c.h.b16 %v468
    %v2327 = vunpack.c.l.b16 %v469
    %v2328 = vunpack.c.h.b16 %v469
    %v2329 = vunpack.c.l.b16 %v470
    %v2330 = vunpack.c.h.b16 %v470
    %v2331 = vunpack.c.l.b16 %v471
    %v2332 = vunpack.c.h.b16 %v471
    %v2333 = vunpack.c.l.b16 %v472
    %v2334 = vunpack.c.h.b16 %v472
    %v2335 = vunpack.c.l.b16 %v473
    %v2336 = vunpack.c.h.b16 %v473
    %v2337 = vunpack.c.l.b16 %v474
    %v2338 = vunpack.c.h.b16 %v474
    %v2339 = vunpack.c.l.b16 %v475
    %v2340 = vunpack.c.h.b16 %v475
    %v2341 = vunpack.c.l.b16 %v476
    %v2342 = vunpack.c.h.b16 %v476
    %v2343 = vunpack.c.l.b16 %v477
    %v2344 = vunpack.c.h.b16 %v477
    %v2345 = vunpack.c.l.b16 %v478
    %v2346 = vunpack.c.h.b16 %v478
    %v2347 = vunpack.c.l.b16 %v479
    %v2348 = vunpack.c.h.b16 %v479
    %v2349 = vunpack.c.l.b16 %v480
    %v2350 = vunpack.c.h.b16 %v480
    %v2351 = vunpack.c.l.b16 %v481
    %v2352 = vunpack.c.h.b16 %v481
    %v2353 = vunpack.c.l.b16 %v482
    %v2354 = vunpack.c.h.b16 %v482
    %v2355 = vunpack.c.l.b16 %v483
    %v2356 = vunpack.c.h.b16 %v483
    %v2357 = vunpack.c.l.b16 %v484
    %v2358 = vunpack.c.h.b16 %v484
    %v2359 = vunpack.c.l.b16 %v485
    %v2360 = vunpack.c.h.b16 %v485
    %v2361 = vunpack.c.l.b16 %v486
    %v2362 = vunpack.c.h.b16 %v486
    %v2363 = vunpack.c.l.b16 %v487
    %v2364 = vunpack.c.h.b16 %v487
    %v2365 = vunpack.c.l.b16 %v488
    %v2366 = vunpack.c.h.b16 %v488
    %v2367 = vunpack.c.l.b16 %v489
    %v2368 = vunpack.c.h.b16 %v489
    %v2369 = vunpack.c.l.b16 %v490
    %v2370 = vunpack.c.h.b16 %v490
    %v2371 = vunpack.c.l.b16 %v491
    %v2372 = vunpack.c.h.b16 %v491
    %v2373 = vunpack.c.l.b16 %v492
    %v2374 = vunpack.c.h.b16 %v492
    %v2375 = vunpack.c.l.b16 %v493
    %v2376 = vunpack.c.h.b16 %v493
    %v2377 = vunpack.c.l.b16 %v494
    %v2378 = vunpack.c.h.b16 %v494
    %v2379 = vunpack.c.l.b16 %v495
    %v2380 = vunpack.c.h.b16 %v495
    %v2381 = vunpack.c.l.b16 %v496
    %v2382 = vunpack.c.h.b16 %v496
    %v2383 = vunpack.c.l.b16 %v497
    %v2384 = vunpack.c.h.b16 %v497
    %v2385 = vunpack.c.l.b16 %v498
    %v2386 = vunpack.c.h.b16 %v498
    %v2387 = vunpack.c.l.b16 %v499
    %v2388 = vunpack.c.h.b16 %v499
    %v2389 = vunpack.c.l.b16 %v500
    %v2390 = vunpack.c.h.b16 %v500
    %v2391 = vunpack.c.l.b16 %v501
    %v2392 = vunpack.c.h.b16 %v501
    %v2393 = vunpack.c.l.b16 %v502
    %v2394 = vunpack.c.h.b16 %v502
    %v2395 = vunpack.c.l.b16 %v503
    %v2396 = vunpack.c.h.b16 %v503
    %v2397 = vunpack.c.l.b16 %v504
    %v2398 = vunpack.c.h.b16 %v504
    %v2399 = vunpack.c.l.b16 %v505
    %v2400 = vunpack.c.h.b16 %v505
    %v2401 = vunpack.c.l.b16 %v506
    %v2402 = vunpack.c.h.b16 %v506
    %v2403 = vunpack.c.l.b16 %v507
    %v2404 = vunpack.c.h.b16 %v507
    %v2405 = vunpack.c.l.b16 %v508
    %v2406 = vunpack.c.h.b16 %v508
    %v2407 = vunpack.c.l.b16 %v509
    %v2408 = vunpack.c.h.b16 %v509
    %v2409 = vunpack.c.l.b16 %v510
    %v2410 = vunpack.c.h.b16 %v510
    %v2411 = vunpack.c.l.b16 %v511
    %v2412 = vunpack.c.h.b16 %v511
    %v2413 = vunpack.c.l.b16 %v512
    %v2414 = vunpack.c.h.b16 %v512
    %v2415 = vunpack.c.l.b16 %v513
    %v2416 = vunpack.c.h.b16 %v513
    %v2417 = vunpack.c.l.b16 %v514
    %v2418 = vunpack.c.h.b16 %v514
    %v2419 = vunpack.c.l.b16 %v515
    %v2420 = vunpack.c.h.b16 %v515
    %v2421 = vunpack.c.l.b16 %v516
    %v2422 = vunpack.c.h.b16 %v516
    %v2423 = vunpack.c.l.b16 %v517
    %v2424 = vunpack.c.h.b16 %v517
    %v2425 = vunpack.c.l.b16 %v518
    %v2426 = vunpack.c.h.b16 %v518
    %v2427 = vunpack.c.l.b16 %v519
    %v2428 = vunpack.c.h.b16 %v519
    %v2429 = vunpack.c.l.b16 %v520
    %v2430 = vunpack.c.h.b16 %v520
    %v2431 = vunpack.c.l.b16 %v521
    %v2432 = vunpack.c.h.b16 %v521
    %v2433 = vunpack.c.l.b16 %v522
    %v2434 = vunpack.c.h.b16 %v522
    %v2435 = vunpack.c.l.b16 %v523
    %v2436 = vunpack.c.h.b16 %v523
    %v2437 = vunpack.c.l.b16 %v524
    %v2438 = vunpack.c.h.b16 %v524
    %v2439 = vunpack.c.l.b16 %v525
    %v2440 = vunpack.c.h.b16 %v525
    %v2441 = vunpack.c.l.b16 %v526
    %v2442 = vunpack.c.h.b16 %v526
    %v2443 = vunpack.c.l.b16 %v527
    %v2444 = vunpack.c.h.b16 %v527
    %v2445 = vunpack.c.l.b16 %v528
    %v2446 = vunpack.c.h.b16 %v528
    %v2447 = vunpack.c.l.b16 %v529
    %v2448 = vunpack.c.h.b16 %v529
    %v2449 = vunpack.c.l.b16 %v530
    %v2450 = vunpack.c.h.b16 %v530
    %v2451 = vunpack.c.l.b16 %v531
    %v2452 = vunpack.c.h.b16 %v531
    %v2453 = vunpack.c.l.b16 %v532
    %v2454 = vunpack.c.h.b16 %v532
    %v2455 = vunpack.c.l.b16 %v533
    %v2456 = vunpack.c.h.b16 %v533
    %v2457 = vunpack.c.l.b16 %v534
    %v2458 = vunpack.c.h.b16 %v534
    %v2459 = vunpack.c.l.b16 %v535
    %v2460 = vunpack.c.h.b16 %v535
    %v2461 = vunpack.c.l.b16 %v536
    %v2462 = vunpack.c.h.b16 %v536
    %v2463 = vunpack.c.l.b16 %v537
    %v2464 = vunpack.c.h.b16 %v537
    %v2465 = vunpack.c.l.b16 %v538
    %v2466 = vunpack.c.h.b16 %v538
    %v2467 = vunpack.c.l.b16 %v539
    %v2468 = vunpack.c.h.b16 %v539
    %v2469 = vunpack.c.l.b16 %v540
    %v2470 = vunpack.c.h.b16 %v540
    %v2471 = vunpack.c.l.b16 %v541
    %v2472 = vunpack.c.h.b16 %v541
    %v2473 = vunpack.c.l.b16 %v542
    %v2474 = vunpack.c.h.b16 %v542
    %v2475 = vunpack.c.l.b16 %v543
    %v2476 = vunpack.c.h.b16 %v543
    %v2477 = vunpack.c.l.b16 %v544
    %v2478 = vunpack.c.h.b16 %v544
    %v2479 = vunpack.c.l.b16 %v545
    %v2480 = vunpack.c.h.b16 %v545
    %v2481 = vunpack.c.l.b16 %v546
    %v2482 = vunpack.c.h.b16 %v546
    %v2483 = vunpack.c.l.b16 %v547
    %v2484 = vunpack.c.h.b16 %v547
    %v2485 = vunpack.c.l.b16 %v548
    %v2486 = vunpack.c.h.b16 %v548
    %v2487 = vunpack.c.l.b16 %v549
    %v2488 = vunpack.c.h.b16 %v549
    %v2489 = vunpack.c.l.b16 %v550
    %v2490 = vunpack.c.h.b16 %v550
    %v2491 = vunpack.c.l.b16 %v551
    %v2492 = vunpack.c.h.b16 %v551
    %v2493 = vunpack.c.l.b16 %v552
    %v2494 = vunpack.c.h.b16 %v552
    %v2495 = vunpack.c.l.b16 %v553
    %v2496 = vunpack.c.h.b16 %v553
    %v2497 = vunpack.c.l.b16 %v554
    %v2498 = vunpack.c.h.b16 %v554
    %v2499 = vunpack.c.l.b16 %v555
    %v2500 = vunpack.c.h.b16 %v555
    %v2501 = vunpack.c.l.b16 %v556
    %v2502 = vunpack.c.h.b16 %v556
    %v2503 = vunpack.c.l.b16 %v557
    %v2504 = vunpack.c.h.b16 %v557
    %v2505 = vunpack.c.l.b16 %v558
    %v2506 = vunpack.c.h.b16 %v558
    %v2507 = vunpack.c.l.b16 %v559
    %v2508 = vunpack.c.h.b16 %v559
    %v2509 = vunpack.c.l.b16 %v560
    %v2510 = vunpack.c.h.b16 %v560
    %v2511 = vunpack.c.l.b16 %v561
    %v2512 = vunpack.c.h.b16 %v561
    %v2513 = vunpack.c.l.b16 %v562
    %v2514 = vunpack.c.h.b16 %v562
    %v2515 = vunpack.c.l.b16 %v563
    %v2516 = vunpack.c.h.b16 %v563
    %v2517 = vunpack.c.l.b16 %v564
    %v2518 = vunpack.c.h.b16 %v564
    %v2519 = vunpack.c.l.b16 %v565
    %v2520 = vunpack.c.h.b16 %v565
    %v2521 = vunpack.c.l.b16 %v566
    %v2522 = vunpack.c.h.b16 %v566
    %v2523 = vunpack.c.l.b16 %v567
    %v2524 = vunpack.c.h.b16 %v567
    %v2525 = vunpack.c.l.b16 %v568
    %v2526 = vunpack.c.h.b16 %v568
    %v2527 = vunpack.c.l.b16 %v569
    %v2528 = vunpack.c.h.b16 %v569
    %v2529 = vunpack.c.l.b16 %v570
    %v2530 = vunpack.c.h.b16 %v570
    %v2531 = vunpack.c.l.b16 %v571
    %v2532 = vunpack.c.h.b16 %v571
    %v2533 = vunpack.c.l.b16 %v572
    %v2534 = vunpack.c.h.b16 %v572
    %v2535 = vunpack.c.l.b16 %v573
    %v2536 = vunpack.c.h.b16 %v573
    %v2537 = vunpack.c.l.b16 %v574
    %v2538 = vunpack.c.h.b16 %v574
    %v2539 = vunpack.c.l.b16 %v575
    %v2540 = vunpack.c.h.b16 %v575
    %v2541 = vunpack.c.l.b16 %v576
    %v2542 = vunpack.c.h.b16 %v576
    %v2543 = vunpack.c.l.b16 %v577
    %v2544 = vunpack.c.h.b16 %v577
    %v2545 = vunpack.c.l.b16 %v578
    %v2546 = vunpack.c.h.b16 %v578
    %v2547 = vunpack.c.l.b16 %v579
    %v2548 = vunpack.c.h.b16 %v579
    %v2549 = vunpack.c.l.b16 %v580
    %v2550 = vunpack.c.h.b16 %v580
    %v2551 = vunpack.c.l.b16 %v581
    %v2552 = vunpack.c.h.b16 %v581
    %v2553 = vunpack.c.l.b16 %v582
    %v2554 = vunpack.c.h.b16 %v582
    %v2555 = vunpack.c.l.b16 %v583
    %v2556 = vunpack.c.h.b16 %v583
    %v2557 = vunpack.c.l.b16 %v584
    %v2558 = vunpack.c.h.b16 %v584
    %v2559 = vunpack.c.l.b16 %v585
    %v2560 = vunpack.c.h.b16 %v585
    %v2561 = vunpack.c.l.b16 %v586
    %v2562 = vunpack.c.h.b16 %v586
    %v2563 = vunpack.c.l.b16 %v587
    %v2564 = vunpack.c.h.b16 %v587
    %v2565 = vunpack.c.l.b16 %v588
    %v2566 = vunpack.c.h.b16 %v588
    %v2567 = vunpack.c.l.b16 %v589
    %v2568 = vunpack.c.h.b16 %v589
    %v2569 = vunpack.c.l.b16 %v590
    %v2570 = vunpack.c.h.b16 %v590
    %v2571 = vunpack.c.l.b16 %v591
    %v2572 = vunpack.c.h.b16 %v591
    %v2573 = vunpack.c.l.b16 %v592
    %v2574 = vunpack.c.h.b16 %v592
    %v2575 = vunpack.c.l.b16 %v593
    %v2576 = vunpack.c.h.b16 %v593
    %v2577 = vunpack.c.l.b16 %v594
    %v2578 = vunpack.c.h.b16 %v594
    %v2579 = vunpack.c.l.b16 %v595
    %v2580 = vunpack.c.h.b16 %v595
    %v2581 = vunpack.c.l.b16 %v596
    %v2582 = vunpack.c.h.b16 %v596
    %v2583 = vunpack.c.l.b16 %v597
    %v2584 = vunpack.c.h.b16 %v597
    %v2585 = vunpack.c.l.b16 %v598
    %v2586 = vunpack.c.h.b16 %v598
    %v2587 = vunpack.c.l.b16 %v599
    %v2588 = vunpack.c.h.b16 %v599
    %v2589 = vunpack.c.l.b16 %v600
    %v2590 = vunpack.c.h.b16 %v600
    %v2591 = vunpack.c.l.b16 %v601
    %v2592 = vunpack.c.h.b16 %v601
    %v2593 = vunpack.c.l.b16 %v602
    %v2594 = vunpack.c.h.b16 %v602
    %v2595 = vunpack.c.l.b16 %v603
    %v2596 = vunpack.c.h.b16 %v603
    %v2597 = vunpack.c.l.b16 %v604
    %v2598 = vunpack.c.h.b16 %v604
    %v2599 = vunpack.c.l.b16 %v605
    %v2600 = vunpack.c.h.b16 %v605
    %v2601 = vunpack.c.l.b16 %v606
    %v2602 = vunpack.c.h.b16 %v606
    %v2603 = vunpack.c.l.b16 %v607
    %v2604 = vunpack.c.h.b16 %v607
    %v2605 = vunpack.c.l.b16 %v608
    %v2606 = vunpack.c.h.b16 %v608
    %v2607 = vunpack.c.l.b16 %v609
    %v2608 = vunpack.c.h.b16 %v609
    %v2609 = vunpack.c.l.b16 %v610
    %v2610 = vunpack.c.h.b16 %v610
    %v2611 = vunpack.c.l.b16 %v611
    %v2612 = vunpack.c.h.b16 %v611
    %v2613 = vunpack.c.l.b16 %v612
    %v2614 = vunpack.c.h.b16 %v612
    %v2615 = vunpack.c.l.b16 %v613
    %v2616 = vunpack.c.h.b16 %v613
    %v2617 = vunpack.c.l.b16 %v614
    %v2618 = vunpack.c.h.b16 %v614
    %v2619 = vunpack.c.l.b16 %v615
    %v2620 = vunpack.c.h.b16 %v615
    %v2621 = vunpack.c.l.b16 %v616
    %v2622 = vunpack.c.h.b16 %v616
    %v2623 = vunpack.c.l.b16 %v617
    %v2624 = vunpack.c.h.b16 %v617
    %v2625 = vunpack.c.l.b16 %v618
    %v2626 = vunpack.c.h.b16 %v618
    %v2627 = vunpack.c.l.b16 %v619
    %v2628 = vunpack.c.h.b16 %v619
    %v2629 = vunpack.c.l.b16 %v620
    %v2630 = vunpack.c.h.b16 %v620
    %v2631 = vunpack.c.l.b16 %v621
    %v2632 = vunpack.c.h.b16 %v621
    %v2633 = vunpack.c.l.b16 %v622
    %v2634 = vunpack.c.h.b16 %v622
    %v2635 = vunpack.c.l.b16 %v623
    %v2636 = vunpack.c.h.b16 %v623
    %v2637 = vunpack.c.l.b16 %v624
    %v2638 = vunpack.c.h.b16 %v624
    %v2639 = vunpack.c.l.b16 %v625
    %v2640 = vunpack.c.h.b16 %v625
    %v2641 = vunpack.c.l.b16 %v626
    %v2642 = vunpack.c.h.b16 %v626
    %v2643 = vunpack.c.l.b16 %v627
    %v2644 = vunpack.c.h.b16 %v627
    %v2645 = vunpack.c.l.b16 %v628
    %v2646 = vunpack.c.h.b16 %v628
    %v2647 = vunpack.c.l.b16 %v629
    %v2648 = vunpack.c.h.b16 %v629
    %v2649 = vunpack.c.l.b16 %v630
    %v2650 = vunpack.c.h.b16 %v630
    %v2651 = vunpack.c.l.b16 %v631
    %v2652 = vunpack.c.h.b16 %v631
    %v2653 = vunpack.c.l.b16 %v632
    %v2654 = vunpack.c.h.b16 %v632
    %v2655 = vunpack.c.l.b16 %v633
    %v2656 = vunpack.c.h.b16 %v633
    %v2657 = vunpack.c.l.b16 %v634
    %v2658 = vunpack.c.h.b16 %v634
    %v2659 = vunpack.c.l.b16 %v635
    %v2660 = vunpack.c.h.b16 %v635
    %v2661 = vunpack.c.l.b16 %v636
    %v2662 = vunpack.c.h.b16 %v636
    %v2663 = vunpack.c.l.b16 %v637
    %v2664 = vunpack.c.h.b16 %v637
    %v2665 = vunpack.c.l.b16 %v638
    %v2666 = vunpack.c.h.b16 %v638
    %v2667 = vunpack.c.l.b16 %v639
    %v2668 = vunpack.c.h.b16 %v639
    %v2669 = vunpack.c.l.b16 %v640
    %v2670 = vunpack.c.h.b16 %v640
    %v2671 = vunpack.c.l.b16 %v641
    %v2672 = vunpack.c.h.b16 %v641
    %v2673 = vunpack.c.l.b16 %v642
    %v2674 = vunpack.c.h.b16 %v642
    %v2675 = vunpack.c.l.b16 %v643
    %v2676 = vunpack.c.h.b16 %v643
    %v2677 = vunpack.c.l.b16 %v644
    %v2678 = vunpack.c.h.b16 %v644
    %v2679 = vunpack.c.l.b16 %v645
    %v2680 = vunpack.c.h.b16 %v645
    %v2681 = vunpack.c.l.b16 %v646
    %v2682 = vunpack.c.h.b16 %v646
    %v2683 = vunpack.c.l.b16 %v647
    %v2684 = vunpack.c.h.b16 %v647
    %v2685 = vunpack.c.l.b16 %v648
    %v2686 = vunpack.c.h.b16 %v648
    %v2687 = vunpack.c.l.b16 %v649
    %v2688 = vunpack.c.h.b16 %v649
    %v2689 = vunpack.c.l.b16 %v650
    %v2690 = vunpack.c.h.b16 %v650
    %v2691 = vunpack.c.l.b16 %v651
    %v2692 = vunpack.c.h.b16 %v651
    %v2693 = vunpack.c.l.b16 %v652
    %v2694 = vunpack.c.h.b16 %v652
    %v2695 = vunpack.c.l.b16 %v653
    %v2696 = vunpack.c.h.b16 %v653
    %v2697 = vunpack.c.l.b16 %v654
    %v2698 = vunpack.c.h.b16 %v654
    %v2699 = vunpack.c.l.b16 %v655
    %v2700 = vunpack.c.h.b16 %v655
    %v2701 = vunpack.c.l.b16 %v656
    %v2702 = vunpack.c.h.b16 %v656
    %v2703 = vunpack.c.l.b16 %v657
    %v2704 = vunpack.c.h.b16 %v657
    %v2705 = vunpack.c.l.b16 %v658
    %v2706 = vunpack.c.h.b16 %v658
    %v2707 = vunpack.c.l.b16 %v659
    %v2708 = vunpack.c.h.b16 %v659
    %v2709 = vunpack.c.l.b16 %v660
    %v2710 = vunpack.c.h.b16 %v660
    %v2711 = vunpack.c.l.b16 %v661
    %v2712 = vunpack.c.h.b16 %v661
    %v2713 = vunpack.c.l.b16 %v662
    %v2714 = vunpack.c.h.b16 %v662
    %v2715 = vunpack.c.l.b16 %v663
    %v2716 = vunpack.c.h.b16 %v663
    %v2717 = vunpack.c.l.b16 %v664
    %v2718 = vunpack.c.h.b16 %v664
    %v2719 = vunpack.c.l.b16 %v665
    %v2720 = vunpack.c.h.b16 %v665
    %v2721 = vunpack.c.l.b16 %v666
    %v2722 = vunpack.c.h.b16 %v666
    %v2723 = vunpack.c.l.b16 %v667
    %v2724 = vunpack.c.h.b16 %v667
    %v2725 = vunpack.c.l.b16 %v668
    %v2726 = vunpack.c.h.b16 %v668
    %v2727 = vunpack.c.l.b16 %v669
    %v2728 = vunpack.c.h.b16 %v669
    %v2729 = vunpack.c.l.b16 %v670
    %v2730 = vunpack.c.h.b16 %v670
    %v2731 = vunpack.c.l.b16 %v671
    %v2732 = vunpack.c.h.b16 %v671
    %v2733 = vunpack.c.l.b16 %v672
    %v2734 = vunpack.c.h.b16 %v672
    %v2735 = vunpack.c.l.b16 %v673
    %v2736 = vunpack.c.h.b16 %v673
    %v2737 = vunpack.c.l.b16 %v674
    %v2738 = vunpack.c.h.b16 %v674
    %v2739 = vunpack.c.l.b16 %v675
    %v2740 = vunpack.c.h.b16 %v675
    %v2741 = vunpack.c.l.b16 %v676
    %v2742 = vunpack.c.h.b16 %v676
    %v2743 = vunpack.c.l.b16 %v677
    %v2744 = vunpack.c.h.b16 %v677
    %v2745 = vunpack.c.l.b16 %v678
    %v2746 = vunpack.c.h.b16 %v678
    %v2747 = vunpack.c.l.b16 %v679
    %v2748 = vunpack.c.h.b16 %v679
    %v2749 = vunpack.c.l.b16 %v680
    %v2750 = vunpack.c.h.b16 %v680
    %v2751 = vunpack.c.l.b16 %v681
    %v2752 = vunpack.c.h.b16 %v681
    %v2753 = vunpack.c.l.b16 %v682
    %v2754 = vunpack.c.h.b16 %v682
    %v2755 = vunpack.c.l.b16 %v683
    %v2756 = vunpack.c.h.b16 %v683
    %v2757 = vunpack.c.l.b16 %v684
    %v2758 = vunpack.c.h.b16 %v684
    %v2759 = vunpack.c.l.b16 %v685
    %v2760 = vunpack.c.h.b16 %v685
    %v2761 = vunpack.c.l.b16 %v686
    %v2762 = vunpack.c.h.b16 %v686
    %v2763 = vunpack.c.l.b16 %v687
    %v2764 = vunpack.c.h.b16 %v687
    %v2765 = vunpack.c.l.b16 %v688
    %v2766 = vunpack.c.h.b16 %v688
    %v2767 = vunpack.c.l.b16 %v689
    %v2768 = vunpack.c.h.b16 %v689
    %v2769 = vunpack.c.l.b16 %v690
    %v2770 = vunpack.c.h.b16 %v690
    %v2771 = vunpack.c.l.b16 %v691
    %v2772 = vunpack.c.h.b16 %v691
    %v2773 = vunpack.c.l.b16 %v692
    %v2774 = vunpack.c.h.b16 %v692
    %v2775 = vunpack.c.l.b16 %v693
    %v2776 = vunpack.c.h.b16 %v693
    %v2777 = vunpack.c.l.b16 %v694
    %v2778 = vunpack.c.h.b16 %v694
    %v2779 = vunpack.c.l.b16 %v695
    %v2780 = vunpack.c.h.b16 %v695
    %v2781 = vunpack.c.l.b16 %v696
    %v2782 = vunpack.c.h.b16 %v696
    %v2783 = vunpack.c.l.b16 %v697
    %v2784 = vunpack.c.h.b16 %v697
    %v2785 = vunpack.c.l.b16 %v698
    %v2786 = vunpack.c.h.b16 %v698
    %v2787 = vunpack.c.l.b16 %v699
    %v2788 = vunpack.c.h.b16 %v699
    %v2789 = vunpack.c.l.b16 %v700
    %v2790 = vunpack.c.h.b16 %v700
    %v2791 = vunpack.c.l.b16 %v701
    %v2792 = vunpack.c.h.b16 %v701
    %v2793 = vunpack.c.l.b16 %v702
    %v2794 = vunpack.c.h.b16 %v702
    %v2795 = vunpack.c.l.b16 %v703
    %v2796 = vunpack.c.h.b16 %v703
    %v2797 = vunpack.c.l.b16 %v704
    %v2798 = vunpack.c.h.b16 %v704
    %v2799 = vunpack.c.l.b16 %v705
    %v2800 = vunpack.c.h.b16 %v705
    %v2801 = vunpack.c.l.b16 %v706
    %v2802 = vunpack.c.h.b16 %v706
    %v2803 = vunpack.c.l.b16 %v707
    %v2804 = vunpack.c.h.b16 %v707
    %v2805 = vunpack.c.l.b16 %v708
    %v2806 = vunpack.c.h.b16 %v708
    %v2807 = vunpack.c.l.b16 %v709
    %v2808 = vunpack.c.h.b16 %v709
    %v2809 = vunpack.c.l.b16 %v710
    %v2810 = vunpack.c.h.b16 %v710
    %v2811 = vunpack.c.l.b16 %v711
    %v2812 = vunpack.c.h.b16 %v711
    %v2813 = vunpack.c.l.b16 %v712
    %v2814 = vunpack.c.h.b16 %v712
    %v2815 = vunpack.c.l.b16 %v713
    %v2816 = vunpack.c.h.b16 %v713
    %v2817 = vunpack.c.l.b16 %v714
    %v2818 = vunpack.c.h.b16 %v714
    %v2819 = vunpack.c.l.b16 %v715
    %v2820 = vunpack.c.h.b16 %v715
    %v2821 = vunpack.c.l.b16 %v716
    %v2822 = vunpack.c.h.b16 %v716
    %v2823 = vunpack.c.l.b16 %v717
    %v2824 = vunpack.c.h.b16 %v717
    %v2825 = vunpack.c.l.b16 %v718
    %v2826 = vunpack.c.h.b16 %v718
    %v2827 = vunpack.c.l.b16 %v719
    %v2828 = vunpack.c.h.b16 %v719
    %v2829 = vunpack.c.l.b16 %v720
    %v2830 = vunpack.c.h.b16 %v720
    %v2831 = vunpack.c.l.b16 %v721
    %v2832 = vunpack.c.h.b16 %v721
    %v2833 = vunpack.c.l.b16 %v722
    %v2834 = vunpack.c.h.b16 %v722
    %v2835 = vunpack.c.l.b16 %v723
    %v2836 = vunpack.c.h.b16 %v723
    %v2837 = vunpack.c.l.b16 %v724
    %v2838 = vunpack.c.h.b16 %v724
    %v2839 = vunpack.c.l.b16 %v725
    %v2840 = vunpack.c.h.b16 %v725
    %v2841 = vunpack.c.l.b16 %v726
    %v2842 = vunpack.c.h.b16 %v726
    %v2843 = vunpack.c.l.b16 %v727
    %v2844 = vunpack.c.h.b16 %v727
    %v2845 = vunpack.c.l.b16 %v728
    %v2846 = vunpack.c.h.b16 %v728
    %v2847 = vunpack.c.l.b16 %v729
    %v2848 = vunpack.c.h.b16 %v729
    %v2849 = vunpack.c.l.b16 %v730
    %v2850 = vunpack.c.h.b16 %v730
    %v2851 = vunpack.c.l.b16 %v731
    %v2852 = vunpack.c.h.b16 %v731
    %v2853 = vunpack.c.l.b16 %v732
    %v2854 = vunpack.c.h.b16 %v732
    %v2855 = vunpack.c.l.b16 %v733
    %v2856 = vunpack.c.h.b16 %v733
    %v2857 = vunpack.c.l.b16 %v734
    %v2858 = vunpack.c.h.b16 %v734
    %v2859 = vunpack.c.l.b16 %v735
    %v2860 = vunpack.c.h.b16 %v735
    %v2861 = vunpack.c.l.b16 %v736
    %v2862 = vunpack.c.h.b16 %v736
    %v2863 = vunpack.c.l.b16 %v737
    %v2864 = vunpack.c.h.b16 %v737
    %v2865 = vunpack.c.l.b16 %v738
    %v2866 = vunpack.c.h.b16 %v738
    %v2867 = vunpack.c.l.b16 %v739
    %v2868 = vunpack.c.h.b16 %v739
    %v2869 = vunpack.c.l.b16 %v740
    %v2870 = vunpack.c.h.b16 %v740
    %v2871 = vunpack.c.l.b16 %v741
    %v2872 = vunpack.c.h.b16 %v741
    %v2873 = vunpack.c.l.b16 %v742
    %v2874 = vunpack.c.h.b16 %v742
    %v2875 = vunpack.c.l.b16 %v743
    %v2876 = vunpack.c.h.b16 %v743
    %v2877 = vunpack.c.l.b16 %v744
    %v2878 = vunpack.c.h.b16 %v744
    %v2879 = vunpack.c.l.b16 %v745
    %v2880 = vunpack.c.h.b16 %v745
    %v2881 = vunpack.c.l.b16 %v746
    %v2882 = vunpack.c.h.b16 %v746
    %v2883 = vunpack.c.l.b16 %v747
    %v2884 = vunpack.c.h.b16 %v747
    %v2885 = vunpack.c.l.b16 %v748
    %v2886 = vunpack.c.h.b16 %v748
    %v2887 = vunpack.c.l.b16 %v749
    %v2888 = vunpack.c.h.b16 %v749
    %v2889 = vunpack.c.l.b16 %v750
    %v2890 = vunpack.c.h.b16 %v750
    %v2891 = vunpack.c.l.b16 %v751
    %v2892 = vunpack.c.h.b16 %v751
    %v2893 = vunpack.c.l.b16 %v752
    %v2894 = vunpack.c.h.b16 %v752
    %v2895 = vunpack.c.l.b16 %v753
    %v2896 = vunpack.c.h.b16 %v753
    %v2897 = vunpack.c.l.b16 %v754
    %v2898 = vunpack.c.h.b16 %v754
    %v2899 = vunpack.c.l.b16 %v755
    %v2900 = vunpack.c.h.b16 %v755
    %v2901 = vunpack.c.l.b16 %v756
    %v2902 = vunpack.c.h.b16 %v756
    %v2903 = vunpack.c.l.b16 %v757
    %v2904 = vunpack.c.h.b16 %v757
    %v2905 = vunpack.c.l.b16 %v758
    %v2906 = vunpack.c.h.b16 %v758
    %v2907 = vunpack.c.l.b16 %v759
    %v2908 = vunpack.c.h.b16 %v759
    %v2909 = vunpack.c.l.b16 %v760
    %v2910 = vunpack.c.h.b16 %v760
    %v2911 = vunpack.c.l.b16 %v761
    %v2912 = vunpack.c.h.b16 %v761
    %v2913 = vunpack.c.l.b16 %v762
    %v2914 = vunpack.c.h.b16 %v762
    %v2915 = vunpack.c.l.b16 %v763
    %v2916 = vunpack.c.h.b16 %v763
    %v2917 = vunpack.c.l.b16 %v764
    %v2918 = vunpack.c.h.b16 %v764
    %v2919 = vunpack.c.l.b16 %v765
    %v2920 = vunpack.c.h.b16 %v765
    %v2921 = vunpack.c.l.b16 %v766
    %v2922 = vunpack.c.h.b16 %v766
    %v2923 = vunpack.c.l.b16 %v767
    %v2924 = vunpack.c.h.b16 %v767
    %v2925 = vunpack.c.l.b16 %v768
    %v2926 = vunpack.c.h.b16 %v768
    %v2927 = vunpack.c.l.b16 %v769
    %v2928 = vunpack.c.h.b16 %v769
    %v2929 = vunpack.c.l.b16 %v770
    %v2930 = vunpack.c.h.b16 %v770
    %v2931 = vunpack.c.l.b16 %v771
    %v2932 = vunpack.c.h.b16 %v771
    %v2933 = vunpack.c.l.b16 %v772
    %v2934 = vunpack.c.h.b16 %v772
    %v2935 = vunpack.c.l.b16 %v773
    %v2936 = vunpack.c.h.b16 %v773
    %v2937 = vunpack.c.l.b16 %v774
    %v2938 = vunpack.c.h.b16 %v774
    %v2939 = vunpack.c.l.b16 %v775
    %v2940 = vunpack.c.h.b16 %v775
    %v2941 = vunpack.c.l.b16 %v776
    %v2942 = vunpack.c.h.b16 %v776
    %v2943 = vunpack.c.l.b16 %v777
    %v2944 = vunpack.c.h.b16 %v777
    %v2945 = vunpack.c.l.b16 %v778
    %v2946 = vunpack.c.h.b16 %v778
    %v2947 = vunpack.c.l.b16 %v779
    %v2948 = vunpack.c.h.b16 %v779
    %v2949 = vunpack.c.l.b16 %v780
    %v2950 = vunpack.c.h.b16 %v780
    %v2951 = vunpack.c.l.b16 %v781
    %v2952 = vunpack.c.h.b16 %v781
    %v2953 = vunpack.c.l.b16 %v782
    %v2954 = vunpack.c.h.b16 %v782
    %v2955 = vunpack.c.l.b16 %v783
    %v2956 = vunpack.c.h.b16 %v783
    %v2957 = vunpack.c.l.b16 %v784
    %v2958 = vunpack.c.h.b16 %v784
    %v2959 = vunpack.c.l.b16 %v785
    %v2960 = vunpack.c.h.b16 %v785
    %v2961 = vunpack.c.l.b16 %v786
    %v2962 = vunpack.c.h.b16 %v786
    %v2963 = vunpack.c.l.b16 %v787
    %v2964 = vunpack.c.h.b16 %v787
    %v2965 = vunpack.c.l.b16 %v788
    %v2966 = vunpack.c.h.b16 %v788
    %v2967 = vunpack.c.l.b16 %v789
    %v2968 = vunpack.c.h.b16 %v789
    %v2969 = vunpack.c.l.b16 %v790
    %v2970 = vunpack.c.h.b16 %v790
    %v2971 = vunpack.c.l.b16 %v791
    %v2972 = vunpack.c.h.b16 %v791
    %v2973 = vunpack.c.l.b16 %v792
    %v2974 = vunpack.c.h.b16 %v792
    %v2975 = vunpack.c.l.b16 %v793
    %v2976 = vunpack.c.h.b16 %v793
    %v2977 = vunpack.c.l.b16 %v794
    %v2978 = vunpack.c.h.b16 %v794
    %v2979 = vunpack.c.l.b16 %v795
    %v2980 = vunpack.c.h.b16 %v795
    %v2981 = vunpack.c.l.b16 %v796
    %v2982 = vunpack.c.h.b16 %v796
    %v2983 = vunpack.c.l.b16 %v797
    %v2984 = vunpack.c.h.b16 %v797
    %v2985 = vunpack.c.l.b16 %v798
    %v2986 = vunpack.c.h.b16 %v798
    %v2987 = vunpack.c.l.b16 %v799
    %v2988 = vunpack.c.h.b16 %v799
    %v2989 = vunpack.c.l.b16 %v800
    %v2990 = vunpack.c.h.b16 %v800
    %v2991 = vunpack.c.l.b16 %v801
    %v2992 = vunpack.c.h.b16 %v801
    %v2993 = vunpack.c.l.b16 %v802
    %v2994 = vunpack.c.h.b16 %v802
    %v2995 = vunpack.c.l.b16 %v803
    %v2996 = vunpack.c.h.b16 %v803
    %v2997 = vunpack.c.l.b16 %v804
    %v2998 = vunpack.c.h.b16 %v804
    %v2999 = vunpack.c.l.b16 %v805
    %v3000 = vunpack.c.h.b16 %v805
    %v3001 = vunpack.c.l.b16 %v806
    %v3002 = vunpack.c.h.b16 %v806
    %v3003 = vunpack.c.l.b16 %v807
    %v3004 = vunpack.c.h.b16 %v807
    %v3005 = vunpack.c.l.b16 %v808
    %v3006 = vunpack.c.h.b16 %v808
    %v3007 = vunpack.c.l.b16 %v809
    %v3008 = vunpack.c.h.b16 %v809
    %v3009 = vunpack.c.l.b16 %v810
    %v3010 = vunpack.c.h.b16 %v810
    %v3011 = vunpack.c.l.b16 %v811
    %v3012 = vunpack.c.h.b16 %v811
    %v3013 = vunpack.c.l.b16 %v812
    %v3014 = vunpack.c.h.b16 %v812
    %v3015 = vunpack.c.l.b16 %v813
    %v3016 = vunpack.c.h.b16 %v813
    %v3017 = vunpack.c.l.b16 %v814
    %v3018 = vunpack.c.h.b16 %v814
    %v3019 = vunpack.c.l.b16 %v815
    %v3020 = vunpack.c.h.b16 %v815
    %v3021 = vunpack.c.l.b16 %v816
    %v3022 = vunpack.c.h.b16 %v816
    %v3023 = vunpack.c.l.b16 %v817
    %v3024 = vunpack.c.h.b16 %v817
    %v3025 = vunpack.c.l.b16 %v818
    %v3026 = vunpack.c.h.b16 %v818
    %v3027 = vunpack.c.l.b16 %v819
    %v3028 = vunpack.c.h.b16 %v819
    %v3029 = vunpack.c.l.b16 %v820
    %v3030 = vunpack.c.h.b16 %v820
    %v3031 = vunpack.c.l.b16 %v821
    %v3032 = vunpack.c.h.b16 %v821
    %v3033 = vunpack.c.l.b16 %v822
    %v3034 = vunpack.c.h.b16 %v822
    %v3035 = vunpack.c.l.b16 %v823
    %v3036 = vunpack.c.h.b16 %v823
    %v3037 = vunpack.c.l.b16 %v824
    %v3038 = vunpack.c.h.b16 %v824
    %v3039 = vunpack.c.l.b16 %v825
    %v3040 = vunpack.c.h.b16 %v825
    %v3041 = vunpack.c.l.b16 %v826
    %v3042 = vunpack.c.h.b16 %v826
    %v3043 = vunpack.c.l.b16 %v827
    %v3044 = vunpack.c.h.b16 %v827
    %v3045 = vunpack.c.l.b16 %v828
    %v3046 = vunpack.c.h.b16 %v828
    %v3047 = vunpack.c.l.b16 %v829
    %v3048 = vunpack.c.h.b16 %v829
    %v3049 = vunpack.c.l.b16 %v830
    %v3050 = vunpack.c.h.b16 %v830
    %v3051 = vunpack.c.l.b16 %v831
    %v3052 = vunpack.c.h.b16 %v831
    %v3053 = vunpack.c.l.b16 %v832
    %v3054 = vunpack.c.h.b16 %v832
    %v3055 = vunpack.c.l.b16 %v833
    %v3056 = vunpack.c.h.b16 %v833
    %v3057 = vunpack.c.l.b16 %v834
    %v3058 = vunpack.c.h.b16 %v834
    %v3059 = vunpack.c.l.b16 %v835
    %v3060 = vunpack.c.h.b16 %v835
    %v3061 = vunpack.c.l.b16 %v836
    %v3062 = vunpack.c.h.b16 %v836
    %v3063 = vunpack.c.l.b16 %v837
    %v3064 = vunpack.c.h.b16 %v837
    %v3065 = vunpack.c.l.b16 %v838
    %v3066 = vunpack.c.h.b16 %v838
    %v3067 = vunpack.c.l.b16 %v839
    %v3068 = vunpack.c.h.b16 %v839
    %v3069 = vunpack.c.l.b16 %v840
    %v3070 = vunpack.c.h.b16 %v840
    %v3071 = vunpack.c.l.b16 %v841
    %v3072 = vunpack.c.h.b16 %v841
    %v3073 = vunpack.c.l.b16 %v842
    %v3074 = vunpack.c.h.b16 %v842
    %v3075 = vunpack.c.l.b16 %v843
    %v3076 = vunpack.c.h.b16 %v843
    %v3077 = vunpack.c.l.b16 %v844
    %v3078 = vunpack.c.h.b16 %v844
    %v3079 = vunpack.c.l.b16 %v845
    %v3080 = vunpack.c.h.b16 %v845
    %v3081 = vunpack.c.l.b16 %v846
    %v3082 = vunpack.c.h.b16 %v846
    %v3083 = vunpack.c.l.b16 %v847
    %v3084 = vunpack.c.h.b16 %v847
    %v3085 = vunpack.c.l.b16 %v848
    %v3086 = vunpack.c.h.b16 %v848
    %v3087 = vunpack.c.l.b16 %v849
    %v3088 = vunpack.c.h.b16 %v849
    %v3089 = vunpack.c.l.b16 %v850
    %v3090 = vunpack.c.h.b16 %v850
    %v3091 = vunpack.c.l.b16 %v851
    %v3092 = vunpack.c.h.b16 %v851
    %v3093 = vunpack.c.l.b16 %v852
    %v3094 = vunpack.c.h.b16 %v852
    %v3095 = vunpack.c.l.b16 %v853
    %v3096 = vunpack.c.h.b16 %v853
    %v3097 = vunpack.c.l.b16 %v854
    %v3098 = vunpack.c.h.b16 %v854
    %v3099 = vunpack.c.l.b16 %v855
    %v3100 = vunpack.c.h.b16 %v855
    %v3101 = vunpack.c.l.b16 %v856
    %v3102 = vunpack.c.h.b16 %v856
    %v3103 = vunpack.c.l.b16 %v857
    %v3104 = vunpack.c.h.b16 %v857
    %v3105 = vunpack.c.l.b16 %v858
    %v3106 = vunpack.c.h.b16 %v858
    %v3107 = vunpack.c.l.b16 %v859
    %v3108 = vunpack.c.h.b16 %v859
    %v3109 = vunpack.c.l.b16 %v860
    %v3110 = vunpack.c.h.b16 %v860
    %v3111 = vunpack.c.l.b16 %v861
    %v3112 = vunpack.c.h.b16 %v861
    %v3113 = vunpack.c.l.b16 %v862
    %v3114 = vunpack.c.h.b16 %v862
    %v3115 = vunpack.c.l.b16 %v863
    %v3116 = vunpack.c.h.b16 %v863
    %v3117 = vunpack.c.l.b16 %v864
    %v3118 = vunpack.c.h.b16 %v864
    %v3119 = vunpack.c.l.b16 %v865
    %v3120 = vunpack.c.h.b16 %v865
    %v3121 = vunpack.c.l.b16 %v866
    %v3122 = vunpack.c.h.b16 %v866
    %v3123 = vunpack.c.l.b16 %v867
    %v3124 = vunpack.c.h.b16 %v867
    %v3125 = vunpack.c.l.b16 %v868
    %v3126 = vunpack.c.h.b16 %v868
    %v3127 = vunpack.c.l.b16 %v869
    %v3128 = vunpack.c.h.b16 %v869
    %v3129 = vunpack.c.l.b16 %v870
    %v3130 = vunpack.c.h.b16 %v870
    %v3131 = vunpack.c.l.b16 %v871
    %v3132 = vunpack.c.h.b16 %v871
    %v3133 = vunpack.c.l.b16 %v872
    %v3134 = vunpack.c.h.b16 %v872
    %v3135 = vunpack.c.l.b16 %v873
    %v3136 = vunpack.c.h.b16 %v873
    %v3137 = vunpack.c.l.b16 %v874
    %v3138 = vunpack.c.h.b16 %v874
    %v3139 = vunpack.c.l.b16 %v875
    %v3140 = vunpack.c.h.b16 %v875
    %v3141 = vunpack.c.l.b16 %v876
    %v3142 = vunpack.c.h.b16 %v876
    %v3143 = vunpack.c.l.b16 %v877
    %v3144 = vunpack.c.h.b16 %v877
    %v3145 = vunpack.c.l.b16 %v878
    %v3146 = vunpack.c.h.b16 %v878
    %v3147 = vunpack.c.l.b16 %v879
    %v3148 = vunpack.c.h.b16 %v879
    %v3149 = vunpack.c.l.b16 %v880
    %v3150 = vunpack.c.h.b16 %v880
    %v3151 = vunpack.c.l.b16 %v881
    %v3152 = vunpack.c.h.b16 %v881
    %v3153 = vunpack.c.l.b16 %v882
    %v3154 = vunpack.c.h.b16 %v882
    %v3155 = vunpack.c.l.b16 %v883
    %v3156 = vunpack.c.h.b16 %v883
    %v3157 = vunpack.c.l.b16 %v884
    %v3158 = vunpack.c.h.b16 %v884
    %v3159 = vunpack.c.l.b16 %v885
    %v3160 = vunpack.c.h.b16 %v885
    %v3161 = vunpack.c.l.b16 %v886
    %v3162 = vunpack.c.h.b16 %v886
    %v3163 = vunpack.c.l.b16 %v887
    %v3164 = vunpack.c.h.b16 %v887
    %v3165 = vunpack.c.l.b16 %v888
    %v3166 = vunpack.c.h.b16 %v888
    %v3167 = vunpack.c.l.b16 %v889
    %v3168 = vunpack.c.h.b16 %v889
    %v3169 = vunpack.c.l.b16 %v890
    %v3170 = vunpack.c.h.b16 %v890
    %v3171 = vunpack.c.l.b16 %v891
    %v3172 = vunpack.c.h.b16 %v891
    %v3173 = vunpack.c.l.b16 %v892
    %v3174 = vunpack.c.h.b16 %v892
    %v3175 = vunpack.c.l.b16 %v893
    %v3176 = vunpack.c.h.b16 %v893
    %v3177 = vunpack.c.l.b16 %v894
    %v3178 = vunpack.c.h.b16 %v894
    %v3179 = vunpack.c.l.b16 %v895
    %v3180 = vunpack.c.h.b16 %v895
    %v3181 = vunpack.c.l.b16 %v896
    %v3182 = vunpack.c.h.b16 %v896
    %v3183 = vunpack.c.l.b16 %v897
    %v3184 = vunpack.c.h.b16 %v897
    %v3185 = vunpack.c.l.b16 %v898
    %v3186 = vunpack.c.h.b16 %v898
    %v3187 = vunpack.c.l.b16 %v899
    %v3188 = vunpack.c.h.b16 %v899
    %v3189 = vunpack.c.l.b16 %v900
    %v3190 = vunpack.c.h.b16 %v900
    %v3191 = vunpack.c.l.b16 %v901
    %v3192 = vunpack.c.h.b16 %v901
    %v3193 = vunpack.c.l.b16 %v902
    %v3194 = vunpack.c.h.b16 %v902
    %v3195 = vunpack.c.l.b16 %v903
    %v3196 = vunpack.c.h.b16 %v903
    %v3197 = vunpack.c.l.b16 %v904
    %v3198 = vunpack.c.h.b16 %v904
    %v3199 = vunpack.c.l.b16 %v905
    %v3200 = vunpack.c.h.b16 %v905
    %v3201 = vunpack.c.l.b16 %v906
    %v3202 = vunpack.c.h.b16 %v906
    %v3203 = vunpack.c.l.b16 %v907
    %v3204 = vunpack.c.h.b16 %v907
    %v3205 = vunpack.c.l.b16 %v908
    %v3206 = vunpack.c.h.b16 %v908
    %v3207 = vunpack.c.l.b16 %v909
    %v3208 = vunpack.c.h.b16 %v909
    %v3209 = vunpack.c.l.b16 %v910
    %v3210 = vunpack.c.h.b16 %v910
    %v3211 = vunpack.c.l.b16 %v911
    %v3212 = vunpack.c.h.b16 %v911
    %v3213 = vunpack.c.l.b16 %v912
    %v3214 = vunpack.c.h.b16 %v912
    %v3215 = vunpack.c.l.b16 %v913
    %v3216 = vunpack.c.h.b16 %v913
    %v3217 = vunpack.c.l.b16 %v914
    %v3218 = vunpack.c.h.b16 %v914
    %v3219 = vpack.c.b16 %v1699, %v1683
    %v3220 = vpack.c.b16 %v1700, %v1684
    %v3221 = vpack.c.b16 %v1701, %v1685
    %v3222 = vpack.c.b16 %v1702, %v1686
    %v3223 = vpack.c.b16 %v1703, %v1687
    %v3224 = vpack.c.b16 %v1704, %v1688
    %v3225 = vpack.c.b16 %v1705, %v1689
    %v3226 = vpack.c.b16 %v1706, %v1690
    %v3227 = vpack.c.b16 %v1707, %v1691
    %v3228 = vpack.c.b16 %v1708, %v1692
    %v3229 = vpack.c.b16 %v1709, %v1693
    %v3230 = vpack.c.b16 %v1710, %v1694
    %v3231 = vpack.c.b16 %v1711, %v1695
    %v3232 = vpack.c.b16 %v1712, %v1696
    %v3233 = vpack.c.b16 %v1713, %v1697
    %v3234 = vpack.c.b16 %v1714, %v1698
    %v3235 = vpack.c.b16 %v1731, %v1715
    %v3236 = vpack.c.b16 %v1732, %v1716
    %v3237 = vpack.c.b16 %v1733, %v1717
    %v3238 = vpack.c.b16 %v1734, %v1718
    %v3239 = vpack.c.b16 %v1735, %v1719
    %v3240 = vpack.c.b16 %v1736, %v1720
    %v3241 = vpack.c.b16 %v1737, %v1721
    %v3242 = vpack.c.b16 %v1738, %v1722
    %v3243 = vpack.c.b16 %v1739, %v1723
    %v3244 = vpack.c.b16 %v1740, %v1724
    %v3245 = vpack.c.b16 %v1741, %v1725
    %v3246 = vpack.c.b16 %v1742, %v1726
    %v3247 = vpack.c.b16 %v1743, %v1727
    %v3248 = vpack.c.b16 %v1744, %v1728
    %v3249 = vpack.c.b16 %v1745, %v1729
    %v3250 = vpack.c.b16 %v1746, %v1730
    %v3251 = vpack.c.b16 %v1763, %v1747
    %v3252 = vpack.c.b16 %v1764, %v1748
    %v3253 = vpack.c.b16 %v1765, %v1749
    %v3254 = vpack.c.b16 %v1766, %v1750
    %v3255 = vpack.c.b16 %v1767, %v1751
    %v3256 = vpack.c.b16 %v1768, %v1752
    %v3257 = vpack.c.b16 %v1769, %v1753
    %v3258 = vpack.c.b16 %v1770, %v1754
    %v3259 = vpack.c.b16 %v1771, %v1755
    %v3260 = vpack.c.b16 %v1772, %v1756
    %v3261 = vpack.c.b16 %v1773, %v1757
    %v3262 = vpack.c.b16 %v1774, %v1758
    %v3263 = vpack.c.b16 %v1775, %v1759
    %v3264 = vpack.c.b16 %v1776, %v1760
    %v3265 = vpack.c.b16 %v1777, %v1761
    %v3266 = vpack.c.b16 %v1778, %v1762
    %v3267 = vpack.c.b16 %v1795, %v1779
    %v3268 = vpack.c.b16 %v1796, %v1780
    %v3269 = vpack.c.b16 %v1797, %v1781
    %v3270 = vpack.c.b16 %v1798, %v1782
    %v3271 = vpack.c.b16 %v1799, %v1783
    %v3272 = vpack.c.b16 %v1800, %v1784
    %v3273 = vpack.c.b16 %v1801, %v1785
    %v3274 = vpack.c.b16 %v1802, %v1786
    %v3275 = vpack.c.b16 %v1803, %v1787
    %v3276 = vpack.c.b16 %v1804, %v1788
    %v3277 = vpack.c.b16 %v1805, %v1789
    %v3278 = vpack.c.b16 %v1806, %v1790
    %v3279 = vpack.c.b16 %v1807, %v1791
    %v3280 = vpack.c.b16 %v1808, %v1792
    %v3281 = vpack.c.b16 %v1809, %v1793
    %v3282 = vpack.c.b16 %v1810, %v1794
    %v3283 = vpack.c.b16 %v1827, %v1811
    %v3284 = vpack.c.b16 %v1828, %v1812
    %v3285 = vpack.c.b16 %v1829, %v1813
    %v3286 = vpack.c.b16 %v1830, %v1814
    %v3287 = vpack.c.b16 %v1831, %v1815
    %v3288 = vpack.c.b16 %v1832, %v1816
    %v3289 = vpack.c.b16 %v1833, %v1817
    %v3290 = vpack.c.b16 %v1834, %v1818
    %v3291 = vpack.c.b16 %v1835, %v1819
    %v3292 = vpack.c.b16 %v1836, %v1820
    %v3293 = vpack.c.b16 %v1837, %v1821
    %v3294 = vpack.c.b16 %v1838, %v1822
    %v3295 = vpack.c.b16 %v1839, %v1823
    %v3296 = vpack.c.b16 %v1840, %v1824
    %v3297 = vpack.c.b16 %v1841, %v1825
    %v3298 = vpack.c.b16 %v1842, %v1826
    %v3299 = vpack.c.b16 %v1859, %v1843
    %v3300 = vpack.c.b16 %v1860, %v1844
    %v3301 = vpack.c.b16 %v1861, %v1845
    %v3302 = vpack.c.b16 %v1862, %v1846
    %v3303 = vpack.c.b16 %v1863, %v1847
    %v3304 = vpack.c.b16 %v1864, %v1848
    %v3305 = vpack.c.b16 %v1865, %v1849
    %v3306 = vpack.c.b16 %v1866, %v1850
    %v3307 = vpack.c.b16 %v1867, %v1851
    %v3308 = vpack.c.b16 %v1868, %v1852
    %v3309 = vpack.c.b16 %v1869, %v1853
    %v3310 = vpack.c.b16 %v1870, %v1854
    %v3311 = vpack.c.b16 %v1871, %v1855
    %v3312 = vpack.c.b16 %v1872, %v1856
    %v3313 = vpack.c.b16 %v1873, %v1857
    %v3314 = vpack.c.b16 %v1874, %v1858
    %v3315 = vpack.c.b16 %v1891, %v1875
    %v3316 = vpack.c.b16 %v1892, %v1876
    %v3317 = vpack.c.b16 %v1893, %v1877
    %v3318 = vpack.c.b16 %v1894, %v1878
    %v3319 = vpack.c.b16 %v1895, %v1879
    %v3320 = vpack.c.b16 %v1896, %v1880
    %v3321 = vpack.c.b16 %v1897, %v1881
    %v3322 = vpack.c.b16 %v1898, %v1882
    %v3323 = vpack.c.b16 %v1899, %v1883
    %v3324 = vpack.c.b16 %v1900, %v1884
    %v3325 = vpack.c.b16 %v1901, %v1885
    %v3326 = vpack.c.b16 %v1902, %v1886
    %v3327 = vpack.c.b16 %v1903, %v1887
    %v3328 = vpack.c.b16 %v1904, %v1888
    %v3329 = vpack.c.b16 %v1905, %v1889
    %v3330 = vpack.c.b16 %v1906, %v1890
    %v3331 = vpack.c.b16 %v1923, %v1907
    %v3332 = vpack.c.b16 %v1924, %v1908
    %v3333 = vpack.c.b16 %v1925, %v1909
    %v3334 = vpack.c.b16 %v1926, %v1910
    %v3335 = vpack.c.b16 %v1927, %v1911
    %v3336 = vpack.c.b16 %v1928, %v1912
    %v3337 = vpack.c.b16 %v1929, %v1913
    %v3338 = vpack.c.b16 %v1930, %v1914
    %v3339 = vpack.c.b16 %v1931, %v1915
    %v3340 = vpack.c.b16 %v1932, %v1916
    %v3341 = vpack.c.b16 %v1933, %v1917
    %v3342 = vpack.c.b16 %v1934, %v1918
    %v3343 = vpack.c.b16 %v1935, %v1919
    %v3344 = vpack.c.b16 %v1936, %v1920
    %v3345 = vpack.c.b16 %v1937, %v1921
    %v3346 = vpack.c.b16 %v1938, %v1922
    %v3347 = vpack.c.b16 %v1955, %v1939
    %v3348 = vpack.c.b16 %v1956, %v1940
    %v3349 = vpack.c.b16 %v1957, %v1941
    %v3350 = vpack.c.b16 %v1958, %v1942
    %v3351 = vpack.c.b16 %v1959, %v1943
    %v3352 = vpack.c.b16 %v1960, %v1944
    %v3353 = vpack.c.b16 %v1961, %v1945
    %v3354 = vpack.c.b16 %v1962, %v1946
    %v3355 = vpack.c.b16 %v1963, %v1947
    %v3356 = vpack.c.b16 %v1964, %v1948
    %v3357 = vpack.c.b16 %v1965, %v1949
    %v3358 = vpack.c.b16 %v1966, %v1950
    %v3359 = vpack.c.b16 %v1967, %v1951
    %v3360 = vpack.c.b16 %v1968, %v1952
    %v3361 = vpack.c.b16 %v1969, %v1953
    %v3362 = vpack.c.b16 %v1970, %v1954
    %v3363 = vpack.c.b16 %v1987, %v1971
    %v3364 = vpack.c.b16 %v1988, %v1972
    %v3365 = vpack.c.b16 %v1989, %v1973
    %v3366 = vpack.c.b16 %v1990, %v1974
    %v3367 = vpack.c.b16 %v1991, %v1975
    %v3368 = vpack.c.b16 %v1992, %v1976
    %v3369 = vpack.c.b16 %v1993, %v1977
    %v3370 = vpack.c.b16 %v1994, %v1978
    %v3371 = vpack.c.b16 %v1995, %v1979
    %v3372 = vpack.c.b16 %v1996, %v1980
    %v3373 = vpack.c.b16 %v1997, %v1981
    %v3374 = vpack.c.b16 %v1998, %v1982
    %v3375 = vpack.c.b16 %v1999, %v1983
    %v3376 = vpack.c.b16 %v2000, %v1984
    %v3377 = vpack.c.b16 %v2001, %v1985
    %v3378 = vpack.c.b16 %v2002, %v1986
    %v3379 = vpack.c.b16 %v2019, %v2003
    %v3380 = vpack.c.b16 %v2020, %v2004
    %v3381 = vpack.c.b16 %v2021, %v2005
    %v3382 = vpack.c.b16 %v2022, %v2006
    %v3383 = vpack.c.b16 %v2023, %v2007
    %v3384 = vpack.c.b16 %v2024, %v2008
    %v3385 = vpack.c.b16 %v2025, %v2009
    %v3386 = vpack.c.b16 %v2026, %v2010
    %v3387 = vpack.c.b16 %v2027, %v2011
    %v3388 = vpack.c.b16 %v2028, %v2012
    %v3389 = vpack.c.b16 %v2029, %v2013
    %v3390 = vpack.c.b16 %v2030, %v2014
    %v3391 = vpack.c.b16 %v2031, %v2015
    %v3392 = vpack.c.b16 %v2032, %v2016
    %v3393 = vpack.c.b16 %v2033, %v2017
    %v3394 = vpack.c.b16 %v2034, %v2018
    %v3395 = vpack.c.b16 %v2051, %v2035
    %v3396 = vpack.c.b16 %v2052, %v2036
    %v3397 = vpack.c.b16 %v2053, %v2037
    %v3398 = vpack.c.b16 %v2054, %v2038
    %v3399 = vpack.c.b16 %v2055, %v2039
    %v3400 = vpack.c.b16 %v2056, %v2040
    %v3401 = vpack.c.b16 %v2057, %v2041
    %v3402 = vpack.c.b16 %v2058, %v2042
    %v3403 = vpack.c.b16 %v2059, %v2043
    %v3404 = vpack.c.b16 %v2060, %v2044
    %v3405 = vpack.c.b16 %v2061, %v2045
    %v3406 = vpack.c.b16 %v2062, %v2046
    %v3407 = vpack.c.b16 %v2063, %v2047
    %v3408 = vpack.c.b16 %v2064, %v2048
    %v3409 = vpack.c.b16 %v2065, %v2049
    %v3410 = vpack.c.b16 %v2066, %v2050
    %v3411 = vpack.c.b16 %v2083, %v2067
    %v3412 = vpack.c.b16 %v2084, %v2068
    %v3413 = vpack.c.b16 %v2085, %v2069
    %v3414 = vpack.c.b16 %v2086, %v2070
    %v3415 = vpack.c.b16 %v2087, %v2071
    %v3416 = vpack.c.b16 %v2088, %v2072
    %v3417 = vpack.c.b16 %v2089, %v2073
    %v3418 = vpack.c.b16 %v2090, %v2074
    %v3419 = vpack.c.b16 %v2091, %v2075
    %v3420 = vpack.c.b16 %v2092, %v2076
    %v3421 = vpack.c.b16 %v2093, %v2077
    %v3422 = vpack.c.b16 %v2094, %v2078
    %v3423 = vpack.c.b16 %v2095, %v2079
    %v3424 = vpack.c.b16 %v2096, %v2080
    %v3425 = vpack.c.b16 %v2097, %v2081
    %v3426 = vpack.c.b16 %v2098, %v2082
    %v3427 = vpack.c.b16 %v2115, %v2099
    %v3428 = vpack.c.b16 %v2116, %v2100
    %v3429 = vpack.c.b16 %v2117, %v2101
    %v3430 = vpack.c.b16 %v2118, %v2102
    %v3431 = vpack.c.b16 %v2119, %v2103
    %v3432 = vpack.c.b16 %v2120, %v2104
    %v3433 = vpack.c.b16 %v2121, %v2105
    %v3434 = vpack.c.b16 %v2122, %v2106
    %v3435 = vpack.c.b16 %v2123, %v2107
    %v3436 = vpack.c.b16 %v2124, %v2108
    %v3437 = vpack.c.b16 %v2125, %v2109
    %v3438 = vpack.c.b16 %v2126, %v2110
    %v3439 = vpack.c.b16 %v2127, %v2111
    %v3440 = vpack.c.b16 %v2128, %v2112
    %v3441 = vpack.c.b16 %v2129, %v2113
    %v3442 = vpack.c.b16 %v2130, %v2114
    %v3443 = vpack.c.b16 %v2147, %v2131
    %v3444 = vpack.c.b16 %v2148, %v2132
    %v3445 = vpack.c.b16 %v2149, %v2133
    %v3446 = vpack.c.b16 %v2150, %v2134
    %v3447 = vpack.c.b16 %v2151, %v2135
    %v3448 = vpack.c.b16 %v2152, %v2136
    %v3449 = vpack.c.b16 %v2153, %v2137
    %v3450 = vpack.c.b16 %v2154, %v2138
    %v3451 = vpack.c.b16 %v2155, %v2139
    %v3452 = vpack.c.b16 %v2156, %v2140
    %v3453 = vpack.c.b16 %v2157, %v2141
    %v3454 = vpack.c.b16 %v2158, %v2142
    %v3455 = vpack.c.b16 %v2159, %v2143
    %v3456 = vpack.c.b16 %v2160, %v2144
    %v3457 = vpack.c.b16 %v2161, %v2145
    %v3458 = vpack.c.b16 %v2162, %v2146
    %v3459 = vpack.c.b16 %v2179, %v2163
    %v3460 = vpack.c.b16 %v2180, %v2164
    %v3461 = vpack.c.b16 %v2181, %v2165
    %v3462 = vpack.c.b16 %v2182, %v2166
    %v3463 = vpack.c.b16 %v2183, %v2167
    %v3464 = vpack.c.b16 %v2184, %v2168
    %v3465 = vpack.c.b16 %v2185, %v2169
    %v3466 = vpack.c.b16 %v2186, %v2170
    %v3467 = vpack.c.b16 %v2187, %v2171
    %v3468 = vpack.c.b16 %v2188, %v2172
    %v3469 = vpack.c.b16 %v2189, %v2173
    %v3470 = vpack.c.b16 %v2190, %v2174
    %v3471 = vpack.c.b16 %v2191, %v2175
    %v3472 = vpack.c.b16 %v2192, %v2176
    %v3473 = vpack.c.b16 %v2193, %v2177
    %v3474 = vpack.c.b16 %v2194, %v2178
    %v3475 = vpack.c.b16 %v2211, %v2195
    %v3476 = vpack.c.b16 %v2212, %v2196
    %v3477 = vpack.c.b16 %v2213, %v2197
    %v3478 = vpack.c.b16 %v2214, %v2198
    %v3479 = vpack.c.b16 %v2215, %v2199
    %v3480 = vpack.c.b16 %v2216, %v2200
    %v3481 = vpack.c.b16 %v2217, %v2201
    %v3482 = vpack.c.b16 %v2218, %v2202
    %v3483 = vpack.c.b16 %v2219, %v2203
    %v3484 = vpack.c.b16 %v2220, %v2204
    %v3485 = vpack.c.b16 %v2221, %v2205
    %v3486 = vpack.c.b16 %v2222, %v2206
    %v3487 = vpack.c.b16 %v2223, %v2207
    %v3488 = vpack.c.b16 %v2224, %v2208
    %v3489 = vpack.c.b16 %v2225, %v2209
    %v3490 = vpack.c.b16 %v2226, %v2210
    %v3491 = vpack.c.b16 %v2243, %v2227
    %v3492 = vpack.c.b16 %v2244, %v2228
    %v3493 = vpack.c.b16 %v2245, %v2229
    %v3494 = vpack.c.b16 %v2246, %v2230
    %v3495 = vpack.c.b16 %v2247, %v2231
    %v3496 = vpack.c.b16 %v2248, %v2232
    %v3497 = vpack.c.b16 %v2249, %v2233
    %v3498 = vpack.c.b16 %v2250, %v2234
    %v3499 = vpack.c.b16 %v2251, %v2235
    %v3500 = vpack.c.b16 %v2252, %v2236
    %v3501 = vpack.c.b16 %v2253, %v2237
    %v3502 = vpack.c.b16 %v2254, %v2238
    %v3503 = vpack.c.b16 %v2255, %v2239
    %v3504 = vpack.c.b16 %v2256, %v2240
    %v3505 = vpack.c.b16 %v2257, %v2241
    %v3506 = vpack.c.b16 %v2258, %v2242
    %v3507 = vpack.c.b16 %v2275, %v2259
    %v3508 = vpack.c.b16 %v2276, %v2260
    %v3509 = vpack.c.b16 %v2277, %v2261
    %v3510 = vpack.c.b16 %v2278, %v2262
    %v3511 = vpack.c.b16 %v2279, %v2263
    %v3512 = vpack.c.b16 %v2280, %v2264
    %v3513 = vpack.c.b16 %v2281, %v2265
    %v3514 = vpack.c.b16 %v2282, %v2266
    %v3515 = vpack.c.b16 %v2283, %v2267
    %v3516 = vpack.c.b16 %v2284, %v2268
    %v3517 = vpack.c.b16 %v2285, %v2269
    %v3518 = vpack.c.b16 %v2286, %v2270
    %v3519 = vpack.c.b16 %v2287, %v2271
    %v3520 = vpack.c.b16 %v2288, %v2272
    %v3521 = vpack.c.b16 %v2289, %v2273
    %v3522 = vpack.c.b16 %v2290, %v2274
    %v3523 = vpack.c.b16 %v2307, %v2291
    %v3524 = vpack.c.b16 %v2308, %v2292
    %v3525 = vpack.c.b16 %v2309, %v2293
    %v3526 = vpack.c.b16 %v2310, %v2294
    %v3527 = vpack.c.b16 %v2311, %v2295
    %v3528 = vpack.c.b16 %v2312, %v2296
    %v3529 = vpack.c.b16 %v2313, %v2297
    %v3530 = vpack.c.b16 %v2314, %v2298
    %v3531 = vpack.c.b16 %v2315, %v2299
    %v3532 = vpack.c.b16 %v2316, %v2300
    %v3533 = vpack.c.b16 %v2317, %v2301
    %v3534 = vpack.c.b16 %v2318, %v2302
    %v3535 = vpack.c.b16 %v2319, %v2303
    %v3536 = vpack.c.b16 %v2320, %v2304
    %v3537 = vpack.c.b16 %v2321, %v2305
    %v3538 = vpack.c.b16 %v2322, %v2306
    %v3539 = vpack.c.b16 %v2339, %v2323
    %v3540 = vpack.c.b16 %v2340, %v2324
    %v3541 = vpack.c.b16 %v2341, %v2325
    %v3542 = vpack.c.b16 %v2342, %v2326
    %v3543 = vpack.c.b16 %v2343, %v2327
    %v3544 = vpack.c.b16 %v2344, %v2328
    %v3545 = vpack.c.b16 %v2345, %v2329
    %v3546 = vpack.c.b16 %v2346, %v2330
    %v3547 = vpack.c.b16 %v2347, %v2331
    %v3548 = vpack.c.b16 %v2348, %v2332
    %v3549 = vpack.c.b16 %v2349, %v2333
    %v3550 = vpack.c.b16 %v2350, %v2334
    %v3551 = vpack.c.b16 %v2351, %v2335
    %v3552 = vpack.c.b16 %v2352, %v2336
    %v3553 = vpack.c.b16 %v2353, %v2337
    %v3554 = vpack.c.b16 %v2354, %v2338
    %v3555 = vpack.c.b16 %v2371, %v2355
    %v3556 = vpack.c.b16 %v2372, %v2356
    %v3557 = vpack.c.b16 %v2373, %v2357
    %v3558 = vpack.c.b16 %v2374, %v2358
    %v3559 = vpack.c.b16 %v2375, %v2359
    %v3560 = vpack.c.b16 %v2376, %v2360
    %v3561 = vpack.c.b16 %v2377, %v2361
    %v3562 = vpack.c.b16 %v2378, %v2362
    %v3563 = vpack.c.b16 %v2379, %v2363
    %v3564 = vpack.c.b16 %v2380, %v2364
    %v3565 = vpack.c.b16 %v2381, %v2365
    %v3566 = vpack.c.b16 %v2382, %v2366
    %v3567 = vpack.c.b16 %v2383, %v2367
    %v3568 = vpack.c.b16 %v2384, %v2368
    %v3569 = vpack.c.b16 %v2385, %v2369
    %v3570 = vpack.c.b16 %v2386, %v2370
    %v3571 = vpack.c.b16 %v2403, %v2387
    %v3572 = vpack.c.b16 %v2404, %v2388
    %v3573 = vpack.c.b16 %v2405, %v2389
    %v3574 = vpack.c.b16 %v2406, %v2390
    %v3575 = vpack.c.b16 %v2407, %v2391
    %v3576 = vpack.c.b16 %v2408, %v2392
    %v3577 = vpack.c.b16 %v2409, %v2393
    %v3578 = vpack.c.b16 %v2410, %v2394
    %v3579 = vpack.c.b16 %v2411, %v2395
    %v3580 = vpack.c.b16 %v2412, %v2396
    %v3581 = vpack.c.b16 %v2413, %v2397
    %v3582 = vpack.c.b16 %v2414, %v2398
    %v3583 = vpack.c.b16 %v2415, %v2399
    %v3584 = vpack.c.b16 %v2416, %v2400
    %v3585 = vpack.c.b16 %v2417, %v2401
    %v3586 = vpack.c.b16 %v2418, %v2402
    %v3587 = vpack.c.b16 %v2435, %v2419
    %v3588 = vpack.c.b16 %v2436, %v2420
    %v3589 = vpack.c.b16 %v2437, %v2421
    %v3590 = vpack.c.b16 %v2438, %v2422
    %v3591 = vpack.c.b16 %v2439, %v2423
    %v3592 = vpack.c.b16 %v2440, %v2424
    %v3593 = vpack.c.b16 %v2441, %v2425
    %v3594 = vpack.c.b16 %v2442, %v2426
    %v3595 = vpack.c.b16 %v2443, %v2427
    %v3596 = vpack.c.b16 %v2444, %v2428
    %v3597 = vpack.c.b16 %v2445, %v2429
    %v3598 = vpack.c.b16 %v2446, %v2430
    %v3599 = vpack.c.b16 %v2447, %v2431
    %v3600 = vpack.c.b16 %v2448, %v2432
    %v3601 = vpack.c.b16 %v2449, %v2433
    %v3602 = vpack.c.b16 %v2450, %v2434
    %v3603 = vpack.c.b16 %v2467, %v2451
    %v3604 = vpack.c.b16 %v2468, %v2452
    %v3605 = vpack.c.b16 %v2469, %v2453
    %v3606 = vpack.c.b16 %v2470, %v2454
    %v3607 = vpack.c.b16 %v2471, %v2455
    %v3608 = vpack.c.b16 %v2472, %v2456
    %v3609 = vpack.c.b16 %v2473, %v2457
    %v3610 = vpack.c.b16 %v2474, %v2458
    %v3611 = vpack.c.b16 %v2475, %v2459
    %v3612 = vpack.c.b16 %v2476, %v2460
    %v3613 = vpack.c.b16 %v2477, %v2461
    %v3614 = vpack.c.b16 %v2478, %v2462
    %v3615 = vpack.c.b16 %v2479, %v2463
    %v3616 = vpack.c.b16 %v2480, %v2464
    %v3617 = vpack.c.b16 %v2481, %v2465
    %v3618 = vpack.c.b16 %v2482, %v2466
    %v3619 = vpack.c.b16 %v2499, %v2483
    %v3620 = vpack.c.b16 %v2500, %v2484
    %v3621 = vpack.c.b16 %v2501, %v2485
    %v3622 = vpack.c.b16 %v2502, %v2486
    %v3623 = vpack.c.b16 %v2503, %v2487
    %v3624 = vpack.c.b16 %v2504, %v2488
    %v3625 = vpack.c.b16 %v2505, %v2489
    %v3626 = vpack.c.b16 %v2506, %v2490
    %v3627 = vpack.c.b16 %v2507, %v2491
    %v3628 = vpack.c.b16 %v2508, %v2492
    %v3629 = vpack.c.b16 %v2509, %v2493
    %v3630 = vpack.c.b16 %v2510, %v2494
    %v3631 = vpack.c.b16 %v2511, %v2495
    %v3632 = vpack.c.b16 %v2512, %v2496
    %v3633 = vpack.c.b16 %v2513, %v2497
    %v3634 = vpack.c.b16 %v2514, %v2498
    %v3635 = vpack.c.b16 %v2531, %v2515
    %v3636 = vpack.c.b16 %v2532, %v2516
    %v3637 = vpack.c.b16 %v2533, %v2517
    %v3638 = vpack.c.b16 %v2534, %v2518
    %v3639 = vpack.c.b16 %v2535, %v2519
    %v3640 = vpack.c.b16 %v2536, %v2520
    %v3641 = vpack.c.b16 %v2537, %v2521
    %v3642 = vpack.c.b16 %v2538, %v2522
    %v3643 = vpack.c.b16 %v2539, %v2523
    %v3644 = vpack.c.b16 %v2540, %v2524
    %v3645 = vpack.c.b16 %v2541, %v2525
    %v3646 = vpack.c.b16 %v2542, %v2526
    %v3647 = vpack.c.b16 %v2543, %v2527
    %v3648 = vpack.c.b16 %v2544, %v2528
    %v3649 = vpack.c.b16 %v2545, %v2529
    %v3650 = vpack.c.b16 %v2546, %v2530
    %v3651 = vpack.c.b16 %v2563, %v2547
    %v3652 = vpack.c.b16 %v2564, %v2548
    %v3653 = vpack.c.b16 %v2565, %v2549
    %v3654 = vpack.c.b16 %v2566, %v2550
    %v3655 = vpack.c.b16 %v2567, %v2551
    %v3656 = vpack.c.b16 %v2568, %v2552
    %v3657 = vpack.c.b16 %v2569, %v2553
    %v3658 = vpack.c.b16 %v2570, %v2554
    %v3659 = vpack.c.b16 %v2571, %v2555
    %v3660 = vpack.c.b16 %v2572, %v2556
    %v3661 = vpack.c.b16 %v2573, %v2557
    %v3662 = vpack.c.b16 %v2574, %v2558
    %v3663 = vpack.c.b16 %v2575, %v2559
    %v3664 = vpack.c.b16 %v2576, %v2560
    %v3665 = vpack.c.b16 %v2577, %v2561
    %v3666 = vpack.c.b16 %v2578, %v2562
    %v3667 = vpack.c.b16 %v2595, %v2579
    %v3668 = vpack.c.b16 %v2596, %v2580
    %v3669 = vpack.c.b16 %v2597, %v2581
    %v3670 = vpack.c.b16 %v2598, %v2582
    %v3671 = vpack.c.b16 %v2599, %v2583
    %v3672 = vpack.c.b16 %v2600, %v2584
    %v3673 = vpack.c.b16 %v2601, %v2585
    %v3674 = vpack.c.b16 %v2602, %v2586
    %v3675 = vpack.c.b16 %v2603, %v2587
    %v3676 = vpack.c.b16 %v2604, %v2588
    %v3677 = vpack.c.b16 %v2605, %v2589
    %v3678 = vpack.c.b16 %v2606, %v2590
    %v3679 = vpack.c.b16 %v2607, %v2591
    %v3680 = vpack.c.b16 %v2608, %v2592
    %v3681 = vpack.c.b16 %v2609, %v2593
    %v3682 = vpack.c.b16 %v2610, %v2594
    %v3683 = vpack.c.b16 %v2627, %v2611
    %v3684 = vpack.c.b16 %v2628, %v2612
    %v3685 = vpack.c.b16 %v2629, %v2613
    %v3686 = vpack.c.b16 %v2630, %v2614
    %v3687 = vpack.c.b16 %v2631, %v2615
    %v3688 = vpack.c.b16 %v2632, %v2616
    %v3689 = vpack.c.b16 %v2633, %v2617
    %v3690 = vpack.c.b16 %v2634, %v2618
    %v3691 = vpack.c.b16 %v2635, %v2619
    %v3692 = vpack.c.b16 %v2636, %v2620
    %v3693 = vpack.c.b16 %v2637, %v2621
    %v3694 = vpack.c.b16 %v2638, %v2622
    %v3695 = vpack.c.b16 %v2639, %v2623
    %v3696 = vpack.c.b16 %v2640, %v2624
    %v3697 = vpack.c.b16 %v2641, %v2625
    %v3698 = vpack.c.b16 %v2642, %v2626
    %v3699 = vpack.c.b16 %v2659, %v2643
    %v3700 = vpack.c.b16 %v2660, %v2644
    %v3701 = vpack.c.b16 %v2661, %v2645
    %v3702 = vpack.c.b16 %v2662, %v2646
    %v3703 = vpack.c.b16 %v2663, %v2647
    %v3704 = vpack.c.b16 %v2664, %v2648
    %v3705 = vpack.c.b16 %v2665, %v2649
    %v3706 = vpack.c.b16 %v2666, %v2650
    %v3707 = vpack.c.b16 %v2667, %v2651
    %v3708 = vpack.c.b16 %v2668, %v2652
    %v3709 = vpack.c.b16 %v2669, %v2653
    %v3710 = vpack.c.b16 %v2670, %v2654
    %v3711 = vpack.c.b16 %v2671, %v2655
    %v3712 = vpack.c.b16 %v2672, %v2656
    %v3713 = vpack.c.b16 %v2673, %v2657
    %v3714 = vpack.c.b16 %v2674, %v2658
    %v3715 = vpack.c.b16 %v2691, %v2675
    %v3716 = vpack.c.b16 %v2692, %v2676
    %v3717 = vpack.c.b16 %v2693, %v2677
    %v3718 = vpack.c.b16 %v2694, %v2678
    %v3719 = vpack.c.b16 %v2695, %v2679
    %v3720 = vpack.c.b16 %v2696, %v2680
    %v3721 = vpack.c.b16 %v2697, %v2681
    %v3722 = vpack.c.b16 %v2698, %v2682
    %v3723 = vpack.c.b16 %v2699, %v2683
    %v3724 = vpack.c.b16 %v2700, %v2684
    %v3725 = vpack.c.b16 %v2701, %v2685
    %v3726 = vpack.c.b16 %v2702, %v2686
    %v3727 = vpack.c.b16 %v2703, %v2687
    %v3728 = vpack.c.b16 %v2704, %v2688
    %v3729 = vpack.c.b16 %v2705, %v2689
    %v3730 = vpack.c.b16 %v2706, %v2690
    %v3731 = vpack.c.b16 %v2723, %v2707
    %v3732 = vpack.c.b16 %v2724, %v2708
    %v3733 = vpack.c.b16 %v2725, %v2709
    %v3734 = vpack.c.b16 %v2726, %v2710
    %v3735 = vpack.c.b16 %v2727, %v2711
    %v3736 = vpack.c.b16 %v2728, %v2712
    %v3737 = vpack.c.b16 %v2729, %v2713
    %v3738 = vpack.c.b16 %v2730, %v2714
    %v3739 = vpack.c.b16 %v2731, %v2715
    %v3740 = vpack.c.b16 %v2732, %v2716
    %v3741 = vpack.c.b16 %v2733, %v2717
    %v3742 = vpack.c.b16 %v2734, %v2718
    %v3743 = vpack.c.b16 %v2735, %v2719
    %v3744 = vpack.c.b16 %v2736, %v2720
    %v3745 = vpack.c.b16 %v2737, %v2721
    %v3746 = vpack.c.b16 %v2738, %v2722
    %v3747 = vpack.c.b16 %v2755, %v2739
    %v3748 = vpack.c.b16 %v2756, %v2740
    %v3749 = vpack.c.b16 %v2757, %v2741
    %v3750 = vpack.c.b16 %v2758, %v2742
    %v3751 = vpack.c.b16 %v2759, %v2743
    %v3752 = vpack.c.b16 %v2760, %v2744
    %v3753 = vpack.c.b16 %v2761, %v2745
    %v3754 = vpack.c.b16 %v2762, %v2746
    %v3755 = vpack.c.b16 %v2763, %v2747
    %v3756 = vpack.c.b16 %v2764, %v2748
    %v3757 = vpack.c.b16 %v2765, %v2749
    %v3758 = vpack.c.b16 %v2766, %v2750
    %v3759 = vpack.c.b16 %v2767, %v2751
    %v3760 = vpack.c.b16 %v2768, %v2752
    %v3761 = vpack.c.b16 %v2769, %v2753
    %v3762 = vpack.c.b16 %v2770, %v2754
    %v3763 = vpack.c.b16 %v2787, %v2771
    %v3764 = vpack.c.b16 %v2788, %v2772
    %v3765 = vpack.c.b16 %v2789, %v2773
    %v3766 = vpack.c.b16 %v2790, %v2774
    %v3767 = vpack.c.b16 %v2791, %v2775
    %v3768 = vpack.c.b16 %v2792, %v2776
    %v3769 = vpack.c.b16 %v2793, %v2777
    %v3770 = vpack.c.b16 %v2794, %v2778
    %v3771 = vpack.c.b16 %v2795, %v2779
    %v3772 = vpack.c.b16 %v2796, %v2780
    %v3773 = vpack.c.b16 %v2797, %v2781
    %v3774 = vpack.c.b16 %v2798, %v2782
    %v3775 = vpack.c.b16 %v2799, %v2783
    %v3776 = vpack.c.b16 %v2800, %v2784
    %v3777 = vpack.c.b16 %v2801, %v2785
    %v3778 = vpack.c.b16 %v2802, %v2786
    %v3779 = vpack.c.b16 %v2819, %v2803
    %v3780 = vpack.c.b16 %v2820, %v2804
    %v3781 = vpack.c.b16 %v2821, %v2805
    %v3782 = vpack.c.b16 %v2822, %v2806
    %v3783 = vpack.c.b16 %v2823, %v2807
    %v3784 = vpack.c.b16 %v2824, %v2808
    %v3785 = vpack.c.b16 %v2825, %v2809
    %v3786 = vpack.c.b16 %v2826, %v2810
    %v3787 = vpack.c.b16 %v2827, %v2811
    %v3788 = vpack.c.b16 %v2828, %v2812
    %v3789 = vpack.c.b16 %v2829, %v2813
    %v3790 = vpack.c.b16 %v2830, %v2814
    %v3791 = vpack.c.b16 %v2831, %v2815
    %v3792 = vpack.c.b16 %v2832, %v2816
    %v3793 = vpack.c.b16 %v2833, %v2817
    %v3794 = vpack.c.b16 %v2834, %v2818
    %v3795 = vpack.c.b16 %v2851, %v2835
    %v3796 = vpack.c.b16 %v2852, %v2836
    %v3797 = vpack.c.b16 %v2853, %v2837
    %v3798 = vpack.c.b16 %v2854, %v2838
    %v3799 = vpack.c.b16 %v2855, %v2839
    %v3800 = vpack.c.b16 %v2856, %v2840
    %v3801 = vpack.c.b16 %v2857, %v2841
    %v3802 = vpack.c.b16 %v2858, %v2842
    %v3803 = vpack.c.b16 %v2859, %v2843
    %v3804 = vpack.c.b16 %v2860, %v2844
    %v3805 = vpack.c.b16 %v2861, %v2845
    %v3806 = vpack.c.b16 %v2862, %v2846
    %v3807 = vpack.c.b16 %v2863, %v2847
    %v3808 = vpack.c.b16 %v2864, %v2848
    %v3809 = vpack.c.b16 %v2865, %v2849
    %v3810 = vpack.c.b16 %v2866, %v2850
    %v3811 = vpack.c.b16 %v2883, %v2867
    %v3812 = vpack.c.b16 %v2884, %v2868
    %v3813 = vpack.c.b16 %v2885, %v2869
    %v3814 = vpack.c.b16 %v2886, %v2870
    %v3815 = vpack.c.b16 %v2887, %v2871
    %v3816 = vpack.c.b16 %v2888, %v2872
    %v3817 = vpack.c.b16 %v2889, %v2873
    %v3818 = vpack.c.b16 %v2890, %v2874
    %v3819 = vpack.c.b16 %v2891, %v2875
    %v3820 = vpack.c.b16 %v2892, %v2876
    %v3821 = vpack.c.b16 %v2893, %v2877
    %v3822 = vpack.c.b16 %v2894, %v2878
    %v3823 = vpack.c.b16 %v2895, %v2879
    %v3824 = vpack.c.b16 %v2896, %v2880
    %v3825 = vpack.c.b16 %v2897, %v2881
    %v3826 = vpack.c.b16 %v2898, %v2882
    %v3827 = vpack.c.b16 %v2915, %v2899
    %v3828 = vpack.c.b16 %v2916, %v2900
    %v3829 = vpack.c.b16 %v2917, %v2901
    %v3830 = vpack.c.b16 %v2918, %v2902
    %v3831 = vpack.c.b16 %v2919, %v2903
    %v3832 = vpack.c.b16 %v2920, %v2904
    %v3833 = vpack.c.b16 %v2921, %v2905
    %v3834 = vpack.c.b16 %v2922, %v2906
    %v3835 = vpack.c.b16 %v2923, %v2907
    %v3836 = vpack.c.b16 %v2924, %v2908
    %v3837 = vpack.c.b16 %v2925, %v2909
    %v3838 = vpack.c.b16 %v2926, %v2910
    %v3839 = vpack.c.b16 %v2927, %v2911
    %v3840 = vpack.c.b16 %v2928, %v2912
    %v3841 = vpack.c.b16 %v2929, %v2913
    %v3842 = vpack.c.b16 %v2930, %v2914
    %v3843 = vpack.c.b16 %v2947, %v2931
    %v3844 = vpack.c.b16 %v2948, %v2932
    %v3845 = vpack.c.b16 %v2949, %v2933
    %v3846 = vpack.c.b16 %v2950, %v2934
    %v3847 = vpack.c.b16 %v2951, %v2935
    %v3848 = vpack.c.b16 %v2952, %v2936
    %v3849 = vpack.c.b16 %v2953, %v2937
    %v3850 = vpack.c.b16 %v2954, %v2938
    %v3851 = vpack.c.b16 %v2955, %v2939
    %v3852 = vpack.c.b16 %v2956, %v2940
    %v3853 = vpack.c.b16 %v2957, %v2941
    %v3854 = vpack.c.b16 %v2958, %v2942
    %v3855 = vpack.c.b16 %v2959, %v2943
    %v3856 = vpack.c.b16 %v2960, %v2944
    %v3857 = vpack.c.b16 %v2961, %v2945
    %v3858 = vpack.c.b16 %v2962, %v2946
    %v3859 = vpack.c.b16 %v2979, %v2963
    %v3860 = vpack.c.b16 %v2980, %v2964
    %v3861 = vpack.c.b16 %v2981, %v2965
    %v3862 = vpack.c.b16 %v2982, %v2966
    %v3863 = vpack.c.b16 %v2983, %v2967
    %v3864 = vpack.c.b16 %v2984, %v2968
    %v3865 = vpack.c.b16 %v2985, %v2969
    %v3866 = vpack.c.b16 %v2986, %v2970
    %v3867 = vpack.c.b16 %v2987, %v2971
    %v3868 = vpack.c.b16 %v2988, %v2972
    %v3869 = vpack.c.b16 %v2989, %v2973
    %v3870 = vpack.c.b16 %v2990, %v2974
    %v3871 = vpack.c.b16 %v2991, %v2975
    %v3872 = vpack.c.b16 %v2992, %v2976
    %v3873 = vpack.c.b16 %v2993, %v2977
    %v3874 = vpack.c.b16 %v2994, %v2978
    %v3875 = vpack.c.b16 %v3011, %v2995
    %v3876 = vpack.c.b16 %v3012, %v2996
    %v3877 = vpack.c.b16 %v3013, %v2997
    %v3878 = vpack.c.b16 %v3014, %v2998
    %v3879 = vpack.c.b16 %v3015, %v2999
    %v3880 = vpack.c.b16 %v3016, %v3000
    %v3881 = vpack.c.b16 %v3017, %v3001
    %v3882 = vpack.c.b16 %v3018, %v3002
    %v3883 = vpack.c.b16 %v3019, %v3003
    %v3884 = vpack.c.b16 %v3020, %v3004
    %v3885 = vpack.c.b16 %v3021, %v3005
    %v3886 = vpack.c.b16 %v3022, %v3006
    %v3887 = vpack.c.b16 %v3023, %v3007
    %v3888 = vpack.c.b16 %v3024, %v3008
    %v3889 = vpack.c.b16 %v3025, %v3009
    %v3890 = vpack.c.b16 %v3026, %v3010
    %v3891 = vpack.c.b16 %v3043, %v3027
    %v3892 = vpack.c.b16 %v3044, %v3028
    %v3893 = vpack.c.b16 %v3045, %v3029
    %v3894 = vpack.c.b16 %v3046, %v3030
    %v3895 = vpack.c.b16 %v3047, %v3031
    %v3896 = vpack.c.b16 %v3048, %v3032
    %v3897 = vpack.c.b16 %v3049, %v3033
    %v3898 = vpack.c.b16 %v3050, %v3034
    %v3899 = vpack.c.b16 %v3051, %v3035
    %v3900 = vpack.c.b16 %v3052, %v3036
    %v3901 = vpack.c.b16 %v3053, %v3037
    %v3902 = vpack.c.b16 %v3054, %v3038
    %v3903 = vpack.c.b16 %v3055, %v3039
    %v3904 = vpack.c.b16 %v3056, %v3040
    %v3905 = vpack.c.b16 %v3057, %v3041
    %v3906 = vpack.c.b16 %v3058, %v3042
    %v3907 = vpack.c.b16 %v3075, %v3059
    %v3908 = vpack.c.b16 %v3076, %v3060
    %v3909 = vpack.c.b16 %v3077, %v3061
    %v3910 = vpack.c.b16 %v3078, %v3062
    %v3911 = vpack.c.b16 %v3079, %v3063
    %v3912 = vpack.c.b16 %v3080, %v3064
    %v3913 = vpack.c.b16 %v3081, %v3065
    %v3914 = vpack.c.b16 %v3082, %v3066
    %v3915 = vpack.c.b16 %v3083, %v3067
    %v3916 = vpack.c.b16 %v3084, %v3068
    %v3917 = vpack.c.b16 %v3085, %v3069
    %v3918 = vpack.c.b16 %v3086, %v3070
    %v3919 = vpack.c.b16 %v3087, %v3071
    %v3920 = vpack.c.b16 %v3088, %v3072
    %v3921 = vpack.c.b16 %v3089, %v3073
    %v3922 = vpack.c.b16 %v3090, %v3074
    %v3923 = vpack.c.b16 %v3107, %v3091
    %v3924 = vpack.c.b16 %v3108, %v3092
    %v3925 = vpack.c.b16 %v3109, %v3093
    %v3926 = vpack.c.b16 %v3110, %v3094
    %v3927 = vpack.c.b16 %v3111, %v3095
    %v3928 = vpack.c.b16 %v3112, %v3096
    %v3929 = vpack.c.b16 %v3113, %v3097
    %v3930 = vpack.c.b16 %v3114, %v3098
    %v3931 = vpack.c.b16 %v3115, %v3099
    %v3932 = vpack.c.b16 %v3116, %v3100
    %v3933 = vpack.c.b16 %v3117, %v3101
    %v3934 = vpack.c.b16 %v3118, %v3102
    %v3935 = vpack.c.b16 %v3119, %v3103
    %v3936 = vpack.c.b16 %v3120, %v3104
    %v3937 = vpack.c.b16 %v3121, %v3105
    %v3938 = vpack.c.b16 %v3122, %v3106
    %v3939 = vpack.c.b16 %v3139, %v3123
    %v3940 = vpack.c.b16 %v3140, %v3124
    %v3941 = vpack.c.b16 %v3141, %v3125
    %v3942 = vpack.c.b16 %v3142, %v3126
    %v3943 = vpack.c.b16 %v3143, %v3127
    %v3944 = vpack.c.b16 %v3144, %v3128
    %v3945 = vpack.c.b16 %v3145, %v3129
    %v3946 = vpack.c.b16 %v3146, %v3130
    %v3947 = vpack.c.b16 %v3147, %v3131
    %v3948 = vpack.c.b16 %v3148, %v3132
    %v3949 = vpack.c.b16 %v3149, %v3133
    %v3950 = vpack.c.b16 %v3150, %v3134
    %v3951 = vpack.c.b16 %v3151, %v3135
    %v3952 = vpack.c.b16 %v3152, %v3136
    %v3953 = vpack.c.b16 %v3153, %v3137
    %v3954 = vpack.c.b16 %v3154, %v3138
    %v3955 = vpack.c.b16 %v3171, %v3155
    %v3956 = vpack.c.b16 %v3172, %v3156
    %v3957 = vpack.c.b16 %v3173, %v3157
    %v3958 = vpack.c.b16 %v3174, %v3158
    %v3959 = vpack.c.b16 %v3175, %v3159
    %v3960 = vpack.c.b16 %v3176, %v3160
    %v3961 = vpack.c.b16 %v3177, %v3161
    %v3962 = vpack.c.b16 %v3178, %v3162
    %v3963 = vpack.c.b16 %v3179, %v3163
    %v3964 = vpack.c.b16 %v3180, %v3164
    %v3965 = vpack.c.b16 %v3181, %v3165
    %v3966 = vpack.c.b16 %v3182, %v3166
    %v3967 = vpack.c.b16 %v3183, %v3167
    %v3968 = vpack.c.b16 %v3184, %v3168
    %v3969 = vpack.c.b16 %v3185, %v3169
    %v3970 = vpack.c.b16 %v3186, %v3170
    %v3971 = vpack.c.b16 %v3203, %v3187
    %v3972 = vpack.c.b16 %v3204, %v3188
    %v3973 = vpack.c.b16 %v3205, %v3189
    %v3974 = vpack.c.b16 %v3206, %v3190
    %v3975 = vpack.c.b16 %v3207, %v3191
    %v3976 = vpack.c.b16 %v3208, %v3192
    %v3977 = vpack.c.b16 %v3209, %v3193
    %v3978 = vpack.c.b16 %v3210, %v3194
    %v3979 = vpack.c.b16 %v3211, %v3195
    %v3980 = vpack.c.b16 %v3212, %v3196
    %v3981 = vpack.c.b16 %v3213, %v3197
    %v3982 = vpack.c.b16 %v3214, %v3198
    %v3983 = vpack.c.b16 %v3215, %v3199
    %v3984 = vpack.c.b16 %v3216, %v3200
    %v3985 = vpack.c.b16 %v3217, %v3201
    %v3986 = vpack.c.b16 %v3218, %v3202
    %4755 = vmatprep.subr.bf16.mxu0 %v3332
    %4756 = vmatpush1.bf16.msra.mxu0 %v3331
    %4757 = vmatprep.subr.bf16.mxu0 %v3316
    %4758 = vmatpush1.bf16.msra.mxu0 %v3315
    %4759 = vmatprep.subr.bf16.mxu0 %v3300
    %4760 = vmatpush1.bf16.msra.mxu0 %v3299
    %4761 = vmatprep.subr.bf16.mxu0 %v3284
    %4762 = vmatpush1.bf16.msra.mxu0 %v3283
    %4763 = vmatprep.subr.bf16.mxu0 %v3268
    %4764 = vmatpush1.bf16.msra.mxu0 %v3267
    %4765 = vmatprep.subr.bf16.mxu0 %v3252
    %4766 = vmatpush1.bf16.msra.mxu0 %v3251
    %4767 = vmatprep.subr.bf16.mxu0 %v3236
    %4768 = vmatpush1.bf16.msra.mxu0 %v3235
    %4769 = vmatprep.subr.bf16.mxu0 %v3220
    %4770 = vmatpush1.bf16.msra.mxu0 %v3219
    %4771 = vmatprep.subr.bf16.mxu0 %v3460
    %4772 = vmatpush2.bf16.msra.mxu0 %v3459
    %4773 = vmatprep.subr.bf16.mxu0 %v3444
    %4774 = vmatpush2.bf16.msra.mxu0 %v3443
    %4775 = vmatprep.subr.bf16.mxu0 %v3428
    %4776 = vmatpush2.bf16.msra.mxu0 %v3427
    %4777 = vmatprep.subr.bf16.mxu0 %v3412
    %4778 = vmatpush2.bf16.msra.mxu0 %v3411
    %4779 = vmatprep.subr.bf16.mxu0 %v3396
    %4780 = vmatpush2.bf16.msra.mxu0 %v3395
    %4781 = vmatprep.subr.bf16.mxu0 %v3380
    %4782 = vmatpush2.bf16.msra.mxu0 %v3379
    %4783 = vmatprep.subr.bf16.mxu0 %v3364
    %4784 = vmatpush2.bf16.msra.mxu0 %v3363
    %4785 = vmatprep.subr.bf16.mxu0 %v3348
    %4786 = vmatpush2.bf16.msra.mxu0 %v3347
    %4787 = vmatprep.mubr.bf16.mxu0 %v142
    %4788 = vmatmul.mubr.bf16.gmra.mxu0 %v141
    %v4789 = vpop.f32.mrf.mxu0
    %v4790 = vadd.f32 0.0, %v4789
    %v4791 = vpop.f32.mrf.mxu0
    %v4792 = vadd.f32 0.0, %v4791
    %v4793 = vpop.f32.mrf.mxu0
    %v4794 = vpop.f32.mrf.mxu0
    %4795 = vdwg.mxu0
    %4796 = vmatprep.subr.bf16.mxu0 %v3588
    %4797 = vmatpush1.bf16.msra.mxu0 %v3587
    %4798 = vmatprep.subr.bf16.mxu0 %v3572
    %4799 = vmatpush1.bf16.msra.mxu0 %v3571
    %4800 = vmatprep.subr.bf16.mxu0 %v3556
    %4801 = vmatpush1.bf16.msra.mxu0 %v3555
    %4802 = vmatprep.subr.bf16.mxu0 %v3540
    %4803 = vmatpush1.bf16.msra.mxu0 %v3539
    %4804 = vmatprep.subr.bf16.mxu0 %v3524
    %4805 = vmatpush1.bf16.msra.mxu0 %v3523
    %4806 = vmatprep.subr.bf16.mxu0 %v3508
    %4807 = vmatpush1.bf16.msra.mxu0 %v3507
    %4808 = vmatprep.subr.bf16.mxu0 %v3492
    %4809 = vmatpush1.bf16.msra.mxu0 %v3491
    %4810 = vmatprep.subr.bf16.mxu0 %v3476
    %4811 = vmatpush1.bf16.msra.mxu0 %v3475
    %4812 = vmatprep.subr.bf16.mxu0 %v3716
    %4813 = vmatpush2.bf16.msra.mxu0 %v3715
    %4814 = vmatprep.subr.bf16.mxu0 %v3700
    %4815 = vmatpush2.bf16.msra.mxu0 %v3699
    %4816 = vmatprep.subr.bf16.mxu0 %v3684
    %4817 = vmatpush2.bf16.msra.mxu0 %v3683
    %4818 = vmatprep.subr.bf16.mxu0 %v3668
    %4819 = vmatpush2.bf16.msra.mxu0 %v3667
    %4820 = vmatprep.subr.bf16.mxu0 %v3652
    %4821 = vmatpush2.bf16.msra.mxu0 %v3651
    %4822 = vmatprep.subr.bf16.mxu0 %v3636
    %4823 = vmatpush2.bf16.msra.mxu0 %v3635
    %4824 = vmatprep.subr.bf16.mxu0 %v3620
    %4825 = vmatpush2.bf16.msra.mxu0 %v3619
    %4826 = vmatprep.subr.bf16.mxu0 %v3604
    %4827 = vmatpush2.bf16.msra.mxu0 %v3603
    %4828 = vmatprep.mubr.bf16.mxu0 %v144
    %4829 = vmatmul.mubr.bf16.gmra.mxu0 %v143
    %v4830 = vpop.f32.mrf.mxu0
    %v4831 = vadd.f32 %v4790, %v4830
    %v4832 = vpop.f32.mrf.mxu0
    %v4833 = vadd.f32 %v4792, %v4832
    %v4834 = vpop.f32.mrf.mxu0
    %v4835 = vpop.f32.mrf.mxu0
    %4836 = vdwg.mxu0
    %4837 = vmatprep.subr.bf16.mxu0 %v3844
    %4838 = vmatpush1.bf16.msra.mxu0 %v3843
    %4839 = vmatprep.subr.bf16.mxu0 %v3828
    %4840 = vmatpush1.bf16.msra.mxu0 %v3827
    %4841 = vmatprep.subr.bf16.mxu0 %v3812
    %4842 = vmatpush1.bf16.msra.mxu0 %v3811
    %4843 = vmatprep.subr.bf16.mxu0 %v3796
    %4844 = vmatpush1.bf16.msra.mxu0 %v3795
    %4845 = vmatprep.subr.bf16.mxu0 %v3780
    %4846 = vmatpush1.bf16.msra.mxu0 %v3779
    %4847 = vmatprep.subr.bf16.mxu0 %v3764
    %4848 = vmatpush1.bf16.msra.mxu0 %v3763
    %4849 = vmatprep.subr.bf16.mxu0 %v3748
    %4850 = vmatpush1.bf16.msra.mxu0 %v3747
    %4851 = vmatprep.subr.bf16.mxu0 %v3732
    %4852 = vmatpush1.bf16.msra.mxu0 %v3731
    %4853 = vmatprep.subr.bf16.mxu0 %v3972
    %4854 = vmatpush2.bf16.msra.mxu0 %v3971
    %4855 = vmatprep.subr.bf16.mxu0 %v3956
    %4856 = vmatpush2.bf16.msra.mxu0 %v3955
    %4857 = vmatprep.subr.bf16.mxu0 %v3940
    %4858 = vmatpush2.bf16.msra.mxu0 %v3939
    %4859 = vmatprep.subr.bf16.mxu0 %v3924
    %4860 = vmatpush2.bf16.msra.mxu0 %v3923
    %4861 = vmatprep.subr.bf16.mxu0 %v3908
    %4862 = vmatpush2.bf16.msra.mxu0 %v3907
    %4863 = vmatprep.subr.bf16.mxu0 %v3892
    %4864 = vmatpush2.bf16.msra.mxu0 %v3891
    %4865 = vmatprep.subr.bf16.mxu0 %v3876
    %4866 = vmatpush2.bf16.msra.mxu0 %v3875
    %4867 = vmatprep.subr.bf16.mxu0 %v3860
    %4868 = vmatpush2.bf16.msra.mxu0 %v3859
    %4869 = vmatprep.mubr.bf16.mxu0 %v146
    %4870 = vmatmul.mubr.bf16.gmra.mxu0 %v145
    %v4871 = vpop.f32.mrf.mxu0
    %v4872 = vadd.f32 %v4831, %v4871
    %v4873 = vpop.f32.mrf.mxu0
    %v4874 = vadd.f32 %v4833, %v4873
    %v4875 = vpop.f32.mrf.mxu0
    %v4876 = vpop.f32.mrf.mxu0
    %4877 = vdwg.mxu0
    %4878 = vmatprep.subr.bf16.mxu0 %v3334
    %4879 = vmatpush1.bf16.msra.mxu0 %v3333
    %4880 = vmatprep.subr.bf16.mxu0 %v3318
    %4881 = vmatpush1.bf16.msra.mxu0 %v3317
    %4882 = vmatprep.subr.bf16.mxu0 %v3302
    %4883 = vmatpush1.bf16.msra.mxu0 %v3301
    %4884 = vmatprep.subr.bf16.mxu0 %v3286
    %4885 = vmatpush1.bf16.msra.mxu0 %v3285
    %4886 = vmatprep.subr.bf16.mxu0 %v3270
    %4887 = vmatpush1.bf16.msra.mxu0 %v3269
    %4888 = vmatprep.subr.bf16.mxu0 %v3254
    %4889 = vmatpush1.bf16.msra.mxu0 %v3253
    %4890 = vmatprep.subr.bf16.mxu0 %v3238
    %4891 = vmatpush1.bf16.msra.mxu0 %v3237
    %4892 = vmatprep.subr.bf16.mxu0 %v3222
    %4893 = vmatpush1.bf16.msra.mxu0 %v3221
    %4894 = vmatprep.subr.bf16.mxu0 %v3462
    %4895 = vmatpush2.bf16.msra.mxu0 %v3461
    %4896 = vmatprep.subr.bf16.mxu0 %v3446
    %4897 = vmatpush2.bf16.msra.mxu0 %v3445
    %4898 = vmatprep.subr.bf16.mxu0 %v3430
    %4899 = vmatpush2.bf16.msra.mxu0 %v3429
    %4900 = vmatprep.subr.bf16.mxu0 %v3414
    %4901 = vmatpush2.bf16.msra.mxu0 %v3413
    %4902 = vmatprep.subr.bf16.mxu0 %v3398
    %4903 = vmatpush2.bf16.msra.mxu0 %v3397
    %4904 = vmatprep.subr.bf16.mxu0 %v3382
    %4905 = vmatpush2.bf16.msra.mxu0 %v3381
    %4906 = vmatprep.subr.bf16.mxu0 %v3366
    %4907 = vmatpush2.bf16.msra.mxu0 %v3365
    %4908 = vmatprep.subr.bf16.mxu0 %v3350
    %4909 = vmatpush2.bf16.msra.mxu0 %v3349
    %4910 = vmatprep.mubr.bf16.mxu0 %v142
    %4911 = vmatmul.mubr.bf16.gmra.mxu0 %v141
    %v4912 = vpop.f32.mrf.mxu0
    %v4913 = vadd.f32 0.0, %v4912
    %v4914 = vpop.f32.mrf.mxu0
    %v4915 = vadd.f32 0.0, %v4914
    %v4916 = vpop.f32.mrf.mxu0
    %v4917 = vpop.f32.mrf.mxu0
    %4918 = vdwg.mxu0
    %4919 = vmatprep.subr.bf16.mxu0 %v3590
    %4920 = vmatpush1.bf16.msra.mxu0 %v3589
    %4921 = vmatprep.subr.bf16.mxu0 %v3574
    %4922 = vmatpush1.bf16.msra.mxu0 %v3573
    %4923 = vmatprep.subr.bf16.mxu0 %v3558
    %4924 = vmatpush1.bf16.msra.mxu0 %v3557
    %4925 = vmatprep.subr.bf16.mxu0 %v3542
    %4926 = vmatpush1.bf16.msra.mxu0 %v3541
    %4927 = vmatprep.subr.bf16.mxu0 %v3526
    %4928 = vmatpush1.bf16.msra.mxu0 %v3525
    %4929 = vmatprep.subr.bf16.mxu0 %v3510
    %4930 = vmatpush1.bf16.msra.mxu0 %v3509
    %4931 = vmatprep.subr.bf16.mxu0 %v3494
    %4932 = vmatpush1.bf16.msra.mxu0 %v3493
    %4933 = vmatprep.subr.bf16.mxu0 %v3478
    %4934 = vmatpush1.bf16.msra.mxu0 %v3477
    %4935 = vmatprep.subr.bf16.mxu0 %v3718
    %4936 = vmatpush2.bf16.msra.mxu0 %v3717
    %4937 = vmatprep.subr.bf16.mxu0 %v3702
    %4938 = vmatpush2.bf16.msra.mxu0 %v3701
    %4939 = vmatprep.subr.bf16.mxu0 %v3686
    %4940 = vmatpush2.bf16.msra.mxu0 %v3685
    %4941 = vmatprep.subr.bf16.mxu0 %v3670
    %4942 = vmatpush2.bf16.msra.mxu0 %v3669
    %4943 = vmatprep.subr.bf16.mxu0 %v3654
    %4944 = vmatpush2.bf16.msra.mxu0 %v3653
    %4945 = vmatprep.subr.bf16.mxu0 %v3638
    %4946 = vmatpush2.bf16.msra.mxu0 %v3637
    %4947 = vmatprep.subr.bf16.mxu0 %v3622
    %4948 = vmatpush2.bf16.msra.mxu0 %v3621
    %4949 = vmatprep.subr.bf16.mxu0 %v3606
    %4950 = vmatpush2.bf16.msra.mxu0 %v3605
    %4951 = vmatprep.mubr.bf16.mxu0 %v144
    %4952 = vmatmul.mubr.bf16.gmra.mxu0 %v143
    %v4953 = vpop.f32.mrf.mxu0
    %v4954 = vadd.f32 %v4913, %v4953
    %v4955 = vpop.f32.mrf.mxu0
    %v4956 = vadd.f32 %v4915, %v4955
    %v4957 = vpop.f32.mrf.mxu0
    %v4958 = vpop.f32.mrf.mxu0
    %4959 = vdwg.mxu0
    %4960 = vmatprep.subr.bf16.mxu0 %v3846
    %4961 = vmatpush1.bf16.msra.mxu0 %v3845
    %4962 = vmatprep.subr.bf16.mxu0 %v3830
    %4963 = vmatpush1.bf16.msra.mxu0 %v3829
    %4964 = vmatprep.subr.bf16.mxu0 %v3814
    %4965 = vmatpush1.bf16.msra.mxu0 %v3813
    %4966 = vmatprep.subr.bf16.mxu0 %v3798
    %4967 = vmatpush1.bf16.msra.mxu0 %v3797
    %4968 = vmatprep.subr.bf16.mxu0 %v3782
    %4969 = vmatpush1.bf16.msra.mxu0 %v3781
    %4970 = vmatprep.subr.bf16.mxu0 %v3766
    %4971 = vmatpush1.bf16.msra.mxu0 %v3765
    %4972 = vmatprep.subr.bf16.mxu0 %v3750
    %4973 = vmatpush1.bf16.msra.mxu0 %v3749
    %4974 = vmatprep.subr.bf16.mxu0 %v3734
    %4975 = vmatpush1.bf16.msra.mxu0 %v3733
    %4976 = vmatprep.subr.bf16.mxu0 %v3974
    %4977 = vmatpush2.bf16.msra.mxu0 %v3973
    %4978 = vmatprep.subr.bf16.mxu0 %v3958
    %4979 = vmatpush2.bf16.msra.mxu0 %v3957
    %4980 = vmatprep.subr.bf16.mxu0 %v3942
    %4981 = vmatpush2.bf16.msra.mxu0 %v3941
    %4982 = vmatprep.subr.bf16.mxu0 %v3926
    %4983 = vmatpush2.bf16.msra.mxu0 %v3925
    %4984 = vmatprep.subr.bf16.mxu0 %v3910
    %4985 = vmatpush2.bf16.msra.mxu0 %v3909
    %4986 = vmatprep.subr.bf16.mxu0 %v3894
    %4987 = vmatpush2.bf16.msra.mxu0 %v3893
    %4988 = vmatprep.subr.bf16.mxu0 %v3878
    %4989 = vmatpush2.bf16.msra.mxu0 %v3877
    %4990 = vmatprep.subr.bf16.mxu0 %v3862
    %4991 = vmatpush2.bf16.msra.mxu0 %v3861
    %4992 = vmatprep.mubr.bf16.mxu0 %v146
    %4993 = vmatmul.mubr.bf16.gmra.mxu0 %v145
    %v4994 = vpop.f32.mrf.mxu0
    %v4995 = vadd.f32 %v4954, %v4994
    %v4996 = vpop.f32.mrf.mxu0
    %v4997 = vadd.f32 %v4956, %v4996
    %v4998 = vpop.f32.mrf.mxu0
    %v4999 = vpop.f32.mrf.mxu0
    %5000 = vdwg.mxu0
    %5001 = vmatprep.subr.bf16.mxu0 %v3336
    %5002 = vmatpush1.bf16.msra.mxu0 %v3335
    %5003 = vmatprep.subr.bf16.mxu0 %v3320
    %5004 = vmatpush1.bf16.msra.mxu0 %v3319
    %5005 = vmatprep.subr.bf16.mxu0 %v3304
    %5006 = vmatpush1.bf16.msra.mxu0 %v3303
    %5007 = vmatprep.subr.bf16.mxu0 %v3288
    %5008 = vmatpush1.bf16.msra.mxu0 %v3287
    %5009 = vmatprep.subr.bf16.mxu0 %v3272
    %5010 = vmatpush1.bf16.msra.mxu0 %v3271
    %5011 = vmatprep.subr.bf16.mxu0 %v3256
    %5012 = vmatpush1.bf16.msra.mxu0 %v3255
    %5013 = vmatprep.subr.bf16.mxu0 %v3240
    %5014 = vmatpush1.bf16.msra.mxu0 %v3239
    %5015 = vmatprep.subr.bf16.mxu0 %v3224
    %5016 = vmatpush1.bf16.msra.mxu0 %v3223
    %5017 = vmatprep.subr.bf16.mxu0 %v3464
    %5018 = vmatpush2.bf16.msra.mxu0 %v3463
    %5019 = vmatprep.subr.bf16.mxu0 %v3448
    %5020 = vmatpush2.bf16.msra.mxu0 %v3447
    %5021 = vmatprep.subr.bf16.mxu0 %v3432
    %5022 = vmatpush2.bf16.msra.mxu0 %v3431
    %5023 = vmatprep.subr.bf16.mxu0 %v3416
    %5024 = vmatpush2.bf16.msra.mxu0 %v3415
    %5025 = vmatprep.subr.bf16.mxu0 %v3400
    %5026 = vmatpush2.bf16.msra.mxu0 %v3399
    %5027 = vmatprep.subr.bf16.mxu0 %v3384
    %5028 = vmatpush2.bf16.msra.mxu0 %v3383
    %5029 = vmatprep.subr.bf16.mxu0 %v3368
    %5030 = vmatpush2.bf16.msra.mxu0 %v3367
    %5031 = vmatprep.subr.bf16.mxu0 %v3352
    %5032 = vmatpush2.bf16.msra.mxu0 %v3351
    %5033 = vmatprep.mubr.bf16.mxu0 %v142
    %5034 = vmatmul.mubr.bf16.gmra.mxu0 %v141
    %v5035 = vpop.f32.mrf.mxu0
    %v5036 = vadd.f32 0.0, %v5035
    %v5037 = vpop.f32.mrf.mxu0
    %v5038 = vadd.f32 0.0, %v5037
    %v5039 = vpop.f32.mrf.mxu0
    %v5040 = vpop.f32.mrf.mxu0
    %5041 = vdwg.mxu0
    %5042 = vmatprep.subr.bf16.mxu0 %v3592
    %5043 = vmatpush1.bf16.msra.mxu0 %v3591
    %5044 = vmatprep.subr.bf16.mxu0 %v3576
    %5045 = vmatpush1.bf16.msra.mxu0 %v3575
    %5046 = vmatprep.subr.bf16.mxu0 %v3560
    %5047 = vmatpush1.bf16.msra.mxu0 %v3559
    %5048 = vmatprep.subr.bf16.mxu0 %v3544
    %5049 = vmatpush1.bf16.msra.mxu0 %v3543
    %5050 = vmatprep.subr.bf16.mxu0 %v3528
    %5051 = vmatpush1.bf16.msra.mxu0 %v3527
    %5052 = vmatprep.subr.bf16.mxu0 %v3512
    %5053 = vmatpush1.bf16.msra.mxu0 %v3511
    %5054 = vmatprep.subr.bf16.mxu0 %v3496
    %5055 = vmatpush1.bf16.msra.mxu0 %v3495
    %5056 = vmatprep.subr.bf16.mxu0 %v3480
    %5057 = vmatpush1.bf16.msra.mxu0 %v3479
    %5058 = vmatprep.subr.bf16.mxu0 %v3720
    %5059 = vmatpush2.bf16.msra.mxu0 %v3719
    %5060 = vmatprep.subr.bf16.mxu0 %v3704
    %5061 = vmatpush2.bf16.msra.mxu0 %v3703
    %5062 = vmatprep.subr.bf16.mxu0 %v3688
    %5063 = vmatpush2.bf16.msra.mxu0 %v3687
    %5064 = vmatprep.subr.bf16.mxu0 %v3672
    %5065 = vmatpush2.bf16.msra.mxu0 %v3671
    %5066 = vmatprep.subr.bf16.mxu0 %v3656
    %5067 = vmatpush2.bf16.msra.mxu0 %v3655
    %5068 = vmatprep.subr.bf16.mxu0 %v3640
    %5069 = vmatpush2.bf16.msra.mxu0 %v3639
    %5070 = vmatprep.subr.bf16.mxu0 %v3624
    %5071 = vmatpush2.bf16.msra.mxu0 %v3623
    %5072 = vmatprep.subr.bf16.mxu0 %v3608
    %5073 = vmatpush2.bf16.msra.mxu0 %v3607
    %5074 = vmatprep.mubr.bf16.mxu0 %v144
    %5075 = vmatmul.mubr.bf16.gmra.mxu0 %v143
    %v5076 = vpop.f32.mrf.mxu0
    %v5077 = vadd.f32 %v5036, %v5076
    %v5078 = vpop.f32.mrf.mxu0
    %v5079 = vadd.f32 %v5038, %v5078
    %v5080 = vpop.f32.mrf.mxu0
    %v5081 = vpop.f32.mrf.mxu0
    %5082 = vdwg.mxu0
    %5083 = vmatprep.subr.bf16.mxu0 %v3848
    %5084 = vmatpush1.bf16.msra.mxu0 %v3847
    %5085 = vmatprep.subr.bf16.mxu0 %v3832
    %5086 = vmatpush1.bf16.msra.mxu0 %v3831
    %5087 = vmatprep.subr.bf16.mxu0 %v3816
    %5088 = vmatpush1.bf16.msra.mxu0 %v3815
    %5089 = vmatprep.subr.bf16.mxu0 %v3800
    %5090 = vmatpush1.bf16.msra.mxu0 %v3799
    %5091 = vmatprep.subr.bf16.mxu0 %v3784
    %5092 = vmatpush1.bf16.msra.mxu0 %v3783
    %5093 = vmatprep.subr.bf16.mxu0 %v3768
    %5094 = vmatpush1.bf16.msra.mxu0 %v3767
    %5095 = vmatprep.subr.bf16.mxu0 %v3752
    %5096 = vmatpush1.bf16.msra.mxu0 %v3751
    %5097 = vmatprep.subr.bf16.mxu0 %v3736
    %5098 = vmatpush1.bf16.msra.mxu0 %v3735
    %5099 = vmatprep.subr.bf16.mxu0 %v3976
    %5100 = vmatpush2.bf16.msra.mxu0 %v3975
    %5101 = vmatprep.subr.bf16.mxu0 %v3960
    %5102 = vmatpush2.bf16.msra.mxu0 %v3959
    %5103 = vmatprep.subr.bf16.mxu0 %v3944
    %5104 = vmatpush2.bf16.msra.mxu0 %v3943
    %5105 = vmatprep.subr.bf16.mxu0 %v3928
    %5106 = vmatpush2.bf16.msra.mxu0 %v3927
    %5107 = vmatprep.subr.bf16.mxu0 %v3912
    %5108 = vmatpush2.bf16.msra.mxu0 %v3911
    %5109 = vmatprep.subr.bf16.mxu0 %v3896
    %5110 = vmatpush2.bf16.msra.mxu0 %v3895
    %5111 = vmatprep.subr.bf16.mxu0 %v3880
    %5112 = vmatpush2.bf16.msra.mxu0 %v3879
    %5113 = vmatprep.subr.bf16.mxu0 %v3864
    %5114 = vmatpush2.bf16.msra.mxu0 %v3863
    %5115 = vmatprep.mubr.bf16.mxu0 %v146
    %5116 = vmatmul.mubr.bf16.gmra.mxu0 %v145
    %v5117 = vpop.f32.mrf.mxu0
    %v5118 = vadd.f32 %v5077, %v5117
    %v5119 = vpop.f32.mrf.mxu0
    %v5120 = vadd.f32 %v5079, %v5119
    %v5121 = vpop.f32.mrf.mxu0
    %v5122 = vpop.f32.mrf.mxu0
    %5123 = vdwg.mxu0
    %5124 = vmatprep.subr.bf16.mxu0 %v3338
    %5125 = vmatpush1.bf16.msra.mxu0 %v3337
    %5126 = vmatprep.subr.bf16.mxu0 %v3322
    %5127 = vmatpush1.bf16.msra.mxu0 %v3321
    %5128 = vmatprep.subr.bf16.mxu0 %v3306
    %5129 = vmatpush1.bf16.msra.mxu0 %v3305
    %5130 = vmatprep.subr.bf16.mxu0 %v3290
    %5131 = vmatpush1.bf16.msra.mxu0 %v3289
    %5132 = vmatprep.subr.bf16.mxu0 %v3274
    %5133 = vmatpush1.bf16.msra.mxu0 %v3273
    %5134 = vmatprep.subr.bf16.mxu0 %v3258
    %5135 = vmatpush1.bf16.msra.mxu0 %v3257
    %5136 = vmatprep.subr.bf16.mxu0 %v3242
    %5137 = vmatpush1.bf16.msra.mxu0 %v3241
    %5138 = vmatprep.subr.bf16.mxu0 %v3226
    %5139 = vmatpush1.bf16.msra.mxu0 %v3225
    %5140 = vmatprep.subr.bf16.mxu0 %v3466
    %5141 = vmatpush2.bf16.msra.mxu0 %v3465
    %5142 = vmatprep.subr.bf16.mxu0 %v3450
    %5143 = vmatpush2.bf16.msra.mxu0 %v3449
    %5144 = vmatprep.subr.bf16.mxu0 %v3434
    %5145 = vmatpush2.bf16.msra.mxu0 %v3433
    %5146 = vmatprep.subr.bf16.mxu0 %v3418
    %5147 = vmatpush2.bf16.msra.mxu0 %v3417
    %5148 = vmatprep.subr.bf16.mxu0 %v3402
    %5149 = vmatpush2.bf16.msra.mxu0 %v3401
    %5150 = vmatprep.subr.bf16.mxu0 %v3386
    %5151 = vmatpush2.bf16.msra.mxu0 %v3385
    %5152 = vmatprep.subr.bf16.mxu0 %v3370
    %5153 = vmatpush2.bf16.msra.mxu0 %v3369
    %5154 = vmatprep.subr.bf16.mxu0 %v3354
    %5155 = vmatpush2.bf16.msra.mxu0 %v3353
    %5156 = vmatprep.mubr.bf16.mxu0 %v142
    %5157 = vmatmul.mubr.bf16.gmra.mxu0 %v141
    %v5158 = vpop.f32.mrf.mxu0
    %v5159 = vadd.f32 0.0, %v5158
    %v5160 = vpop.f32.mrf.mxu0
    %v5161 = vadd.f32 0.0, %v5160
    %v5162 = vpop.f32.mrf.mxu0
    %v5163 = vpop.f32.mrf.mxu0
    %5164 = vdwg.mxu0
    %5165 = vmatprep.subr.bf16.mxu0 %v3594
    %5166 = vmatpush1.bf16.msra.mxu0 %v3593
    %5167 = vmatprep.subr.bf16.mxu0 %v3578
    %5168 = vmatpush1.bf16.msra.mxu0 %v3577
    %5169 = vmatprep.subr.bf16.mxu0 %v3562
    %5170 = vmatpush1.bf16.msra.mxu0 %v3561
    %5171 = vmatprep.subr.bf16.mxu0 %v3546
    %5172 = vmatpush1.bf16.msra.mxu0 %v3545
    %5173 = vmatprep.subr.bf16.mxu0 %v3530
    %5174 = vmatpush1.bf16.msra.mxu0 %v3529
    %5175 = vmatprep.subr.bf16.mxu0 %v3514
    %5176 = vmatpush1.bf16.msra.mxu0 %v3513
    %5177 = vmatprep.subr.bf16.mxu0 %v3498
    %5178 = vmatpush1.bf16.msra.mxu0 %v3497
    %5179 = vmatprep.subr.bf16.mxu0 %v3482
    %5180 = vmatpush1.bf16.msra.mxu0 %v3481
    %5181 = vmatprep.subr.bf16.mxu0 %v3722
    %5182 = vmatpush2.bf16.msra.mxu0 %v3721
    %5183 = vmatprep.subr.bf16.mxu0 %v3706
    %5184 = vmatpush2.bf16.msra.mxu0 %v3705
    %5185 = vmatprep.subr.bf16.mxu0 %v3690
    %5186 = vmatpush2.bf16.msra.mxu0 %v3689
    %5187 = vmatprep.subr.bf16.mxu0 %v3674
    %5188 = vmatpush2.bf16.msra.mxu0 %v3673
    %5189 = vmatprep.subr.bf16.mxu0 %v3658
    %5190 = vmatpush2.bf16.msra.mxu0 %v3657
    %5191 = vmatprep.subr.bf16.mxu0 %v3642
    %5192 = vmatpush2.bf16.msra.mxu0 %v3641
    %5193 = vmatprep.subr.bf16.mxu0 %v3626
    %5194 = vmatpush2.bf16.msra.mxu0 %v3625
    %5195 = vmatprep.subr.bf16.mxu0 %v3610
    %5196 = vmatpush2.bf16.msra.mxu0 %v3609
    %5197 = vmatprep.mubr.bf16.mxu0 %v144
    %5198 = vmatmul.mubr.bf16.gmra.mxu0 %v143
    %v5199 = vpop.f32.mrf.mxu0
    %v5200 = vadd.f32 %v5159, %v5199
    %v5201 = vpop.f32.mrf.mxu0
    %v5202 = vadd.f32 %v5161, %v5201
    %v5203 = vpop.f32.mrf.mxu0
    %v5204 = vpop.f32.mrf.mxu0
    %5205 = vdwg.mxu0
    %5206 = vmatprep.subr.bf16.mxu0 %v3850
    %5207 = vmatpush1.bf16.msra.mxu0 %v3849
    %5208 = vmatprep.subr.bf16.mxu0 %v3834
    %5209 = vmatpush1.bf16.msra.mxu0 %v3833
    %5210 = vmatprep.subr.bf16.mxu0 %v3818
    %5211 = vmatpush1.bf16.msra.mxu0 %v3817
    %5212 = vmatprep.subr.bf16.mxu0 %v3802
    %5213 = vmatpush1.bf16.msra.mxu0 %v3801
    %5214 = vmatprep.subr.bf16.mxu0 %v3786
    %5215 = vmatpush1.bf16.msra.mxu0 %v3785
    %5216 = vmatprep.subr.bf16.mxu0 %v3770
    %5217 = vmatpush1.bf16.msra.mxu0 %v3769
    %5218 = vmatprep.subr.bf16.mxu0 %v3754
    %5219 = vmatpush1.bf16.msra.mxu0 %v3753
    %5220 = vmatprep.subr.bf16.mxu0 %v3738
    %5221 = vmatpush1.bf16.msra.mxu0 %v3737
    %5222 = vmatprep.subr.bf16.mxu0 %v3978
    %5223 = vmatpush2.bf16.msra.mxu0 %v3977
    %5224 = vmatprep.subr.bf16.mxu0 %v3962
    %5225 = vmatpush2.bf16.msra.mxu0 %v3961
    %5226 = vmatprep.subr.bf16.mxu0 %v3946
    %5227 = vmatpush2.bf16.msra.mxu0 %v3945
    %5228 = vmatprep.subr.bf16.mxu0 %v3930
    %5229 = vmatpush2.bf16.msra.mxu0 %v3929
    %5230 = vmatprep.subr.bf16.mxu0 %v3914
    %5231 = vmatpush2.bf16.msra.mxu0 %v3913
    %5232 = vmatprep.subr.bf16.mxu0 %v3898
    %5233 = vmatpush2.bf16.msra.mxu0 %v3897
    %5234 = vmatprep.subr.bf16.mxu0 %v3882
    %5235 = vmatpush2.bf16.msra.mxu0 %v3881
    %5236 = vmatprep.subr.bf16.mxu0 %v3866
    %5237 = vmatpush2.bf16.msra.mxu0 %v3865
    %5238 = vmatprep.mubr.bf16.mxu0 %v146
    %5239 = vmatmul.mubr.bf16.gmra.mxu0 %v145
    %v5240 = vpop.f32.mrf.mxu0
    %v5241 = vadd.f32 %v5200, %v5240
    %v5242 = vpop.f32.mrf.mxu0
    %v5243 = vadd.f32 %v5202, %v5242
    %v5244 = vpop.f32.mrf.mxu0
    %v5245 = vpop.f32.mrf.mxu0
    %5246 = vdwg.mxu0
    %5247 = vmatprep.subr.bf16.mxu0 %v3340
    %5248 = vmatpush1.bf16.msra.mxu0 %v3339
    %5249 = vmatprep.subr.bf16.mxu0 %v3324
    %5250 = vmatpush1.bf16.msra.mxu0 %v3323
    %5251 = vmatprep.subr.bf16.mxu0 %v3308
    %5252 = vmatpush1.bf16.msra.mxu0 %v3307
    %5253 = vmatprep.subr.bf16.mxu0 %v3292
    %5254 = vmatpush1.bf16.msra.mxu0 %v3291
    %5255 = vmatprep.subr.bf16.mxu0 %v3276
    %5256 = vmatpush1.bf16.msra.mxu0 %v3275
    %5257 = vmatprep.subr.bf16.mxu0 %v3260
    %5258 = vmatpush1.bf16.msra.mxu0 %v3259
    %5259 = vmatprep.subr.bf16.mxu0 %v3244
    %5260 = vmatpush1.bf16.msra.mxu0 %v3243
    %5261 = vmatprep.subr.bf16.mxu0 %v3228
    %5262 = vmatpush1.bf16.msra.mxu0 %v3227
    %5263 = vmatprep.subr.bf16.mxu0 %v3468
    %5264 = vmatpush2.bf16.msra.mxu0 %v3467
    %5265 = vmatprep.subr.bf16.mxu0 %v3452
    %5266 = vmatpush2.bf16.msra.mxu0 %v3451
    %5267 = vmatprep.subr.bf16.mxu0 %v3436
    %5268 = vmatpush2.bf16.msra.mxu0 %v3435
    %5269 = vmatprep.subr.bf16.mxu0 %v3420
    %5270 = vmatpush2.bf16.msra.mxu0 %v3419
    %5271 = vmatprep.subr.bf16.mxu0 %v3404
    %5272 = vmatpush2.bf16.msra.mxu0 %v3403
    %5273 = vmatprep.subr.bf16.mxu0 %v3388
    %5274 = vmatpush2.bf16.msra.mxu0 %v3387
    %5275 = vmatprep.subr.bf16.mxu0 %v3372
    %5276 = vmatpush2.bf16.msra.mxu0 %v3371
    %5277 = vmatprep.subr.bf16.mxu0 %v3356
    %5278 = vmatpush2.bf16.msra.mxu0 %v3355
    %5279 = vmatprep.mubr.bf16.mxu0 %v142
    %5280 = vmatmul.mubr.bf16.gmra.mxu0 %v141
    %v5281 = vpop.f32.mrf.mxu0
    %v5282 = vadd.f32 0.0, %v5281
    %v5283 = vpop.f32.mrf.mxu0
    %v5284 = vadd.f32 0.0, %v5283
    %v5285 = vpop.f32.mrf.mxu0
    %v5286 = vpop.f32.mrf.mxu0
    %5287 = vdwg.mxu0
    %5288 = vmatprep.subr.bf16.mxu0 %v3596
    %5289 = vmatpush1.bf16.msra.mxu0 %v3595
    %5290 = vmatprep.subr.bf16.mxu0 %v3580
    %5291 = vmatpush1.bf16.msra.mxu0 %v3579
    %5292 = vmatprep.subr.bf16.mxu0 %v3564
    %5293 = vmatpush1.bf16.msra.mxu0 %v3563
    %5294 = vmatprep.subr.bf16.mxu0 %v3548
    %5295 = vmatpush1.bf16.msra.mxu0 %v3547
    %5296 = vmatprep.subr.bf16.mxu0 %v3532
    %5297 = vmatpush1.bf16.msra.mxu0 %v3531
    %5298 = vmatprep.subr.bf16.mxu0 %v3516
    %5299 = vmatpush1.bf16.msra.mxu0 %v3515
    %5300 = vmatprep.subr.bf16.mxu0 %v3500
    %5301 = vmatpush1.bf16.msra.mxu0 %v3499
    %5302 = vmatprep.subr.bf16.mxu0 %v3484
    %5303 = vmatpush1.bf16.msra.mxu0 %v3483
    %5304 = vmatprep.subr.bf16.mxu0 %v3724
    %5305 = vmatpush2.bf16.msra.mxu0 %v3723
    %5306 = vmatprep.subr.bf16.mxu0 %v3708
    %5307 = vmatpush2.bf16.msra.mxu0 %v3707
    %5308 = vmatprep.subr.bf16.mxu0 %v3692
    %5309 = vmatpush2.bf16.msra.mxu0 %v3691
    %5310 = vmatprep.subr.bf16.mxu0 %v3676
    %5311 = vmatpush2.bf16.msra.mxu0 %v3675
    %5312 = vmatprep.subr.bf16.mxu0 %v3660
    %5313 = vmatpush2.bf16.msra.mxu0 %v3659
    %5314 = vmatprep.subr.bf16.mxu0 %v3644
    %5315 = vmatpush2.bf16.msra.mxu0 %v3643
    %5316 = vmatprep.subr.bf16.mxu0 %v3628
    %5317 = vmatpush2.bf16.msra.mxu0 %v3627
    %5318 = vmatprep.subr.bf16.mxu0 %v3612
    %5319 = vmatpush2.bf16.msra.mxu0 %v3611
    %5320 = vmatprep.mubr.bf16.mxu0 %v144
    %5321 = vmatmul.mubr.bf16.gmra.mxu0 %v143
    %v5322 = vpop.f32.mrf.mxu0
    %v5323 = vadd.f32 %v5282, %v5322
    %v5324 = vpop.f32.mrf.mxu0
    %v5325 = vadd.f32 %v5284, %v5324
    %v5326 = vpop.f32.mrf.mxu0
    %v5327 = vpop.f32.mrf.mxu0
    %5328 = vdwg.mxu0
    %5329 = vmatprep.subr.bf16.mxu0 %v3852
    %5330 = vmatpush1.bf16.msra.mxu0 %v3851
    %5331 = vmatprep.subr.bf16.mxu0 %v3836
    %5332 = vmatpush1.bf16.msra.mxu0 %v3835
    %5333 = vmatprep.subr.bf16.mxu0 %v3820
    %5334 = vmatpush1.bf16.msra.mxu0 %v3819
    %5335 = vmatprep.subr.bf16.mxu0 %v3804
    %5336 = vmatpush1.bf16.msra.mxu0 %v3803
    %5337 = vmatprep.subr.bf16.mxu0 %v3788
    %5338 = vmatpush1.bf16.msra.mxu0 %v3787
    %5339 = vmatprep.subr.bf16.mxu0 %v3772
    %5340 = vmatpush1.bf16.msra.mxu0 %v3771
    %5341 = vmatprep.subr.bf16.mxu0 %v3756
    %5342 = vmatpush1.bf16.msra.mxu0 %v3755
    %5343 = vmatprep.subr.bf16.mxu0 %v3740
    %5344 = vmatpush1.bf16.msra.mxu0 %v3739
    %5345 = vmatprep.subr.bf16.mxu0 %v3980
    %5346 = vmatpush2.bf16.msra.mxu0 %v3979
    %5347 = vmatprep.subr.bf16.mxu0 %v3964
    %5348 = vmatpush2.bf16.msra.mxu0 %v3963
    %5349 = vmatprep.subr.bf16.mxu0 %v3948
    %5350 = vmatpush2.bf16.msra.mxu0 %v3947
    %5351 = vmatprep.subr.bf16.mxu0 %v3932
    %5352 = vmatpush2.bf16.msra.mxu0 %v3931
    %5353 = vmatprep.subr.bf16.mxu0 %v3916
    %5354 = vmatpush2.bf16.msra.mxu0 %v3915
    %5355 = vmatprep.subr.bf16.mxu0 %v3900
    %5356 = vmatpush2.bf16.msra.mxu0 %v3899
    %5357 = vmatprep.subr.bf16.mxu0 %v3884
    %5358 = vmatpush2.bf16.msra.mxu0 %v3883
    %5359 = vmatprep.subr.bf16.mxu0 %v3868
    %5360 = vmatpush2.bf16.msra.mxu0 %v3867
    %5361 = vmatprep.mubr.bf16.mxu0 %v146
    %5362 = vmatmul.mubr.bf16.gmra.mxu0 %v145
    %v5363 = vpop.f32.mrf.mxu0
    %v5364 = vadd.f32 %v5323, %v5363
    %v5365 = vpop.f32.mrf.mxu0
    %v5366 = vadd.f32 %v5325, %v5365
    %v5367 = vpop.f32.mrf.mxu0
    %v5368 = vpop.f32.mrf.mxu0
    %5369 = vdwg.mxu0
    %5370 = vmatprep.subr.bf16.mxu0 %v3342
    %5371 = vmatpush1.bf16.msra.mxu0 %v3341
    %5372 = vmatprep.subr.bf16.mxu0 %v3326
    %5373 = vmatpush1.bf16.msra.mxu0 %v3325
    %5374 = vmatprep.subr.bf16.mxu0 %v3310
    %5375 = vmatpush1.bf16.msra.mxu0 %v3309
    %5376 = vmatprep.subr.bf16.mxu0 %v3294
    %5377 = vmatpush1.bf16.msra.mxu0 %v3293
    %5378 = vmatprep.subr.bf16.mxu0 %v3278
    %5379 = vmatpush1.bf16.msra.mxu0 %v3277
    %5380 = vmatprep.subr.bf16.mxu0 %v3262
    %5381 = vmatpush1.bf16.msra.mxu0 %v3261
    %5382 = vmatprep.subr.bf16.mxu0 %v3246
    %5383 = vmatpush1.bf16.msra.mxu0 %v3245
    %5384 = vmatprep.subr.bf16.mxu0 %v3230
    %5385 = vmatpush1.bf16.msra.mxu0 %v3229
    %5386 = vmatprep.subr.bf16.mxu0 %v3470
    %5387 = vmatpush2.bf16.msra.mxu0 %v3469
    %5388 = vmatprep.subr.bf16.mxu0 %v3454
    %5389 = vmatpush2.bf16.msra.mxu0 %v3453
    %5390 = vmatprep.subr.bf16.mxu0 %v3438
    %5391 = vmatpush2.bf16.msra.mxu0 %v3437
    %5392 = vmatprep.subr.bf16.mxu0 %v3422
    %5393 = vmatpush2.bf16.msra.mxu0 %v3421
    %5394 = vmatprep.subr.bf16.mxu0 %v3406
    %5395 = vmatpush2.bf16.msra.mxu0 %v3405
    %5396 = vmatprep.subr.bf16.mxu0 %v3390
    %5397 = vmatpush2.bf16.msra.mxu0 %v3389
    %5398 = vmatprep.subr.bf16.mxu0 %v3374
    %5399 = vmatpush2.bf16.msra.mxu0 %v3373
    %5400 = vmatprep.subr.bf16.mxu0 %v3358
    %5401 = vmatpush2.bf16.msra.mxu0 %v3357
    %5402 = vmatprep.mubr.bf16.mxu0 %v142
    %5403 = vmatmul.mubr.bf16.gmra.mxu0 %v141
    %v5404 = vpop.f32.mrf.mxu0
    %v5405 = vadd.f32 0.0, %v5404
    %v5406 = vpop.f32.mrf.mxu0
    %v5407 = vadd.f32 0.0, %v5406
    %v5408 = vpop.f32.mrf.mxu0
    %v5409 = vpop.f32.mrf.mxu0
    %5410 = vdwg.mxu0
    %5411 = vmatprep.subr.bf16.mxu0 %v3598
    %5412 = vmatpush1.bf16.msra.mxu0 %v3597
    %5413 = vmatprep.subr.bf16.mxu0 %v3582
    %5414 = vmatpush1.bf16.msra.mxu0 %v3581
    %5415 = vmatprep.subr.bf16.mxu0 %v3566
    %5416 = vmatpush1.bf16.msra.mxu0 %v3565
    %5417 = vmatprep.subr.bf16.mxu0 %v3550
    %5418 = vmatpush1.bf16.msra.mxu0 %v3549
    %5419 = vmatprep.subr.bf16.mxu0 %v3534
    %5420 = vmatpush1.bf16.msra.mxu0 %v3533
    %5421 = vmatprep.subr.bf16.mxu0 %v3518
    %5422 = vmatpush1.bf16.msra.mxu0 %v3517
    %5423 = vmatprep.subr.bf16.mxu0 %v3502
    %5424 = vmatpush1.bf16.msra.mxu0 %v3501
    %5425 = vmatprep.subr.bf16.mxu0 %v3486
    %5426 = vmatpush1.bf16.msra.mxu0 %v3485
    %5427 = vmatprep.subr.bf16.mxu0 %v3726
    %5428 = vmatpush2.bf16.msra.mxu0 %v3725
    %5429 = vmatprep.subr.bf16.mxu0 %v3710
    %5430 = vmatpush2.bf16.msra.mxu0 %v3709
    %5431 = vmatprep.subr.bf16.mxu0 %v3694
    %5432 = vmatpush2.bf16.msra.mxu0 %v3693
    %5433 = vmatprep.subr.bf16.mxu0 %v3678
    %5434 = vmatpush2.bf16.msra.mxu0 %v3677
    %5435 = vmatprep.subr.bf16.mxu0 %v3662
    %5436 = vmatpush2.bf16.msra.mxu0 %v3661
    %5437 = vmatprep.subr.bf16.mxu0 %v3646
    %5438 = vmatpush2.bf16.msra.mxu0 %v3645
    %5439 = vmatprep.subr.bf16.mxu0 %v3630
    %5440 = vmatpush2.bf16.msra.mxu0 %v3629
    %5441 = vmatprep.subr.bf16.mxu0 %v3614
    %5442 = vmatpush2.bf16.msra.mxu0 %v3613
    %5443 = vmatprep.mubr.bf16.mxu0 %v144
    %5444 = vmatmul.mubr.bf16.gmra.mxu0 %v143
    %v5445 = vpop.f32.mrf.mxu0
    %v5446 = vadd.f32 %v5405, %v5445
    %v5447 = vpop.f32.mrf.mxu0
    %v5448 = vadd.f32 %v5407, %v5447
    %v5449 = vpop.f32.mrf.mxu0
    %v5450 = vpop.f32.mrf.mxu0
    %5451 = vdwg.mxu0
    %5452 = vmatprep.subr.bf16.mxu0 %v3854
    %5453 = vmatpush1.bf16.msra.mxu0 %v3853
    %5454 = vmatprep.subr.bf16.mxu0 %v3838
    %5455 = vmatpush1.bf16.msra.mxu0 %v3837
    %5456 = vmatprep.subr.bf16.mxu0 %v3822
    %5457 = vmatpush1.bf16.msra.mxu0 %v3821
    %5458 = vmatprep.subr.bf16.mxu0 %v3806
    %5459 = vmatpush1.bf16.msra.mxu0 %v3805
    %5460 = vmatprep.subr.bf16.mxu0 %v3790
    %5461 = vmatpush1.bf16.msra.mxu0 %v3789
    %5462 = vmatprep.subr.bf16.mxu0 %v3774
    %5463 = vmatpush1.bf16.msra.mxu0 %v3773
    %5464 = vmatprep.subr.bf16.mxu0 %v3758
    %5465 = vmatpush1.bf16.msra.mxu0 %v3757
    %5466 = vmatprep.subr.bf16.mxu0 %v3742
    %5467 = vmatpush1.bf16.msra.mxu0 %v3741
    %5468 = vmatprep.subr.bf16.mxu0 %v3982
    %5469 = vmatpush2.bf16.msra.mxu0 %v3981
    %5470 = vmatprep.subr.bf16.mxu0 %v3966
    %5471 = vmatpush2.bf16.msra.mxu0 %v3965
    %5472 = vmatprep.subr.bf16.mxu0 %v3950
    %5473 = vmatpush2.bf16.msra.mxu0 %v3949
    %5474 = vmatprep.subr.bf16.mxu0 %v3934
    %5475 = vmatpush2.bf16.msra.mxu0 %v3933
    %5476 = vmatprep.subr.bf16.mxu0 %v3918
    %5477 = vmatpush2.bf16.msra.mxu0 %v3917
    %5478 = vmatprep.subr.bf16.mxu0 %v3902
    %5479 = vmatpush2.bf16.msra.mxu0 %v3901
    %5480 = vmatprep.subr.bf16.mxu0 %v3886
    %5481 = vmatpush2.bf16.msra.mxu0 %v3885
    %5482 = vmatprep.subr.bf16.mxu0 %v3870
    %5483 = vmatpush2.bf16.msra.mxu0 %v3869
    %5484 = vmatprep.mubr.bf16.mxu0 %v146
    %5485 = vmatmul.mubr.bf16.gmra.mxu0 %v145
    %v5486 = vpop.f32.mrf.mxu0
    %v5487 = vadd.f32 %v5446, %v5486
    %v5488 = vpop.f32.mrf.mxu0
    %v5489 = vadd.f32 %v5448, %v5488
    %v5490 = vpop.f32.mrf.mxu0
    %v5491 = vpop.f32.mrf.mxu0
    %5492 = vdwg.mxu0
    %5493 = vmatprep.subr.bf16.mxu0 %v3344
    %5494 = vmatpush1.bf16.msra.mxu0 %v3343
    %5495 = vmatprep.subr.bf16.mxu0 %v3328
    %5496 = vmatpush1.bf16.msra.mxu0 %v3327
    %5497 = vmatprep.subr.bf16.mxu0 %v3312
    %5498 = vmatpush1.bf16.msra.mxu0 %v3311
    %5499 = vmatprep.subr.bf16.mxu0 %v3296
    %5500 = vmatpush1.bf16.msra.mxu0 %v3295
    %5501 = vmatprep.subr.bf16.mxu0 %v3280
    %5502 = vmatpush1.bf16.msra.mxu0 %v3279
    %5503 = vmatprep.subr.bf16.mxu0 %v3264
    %5504 = vmatpush1.bf16.msra.mxu0 %v3263
    %5505 = vmatprep.subr.bf16.mxu0 %v3248
    %5506 = vmatpush1.bf16.msra.mxu0 %v3247
    %5507 = vmatprep.subr.bf16.mxu0 %v3232
    %5508 = vmatpush1.bf16.msra.mxu0 %v3231
    %5509 = vmatprep.subr.bf16.mxu0 %v3472
    %5510 = vmatpush2.bf16.msra.mxu0 %v3471
    %5511 = vmatprep.subr.bf16.mxu0 %v3456
    %5512 = vmatpush2.bf16.msra.mxu0 %v3455
    %5513 = vmatprep.subr.bf16.mxu0 %v3440
    %5514 = vmatpush2.bf16.msra.mxu0 %v3439
    %5515 = vmatprep.subr.bf16.mxu0 %v3424
    %5516 = vmatpush2.bf16.msra.mxu0 %v3423
    %5517 = vmatprep.subr.bf16.mxu0 %v3408
    %5518 = vmatpush2.bf16.msra.mxu0 %v3407
    %5519 = vmatprep.subr.bf16.mxu0 %v3392
    %5520 = vmatpush2.bf16.msra.mxu0 %v3391
    %5521 = vmatprep.subr.bf16.mxu0 %v3376
    %5522 = vmatpush2.bf16.msra.mxu0 %v3375
    %5523 = vmatprep.subr.bf16.mxu0 %v3360
    %5524 = vmatpush2.bf16.msra.mxu0 %v3359
    %5525 = vmatprep.mubr.bf16.mxu0 %v142
    %5526 = vmatmul.mubr.bf16.gmra.mxu0 %v141
    %v5527 = vpop.f32.mrf.mxu0
    %v5528 = vadd.f32 0.0, %v5527
    %v5529 = vpop.f32.mrf.mxu0
    %v5530 = vadd.f32 0.0, %v5529
    %v5531 = vpop.f32.mrf.mxu0
    %v5532 = vpop.f32.mrf.mxu0
    %5533 = vdwg.mxu0
    %5534 = vmatprep.subr.bf16.mxu0 %v3600
    %5535 = vmatpush1.bf16.msra.mxu0 %v3599
    %5536 = vmatprep.subr.bf16.mxu0 %v3584
    %5537 = vmatpush1.bf16.msra.mxu0 %v3583
    %5538 = vmatprep.subr.bf16.mxu0 %v3568
    %5539 = vmatpush1.bf16.msra.mxu0 %v3567
    %5540 = vmatprep.subr.bf16.mxu0 %v3552
    %5541 = vmatpush1.bf16.msra.mxu0 %v3551
    %5542 = vmatprep.subr.bf16.mxu0 %v3536
    %5543 = vmatpush1.bf16.msra.mxu0 %v3535
    %5544 = vmatprep.subr.bf16.mxu0 %v3520
    %5545 = vmatpush1.bf16.msra.mxu0 %v3519
    %5546 = vmatprep.subr.bf16.mxu0 %v3504
    %5547 = vmatpush1.bf16.msra.mxu0 %v3503
    %5548 = vmatprep.subr.bf16.mxu0 %v3488
    %5549 = vmatpush1.bf16.msra.mxu0 %v3487
    %5550 = vmatprep.subr.bf16.mxu0 %v3728
    %5551 = vmatpush2.bf16.msra.mxu0 %v3727
    %5552 = vmatprep.subr.bf16.mxu0 %v3712
    %5553 = vmatpush2.bf16.msra.mxu0 %v3711
    %5554 = vmatprep.subr.bf16.mxu0 %v3696
    %5555 = vmatpush2.bf16.msra.mxu0 %v3695
    %5556 = vmatprep.subr.bf16.mxu0 %v3680
    %5557 = vmatpush2.bf16.msra.mxu0 %v3679
    %5558 = vmatprep.subr.bf16.mxu0 %v3664
    %5559 = vmatpush2.bf16.msra.mxu0 %v3663
    %5560 = vmatprep.subr.bf16.mxu0 %v3648
    %5561 = vmatpush2.bf16.msra.mxu0 %v3647
    %5562 = vmatprep.subr.bf16.mxu0 %v3632
    %5563 = vmatpush2.bf16.msra.mxu0 %v3631
    %5564 = vmatprep.subr.bf16.mxu0 %v3616
    %5565 = vmatpush2.bf16.msra.mxu0 %v3615
    %5566 = vmatprep.mubr.bf16.mxu0 %v144
    %5567 = vmatmul.mubr.bf16.gmra.mxu0 %v143
    %v5568 = vpop.f32.mrf.mxu0
    %v5569 = vadd.f32 %v5528, %v5568
    %v5570 = vpop.f32.mrf.mxu0
    %v5571 = vadd.f32 %v5530, %v5570
    %v5572 = vpop.f32.mrf.mxu0
    %v5573 = vpop.f32.mrf.mxu0
    %5574 = vdwg.mxu0
    %5575 = vmatprep.subr.bf16.mxu0 %v3856
    %5576 = vmatpush1.bf16.msra.mxu0 %v3855
    %5577 = vmatprep.subr.bf16.mxu0 %v3840
    %5578 = vmatpush1.bf16.msra.mxu0 %v3839
    %5579 = vmatprep.subr.bf16.mxu0 %v3824
    %5580 = vmatpush1.bf16.msra.mxu0 %v3823
    %5581 = vmatprep.subr.bf16.mxu0 %v3808
    %5582 = vmatpush1.bf16.msra.mxu0 %v3807
    %5583 = vmatprep.subr.bf16.mxu0 %v3792
    %5584 = vmatpush1.bf16.msra.mxu0 %v3791
    %5585 = vmatprep.subr.bf16.mxu0 %v3776
    %5586 = vmatpush1.bf16.msra.mxu0 %v3775
    %5587 = vmatprep.subr.bf16.mxu0 %v3760
    %5588 = vmatpush1.bf16.msra.mxu0 %v3759
    %5589 = vmatprep.subr.bf16.mxu0 %v3744
    %5590 = vmatpush1.bf16.msra.mxu0 %v3743
    %5591 = vmatprep.subr.bf16.mxu0 %v3984
    %5592 = vmatpush2.bf16.msra.mxu0 %v3983
    %5593 = vmatprep.subr.bf16.mxu0 %v3968
    %5594 = vmatpush2.bf16.msra.mxu0 %v3967
    %5595 = vmatprep.subr.bf16.mxu0 %v3952
    %5596 = vmatpush2.bf16.msra.mxu0 %v3951
    %5597 = vmatprep.subr.bf16.mxu0 %v3936
    %5598 = vmatpush2.bf16.msra.mxu0 %v3935
    %5599 = vmatprep.subr.bf16.mxu0 %v3920
    %5600 = vmatpush2.bf16.msra.mxu0 %v3919
    %5601 = vmatprep.subr.bf16.mxu0 %v3904
    %5602 = vmatpush2.bf16.msra.mxu0 %v3903
    %5603 = vmatprep.subr.bf16.mxu0 %v3888
    %5604 = vmatpush2.bf16.msra.mxu0 %v3887
    %5605 = vmatprep.subr.bf16.mxu0 %v3872
    %5606 = vmatpush2.bf16.msra.mxu0 %v3871
    %5607 = vmatprep.mubr.bf16.mxu0 %v146
    %5608 = vmatmul.mubr.bf16.gmra.mxu0 %v145
    %v5609 = vpop.f32.mrf.mxu0
    %v5610 = vadd.f32 %v5569, %v5609
    %v5611 = vpop.f32.mrf.mxu0
    %v5612 = vadd.f32 %v5571, %v5611
    %v5613 = vpop.f32.mrf.mxu0
    %v5614 = vpop.f32.mrf.mxu0
    %5615 = vdwg.mxu0
    %5616 = vmatprep.subr.bf16.mxu0 %v3346
    %5617 = vmatpush1.bf16.msra.mxu0 %v3345
    %5618 = vmatprep.subr.bf16.mxu0 %v3330
    %5619 = vmatpush1.bf16.msra.mxu0 %v3329
    %5620 = vmatprep.subr.bf16.mxu0 %v3314
    %5621 = vmatpush1.bf16.msra.mxu0 %v3313
    %5622 = vmatprep.subr.bf16.mxu0 %v3298
    %5623 = vmatpush1.bf16.msra.mxu0 %v3297
    %5624 = vmatprep.subr.bf16.mxu0 %v3282
    %5625 = vmatpush1.bf16.msra.mxu0 %v3281
    %5626 = vmatprep.subr.bf16.mxu0 %v3266
    %5627 = vmatpush1.bf16.msra.mxu0 %v3265
    %5628 = vmatprep.subr.bf16.mxu0 %v3250
    %5629 = vmatpush1.bf16.msra.mxu0 %v3249
    %5630 = vmatprep.subr.bf16.mxu0 %v3234
    %5631 = vmatpush1.bf16.msra.mxu0 %v3233
    %5632 = vmatprep.subr.bf16.mxu0 %v3474
    %5633 = vmatpush2.bf16.msra.mxu0 %v3473
    %5634 = vmatprep.subr.bf16.mxu0 %v3458
    %5635 = vmatpush2.bf16.msra.mxu0 %v3457
    %5636 = vmatprep.subr.bf16.mxu0 %v3442
    %5637 = vmatpush2.bf16.msra.mxu0 %v3441
    %5638 = vmatprep.subr.bf16.mxu0 %v3426
    %5639 = vmatpush2.bf16.msra.mxu0 %v3425
    %5640 = vmatprep.subr.bf16.mxu0 %v3410
    %5641 = vmatpush2.bf16.msra.mxu0 %v3409
    %5642 = vmatprep.subr.bf16.mxu0 %v3394
    %5643 = vmatpush2.bf16.msra.mxu0 %v3393
    %5644 = vmatprep.subr.bf16.mxu0 %v3378
    %5645 = vmatpush2.bf16.msra.mxu0 %v3377
    %5646 = vmatprep.subr.bf16.mxu0 %v3362
    %5647 = vmatpush2.bf16.msra.mxu0 %v3361
    %5648 = vmatprep.mubr.bf16.mxu0 %v142
    %5649 = vmatmul.mubr.bf16.gmra.mxu0 %v141
    %v5650 = vpop.f32.mrf.mxu0
    %v5651 = vadd.f32 0.0, %v5650
    %v5652 = vpop.f32.mrf.mxu0
    %v5653 = vadd.f32 0.0, %v5652
    %v5654 = vpop.f32.mrf.mxu0
    %v5655 = vpop.f32.mrf.mxu0
    %5656 = vdwg.mxu0
    %5657 = vmatprep.subr.bf16.mxu0 %v3602
    %5658 = vmatpush1.bf16.msra.mxu0 %v3601
    %5659 = vmatprep.subr.bf16.mxu0 %v3586
    %5660 = vmatpush1.bf16.msra.mxu0 %v3585
    %5661 = vmatprep.subr.bf16.mxu0 %v3570
    %5662 = vmatpush1.bf16.msra.mxu0 %v3569
    %5663 = vmatprep.subr.bf16.mxu0 %v3554
    %5664 = vmatpush1.bf16.msra.mxu0 %v3553
    %5665 = vmatprep.subr.bf16.mxu0 %v3538
    %5666 = vmatpush1.bf16.msra.mxu0 %v3537
    %5667 = vmatprep.subr.bf16.mxu0 %v3522
    %5668 = vmatpush1.bf16.msra.mxu0 %v3521
    %5669 = vmatprep.subr.bf16.mxu0 %v3506
    %5670 = vmatpush1.bf16.msra.mxu0 %v3505
    %5671 = vmatprep.subr.bf16.mxu0 %v3490
    %5672 = vmatpush1.bf16.msra.mxu0 %v3489
    %5673 = vmatprep.subr.bf16.mxu0 %v3730
    %5674 = vmatpush2.bf16.msra.mxu0 %v3729
    %5675 = vmatprep.subr.bf16.mxu0 %v3714
    %5676 = vmatpush2.bf16.msra.mxu0 %v3713
    %5677 = vmatprep.subr.bf16.mxu0 %v3698
    %5678 = vmatpush2.bf16.msra.mxu0 %v3697
    %5679 = vmatprep.subr.bf16.mxu0 %v3682
    %5680 = vmatpush2.bf16.msra.mxu0 %v3681
    %5681 = vmatprep.subr.bf16.mxu0 %v3666
    %5682 = vmatpush2.bf16.msra.mxu0 %v3665
    %5683 = vmatprep.subr.bf16.mxu0 %v3650
    %5684 = vmatpush2.bf16.msra.mxu0 %v3649
    %5685 = vmatprep.subr.bf16.mxu0 %v3634
    %5686 = vmatpush2.bf16.msra.mxu0 %v3633
    %5687 = vmatprep.subr.bf16.mxu0 %v3618
    %5688 = vmatpush2.bf16.msra.mxu0 %v3617
    %5689 = vmatprep.mubr.bf16.mxu0 %v144
    %5690 = vmatmul.mubr.bf16.gmra.mxu0 %v143
    %v5691 = vpop.f32.mrf.mxu0
    %v5692 = vadd.f32 %v5651, %v5691
    %v5693 = vpop.f32.mrf.mxu0
    %v5694 = vadd.f32 %v5653, %v5693
    %v5695 = vpop.f32.mrf.mxu0
    %v5696 = vpop.f32.mrf.mxu0
    %5697 = vdwg.mxu0
    %5698 = vmatprep.subr.bf16.mxu0 %v3858
    %5699 = vmatpush1.bf16.msra.mxu0 %v3857
    %5700 = vmatprep.subr.bf16.mxu0 %v3842
    %5701 = vmatpush1.bf16.msra.mxu0 %v3841
    %5702 = vmatprep.subr.bf16.mxu0 %v3826
    %5703 = vmatpush1.bf16.msra.mxu0 %v3825
    %5704 = vmatprep.subr.bf16.mxu0 %v3810
    %5705 = vmatpush1.bf16.msra.mxu0 %v3809
    %5706 = vmatprep.subr.bf16.mxu0 %v3794
    %5707 = vmatpush1.bf16.msra.mxu0 %v3793
    %5708 = vmatprep.subr.bf16.mxu0 %v3778
    %5709 = vmatpush1.bf16.msra.mxu0 %v3777
    %5710 = vmatprep.subr.bf16.mxu0 %v3762
    %5711 = vmatpush1.bf16.msra.mxu0 %v3761
    %5712 = vmatprep.subr.bf16.mxu0 %v3746
    %5713 = vmatpush1.bf16.msra.mxu0 %v3745
    %5714 = vmatprep.subr.bf16.mxu0 %v3986
    %5715 = vmatpush2.bf16.msra.mxu0 %v3985
    %5716 = vmatprep.subr.bf16.mxu0 %v3970
    %5717 = vmatpush2.bf16.msra.mxu0 %v3969
    %5718 = vmatprep.subr.bf16.mxu0 %v3954
    %5719 = vmatpush2.bf16.msra.mxu0 %v3953
    %5720 = vmatprep.subr.bf16.mxu0 %v3938
    %5721 = vmatpush2.bf16.msra.mxu0 %v3937
    %5722 = vmatprep.subr.bf16.mxu0 %v3922
    %5723 = vmatpush2.bf16.msra.mxu0 %v3921
    %5724 = vmatprep.subr.bf16.mxu0 %v3906
    %5725 = vmatpush2.bf16.msra.mxu0 %v3905
    %5726 = vmatprep.subr.bf16.mxu0 %v3890
    %5727 = vmatpush2.bf16.msra.mxu0 %v3889
    %5728 = vmatprep.subr.bf16.mxu0 %v3874
    %5729 = vmatpush2.bf16.msra.mxu0 %v3873
    %5730 = vmatprep.mubr.bf16.mxu0 %v146
    %5731 = vmatmul.mubr.bf16.gmra.mxu0 %v145
    %v5732 = vpop.f32.mrf.mxu0
    %v5733 = vadd.f32 %v5692, %v5732
    %v5734 = vpop.f32.mrf.mxu0
    %v5735 = vadd.f32 %v5694, %v5734
    %v5736 = vpop.f32.mrf.mxu0
    %v5737 = vpop.f32.mrf.mxu0
    %5738 = vdwg.mxu0
    %v5739 = vld [vmem:[#allocation4] sm:$0xff]
    %v5740 = vld [vmem:[#allocation4 + $0x8] sm:$0xff]
    %v5743 = vlaneseq
    %v5744 = vshrl.u32 %v5743, 7
    %v5745 = vsub.s32 0, %v5744
    %v5746 = vrot.slane %v5739, %v5745
    %v5747 = vlaneseq
    %v5748 = vshrl.u32 %v5747, 7
    %v5749 = vsub.s32 1, %v5748
    %v5750 = vrot.slane %v5739, %v5749
    %v5751 = vlaneseq
    %v5752 = vshrl.u32 %v5751, 7
    %v5753 = vsub.s32 2, %v5752
    %v5754 = vrot.slane %v5739, %v5753
    %v5755 = vlaneseq
    %v5756 = vshrl.u32 %v5755, 7
    %v5757 = vsub.s32 3, %v5756
    %v5758 = vrot.slane %v5739, %v5757
    %v5759 = vlaneseq
    %v5760 = vshrl.u32 %v5759, 7
    %v5761 = vsub.s32 4, %v5760
    %v5762 = vrot.slane %v5739, %v5761
    %v5763 = vlaneseq
    %v5764 = vshrl.u32 %v5763, 7
    %v5765 = vsub.s32 5, %v5764
    %v5766 = vrot.slane %v5739, %v5765
    %v5767 = vlaneseq
    %v5768 = vshrl.u32 %v5767, 7
    %v5769 = vsub.s32 6, %v5768
    %v5770 = vrot.slane %v5739, %v5769
    %v5771 = vlaneseq
    %v5772 = vshrl.u32 %v5771, 7
    %v5773 = vsub.s32 7, %v5772
    %v5774 = vrot.slane %v5739, %v5773
    %v5775 = vlaneseq
    %v5776 = vshrl.u32 %v5775, 7
    %v5777 = vsub.s32 0, %v5776
    %v5778 = vrot.slane %v5740, %v5777
    %v5779 = vlaneseq
    %v5780 = vshrl.u32 %v5779, 7
    %v5781 = vsub.s32 1, %v5780
    %v5782 = vrot.slane %v5740, %v5781
    %v5783 = vlaneseq
    %v5784 = vshrl.u32 %v5783, 7
    %v5785 = vsub.s32 2, %v5784
    %v5786 = vrot.slane %v5740, %v5785
    %v5787 = vlaneseq
    %v5788 = vshrl.u32 %v5787, 7
    %v5789 = vsub.s32 3, %v5788
    %v5790 = vrot.slane %v5740, %v5789
    %v5791 = vlaneseq
    %v5792 = vshrl.u32 %v5791, 7
    %v5793 = vsub.s32 4, %v5792
    %v5794 = vrot.slane %v5740, %v5793
    %v5795 = vlaneseq
    %v5796 = vshrl.u32 %v5795, 7
    %v5797 = vsub.s32 5, %v5796
    %v5798 = vrot.slane %v5740, %v5797
    %v5799 = vlaneseq
    %v5800 = vshrl.u32 %v5799, 7
    %v5801 = vsub.s32 6, %v5800
    %v5802 = vrot.slane %v5740, %v5801
    %v5803 = vlaneseq
    %v5804 = vshrl.u32 %v5803, 7
    %v5805 = vsub.s32 7, %v5804
    %v5806 = vrot.slane %v5740, %v5805
    %v5823 = vmul.f32 %v4872, %v5746
    %v5824 = vmul.f32 %v4874, %v5750
    %v5825 = vmul.f32 %v4995, %v5754
    %v5826 = vmul.f32 %v4997, %v5758
    %v5827 = vmul.f32 %v5118, %v5762
    %v5828 = vmul.f32 %v5120, %v5766
    %v5829 = vmul.f32 %v5241, %v5770
    %v5830 = vmul.f32 %v5243, %v5774
    %v5831 = vmul.f32 %v5364, %v5778
    %v5832 = vmul.f32 %v5366, %v5782
    %v5833 = vmul.f32 %v5487, %v5786
    %v5834 = vmul.f32 %v5489, %v5790
    %v5835 = vmul.f32 %v5610, %v5794
    %v5836 = vmul.f32 %v5612, %v5798
    %v5837 = vmul.f32 %v5733, %v5802
    %v5838 = vmul.f32 %v5735, %v5806
    %v5839 = vld [vmem:[#allocation6] sm:$0xff]
    %v5840 = vld [vmem:[#allocation6 + $0x8] sm:$0xff]
    %v5843 = vlaneseq
    %v5844 = vshrl.u32 %v5843, 7
    %v5845 = vsub.s32 0, %v5844
    %v5846 = vrot.slane %v5839, %v5845
    %v5847 = vlaneseq
    %v5848 = vshrl.u32 %v5847, 7
    %v5849 = vsub.s32 1, %v5848
    %v5850 = vrot.slane %v5839, %v5849
    %v5851 = vlaneseq
    %v5852 = vshrl.u32 %v5851, 7
    %v5853 = vsub.s32 2, %v5852
    %v5854 = vrot.slane %v5839, %v5853
    %v5855 = vlaneseq
    %v5856 = vshrl.u32 %v5855, 7
    %v5857 = vsub.s32 3, %v5856
    %v5858 = vrot.slane %v5839, %v5857
    %v5859 = vlaneseq
    %v5860 = vshrl.u32 %v5859, 7
    %v5861 = vsub.s32 4, %v5860
    %v5862 = vrot.slane %v5839, %v5861
    %v5863 = vlaneseq
    %v5864 = vshrl.u32 %v5863, 7
    %v5865 = vsub.s32 5, %v5864
    %v5866 = vrot.slane %v5839, %v5865
    %v5867 = vlaneseq
    %v5868 = vshrl.u32 %v5867, 7
    %v5869 = vsub.s32 6, %v5868
    %v5870 = vrot.slane %v5839, %v5869
    %v5871 = vlaneseq
    %v5872 = vshrl.u32 %v5871, 7
    %v5873 = vsub.s32 7, %v5872
    %v5874 = vrot.slane %v5839, %v5873
    %v5875 = vlaneseq
    %v5876 = vshrl.u32 %v5875, 7
    %v5877 = vsub.s32 0, %v5876
    %v5878 = vrot.slane %v5840, %v5877
    %v5879 = vlaneseq
    %v5880 = vshrl.u32 %v5879, 7
    %v5881 = vsub.s32 1, %v5880
    %v5882 = vrot.slane %v5840, %v5881
    %v5883 = vlaneseq
    %v5884 = vshrl.u32 %v5883, 7
    %v5885 = vsub.s32 2, %v5884
    %v5886 = vrot.slane %v5840, %v5885
    %v5887 = vlaneseq
    %v5888 = vshrl.u32 %v5887, 7
    %v5889 = vsub.s32 3, %v5888
    %v5890 = vrot.slane %v5840, %v5889
    %v5891 = vlaneseq
    %v5892 = vshrl.u32 %v5891, 7
    %v5893 = vsub.s32 4, %v5892
    %v5894 = vrot.slane %v5840, %v5893
    %v5895 = vlaneseq
    %v5896 = vshrl.u32 %v5895, 7
    %v5897 = vsub.s32 5, %v5896
    %v5898 = vrot.slane %v5840, %v5897
    %v5899 = vlaneseq
    %v5900 = vshrl.u32 %v5899, 7
    %v5901 = vsub.s32 6, %v5900
    %v5902 = vrot.slane %v5840, %v5901
    %v5903 = vlaneseq
    %v5904 = vshrl.u32 %v5903, 7
    %v5905 = vsub.s32 7, %v5904
    %v5906 = vrot.slane %v5840, %v5905
    %v5923 = vadd.f32 %v5823, %v5846
    %v5924 = vadd.f32 %v5824, %v5850
    %v5925 = vadd.f32 %v5825, %v5854
    %v5926 = vadd.f32 %v5826, %v5858
    %v5927 = vadd.f32 %v5827, %v5862
    %v5928 = vadd.f32 %v5828, %v5866
    %v5929 = vadd.f32 %v5829, %v5870
    %v5930 = vadd.f32 %v5830, %v5874
    %v5931 = vadd.f32 %v5831, %v5878
    %v5932 = vadd.f32 %v5832, %v5882
    %v5933 = vadd.f32 %v5833, %v5886
    %v5934 = vadd.f32 %v5834, %v5890
    %v5935 = vadd.f32 %v5835, %v5894
    %v5936 = vadd.f32 %v5836, %v5898
    %v5937 = vadd.f32 %v5837, %v5902
    %v5938 = vadd.f32 %v5838, %v5906
    %v5939 = vmax.f32 %v5923, 0.0
    %v5940 = vmax.f32 %v5924, 0.0
    %v5941 = vmax.f32 %v5925, 0.0
    %v5942 = vmax.f32 %v5926, 0.0
    %v5943 = vmax.f32 %v5927, 0.0
    %v5944 = vmax.f32 %v5928, 0.0
    %v5945 = vmax.f32 %v5929, 0.0
    %v5946 = vmax.f32 %v5930, 0.0
    %v5947 = vmax.f32 %v5931, 0.0
    %v5948 = vmax.f32 %v5932, 0.0
    %v5949 = vmax.f32 %v5933, 0.0
    %v5950 = vmax.f32 %v5934, 0.0
    %v5951 = vmax.f32 %v5935, 0.0
    %v5952 = vmax.f32 %v5936, 0.0
    %v5953 = vmax.f32 %v5937, 0.0
    %v5954 = vmax.f32 %v5938, 0.0
    %v5955 = vmax.f32 %v5939, %v5943
    %v5956 = vmax.f32 %v5940, %v5944
    %v5957 = vmax.f32 %v5941, %v5945
    %v5958 = vmax.f32 %v5942, %v5946
    %v5959 = vmax.f32 %v5947, %v5951
    %v5960 = vmax.f32 %v5948, %v5952
    %v5961 = vmax.f32 %v5949, %v5953
    %v5962 = vmax.f32 %v5950, %v5954
    %v5963 = vmax.f32 %v5955, %v5959
    %v5964 = vmax.f32 %v5956, %v5960
    %v5965 = vmax.f32 %v5957, %v5961
    %v5966 = vmax.f32 %v5958, %v5962
    %v5967 = vpack.c.bf16 %v5963, %v5963
    %v5968 = vpack.c.bf16 %v5964, %v5964
    %v5969 = vpack.c.bf16 %v5965, %v5965
    %v5970 = vpack.c.bf16 %v5966, %v5966
    %v5971 = vld [vmem:[#allocation7] sm:$0xff]
    %v5972 = vld [vmem:[#allocation7 + $0x8] sm:$0xff]
    %v5973 = vld [vmem:[#allocation7 + $0x10] sm:$0xff]
    %v5974 = vld [vmem:[#allocation7 + $0x18] sm:$0xff]
    %v5975 = vld [vmem:[#allocation7 + $0x20] sm:$0xff]
    %v5976 = vld [vmem:[#allocation7 + $0x28] sm:$0xff]
    %v5977 = vld [vmem:[#allocation7 + $0x30] sm:$0xff]
    %v5978 = vld [vmem:[#allocation7 + $0x38] sm:$0xff]
    %v5979 = vld [vmem:[#allocation7 + $0x40] sm:$0xff]
    %v5980 = vld [vmem:[#allocation7 + $0x48] sm:$0xff]
    %v5981 = vld [vmem:[#allocation7 + $0x50] sm:$0xff]
    %v5982 = vld [vmem:[#allocation7 + $0x58] sm:$0xff]
    %v5983 = vld [vmem:[#allocation7 + $0x60] sm:$0xff]
    %v5984 = vld [vmem:[#allocation7 + $0x68] sm:$0xff]
    %v5985 = vld [vmem:[#allocation7 + $0x70] sm:$0xff]
    %v5986 = vld [vmem:[#allocation7 + $0x78] sm:$0xff]
    %v5987 = vld [vmem:[#allocation7 + $0x80] sm:$0xff]
    %v5988 = vld [vmem:[#allocation7 + $0x88] sm:$0xff]
    %v5989 = vld [vmem:[#allocation7 + $0x90] sm:$0xff]
    %v5990 = vld [vmem:[#allocation7 + $0x98] sm:$0xff]
    %v5991 = vld [vmem:[#allocation7 + $0xa0] sm:$0xff]
    %v5992 = vld [vmem:[#allocation7 + $0xa8] sm:$0xff]
    %v5993 = vld [vmem:[#allocation7 + $0xb0] sm:$0xff]
    %v5994 = vld [vmem:[#allocation7 + $0xb8] sm:$0xff]
    %v5995 = vld [vmem:[#allocation7 + $0xc0] sm:$0xff]
    %v5996 = vld [vmem:[#allocation7 + $0xc8] sm:$0xff]
    %v5997 = vld [vmem:[#allocation7 + $0xd0] sm:$0xff]
    %v5998 = vld [vmem:[#allocation7 + $0xd8] sm:$0xff]
    %v5999 = vld [vmem:[#allocation7 + $0xe0] sm:$0xff]
    %v6000 = vld [vmem:[#allocation7 + $0xe8] sm:$0xff]
    %v6001 = vld [vmem:[#allocation7 + $0xf0] sm:$0xff]
    %v6002 = vld [vmem:[#allocation7 + $0xf8] sm:$0xff]
    %v6003 = vld [vmem:[#allocation7 + $0x100] sm:$0xff]
    %v6004 = vld [vmem:[#allocation7 + $0x108] sm:$0xff]
    %v6005 = vld [vmem:[#allocation7 + $0x110] sm:$0xff]
    %v6006 = vld [vmem:[#allocation7 + $0x118] sm:$0xff]
    %v6007 = vld [vmem:[#allocation7 + $0x120] sm:$0xff]
    %v6008 = vld [vmem:[#allocation7 + $0x128] sm:$0xff]
    %v6009 = vld [vmem:[#allocation7 + $0x130] sm:$0xff]
    %v6010 = vld [vmem:[#allocation7 + $0x138] sm:$0xff]
    %v6011 = vld [vmem:[#allocation7 + $0x140] sm:$0xff]
    %v6012 = vld [vmem:[#allocation7 + $0x148] sm:$0xff]
    %v6013 = vld [vmem:[#allocation7 + $0x150] sm:$0xff]
    %v6014 = vld [vmem:[#allocation7 + $0x158] sm:$0xff]
    %v6015 = vld [vmem:[#allocation7 + $0x160] sm:$0xff]
    %v6016 = vld [vmem:[#allocation7 + $0x168] sm:$0xff]
    %v6017 = vld [vmem:[#allocation7 + $0x170] sm:$0xff]
    %v6018 = vld [vmem:[#allocation7 + $0x178] sm:$0xff]
    %v6019 = vld [vmem:[#allocation7 + $0x180] sm:$0xff]
    %v6020 = vld [vmem:[#allocation7 + $0x188] sm:$0xff]
    %v6021 = vld [vmem:[#allocation7 + $0x190] sm:$0xff]
    %v6022 = vld [vmem:[#allocation7 + $0x198] sm:$0xff]
    %v6023 = vld [vmem:[#allocation7 + $0x1a0] sm:$0xff]
    %v6024 = vld [vmem:[#allocation7 + $0x1a8] sm:$0xff]
    %v6025 = vld [vmem:[#allocation7 + $0x1b0] sm:$0xff]
    %v6026 = vld [vmem:[#allocation7 + $0x1b8] sm:$0xff]
    %v6027 = vld [vmem:[#allocation7 + $0x1c0] sm:$0xff]
    %v6028 = vld [vmem:[#allocation7 + $0x1c8] sm:$0xff]
    %v6029 = vld [vmem:[#allocation7 + $0x1d0] sm:$0xff]
    %v6030 = vld [vmem:[#allocation7 + $0x1d8] sm:$0xff]
    %v6031 = vld [vmem:[#allocation7 + $0x1e0] sm:$0xff]
    %v6032 = vld [vmem:[#allocation7 + $0x1e8] sm:$0xff]
    %v6033 = vld [vmem:[#allocation7 + $0x1f0] sm:$0xff]
    %v6034 = vld [vmem:[#allocation7 + $0x1f8] sm:$0xff]
    %v6035 = vld [vmem:[#allocation7 + $0x200] sm:$0xff]
    %v6036 = vld [vmem:[#allocation7 + $0x208] sm:$0xff]
    %v6037 = vld [vmem:[#allocation7 + $0x210] sm:$0xff]
    %v6038 = vld [vmem:[#allocation7 + $0x218] sm:$0xff]
    %v6039 = vld [vmem:[#allocation7 + $0x220] sm:$0xff]
    %v6040 = vld [vmem:[#allocation7 + $0x228] sm:$0xff]
    %v6041 = vld [vmem:[#allocation7 + $0x230] sm:$0xff]
    %v6042 = vld [vmem:[#allocation7 + $0x238] sm:$0xff]
    %v6043 = vld [vmem:[#allocation7 + $0x240] sm:$0xff]
    %v6044 = vld [vmem:[#allocation7 + $0x248] sm:$0xff]
    %v6045 = vld [vmem:[#allocation7 + $0x250] sm:$0xff]
    %v6046 = vld [vmem:[#allocation7 + $0x258] sm:$0xff]
    %v6047 = vld [vmem:[#allocation7 + $0x260] sm:$0xff]
    %v6048 = vld [vmem:[#allocation7 + $0x268] sm:$0xff]
    %v6049 = vld [vmem:[#allocation7 + $0x270] sm:$0xff]
    %v6050 = vld [vmem:[#allocation7 + $0x278] sm:$0xff]
    %v6051 = vld [vmem:[#allocation7 + $0x280] sm:$0xff]
    %v6052 = vld [vmem:[#allocation7 + $0x288] sm:$0xff]
    %v6053 = vld [vmem:[#allocation7 + $0x290] sm:$0xff]
    %v6054 = vld [vmem:[#allocation7 + $0x298] sm:$0xff]
    %v6055 = vld [vmem:[#allocation7 + $0x2a0] sm:$0xff]
    %v6056 = vld [vmem:[#allocation7 + $0x2a8] sm:$0xff]
    %v6057 = vld [vmem:[#allocation7 + $0x2b0] sm:$0xff]
    %v6058 = vld [vmem:[#allocation7 + $0x2b8] sm:$0xff]
    %v6059 = vld [vmem:[#allocation7 + $0x2c0] sm:$0xff]
    %v6060 = vld [vmem:[#allocation7 + $0x2c8] sm:$0xff]
    %v6061 = vld [vmem:[#allocation7 + $0x2d0] sm:$0xff]
    %v6062 = vld [vmem:[#allocation7 + $0x2d8] sm:$0xff]
    %v6063 = vld [vmem:[#allocation7 + $0x2e0] sm:$0xff]
    %v6064 = vld [vmem:[#allocation7 + $0x2e8] sm:$0xff]
    %v6065 = vld [vmem:[#allocation7 + $0x2f0] sm:$0xff]
    %v6066 = vld [vmem:[#allocation7 + $0x2f8] sm:$0xff]
    %v6067 = vld [vmem:[#allocation7 + $0x300] sm:$0xff]
    %v6068 = vld [vmem:[#allocation7 + $0x308] sm:$0xff]
    %v6069 = vld [vmem:[#allocation7 + $0x310] sm:$0xff]
    %v6070 = vld [vmem:[#allocation7 + $0x318] sm:$0xff]
    %v6071 = vld [vmem:[#allocation7 + $0x320] sm:$0xff]
    %v6072 = vld [vmem:[#allocation7 + $0x328] sm:$0xff]
    %v6073 = vld [vmem:[#allocation7 + $0x330] sm:$0xff]
    %v6074 = vld [vmem:[#allocation7 + $0x338] sm:$0xff]
    %v6075 = vld [vmem:[#allocation7 + $0x340] sm:$0xff]
    %v6076 = vld [vmem:[#allocation7 + $0x348] sm:$0xff]
    %v6077 = vld [vmem:[#allocation7 + $0x350] sm:$0xff]
    %v6078 = vld [vmem:[#allocation7 + $0x358] sm:$0xff]
    %v6079 = vld [vmem:[#allocation7 + $0x360] sm:$0xff]
    %v6080 = vld [vmem:[#allocation7 + $0x368] sm:$0xff]
    %v6081 = vld [vmem:[#allocation7 + $0x370] sm:$0xff]
    %v6082 = vld [vmem:[#allocation7 + $0x378] sm:$0xff]
    %v6083 = vld [vmem:[#allocation7 + $0x380] sm:$0xff]
    %v6084 = vld [vmem:[#allocation7 + $0x388] sm:$0xff]
    %v6085 = vld [vmem:[#allocation7 + $0x390] sm:$0xff]
    %v6086 = vld [vmem:[#allocation7 + $0x398] sm:$0xff]
    %v6087 = vld [vmem:[#allocation7 + $0x3a0] sm:$0xff]
    %v6088 = vld [vmem:[#allocation7 + $0x3a8] sm:$0xff]
    %v6089 = vld [vmem:[#allocation7 + $0x3b0] sm:$0xff]
    %v6090 = vld [vmem:[#allocation7 + $0x3b8] sm:$0xff]
    %v6091 = vld [vmem:[#allocation7 + $0x3c0] sm:$0xff]
    %v6092 = vld [vmem:[#allocation7 + $0x3c8] sm:$0xff]
    %v6093 = vld [vmem:[#allocation7 + $0x3d0] sm:$0xff]
    %v6094 = vld [vmem:[#allocation7 + $0x3d8] sm:$0xff]
    %v6095 = vld [vmem:[#allocation7 + $0x3e0] sm:$0xff]
    %v6096 = vld [vmem:[#allocation7 + $0x3e8] sm:$0xff]
    %v6097 = vld [vmem:[#allocation7 + $0x3f0] sm:$0xff]
    %v6098 = vld [vmem:[#allocation7 + $0x3f8] sm:$0xff]
    %v6099 = vld [vmem:[#allocation7 + $0x400] sm:$0xff]
    %v6100 = vld [vmem:[#allocation7 + $0x408] sm:$0xff]
    %v6101 = vld [vmem:[#allocation7 + $0x410] sm:$0xff]
    %v6102 = vld [vmem:[#allocation7 + $0x418] sm:$0xff]
    %v6103 = vld [vmem:[#allocation7 + $0x420] sm:$0xff]
    %v6104 = vld [vmem:[#allocation7 + $0x428] sm:$0xff]
    %v6105 = vld [vmem:[#allocation7 + $0x430] sm:$0xff]
    %v6106 = vld [vmem:[#allocation7 + $0x438] sm:$0xff]
    %v6107 = vld [vmem:[#allocation7 + $0x440] sm:$0xff]
    %v6108 = vld [vmem:[#allocation7 + $0x448] sm:$0xff]
    %v6109 = vld [vmem:[#allocation7 + $0x450] sm:$0xff]
    %v6110 = vld [vmem:[#allocation7 + $0x458] sm:$0xff]
    %v6111 = vld [vmem:[#allocation7 + $0x460] sm:$0xff]
    %v6112 = vld [vmem:[#allocation7 + $0x468] sm:$0xff]
    %v6113 = vld [vmem:[#allocation7 + $0x470] sm:$0xff]
    %v6114 = vld [vmem:[#allocation7 + $0x478] sm:$0xff]
    %v6115 = vld [vmem:[#allocation7 + $0x480] sm:$0xff]
    %v6116 = vld [vmem:[#allocation7 + $0x488] sm:$0xff]
    %v6117 = vld [vmem:[#allocation7 + $0x490] sm:$0xff]
    %v6118 = vld [vmem:[#allocation7 + $0x498] sm:$0xff]
    %v6119 = vld [vmem:[#allocation7 + $0x4a0] sm:$0xff]
    %v6120 = vld [vmem:[#allocation7 + $0x4a8] sm:$0xff]
    %v6121 = vld [vmem:[#allocation7 + $0x4b0] sm:$0xff]
    %v6122 = vld [vmem:[#allocation7 + $0x4b8] sm:$0xff]
    %v6123 = vld [vmem:[#allocation7 + $0x4c0] sm:$0xff]
    %v6124 = vld [vmem:[#allocation7 + $0x4c8] sm:$0xff]
    %v6125 = vld [vmem:[#allocation7 + $0x4d0] sm:$0xff]
    %v6126 = vld [vmem:[#allocation7 + $0x4d8] sm:$0xff]
    %v6127 = vld [vmem:[#allocation7 + $0x4e0] sm:$0xff]
    %v6128 = vld [vmem:[#allocation7 + $0x4e8] sm:$0xff]
    %v6129 = vld [vmem:[#allocation7 + $0x4f0] sm:$0xff]
    %v6130 = vld [vmem:[#allocation7 + $0x4f8] sm:$0xff]
    %v6131 = vld [vmem:[#allocation7 + $0x500] sm:$0xff]
    %v6132 = vld [vmem:[#allocation7 + $0x508] sm:$0xff]
    %v6133 = vld [vmem:[#allocation7 + $0x510] sm:$0xff]
    %v6134 = vld [vmem:[#allocation7 + $0x518] sm:$0xff]
    %v6135 = vld [vmem:[#allocation7 + $0x520] sm:$0xff]
    %v6136 = vld [vmem:[#allocation7 + $0x528] sm:$0xff]
    %v6137 = vld [vmem:[#allocation7 + $0x530] sm:$0xff]
    %v6138 = vld [vmem:[#allocation7 + $0x538] sm:$0xff]
    %v6139 = vld [vmem:[#allocation7 + $0x540] sm:$0xff]
    %v6140 = vld [vmem:[#allocation7 + $0x548] sm:$0xff]
    %v6141 = vld [vmem:[#allocation7 + $0x550] sm:$0xff]
    %v6142 = vld [vmem:[#allocation7 + $0x558] sm:$0xff]
    %v6143 = vld [vmem:[#allocation7 + $0x560] sm:$0xff]
    %v6144 = vld [vmem:[#allocation7 + $0x568] sm:$0xff]
    %v6145 = vld [vmem:[#allocation7 + $0x570] sm:$0xff]
    %v6146 = vld [vmem:[#allocation7 + $0x578] sm:$0xff]
    %v6147 = vld [vmem:[#allocation7 + $0x580] sm:$0xff]
    %v6148 = vld [vmem:[#allocation7 + $0x588] sm:$0xff]
    %v6149 = vld [vmem:[#allocation7 + $0x590] sm:$0xff]
    %v6150 = vld [vmem:[#allocation7 + $0x598] sm:$0xff]
    %v6151 = vld [vmem:[#allocation7 + $0x5a0] sm:$0xff]
    %v6152 = vld [vmem:[#allocation7 + $0x5a8] sm:$0xff]
    %v6153 = vld [vmem:[#allocation7 + $0x5b0] sm:$0xff]
    %v6154 = vld [vmem:[#allocation7 + $0x5b8] sm:$0xff]
    %v6155 = vld [vmem:[#allocation7 + $0x5c0] sm:$0xff]
    %v6156 = vld [vmem:[#allocation7 + $0x5c8] sm:$0xff]
    %v6157 = vld [vmem:[#allocation7 + $0x5d0] sm:$0xff]
    %v6158 = vld [vmem:[#allocation7 + $0x5d8] sm:$0xff]
    %v6159 = vld [vmem:[#allocation7 + $0x5e0] sm:$0xff]
    %v6160 = vld [vmem:[#allocation7 + $0x5e8] sm:$0xff]
    %v6161 = vld [vmem:[#allocation7 + $0x5f0] sm:$0xff]
    %v6162 = vld [vmem:[#allocation7 + $0x5f8] sm:$0xff]
    %v6163 = vld [vmem:[#allocation7 + $0x600] sm:$0xff]
    %v6164 = vld [vmem:[#allocation7 + $0x608] sm:$0xff]
    %v6165 = vld [vmem:[#allocation7 + $0x610] sm:$0xff]
    %v6166 = vld [vmem:[#allocation7 + $0x618] sm:$0xff]
    %v6167 = vld [vmem:[#allocation7 + $0x620] sm:$0xff]
    %v6168 = vld [vmem:[#allocation7 + $0x628] sm:$0xff]
    %v6169 = vld [vmem:[#allocation7 + $0x630] sm:$0xff]
    %v6170 = vld [vmem:[#allocation7 + $0x638] sm:$0xff]
    %v6171 = vld [vmem:[#allocation7 + $0x640] sm:$0xff]
    %v6172 = vld [vmem:[#allocation7 + $0x648] sm:$0xff]
    %v6173 = vld [vmem:[#allocation7 + $0x650] sm:$0xff]
    %v6174 = vld [vmem:[#allocation7 + $0x658] sm:$0xff]
    %v6175 = vld [vmem:[#allocation7 + $0x660] sm:$0xff]
    %v6176 = vld [vmem:[#allocation7 + $0x668] sm:$0xff]
    %v6177 = vld [vmem:[#allocation7 + $0x670] sm:$0xff]
    %v6178 = vld [vmem:[#allocation7 + $0x678] sm:$0xff]
    %v6179 = vld [vmem:[#allocation7 + $0x680] sm:$0xff]
    %v6180 = vld [vmem:[#allocation7 + $0x688] sm:$0xff]
    %v6181 = vld [vmem:[#allocation7 + $0x690] sm:$0xff]
    %v6182 = vld [vmem:[#allocation7 + $0x698] sm:$0xff]
    %v6183 = vld [vmem:[#allocation7 + $0x6a0] sm:$0xff]
    %v6184 = vld [vmem:[#allocation7 + $0x6a8] sm:$0xff]
    %v6185 = vld [vmem:[#allocation7 + $0x6b0] sm:$0xff]
    %v6186 = vld [vmem:[#allocation7 + $0x6b8] sm:$0xff]
    %v6187 = vld [vmem:[#allocation7 + $0x6c0] sm:$0xff]
    %v6188 = vld [vmem:[#allocation7 + $0x6c8] sm:$0xff]
    %v6189 = vld [vmem:[#allocation7 + $0x6d0] sm:$0xff]
    %v6190 = vld [vmem:[#allocation7 + $0x6d8] sm:$0xff]
    %v6191 = vld [vmem:[#allocation7 + $0x6e0] sm:$0xff]
    %v6192 = vld [vmem:[#allocation7 + $0x6e8] sm:$0xff]
    %v6193 = vld [vmem:[#allocation7 + $0x6f0] sm:$0xff]
    %v6194 = vld [vmem:[#allocation7 + $0x6f8] sm:$0xff]
    %v6195 = vld [vmem:[#allocation7 + $0x700] sm:$0xff]
    %v6196 = vld [vmem:[#allocation7 + $0x708] sm:$0xff]
    %v6197 = vld [vmem:[#allocation7 + $0x710] sm:$0xff]
    %v6198 = vld [vmem:[#allocation7 + $0x718] sm:$0xff]
    %v6199 = vld [vmem:[#allocation7 + $0x720] sm:$0xff]
    %v6200 = vld [vmem:[#allocation7 + $0x728] sm:$0xff]
    %v6201 = vld [vmem:[#allocation7 + $0x730] sm:$0xff]
    %v6202 = vld [vmem:[#allocation7 + $0x738] sm:$0xff]
    %v6203 = vld [vmem:[#allocation7 + $0x740] sm:$0xff]
    %v6204 = vld [vmem:[#allocation7 + $0x748] sm:$0xff]
    %v6205 = vld [vmem:[#allocation7 + $0x750] sm:$0xff]
    %v6206 = vld [vmem:[#allocation7 + $0x758] sm:$0xff]
    %v6207 = vld [vmem:[#allocation7 + $0x760] sm:$0xff]
    %v6208 = vld [vmem:[#allocation7 + $0x768] sm:$0xff]
    %v6209 = vld [vmem:[#allocation7 + $0x770] sm:$0xff]
    %v6210 = vld [vmem:[#allocation7 + $0x778] sm:$0xff]
    %v6211 = vld [vmem:[#allocation7 + $0x780] sm:$0xff]
    %v6212 = vld [vmem:[#allocation7 + $0x788] sm:$0xff]
    %v6213 = vld [vmem:[#allocation7 + $0x790] sm:$0xff]
    %v6214 = vld [vmem:[#allocation7 + $0x798] sm:$0xff]
    %v6215 = vld [vmem:[#allocation7 + $0x7a0] sm:$0xff]
    %v6216 = vld [vmem:[#allocation7 + $0x7a8] sm:$0xff]
    %v6217 = vld [vmem:[#allocation7 + $0x7b0] sm:$0xff]
    %v6218 = vld [vmem:[#allocation7 + $0x7b8] sm:$0xff]
    %v6219 = vld [vmem:[#allocation7 + $0x7c0] sm:$0xff]
    %v6220 = vld [vmem:[#allocation7 + $0x7c8] sm:$0xff]
    %v6221 = vld [vmem:[#allocation7 + $0x7d0] sm:$0xff]
    %v6222 = vld [vmem:[#allocation7 + $0x7d8] sm:$0xff]
    %v6223 = vld [vmem:[#allocation7 + $0x7e0] sm:$0xff]
    %v6224 = vld [vmem:[#allocation7 + $0x7e8] sm:$0xff]
    %v6225 = vld [vmem:[#allocation7 + $0x7f0] sm:$0xff]
    %v6226 = vld [vmem:[#allocation7 + $0x7f8] sm:$0xff]
    %v6483 = vunpack.c.l.b16 %v5971
    %v6484 = vunpack.c.h.b16 %v5971
    %v6485 = vunpack.c.l.b16 %v5972
    %v6486 = vunpack.c.h.b16 %v5972
    %v6487 = vunpack.c.l.b16 %v5973
    %v6488 = vunpack.c.h.b16 %v5973
    %v6489 = vunpack.c.l.b16 %v5974
    %v6490 = vunpack.c.h.b16 %v5974
    %v6491 = vunpack.c.l.b16 %v5975
    %v6492 = vunpack.c.h.b16 %v5975
    %v6493 = vunpack.c.l.b16 %v5976
    %v6494 = vunpack.c.h.b16 %v5976
    %v6495 = vunpack.c.l.b16 %v5977
    %v6496 = vunpack.c.h.b16 %v5977
    %v6497 = vunpack.c.l.b16 %v5978
    %v6498 = vunpack.c.h.b16 %v5978
    %v6499 = vunpack.c.l.b16 %v5979
    %v6500 = vunpack.c.h.b16 %v5979
    %v6501 = vunpack.c.l.b16 %v5980
    %v6502 = vunpack.c.h.b16 %v5980
    %v6503 = vunpack.c.l.b16 %v5981
    %v6504 = vunpack.c.h.b16 %v5981
    %v6505 = vunpack.c.l.b16 %v5982
    %v6506 = vunpack.c.h.b16 %v5982
    %v6507 = vunpack.c.l.b16 %v5983
    %v6508 = vunpack.c.h.b16 %v5983
    %v6509 = vunpack.c.l.b16 %v5984
    %v6510 = vunpack.c.h.b16 %v5984
    %v6511 = vunpack.c.l.b16 %v5985
    %v6512 = vunpack.c.h.b16 %v5985
    %v6513 = vunpack.c.l.b16 %v5986
    %v6514 = vunpack.c.h.b16 %v5986
    %v6515 = vunpack.c.l.b16 %v5987
    %v6516 = vunpack.c.h.b16 %v5987
    %v6517 = vunpack.c.l.b16 %v5988
    %v6518 = vunpack.c.h.b16 %v5988
    %v6519 = vunpack.c.l.b16 %v5989
    %v6520 = vunpack.c.h.b16 %v5989
    %v6521 = vunpack.c.l.b16 %v5990
    %v6522 = vunpack.c.h.b16 %v5990
    %v6523 = vunpack.c.l.b16 %v5991
    %v6524 = vunpack.c.h.b16 %v5991
    %v6525 = vunpack.c.l.b16 %v5992
    %v6526 = vunpack.c.h.b16 %v5992
    %v6527 = vunpack.c.l.b16 %v5993
    %v6528 = vunpack.c.h.b16 %v5993
    %v6529 = vunpack.c.l.b16 %v5994
    %v6530 = vunpack.c.h.b16 %v5994
    %v6531 = vunpack.c.l.b16 %v5995
    %v6532 = vunpack.c.h.b16 %v5995
    %v6533 = vunpack.c.l.b16 %v5996
    %v6534 = vunpack.c.h.b16 %v5996
    %v6535 = vunpack.c.l.b16 %v5997
    %v6536 = vunpack.c.h.b16 %v5997
    %v6537 = vunpack.c.l.b16 %v5998
    %v6538 = vunpack.c.h.b16 %v5998
    %v6539 = vunpack.c.l.b16 %v5999
    %v6540 = vunpack.c.h.b16 %v5999
    %v6541 = vunpack.c.l.b16 %v6000
    %v6542 = vunpack.c.h.b16 %v6000
    %v6543 = vunpack.c.l.b16 %v6001
    %v6544 = vunpack.c.h.b16 %v6001
    %v6545 = vunpack.c.l.b16 %v6002
    %v6546 = vunpack.c.h.b16 %v6002
    %v6547 = vunpack.c.l.b16 %v6003
    %v6548 = vunpack.c.h.b16 %v6003
    %v6549 = vunpack.c.l.b16 %v6004
    %v6550 = vunpack.c.h.b16 %v6004
    %v6551 = vunpack.c.l.b16 %v6005
    %v6552 = vunpack.c.h.b16 %v6005
    %v6553 = vunpack.c.l.b16 %v6006
    %v6554 = vunpack.c.h.b16 %v6006
    %v6555 = vunpack.c.l.b16 %v6007
    %v6556 = vunpack.c.h.b16 %v6007
    %v6557 = vunpack.c.l.b16 %v6008
    %v6558 = vunpack.c.h.b16 %v6008
    %v6559 = vunpack.c.l.b16 %v6009
    %v6560 = vunpack.c.h.b16 %v6009
    %v6561 = vunpack.c.l.b16 %v6010
    %v6562 = vunpack.c.h.b16 %v6010
    %v6563 = vunpack.c.l.b16 %v6011
    %v6564 = vunpack.c.h.b16 %v6011
    %v6565 = vunpack.c.l.b16 %v6012
    %v6566 = vunpack.c.h.b16 %v6012
    %v6567 = vunpack.c.l.b16 %v6013
    %v6568 = vunpack.c.h.b16 %v6013
    %v6569 = vunpack.c.l.b16 %v6014
    %v6570 = vunpack.c.h.b16 %v6014
    %v6571 = vunpack.c.l.b16 %v6015
    %v6572 = vunpack.c.h.b16 %v6015
    %v6573 = vunpack.c.l.b16 %v6016
    %v6574 = vunpack.c.h.b16 %v6016
    %v6575 = vunpack.c.l.b16 %v6017
    %v6576 = vunpack.c.h.b16 %v6017
    %v6577 = vunpack.c.l.b16 %v6018
    %v6578 = vunpack.c.h.b16 %v6018
    %v6579 = vunpack.c.l.b16 %v6019
    %v6580 = vunpack.c.h.b16 %v6019
    %v6581 = vunpack.c.l.b16 %v6020
    %v6582 = vunpack.c.h.b16 %v6020
    %v6583 = vunpack.c.l.b16 %v6021
    %v6584 = vunpack.c.h.b16 %v6021
    %v6585 = vunpack.c.l.b16 %v6022
    %v6586 = vunpack.c.h.b16 %v6022
    %v6587 = vunpack.c.l.b16 %v6023
    %v6588 = vunpack.c.h.b16 %v6023
    %v6589 = vunpack.c.l.b16 %v6024
    %v6590 = vunpack.c.h.b16 %v6024
    %v6591 = vunpack.c.l.b16 %v6025
    %v6592 = vunpack.c.h.b16 %v6025
    %v6593 = vunpack.c.l.b16 %v6026
    %v6594 = vunpack.c.h.b16 %v6026
    %v6595 = vunpack.c.l.b16 %v6027
    %v6596 = vunpack.c.h.b16 %v6027
    %v6597 = vunpack.c.l.b16 %v6028
    %v6598 = vunpack.c.h.b16 %v6028
    %v6599 = vunpack.c.l.b16 %v6029
    %v6600 = vunpack.c.h.b16 %v6029
    %v6601 = vunpack.c.l.b16 %v6030
    %v6602 = vunpack.c.h.b16 %v6030
    %v6603 = vunpack.c.l.b16 %v6031
    %v6604 = vunpack.c.h.b16 %v6031
    %v6605 = vunpack.c.l.b16 %v6032
    %v6606 = vunpack.c.h.b16 %v6032
    %v6607 = vunpack.c.l.b16 %v6033
    %v6608 = vunpack.c.h.b16 %v6033
    %v6609 = vunpack.c.l.b16 %v6034
    %v6610 = vunpack.c.h.b16 %v6034
    %v6611 = vunpack.c.l.b16 %v6035
    %v6612 = vunpack.c.h.b16 %v6035
    %v6613 = vunpack.c.l.b16 %v6036
    %v6614 = vunpack.c.h.b16 %v6036
    %v6615 = vunpack.c.l.b16 %v6037
    %v6616 = vunpack.c.h.b16 %v6037
    %v6617 = vunpack.c.l.b16 %v6038
    %v6618 = vunpack.c.h.b16 %v6038
    %v6619 = vunpack.c.l.b16 %v6039
    %v6620 = vunpack.c.h.b16 %v6039
    %v6621 = vunpack.c.l.b16 %v6040
    %v6622 = vunpack.c.h.b16 %v6040
    %v6623 = vunpack.c.l.b16 %v6041
    %v6624 = vunpack.c.h.b16 %v6041
    %v6625 = vunpack.c.l.b16 %v6042
    %v6626 = vunpack.c.h.b16 %v6042
    %v6627 = vunpack.c.l.b16 %v6043
    %v6628 = vunpack.c.h.b16 %v6043
    %v6629 = vunpack.c.l.b16 %v6044
    %v6630 = vunpack.c.h.b16 %v6044
    %v6631 = vunpack.c.l.b16 %v6045
    %v6632 = vunpack.c.h.b16 %v6045
    %v6633 = vunpack.c.l.b16 %v6046
    %v6634 = vunpack.c.h.b16 %v6046
    %v6635 = vunpack.c.l.b16 %v6047
    %v6636 = vunpack.c.h.b16 %v6047
    %v6637 = vunpack.c.l.b16 %v6048
    %v6638 = vunpack.c.h.b16 %v6048
    %v6639 = vunpack.c.l.b16 %v6049
    %v6640 = vunpack.c.h.b16 %v6049
    %v6641 = vunpack.c.l.b16 %v6050
    %v6642 = vunpack.c.h.b16 %v6050
    %v6643 = vunpack.c.l.b16 %v6051
    %v6644 = vunpack.c.h.b16 %v6051
    %v6645 = vunpack.c.l.b16 %v6052
    %v6646 = vunpack.c.h.b16 %v6052
    %v6647 = vunpack.c.l.b16 %v6053
    %v6648 = vunpack.c.h.b16 %v6053
    %v6649 = vunpack.c.l.b16 %v6054
    %v6650 = vunpack.c.h.b16 %v6054
    %v6651 = vunpack.c.l.b16 %v6055
    %v6652 = vunpack.c.h.b16 %v6055
    %v6653 = vunpack.c.l.b16 %v6056
    %v6654 = vunpack.c.h.b16 %v6056
    %v6655 = vunpack.c.l.b16 %v6057
    %v6656 = vunpack.c.h.b16 %v6057
    %v6657 = vunpack.c.l.b16 %v6058
    %v6658 = vunpack.c.h.b16 %v6058
    %v6659 = vunpack.c.l.b16 %v6059
    %v6660 = vunpack.c.h.b16 %v6059
    %v6661 = vunpack.c.l.b16 %v6060
    %v6662 = vunpack.c.h.b16 %v6060
    %v6663 = vunpack.c.l.b16 %v6061
    %v6664 = vunpack.c.h.b16 %v6061
    %v6665 = vunpack.c.l.b16 %v6062
    %v6666 = vunpack.c.h.b16 %v6062
    %v6667 = vunpack.c.l.b16 %v6063
    %v6668 = vunpack.c.h.b16 %v6063
    %v6669 = vunpack.c.l.b16 %v6064
    %v6670 = vunpack.c.h.b16 %v6064
    %v6671 = vunpack.c.l.b16 %v6065
    %v6672 = vunpack.c.h.b16 %v6065
    %v6673 = vunpack.c.l.b16 %v6066
    %v6674 = vunpack.c.h.b16 %v6066
    %v6675 = vunpack.c.l.b16 %v6067
    %v6676 = vunpack.c.h.b16 %v6067
    %v6677 = vunpack.c.l.b16 %v6068
    %v6678 = vunpack.c.h.b16 %v6068
    %v6679 = vunpack.c.l.b16 %v6069
    %v6680 = vunpack.c.h.b16 %v6069
    %v6681 = vunpack.c.l.b16 %v6070
    %v6682 = vunpack.c.h.b16 %v6070
    %v6683 = vunpack.c.l.b16 %v6071
    %v6684 = vunpack.c.h.b16 %v6071
    %v6685 = vunpack.c.l.b16 %v6072
    %v6686 = vunpack.c.h.b16 %v6072
    %v6687 = vunpack.c.l.b16 %v6073
    %v6688 = vunpack.c.h.b16 %v6073
    %v6689 = vunpack.c.l.b16 %v6074
    %v6690 = vunpack.c.h.b16 %v6074
    %v6691 = vunpack.c.l.b16 %v6075
    %v6692 = vunpack.c.h.b16 %v6075
    %v6693 = vunpack.c.l.b16 %v6076
    %v6694 = vunpack.c.h.b16 %v6076
    %v6695 = vunpack.c.l.b16 %v6077
    %v6696 = vunpack.c.h.b16 %v6077
    %v6697 = vunpack.c.l.b16 %v6078
    %v6698 = vunpack.c.h.b16 %v6078
    %v6699 = vunpack.c.l.b16 %v6079
    %v6700 = vunpack.c.h.b16 %v6079
    %v6701 = vunpack.c.l.b16 %v6080
    %v6702 = vunpack.c.h.b16 %v6080
    %v6703 = vunpack.c.l.b16 %v6081
    %v6704 = vunpack.c.h.b16 %v6081
    %v6705 = vunpack.c.l.b16 %v6082
    %v6706 = vunpack.c.h.b16 %v6082
    %v6707 = vunpack.c.l.b16 %v6083
    %v6708 = vunpack.c.h.b16 %v6083
    %v6709 = vunpack.c.l.b16 %v6084
    %v6710 = vunpack.c.h.b16 %v6084
    %v6711 = vunpack.c.l.b16 %v6085
    %v6712 = vunpack.c.h.b16 %v6085
    %v6713 = vunpack.c.l.b16 %v6086
    %v6714 = vunpack.c.h.b16 %v6086
    %v6715 = vunpack.c.l.b16 %v6087
    %v6716 = vunpack.c.h.b16 %v6087
    %v6717 = vunpack.c.l.b16 %v6088
    %v6718 = vunpack.c.h.b16 %v6088
    %v6719 = vunpack.c.l.b16 %v6089
    %v6720 = vunpack.c.h.b16 %v6089
    %v6721 = vunpack.c.l.b16 %v6090
    %v6722 = vunpack.c.h.b16 %v6090
    %v6723 = vunpack.c.l.b16 %v6091
    %v6724 = vunpack.c.h.b16 %v6091
    %v6725 = vunpack.c.l.b16 %v6092
    %v6726 = vunpack.c.h.b16 %v6092
    %v6727 = vunpack.c.l.b16 %v6093
    %v6728 = vunpack.c.h.b16 %v6093
    %v6729 = vunpack.c.l.b16 %v6094
    %v6730 = vunpack.c.h.b16 %v6094
    %v6731 = vunpack.c.l.b16 %v6095
    %v6732 = vunpack.c.h.b16 %v6095
    %v6733 = vunpack.c.l.b16 %v6096
    %v6734 = vunpack.c.h.b16 %v6096
    %v6735 = vunpack.c.l.b16 %v6097
    %v6736 = vunpack.c.h.b16 %v6097
    %v6737 = vunpack.c.l.b16 %v6098
    %v6738 = vunpack.c.h.b16 %v6098
    %v6739 = vunpack.c.l.b16 %v6099
    %v6740 = vunpack.c.h.b16 %v6099
    %v6741 = vunpack.c.l.b16 %v6100
    %v6742 = vunpack.c.h.b16 %v6100
    %v6743 = vunpack.c.l.b16 %v6101
    %v6744 = vunpack.c.h.b16 %v6101
    %v6745 = vunpack.c.l.b16 %v6102
    %v6746 = vunpack.c.h.b16 %v6102
    %v6747 = vunpack.c.l.b16 %v6103
    %v6748 = vunpack.c.h.b16 %v6103
    %v6749 = vunpack.c.l.b16 %v6104
    %v6750 = vunpack.c.h.b16 %v6104
    %v6751 = vunpack.c.l.b16 %v6105
    %v6752 = vunpack.c.h.b16 %v6105
    %v6753 = vunpack.c.l.b16 %v6106
    %v6754 = vunpack.c.h.b16 %v6106
    %v6755 = vunpack.c.l.b16 %v6107
    %v6756 = vunpack.c.h.b16 %v6107
    %v6757 = vunpack.c.l.b16 %v6108
    %v6758 = vunpack.c.h.b16 %v6108
    %v6759 = vunpack.c.l.b16 %v6109
    %v6760 = vunpack.c.h.b16 %v6109
    %v6761 = vunpack.c.l.b16 %v6110
    %v6762 = vunpack.c.h.b16 %v6110
    %v6763 = vunpack.c.l.b16 %v6111
    %v6764 = vunpack.c.h.b16 %v6111
    %v6765 = vunpack.c.l.b16 %v6112
    %v6766 = vunpack.c.h.b16 %v6112
    %v6767 = vunpack.c.l.b16 %v6113
    %v6768 = vunpack.c.h.b16 %v6113
    %v6769 = vunpack.c.l.b16 %v6114
    %v6770 = vunpack.c.h.b16 %v6114
    %v6771 = vunpack.c.l.b16 %v6115
    %v6772 = vunpack.c.h.b16 %v6115
    %v6773 = vunpack.c.l.b16 %v6116
    %v6774 = vunpack.c.h.b16 %v6116
    %v6775 = vunpack.c.l.b16 %v6117
    %v6776 = vunpack.c.h.b16 %v6117
    %v6777 = vunpack.c.l.b16 %v6118
    %v6778 = vunpack.c.h.b16 %v6118
    %v6779 = vunpack.c.l.b16 %v6119
    %v6780 = vunpack.c.h.b16 %v6119
    %v6781 = vunpack.c.l.b16 %v6120
    %v6782 = vunpack.c.h.b16 %v6120
    %v6783 = vunpack.c.l.b16 %v6121
    %v6784 = vunpack.c.h.b16 %v6121
    %v6785 = vunpack.c.l.b16 %v6122
    %v6786 = vunpack.c.h.b16 %v6122
    %v6787 = vunpack.c.l.b16 %v6123
    %v6788 = vunpack.c.h.b16 %v6123
    %v6789 = vunpack.c.l.b16 %v6124
    %v6790 = vunpack.c.h.b16 %v6124
    %v6791 = vunpack.c.l.b16 %v6125
    %v6792 = vunpack.c.h.b16 %v6125
    %v6793 = vunpack.c.l.b16 %v6126
    %v6794 = vunpack.c.h.b16 %v6126
    %v6795 = vunpack.c.l.b16 %v6127
    %v6796 = vunpack.c.h.b16 %v6127
    %v6797 = vunpack.c.l.b16 %v6128
    %v6798 = vunpack.c.h.b16 %v6128
    %v6799 = vunpack.c.l.b16 %v6129
    %v6800 = vunpack.c.h.b16 %v6129
    %v6801 = vunpack.c.l.b16 %v6130
    %v6802 = vunpack.c.h.b16 %v6130
    %v6803 = vunpack.c.l.b16 %v6131
    %v6804 = vunpack.c.h.b16 %v6131
    %v6805 = vunpack.c.l.b16 %v6132
    %v6806 = vunpack.c.h.b16 %v6132
    %v6807 = vunpack.c.l.b16 %v6133
    %v6808 = vunpack.c.h.b16 %v6133
    %v6809 = vunpack.c.l.b16 %v6134
    %v6810 = vunpack.c.h.b16 %v6134
    %v6811 = vunpack.c.l.b16 %v6135
    %v6812 = vunpack.c.h.b16 %v6135
    %v6813 = vunpack.c.l.b16 %v6136
    %v6814 = vunpack.c.h.b16 %v6136
    %v6815 = vunpack.c.l.b16 %v6137
    %v6816 = vunpack.c.h.b16 %v6137
    %v6817 = vunpack.c.l.b16 %v6138
    %v6818 = vunpack.c.h.b16 %v6138
    %v6819 = vunpack.c.l.b16 %v6139
    %v6820 = vunpack.c.h.b16 %v6139
    %v6821 = vunpack.c.l.b16 %v6140
    %v6822 = vunpack.c.h.b16 %v6140
    %v6823 = vunpack.c.l.b16 %v6141
    %v6824 = vunpack.c.h.b16 %v6141
    %v6825 = vunpack.c.l.b16 %v6142
    %v6826 = vunpack.c.h.b16 %v6142
    %v6827 = vunpack.c.l.b16 %v6143
    %v6828 = vunpack.c.h.b16 %v6143
    %v6829 = vunpack.c.l.b16 %v6144
    %v6830 = vunpack.c.h.b16 %v6144
    %v6831 = vunpack.c.l.b16 %v6145
    %v6832 = vunpack.c.h.b16 %v6145
    %v6833 = vunpack.c.l.b16 %v6146
    %v6834 = vunpack.c.h.b16 %v6146
    %v6835 = vunpack.c.l.b16 %v6147
    %v6836 = vunpack.c.h.b16 %v6147
    %v6837 = vunpack.c.l.b16 %v6148
    %v6838 = vunpack.c.h.b16 %v6148
    %v6839 = vunpack.c.l.b16 %v6149
    %v6840 = vunpack.c.h.b16 %v6149
    %v6841 = vunpack.c.l.b16 %v6150
    %v6842 = vunpack.c.h.b16 %v6150
    %v6843 = vunpack.c.l.b16 %v6151
    %v6844 = vunpack.c.h.b16 %v6151
    %v6845 = vunpack.c.l.b16 %v6152
    %v6846 = vunpack.c.h.b16 %v6152
    %v6847 = vunpack.c.l.b16 %v6153
    %v6848 = vunpack.c.h.b16 %v6153
    %v6849 = vunpack.c.l.b16 %v6154
    %v6850 = vunpack.c.h.b16 %v6154
    %v6851 = vunpack.c.l.b16 %v6155
    %v6852 = vunpack.c.h.b16 %v6155
    %v6853 = vunpack.c.l.b16 %v6156
    %v6854 = vunpack.c.h.b16 %v6156
    %v6855 = vunpack.c.l.b16 %v6157
    %v6856 = vunpack.c.h.b16 %v6157
    %v6857 = vunpack.c.l.b16 %v6158
    %v6858 = vunpack.c.h.b16 %v6158
    %v6859 = vunpack.c.l.b16 %v6159
    %v6860 = vunpack.c.h.b16 %v6159
    %v6861 = vunpack.c.l.b16 %v6160
    %v6862 = vunpack.c.h.b16 %v6160
    %v6863 = vunpack.c.l.b16 %v6161
    %v6864 = vunpack.c.h.b16 %v6161
    %v6865 = vunpack.c.l.b16 %v6162
    %v6866 = vunpack.c.h.b16 %v6162
    %v6867 = vunpack.c.l.b16 %v6163
    %v6868 = vunpack.c.h.b16 %v6163
    %v6869 = vunpack.c.l.b16 %v6164
    %v6870 = vunpack.c.h.b16 %v6164
    %v6871 = vunpack.c.l.b16 %v6165
    %v6872 = vunpack.c.h.b16 %v6165
    %v6873 = vunpack.c.l.b16 %v6166
    %v6874 = vunpack.c.h.b16 %v6166
    %v6875 = vunpack.c.l.b16 %v6167
    %v6876 = vunpack.c.h.b16 %v6167
    %v6877 = vunpack.c.l.b16 %v6168
    %v6878 = vunpack.c.h.b16 %v6168
    %v6879 = vunpack.c.l.b16 %v6169
    %v6880 = vunpack.c.h.b16 %v6169
    %v6881 = vunpack.c.l.b16 %v6170
    %v6882 = vunpack.c.h.b16 %v6170
    %v6883 = vunpack.c.l.b16 %v6171
    %v6884 = vunpack.c.h.b16 %v6171
    %v6885 = vunpack.c.l.b16 %v6172
    %v6886 = vunpack.c.h.b16 %v6172
    %v6887 = vunpack.c.l.b16 %v6173
    %v6888 = vunpack.c.h.b16 %v6173
    %v6889 = vunpack.c.l.b16 %v6174
    %v6890 = vunpack.c.h.b16 %v6174
    %v6891 = vunpack.c.l.b16 %v6175
    %v6892 = vunpack.c.h.b16 %v6175
    %v6893 = vunpack.c.l.b16 %v6176
    %v6894 = vunpack.c.h.b16 %v6176
    %v6895 = vunpack.c.l.b16 %v6177
    %v6896 = vunpack.c.h.b16 %v6177
    %v6897 = vunpack.c.l.b16 %v6178
    %v6898 = vunpack.c.h.b16 %v6178
    %v6899 = vunpack.c.l.b16 %v6179
    %v6900 = vunpack.c.h.b16 %v6179
    %v6901 = vunpack.c.l.b16 %v6180
    %v6902 = vunpack.c.h.b16 %v6180
    %v6903 = vunpack.c.l.b16 %v6181
    %v6904 = vunpack.c.h.b16 %v6181
    %v6905 = vunpack.c.l.b16 %v6182
    %v6906 = vunpack.c.h.b16 %v6182
    %v6907 = vunpack.c.l.b16 %v6183
    %v6908 = vunpack.c.h.b16 %v6183
    %v6909 = vunpack.c.l.b16 %v6184
    %v6910 = vunpack.c.h.b16 %v6184
    %v6911 = vunpack.c.l.b16 %v6185
    %v6912 = vunpack.c.h.b16 %v6185
    %v6913 = vunpack.c.l.b16 %v6186
    %v6914 = vunpack.c.h.b16 %v6186
    %v6915 = vunpack.c.l.b16 %v6187
    %v6916 = vunpack.c.h.b16 %v6187
    %v6917 = vunpack.c.l.b16 %v6188
    %v6918 = vunpack.c.h.b16 %v6188
    %v6919 = vunpack.c.l.b16 %v6189
    %v6920 = vunpack.c.h.b16 %v6189
    %v6921 = vunpack.c.l.b16 %v6190
    %v6922 = vunpack.c.h.b16 %v6190
    %v6923 = vunpack.c.l.b16 %v6191
    %v6924 = vunpack.c.h.b16 %v6191
    %v6925 = vunpack.c.l.b16 %v6192
    %v6926 = vunpack.c.h.b16 %v6192
    %v6927 = vunpack.c.l.b16 %v6193
    %v6928 = vunpack.c.h.b16 %v6193
    %v6929 = vunpack.c.l.b16 %v6194
    %v6930 = vunpack.c.h.b16 %v6194
    %v6931 = vunpack.c.l.b16 %v6195
    %v6932 = vunpack.c.h.b16 %v6195
    %v6933 = vunpack.c.l.b16 %v6196
    %v6934 = vunpack.c.h.b16 %v6196
    %v6935 = vunpack.c.l.b16 %v6197
    %v6936 = vunpack.c.h.b16 %v6197
    %v6937 = vunpack.c.l.b16 %v6198
    %v6938 = vunpack.c.h.b16 %v6198
    %v6939 = vunpack.c.l.b16 %v6199
    %v6940 = vunpack.c.h.b16 %v6199
    %v6941 = vunpack.c.l.b16 %v6200
    %v6942 = vunpack.c.h.b16 %v6200
    %v6943 = vunpack.c.l.b16 %v6201
    %v6944 = vunpack.c.h.b16 %v6201
    %v6945 = vunpack.c.l.b16 %v6202
    %v6946 = vunpack.c.h.b16 %v6202
    %v6947 = vunpack.c.l.b16 %v6203
    %v6948 = vunpack.c.h.b16 %v6203
    %v6949 = vunpack.c.l.b16 %v6204
    %v6950 = vunpack.c.h.b16 %v6204
    %v6951 = vunpack.c.l.b16 %v6205
    %v6952 = vunpack.c.h.b16 %v6205
    %v6953 = vunpack.c.l.b16 %v6206
    %v6954 = vunpack.c.h.b16 %v6206
    %v6955 = vunpack.c.l.b16 %v6207
    %v6956 = vunpack.c.h.b16 %v6207
    %v6957 = vunpack.c.l.b16 %v6208
    %v6958 = vunpack.c.h.b16 %v6208
    %v6959 = vunpack.c.l.b16 %v6209
    %v6960 = vunpack.c.h.b16 %v6209
    %v6961 = vunpack.c.l.b16 %v6210
    %v6962 = vunpack.c.h.b16 %v6210
    %v6963 = vunpack.c.l.b16 %v6211
    %v6964 = vunpack.c.h.b16 %v6211
    %v6965 = vunpack.c.l.b16 %v6212
    %v6966 = vunpack.c.h.b16 %v6212
    %v6967 = vunpack.c.l.b16 %v6213
    %v6968 = vunpack.c.h.b16 %v6213
    %v6969 = vunpack.c.l.b16 %v6214
    %v6970 = vunpack.c.h.b16 %v6214
    %v6971 = vunpack.c.l.b16 %v6215
    %v6972 = vunpack.c.h.b16 %v6215
    %v6973 = vunpack.c.l.b16 %v6216
    %v6974 = vunpack.c.h.b16 %v6216
    %v6975 = vunpack.c.l.b16 %v6217
    %v6976 = vunpack.c.h.b16 %v6217
    %v6977 = vunpack.c.l.b16 %v6218
    %v6978 = vunpack.c.h.b16 %v6218
    %v6979 = vunpack.c.l.b16 %v6219
    %v6980 = vunpack.c.h.b16 %v6219
    %v6981 = vunpack.c.l.b16 %v6220
    %v6982 = vunpack.c.h.b16 %v6220
    %v6983 = vunpack.c.l.b16 %v6221
    %v6984 = vunpack.c.h.b16 %v6221
    %v6985 = vunpack.c.l.b16 %v6222
    %v6986 = vunpack.c.h.b16 %v6222
    %v6987 = vunpack.c.l.b16 %v6223
    %v6988 = vunpack.c.h.b16 %v6223
    %v6989 = vunpack.c.l.b16 %v6224
    %v6990 = vunpack.c.h.b16 %v6224
    %v6991 = vunpack.c.l.b16 %v6225
    %v6992 = vunpack.c.h.b16 %v6225
    %v6993 = vunpack.c.l.b16 %v6226
    %v6994 = vunpack.c.h.b16 %v6226
    %v6995 = vpack.c.b16 %v6491, %v6483
    %v6996 = vpack.c.b16 %v6492, %v6484
    %v6997 = vpack.c.b16 %v6493, %v6485
    %v6998 = vpack.c.b16 %v6494, %v6486
    %v6999 = vpack.c.b16 %v6495, %v6487
    %v7000 = vpack.c.b16 %v6496, %v6488
    %v7001 = vpack.c.b16 %v6497, %v6489
    %v7002 = vpack.c.b16 %v6498, %v6490
    %v7003 = vpack.c.b16 %v6507, %v6499
    %v7004 = vpack.c.b16 %v6508, %v6500
    %v7005 = vpack.c.b16 %v6509, %v6501
    %v7006 = vpack.c.b16 %v6510, %v6502
    %v7007 = vpack.c.b16 %v6511, %v6503
    %v7008 = vpack.c.b16 %v6512, %v6504
    %v7009 = vpack.c.b16 %v6513, %v6505
    %v7010 = vpack.c.b16 %v6514, %v6506
    %v7011 = vpack.c.b16 %v6523, %v6515
    %v7012 = vpack.c.b16 %v6524, %v6516
    %v7013 = vpack.c.b16 %v6525, %v6517
    %v7014 = vpack.c.b16 %v6526, %v6518
    %v7015 = vpack.c.b16 %v6527, %v6519
    %v7016 = vpack.c.b16 %v6528, %v6520
    %v7017 = vpack.c.b16 %v6529, %v6521
    %v7018 = vpack.c.b16 %v6530, %v6522
    %v7019 = vpack.c.b16 %v6539, %v6531
    %v7020 = vpack.c.b16 %v6540, %v6532
    %v7021 = vpack.c.b16 %v6541, %v6533
    %v7022 = vpack.c.b16 %v6542, %v6534
    %v7023 = vpack.c.b16 %v6543, %v6535
    %v7024 = vpack.c.b16 %v6544, %v6536
    %v7025 = vpack.c.b16 %v6545, %v6537
    %v7026 = vpack.c.b16 %v6546, %v6538
    %v7027 = vpack.c.b16 %v6555, %v6547
    %v7028 = vpack.c.b16 %v6556, %v6548
    %v7029 = vpack.c.b16 %v6557, %v6549
    %v7030 = vpack.c.b16 %v6558, %v6550
    %v7031 = vpack.c.b16 %v6559, %v6551
    %v7032 = vpack.c.b16 %v6560, %v6552
    %v7033 = vpack.c.b16 %v6561, %v6553
    %v7034 = vpack.c.b16 %v6562, %v6554
    %v7035 = vpack.c.b16 %v6571, %v6563
    %v7036 = vpack.c.b16 %v6572, %v6564
    %v7037 = vpack.c.b16 %v6573, %v6565
    %v7038 = vpack.c.b16 %v6574, %v6566
    %v7039 = vpack.c.b16 %v6575, %v6567
    %v7040 = vpack.c.b16 %v6576, %v6568
    %v7041 = vpack.c.b16 %v6577, %v6569
    %v7042 = vpack.c.b16 %v6578, %v6570
    %v7043 = vpack.c.b16 %v6587, %v6579
    %v7044 = vpack.c.b16 %v6588, %v6580
    %v7045 = vpack.c.b16 %v6589, %v6581
    %v7046 = vpack.c.b16 %v6590, %v6582
    %v7047 = vpack.c.b16 %v6591, %v6583
    %v7048 = vpack.c.b16 %v6592, %v6584
    %v7049 = vpack.c.b16 %v6593, %v6585
    %v7050 = vpack.c.b16 %v6594, %v6586
    %v7051 = vpack.c.b16 %v6603, %v6595
    %v7052 = vpack.c.b16 %v6604, %v6596
    %v7053 = vpack.c.b16 %v6605, %v6597
    %v7054 = vpack.c.b16 %v6606, %v6598
    %v7055 = vpack.c.b16 %v6607, %v6599
    %v7056 = vpack.c.b16 %v6608, %v6600
    %v7057 = vpack.c.b16 %v6609, %v6601
    %v7058 = vpack.c.b16 %v6610, %v6602
    %v7059 = vpack.c.b16 %v6619, %v6611
    %v7060 = vpack.c.b16 %v6620, %v6612
    %v7061 = vpack.c.b16 %v6621, %v6613
    %v7062 = vpack.c.b16 %v6622, %v6614
    %v7063 = vpack.c.b16 %v6623, %v6615
    %v7064 = vpack.c.b16 %v6624, %v6616
    %v7065 = vpack.c.b16 %v6625, %v6617
    %v7066 = vpack.c.b16 %v6626, %v6618
    %v7067 = vpack.c.b16 %v6635, %v6627
    %v7068 = vpack.c.b16 %v6636, %v6628
    %v7069 = vpack.c.b16 %v6637, %v6629
    %v7070 = vpack.c.b16 %v6638, %v6630
    %v7071 = vpack.c.b16 %v6639, %v6631
    %v7072 = vpack.c.b16 %v6640, %v6632
    %v7073 = vpack.c.b16 %v6641, %v6633
    %v7074 = vpack.c.b16 %v6642, %v6634
    %v7075 = vpack.c.b16 %v6651, %v6643
    %v7076 = vpack.c.b16 %v6652, %v6644
    %v7077 = vpack.c.b16 %v6653, %v6645
    %v7078 = vpack.c.b16 %v6654, %v6646
    %v7079 = vpack.c.b16 %v6655, %v6647
    %v7080 = vpack.c.b16 %v6656, %v6648
    %v7081 = vpack.c.b16 %v6657, %v6649
    %v7082 = vpack.c.b16 %v6658, %v6650
    %v7083 = vpack.c.b16 %v6667, %v6659
    %v7084 = vpack.c.b16 %v6668, %v6660
    %v7085 = vpack.c.b16 %v6669, %v6661
    %v7086 = vpack.c.b16 %v6670, %v6662
    %v7087 = vpack.c.b16 %v6671, %v6663
    %v7088 = vpack.c.b16 %v6672, %v6664
    %v7089 = vpack.c.b16 %v6673, %v6665
    %v7090 = vpack.c.b16 %v6674, %v6666
    %v7091 = vpack.c.b16 %v6683, %v6675
    %v7092 = vpack.c.b16 %v6684, %v6676
    %v7093 = vpack.c.b16 %v6685, %v6677
    %v7094 = vpack.c.b16 %v6686, %v6678
    %v7095 = vpack.c.b16 %v6687, %v6679
    %v7096 = vpack.c.b16 %v6688, %v6680
    %v7097 = vpack.c.b16 %v6689, %v6681
    %v7098 = vpack.c.b16 %v6690, %v6682
    %v7099 = vpack.c.b16 %v6699, %v6691
    %v7100 = vpack.c.b16 %v6700, %v6692
    %v7101 = vpack.c.b16 %v6701, %v6693
    %v7102 = vpack.c.b16 %v6702, %v6694
    %v7103 = vpack.c.b16 %v6703, %v6695
    %v7104 = vpack.c.b16 %v6704, %v6696
    %v7105 = vpack.c.b16 %v6705, %v6697
    %v7106 = vpack.c.b16 %v6706, %v6698
    %v7107 = vpack.c.b16 %v6715, %v6707
    %v7108 = vpack.c.b16 %v6716, %v6708
    %v7109 = vpack.c.b16 %v6717, %v6709
    %v7110 = vpack.c.b16 %v6718, %v6710
    %v7111 = vpack.c.b16 %v6719, %v6711
    %v7112 = vpack.c.b16 %v6720, %v6712
    %v7113 = vpack.c.b16 %v6721, %v6713
    %v7114 = vpack.c.b16 %v6722, %v6714
    %v7115 = vpack.c.b16 %v6731, %v6723
    %v7116 = vpack.c.b16 %v6732, %v6724
    %v7117 = vpack.c.b16 %v6733, %v6725
    %v7118 = vpack.c.b16 %v6734, %v6726
    %v7119 = vpack.c.b16 %v6735, %v6727
    %v7120 = vpack.c.b16 %v6736, %v6728
    %v7121 = vpack.c.b16 %v6737, %v6729
    %v7122 = vpack.c.b16 %v6738, %v6730
    %v7123 = vpack.c.b16 %v6747, %v6739
    %v7124 = vpack.c.b16 %v6748, %v6740
    %v7125 = vpack.c.b16 %v6749, %v6741
    %v7126 = vpack.c.b16 %v6750, %v6742
    %v7127 = vpack.c.b16 %v6751, %v6743
    %v7128 = vpack.c.b16 %v6752, %v6744
    %v7129 = vpack.c.b16 %v6753, %v6745
    %v7130 = vpack.c.b16 %v6754, %v6746
    %v7131 = vpack.c.b16 %v6763, %v6755
    %v7132 = vpack.c.b16 %v6764, %v6756
    %v7133 = vpack.c.b16 %v6765, %v6757
    %v7134 = vpack.c.b16 %v6766, %v6758
    %v7135 = vpack.c.b16 %v6767, %v6759
    %v7136 = vpack.c.b16 %v6768, %v6760
    %v7137 = vpack.c.b16 %v6769, %v6761
    %v7138 = vpack.c.b16 %v6770, %v6762
    %v7139 = vpack.c.b16 %v6779, %v6771
    %v7140 = vpack.c.b16 %v6780, %v6772
    %v7141 = vpack.c.b16 %v6781, %v6773
    %v7142 = vpack.c.b16 %v6782, %v6774
    %v7143 = vpack.c.b16 %v6783, %v6775
    %v7144 = vpack.c.b16 %v6784, %v6776
    %v7145 = vpack.c.b16 %v6785, %v6777
    %v7146 = vpack.c.b16 %v6786, %v6778
    %v7147 = vpack.c.b16 %v6795, %v6787
    %v7148 = vpack.c.b16 %v6796, %v6788
    %v7149 = vpack.c.b16 %v6797, %v6789
    %v7150 = vpack.c.b16 %v6798, %v6790
    %v7151 = vpack.c.b16 %v6799, %v6791
    %v7152 = vpack.c.b16 %v6800, %v6792
    %v7153 = vpack.c.b16 %v6801, %v6793
    %v7154 = vpack.c.b16 %v6802, %v6794
    %v7155 = vpack.c.b16 %v6811, %v6803
    %v7156 = vpack.c.b16 %v6812, %v6804
    %v7157 = vpack.c.b16 %v6813, %v6805
    %v7158 = vpack.c.b16 %v6814, %v6806
    %v7159 = vpack.c.b16 %v6815, %v6807
    %v7160 = vpack.c.b16 %v6816, %v6808
    %v7161 = vpack.c.b16 %v6817, %v6809
    %v7162 = vpack.c.b16 %v6818, %v6810
    %v7163 = vpack.c.b16 %v6827, %v6819
    %v7164 = vpack.c.b16 %v6828, %v6820
    %v7165 = vpack.c.b16 %v6829, %v6821
    %v7166 = vpack.c.b16 %v6830, %v6822
    %v7167 = vpack.c.b16 %v6831, %v6823
    %v7168 = vpack.c.b16 %v6832, %v6824
    %v7169 = vpack.c.b16 %v6833, %v6825
    %v7170 = vpack.c.b16 %v6834, %v6826
    %v7171 = vpack.c.b16 %v6843, %v6835
    %v7172 = vpack.c.b16 %v6844, %v6836
    %v7173 = vpack.c.b16 %v6845, %v6837
    %v7174 = vpack.c.b16 %v6846, %v6838
    %v7175 = vpack.c.b16 %v6847, %v6839
    %v7176 = vpack.c.b16 %v6848, %v6840
    %v7177 = vpack.c.b16 %v6849, %v6841
    %v7178 = vpack.c.b16 %v6850, %v6842
    %v7179 = vpack.c.b16 %v6859, %v6851
    %v7180 = vpack.c.b16 %v6860, %v6852
    %v7181 = vpack.c.b16 %v6861, %v6853
    %v7182 = vpack.c.b16 %v6862, %v6854
    %v7183 = vpack.c.b16 %v6863, %v6855
    %v7184 = vpack.c.b16 %v6864, %v6856
    %v7185 = vpack.c.b16 %v6865, %v6857
    %v7186 = vpack.c.b16 %v6866, %v6858
    %v7187 = vpack.c.b16 %v6875, %v6867
    %v7188 = vpack.c.b16 %v6876, %v6868
    %v7189 = vpack.c.b16 %v6877, %v6869
    %v7190 = vpack.c.b16 %v6878, %v6870
    %v7191 = vpack.c.b16 %v6879, %v6871
    %v7192 = vpack.c.b16 %v6880, %v6872
    %v7193 = vpack.c.b16 %v6881, %v6873
    %v7194 = vpack.c.b16 %v6882, %v6874
    %v7195 = vpack.c.b16 %v6891, %v6883
    %v7196 = vpack.c.b16 %v6892, %v6884
    %v7197 = vpack.c.b16 %v6893, %v6885
    %v7198 = vpack.c.b16 %v6894, %v6886
    %v7199 = vpack.c.b16 %v6895, %v6887
    %v7200 = vpack.c.b16 %v6896, %v6888
    %v7201 = vpack.c.b16 %v6897, %v6889
    %v7202 = vpack.c.b16 %v6898, %v6890
    %v7203 = vpack.c.b16 %v6907, %v6899
    %v7204 = vpack.c.b16 %v6908, %v6900
    %v7205 = vpack.c.b16 %v6909, %v6901
    %v7206 = vpack.c.b16 %v6910, %v6902
    %v7207 = vpack.c.b16 %v6911, %v6903
    %v7208 = vpack.c.b16 %v6912, %v6904
    %v7209 = vpack.c.b16 %v6913, %v6905
    %v7210 = vpack.c.b16 %v6914, %v6906
    %v7211 = vpack.c.b16 %v6923, %v6915
    %v7212 = vpack.c.b16 %v6924, %v6916
    %v7213 = vpack.c.b16 %v6925, %v6917
    %v7214 = vpack.c.b16 %v6926, %v6918
    %v7215 = vpack.c.b16 %v6927, %v6919
    %v7216 = vpack.c.b16 %v6928, %v6920
    %v7217 = vpack.c.b16 %v6929, %v6921
    %v7218 = vpack.c.b16 %v6930, %v6922
    %v7219 = vpack.c.b16 %v6939, %v6931
    %v7220 = vpack.c.b16 %v6940, %v6932
    %v7221 = vpack.c.b16 %v6941, %v6933
    %v7222 = vpack.c.b16 %v6942, %v6934
    %v7223 = vpack.c.b16 %v6943, %v6935
    %v7224 = vpack.c.b16 %v6944, %v6936
    %v7225 = vpack.c.b16 %v6945, %v6937
    %v7226 = vpack.c.b16 %v6946, %v6938
    %v7227 = vpack.c.b16 %v6955, %v6947
    %v7228 = vpack.c.b16 %v6956, %v6948
    %v7229 = vpack.c.b16 %v6957, %v6949
    %v7230 = vpack.c.b16 %v6958, %v6950
    %v7231 = vpack.c.b16 %v6959, %v6951
    %v7232 = vpack.c.b16 %v6960, %v6952
    %v7233 = vpack.c.b16 %v6961, %v6953
    %v7234 = vpack.c.b16 %v6962, %v6954
    %v7235 = vpack.c.b16 %v6971, %v6963
    %v7236 = vpack.c.b16 %v6972, %v6964
    %v7237 = vpack.c.b16 %v6973, %v6965
    %v7238 = vpack.c.b16 %v6974, %v6966
    %v7239 = vpack.c.b16 %v6975, %v6967
    %v7240 = vpack.c.b16 %v6976, %v6968
    %v7241 = vpack.c.b16 %v6977, %v6969
    %v7242 = vpack.c.b16 %v6978, %v6970
    %v7243 = vpack.c.b16 %v6987, %v6979
    %v7244 = vpack.c.b16 %v6988, %v6980
    %v7245 = vpack.c.b16 %v6989, %v6981
    %v7246 = vpack.c.b16 %v6990, %v6982
    %v7247 = vpack.c.b16 %v6991, %v6983
    %v7248 = vpack.c.b16 %v6992, %v6984
    %v7249 = vpack.c.b16 %v6993, %v6985
    %v7250 = vpack.c.b16 %v6994, %v6986
    %7507 = vmatprep.subr.bf16.mxu0 %v7052
    %7508 = vmatpush1.bf16.msra.mxu0 %v7051
    %7509 = vmatprep.subr.bf16.mxu0 %v7044
    %7510 = vmatpush1.bf16.msra.mxu0 %v7043
    %7511 = vmatprep.subr.bf16.mxu0 %v7036
    %7512 = vmatpush1.bf16.msra.mxu0 %v7035
    %7513 = vmatprep.subr.bf16.mxu0 %v7028
    %7514 = vmatpush1.bf16.msra.mxu0 %v7027
    %7515 = vmatprep.subr.bf16.mxu0 %v7020
    %7516 = vmatpush1.bf16.msra.mxu0 %v7019
    %7517 = vmatprep.subr.bf16.mxu0 %v7012
    %7518 = vmatpush1.bf16.msra.mxu0 %v7011
    %7519 = vmatprep.subr.bf16.mxu0 %v7004
    %7520 = vmatpush1.bf16.msra.mxu0 %v7003
    %7521 = vmatprep.subr.bf16.mxu0 %v6996
    %7522 = vmatpush1.bf16.msra.mxu0 %v6995
    %7523 = vmatprep.subr.bf16.mxu0 %v7116
    %7524 = vmatpush2.bf16.msra.mxu0 %v7115
    %7525 = vmatprep.subr.bf16.mxu0 %v7108
    %7526 = vmatpush2.bf16.msra.mxu0 %v7107
    %7527 = vmatprep.subr.bf16.mxu0 %v7100
    %7528 = vmatpush2.bf16.msra.mxu0 %v7099
    %7529 = vmatprep.subr.bf16.mxu0 %v7092
    %7530 = vmatpush2.bf16.msra.mxu0 %v7091
    %7531 = vmatprep.subr.bf16.mxu0 %v7084
    %7532 = vmatpush2.bf16.msra.mxu0 %v7083
    %7533 = vmatprep.subr.bf16.mxu0 %v7076
    %7534 = vmatpush2.bf16.msra.mxu0 %v7075
    %7535 = vmatprep.subr.bf16.mxu0 %v7068
    %7536 = vmatpush2.bf16.msra.mxu0 %v7067
    %7537 = vmatprep.subr.bf16.mxu0 %v7060
    %7538 = vmatpush2.bf16.msra.mxu0 %v7059
    %7539 = vmatprep.mubr.bf16.mxu0 %v5968
    %7540 = vmatmul.mubr.bf16.gmra.mxu0 %v5967
    %v7541 = vpop.f32.mrf.mxu0
    %v7542 = vadd.f32 0.0, %v7541
    %v7543 = vpop.f32.mrf.mxu0
    %v7544 = vadd.f32 0.0, %v7543
    %v7545 = vpop.f32.mrf.mxu0
    %v7546 = vpop.f32.mrf.mxu0
    %7547 = vdwg.mxu0
    %7548 = vmatprep.subr.bf16.mxu0 %v7180
    %7549 = vmatpush1.bf16.msra.mxu0 %v7179
    %7550 = vmatprep.subr.bf16.mxu0 %v7172
    %7551 = vmatpush1.bf16.msra.mxu0 %v7171
    %7552 = vmatprep.subr.bf16.mxu0 %v7164
    %7553 = vmatpush1.bf16.msra.mxu0 %v7163
    %7554 = vmatprep.subr.bf16.mxu0 %v7156
    %7555 = vmatpush1.bf16.msra.mxu0 %v7155
    %7556 = vmatprep.subr.bf16.mxu0 %v7148
    %7557 = vmatpush1.bf16.msra.mxu0 %v7147
    %7558 = vmatprep.subr.bf16.mxu0 %v7140
    %7559 = vmatpush1.bf16.msra.mxu0 %v7139
    %7560 = vmatprep.subr.bf16.mxu0 %v7132
    %7561 = vmatpush1.bf16.msra.mxu0 %v7131
    %7562 = vmatprep.subr.bf16.mxu0 %v7124
    %7563 = vmatpush1.bf16.msra.mxu0 %v7123
    %7564 = vmatprep.subr.bf16.mxu0 %v7244
    %7565 = vmatpush2.bf16.msra.mxu0 %v7243
    %7566 = vmatprep.subr.bf16.mxu0 %v7236
    %7567 = vmatpush2.bf16.msra.mxu0 %v7235
    %7568 = vmatprep.subr.bf16.mxu0 %v7228
    %7569 = vmatpush2.bf16.msra.mxu0 %v7227
    %7570 = vmatprep.subr.bf16.mxu0 %v7220
    %7571 = vmatpush2.bf16.msra.mxu0 %v7219
    %7572 = vmatprep.subr.bf16.mxu0 %v7212
    %7573 = vmatpush2.bf16.msra.mxu0 %v7211
    %7574 = vmatprep.subr.bf16.mxu0 %v7204
    %7575 = vmatpush2.bf16.msra.mxu0 %v7203
    %7576 = vmatprep.subr.bf16.mxu0 %v7196
    %7577 = vmatpush2.bf16.msra.mxu0 %v7195
    %7578 = vmatprep.subr.bf16.mxu0 %v7188
    %7579 = vmatpush2.bf16.msra.mxu0 %v7187
    %7580 = vmatprep.mubr.bf16.mxu0 %v5970
    %7581 = vmatmul.mubr.bf16.gmra.mxu0 %v5969
    %v7582 = vpop.f32.mrf.mxu0
    %v7583 = vadd.f32 %v7542, %v7582
    %v7584 = vpop.f32.mrf.mxu0
    %v7585 = vadd.f32 %v7544, %v7584
    %v7586 = vpop.f32.mrf.mxu0
    %v7587 = vpop.f32.mrf.mxu0
    %7588 = vdwg.mxu0
    %7589 = vmatprep.subr.bf16.mxu0 %v7054
    %7590 = vmatpush1.bf16.msra.mxu0 %v7053
    %7591 = vmatprep.subr.bf16.mxu0 %v7046
    %7592 = vmatpush1.bf16.msra.mxu0 %v7045
    %7593 = vmatprep.subr.bf16.mxu0 %v7038
    %7594 = vmatpush1.bf16.msra.mxu0 %v7037
    %7595 = vmatprep.subr.bf16.mxu0 %v7030
    %7596 = vmatpush1.bf16.msra.mxu0 %v7029
    %7597 = vmatprep.subr.bf16.mxu0 %v7022
    %7598 = vmatpush1.bf16.msra.mxu0 %v7021
    %7599 = vmatprep.subr.bf16.mxu0 %v7014
    %7600 = vmatpush1.bf16.msra.mxu0 %v7013
    %7601 = vmatprep.subr.bf16.mxu0 %v7006
    %7602 = vmatpush1.bf16.msra.mxu0 %v7005
    %7603 = vmatprep.subr.bf16.mxu0 %v6998
    %7604 = vmatpush1.bf16.msra.mxu0 %v6997
    %7605 = vmatprep.subr.bf16.mxu0 %v7118
    %7606 = vmatpush2.bf16.msra.mxu0 %v7117
    %7607 = vmatprep.subr.bf16.mxu0 %v7110
    %7608 = vmatpush2.bf16.msra.mxu0 %v7109
    %7609 = vmatprep.subr.bf16.mxu0 %v7102
    %7610 = vmatpush2.bf16.msra.mxu0 %v7101
    %7611 = vmatprep.subr.bf16.mxu0 %v7094
    %7612 = vmatpush2.bf16.msra.mxu0 %v7093
    %7613 = vmatprep.subr.bf16.mxu0 %v7086
    %7614 = vmatpush2.bf16.msra.mxu0 %v7085
    %7615 = vmatprep.subr.bf16.mxu0 %v7078
    %7616 = vmatpush2.bf16.msra.mxu0 %v7077
    %7617 = vmatprep.subr.bf16.mxu0 %v7070
    %7618 = vmatpush2.bf16.msra.mxu0 %v7069
    %7619 = vmatprep.subr.bf16.mxu0 %v7062
    %7620 = vmatpush2.bf16.msra.mxu0 %v7061
    %7621 = vmatprep.mubr.bf16.mxu0 %v5968
    %7622 = vmatmul.mubr.bf16.gmra.mxu0 %v5967
    %v7623 = vpop.f32.mrf.mxu0
    %v7624 = vadd.f32 0.0, %v7623
    %v7625 = vpop.f32.mrf.mxu0
    %v7626 = vadd.f32 0.0, %v7625
    %v7627 = vpop.f32.mrf.mxu0
    %v7628 = vpop.f32.mrf.mxu0
    %7629 = vdwg.mxu0
    %7630 = vmatprep.subr.bf16.mxu0 %v7182
    %7631 = vmatpush1.bf16.msra.mxu0 %v7181
    %7632 = vmatprep.subr.bf16.mxu0 %v7174
    %7633 = vmatpush1.bf16.msra.mxu0 %v7173
    %7634 = vmatprep.subr.bf16.mxu0 %v7166
    %7635 = vmatpush1.bf16.msra.mxu0 %v7165
    %7636 = vmatprep.subr.bf16.mxu0 %v7158
    %7637 = vmatpush1.bf16.msra.mxu0 %v7157
    %7638 = vmatprep.subr.bf16.mxu0 %v7150
    %7639 = vmatpush1.bf16.msra.mxu0 %v7149
    %7640 = vmatprep.subr.bf16.mxu0 %v7142
    %7641 = vmatpush1.bf16.msra.mxu0 %v7141
    %7642 = vmatprep.subr.bf16.mxu0 %v7134
    %7643 = vmatpush1.bf16.msra.mxu0 %v7133
    %7644 = vmatprep.subr.bf16.mxu0 %v7126
    %7645 = vmatpush1.bf16.msra.mxu0 %v7125
    %7646 = vmatprep.subr.bf16.mxu0 %v7246
    %7647 = vmatpush2.bf16.msra.mxu0 %v7245
    %7648 = vmatprep.subr.bf16.mxu0 %v7238
    %7649 = vmatpush2.bf16.msra.mxu0 %v7237
    %7650 = vmatprep.subr.bf16.mxu0 %v7230
    %7651 = vmatpush2.bf16.msra.mxu0 %v7229
    %7652 = vmatprep.subr.bf16.mxu0 %v7222
    %7653 = vmatpush2.bf16.msra.mxu0 %v7221
    %7654 = vmatprep.subr.bf16.mxu0 %v7214
    %7655 = vmatpush2.bf16.msra.mxu0 %v7213
    %7656 = vmatprep.subr.bf16.mxu0 %v7206
    %7657 = vmatpush2.bf16.msra.mxu0 %v7205
    %7658 = vmatprep.subr.bf16.mxu0 %v7198
    %7659 = vmatpush2.bf16.msra.mxu0 %v7197
    %7660 = vmatprep.subr.bf16.mxu0 %v7190
    %7661 = vmatpush2.bf16.msra.mxu0 %v7189
    %7662 = vmatprep.mubr.bf16.mxu0 %v5970
    %7663 = vmatmul.mubr.bf16.gmra.mxu0 %v5969
    %v7664 = vpop.f32.mrf.mxu0
    %v7665 = vadd.f32 %v7624, %v7664
    %v7666 = vpop.f32.mrf.mxu0
    %v7667 = vadd.f32 %v7626, %v7666
    %v7668 = vpop.f32.mrf.mxu0
    %v7669 = vpop.f32.mrf.mxu0
    %7670 = vdwg.mxu0
    %7671 = vmatprep.subr.bf16.mxu0 %v7056
    %7672 = vmatpush1.bf16.msra.mxu0 %v7055
    %7673 = vmatprep.subr.bf16.mxu0 %v7048
    %7674 = vmatpush1.bf16.msra.mxu0 %v7047
    %7675 = vmatprep.subr.bf16.mxu0 %v7040
    %7676 = vmatpush1.bf16.msra.mxu0 %v7039
    %7677 = vmatprep.subr.bf16.mxu0 %v7032
    %7678 = vmatpush1.bf16.msra.mxu0 %v7031
    %7679 = vmatprep.subr.bf16.mxu0 %v7024
    %7680 = vmatpush1.bf16.msra.mxu0 %v7023
    %7681 = vmatprep.subr.bf16.mxu0 %v7016
    %7682 = vmatpush1.bf16.msra.mxu0 %v7015
    %7683 = vmatprep.subr.bf16.mxu0 %v7008
    %7684 = vmatpush1.bf16.msra.mxu0 %v7007
    %7685 = vmatprep.subr.bf16.mxu0 %v7000
    %7686 = vmatpush1.bf16.msra.mxu0 %v6999
    %7687 = vmatprep.subr.bf16.mxu0 %v7120
    %7688 = vmatpush2.bf16.msra.mxu0 %v7119
    %7689 = vmatprep.subr.bf16.mxu0 %v7112
    %7690 = vmatpush2.bf16.msra.mxu0 %v7111
    %7691 = vmatprep.subr.bf16.mxu0 %v7104
    %7692 = vmatpush2.bf16.msra.mxu0 %v7103
    %7693 = vmatprep.subr.bf16.mxu0 %v7096
    %7694 = vmatpush2.bf16.msra.mxu0 %v7095
    %7695 = vmatprep.subr.bf16.mxu0 %v7088
    %7696 = vmatpush2.bf16.msra.mxu0 %v7087
    %7697 = vmatprep.subr.bf16.mxu0 %v7080
    %7698 = vmatpush2.bf16.msra.mxu0 %v7079
    %7699 = vmatprep.subr.bf16.mxu0 %v7072
    %7700 = vmatpush2.bf16.msra.mxu0 %v7071
    %7701 = vmatprep.subr.bf16.mxu0 %v7064
    %7702 = vmatpush2.bf16.msra.mxu0 %v7063
    %7703 = vmatprep.mubr.bf16.mxu0 %v5968
    %7704 = vmatmul.mubr.bf16.gmra.mxu0 %v5967
    %v7705 = vpop.f32.mrf.mxu0
    %v7706 = vadd.f32 0.0, %v7705
    %v7707 = vpop.f32.mrf.mxu0
    %v7708 = vadd.f32 0.0, %v7707
    %v7709 = vpop.f32.mrf.mxu0
    %v7710 = vpop.f32.mrf.mxu0
    %7711 = vdwg.mxu0
    %7712 = vmatprep.subr.bf16.mxu0 %v7184
    %7713 = vmatpush1.bf16.msra.mxu0 %v7183
    %7714 = vmatprep.subr.bf16.mxu0 %v7176
    %7715 = vmatpush1.bf16.msra.mxu0 %v7175
    %7716 = vmatprep.subr.bf16.mxu0 %v7168
    %7717 = vmatpush1.bf16.msra.mxu0 %v7167
    %7718 = vmatprep.subr.bf16.mxu0 %v7160
    %7719 = vmatpush1.bf16.msra.mxu0 %v7159
    %7720 = vmatprep.subr.bf16.mxu0 %v7152
    %7721 = vmatpush1.bf16.msra.mxu0 %v7151
    %7722 = vmatprep.subr.bf16.mxu0 %v7144
    %7723 = vmatpush1.bf16.msra.mxu0 %v7143
    %7724 = vmatprep.subr.bf16.mxu0 %v7136
    %7725 = vmatpush1.bf16.msra.mxu0 %v7135
    %7726 = vmatprep.subr.bf16.mxu0 %v7128
    %7727 = vmatpush1.bf16.msra.mxu0 %v7127
    %7728 = vmatprep.subr.bf16.mxu0 %v7248
    %7729 = vmatpush2.bf16.msra.mxu0 %v7247
    %7730 = vmatprep.subr.bf16.mxu0 %v7240
    %7731 = vmatpush2.bf16.msra.mxu0 %v7239
    %7732 = vmatprep.subr.bf16.mxu0 %v7232
    %7733 = vmatpush2.bf16.msra.mxu0 %v7231
    %7734 = vmatprep.subr.bf16.mxu0 %v7224
    %7735 = vmatpush2.bf16.msra.mxu0 %v7223
    %7736 = vmatprep.subr.bf16.mxu0 %v7216
    %7737 = vmatpush2.bf16.msra.mxu0 %v7215
    %7738 = vmatprep.subr.bf16.mxu0 %v7208
    %7739 = vmatpush2.bf16.msra.mxu0 %v7207
    %7740 = vmatprep.subr.bf16.mxu0 %v7200
    %7741 = vmatpush2.bf16.msra.mxu0 %v7199
    %7742 = vmatprep.subr.bf16.mxu0 %v7192
    %7743 = vmatpush2.bf16.msra.mxu0 %v7191
    %7744 = vmatprep.mubr.bf16.mxu0 %v5970
    %7745 = vmatmul.mubr.bf16.gmra.mxu0 %v5969
    %v7746 = vpop.f32.mrf.mxu0
    %v7747 = vadd.f32 %v7706, %v7746
    %v7748 = vpop.f32.mrf.mxu0
    %v7749 = vadd.f32 %v7708, %v7748
    %v7750 = vpop.f32.mrf.mxu0
    %v7751 = vpop.f32.mrf.mxu0
    %7752 = vdwg.mxu0
    %7753 = vmatprep.subr.bf16.mxu0 %v7058
    %7754 = vmatpush1.bf16.msra.mxu0 %v7057
    %7755 = vmatprep.subr.bf16.mxu0 %v7050
    %7756 = vmatpush1.bf16.msra.mxu0 %v7049
    %7757 = vmatprep.subr.bf16.mxu0 %v7042
    %7758 = vmatpush1.bf16.msra.mxu0 %v7041
    %7759 = vmatprep.subr.bf16.mxu0 %v7034
    %7760 = vmatpush1.bf16.msra.mxu0 %v7033
    %7761 = vmatprep.subr.bf16.mxu0 %v7026
    %7762 = vmatpush1.bf16.msra.mxu0 %v7025
    %7763 = vmatprep.subr.bf16.mxu0 %v7018
    %7764 = vmatpush1.bf16.msra.mxu0 %v7017
    %7765 = vmatprep.subr.bf16.mxu0 %v7010
    %7766 = vmatpush1.bf16.msra.mxu0 %v7009
    %7767 = vmatprep.subr.bf16.mxu0 %v7002
    %7768 = vmatpush1.bf16.msra.mxu0 %v7001
    %7769 = vmatprep.subr.bf16.mxu0 %v7122
    %7770 = vmatpush2.bf16.msra.mxu0 %v7121
    %7771 = vmatprep.subr.bf16.mxu0 %v7114
    %7772 = vmatpush2.bf16.msra.mxu0 %v7113
    %7773 = vmatprep.subr.bf16.mxu0 %v7106
    %7774 = vmatpush2.bf16.msra.mxu0 %v7105
    %7775 = vmatprep.subr.bf16.mxu0 %v7098
    %7776 = vmatpush2.bf16.msra.mxu0 %v7097
    %7777 = vmatprep.subr.bf16.mxu0 %v7090
    %7778 = vmatpush2.bf16.msra.mxu0 %v7089
    %7779 = vmatprep.subr.bf16.mxu0 %v7082
    %7780 = vmatpush2.bf16.msra.mxu0 %v7081
    %7781 = vmatprep.subr.bf16.mxu0 %v7074
    %7782 = vmatpush2.bf16.msra.mxu0 %v7073
    %7783 = vmatprep.subr.bf16.mxu0 %v7066
    %7784 = vmatpush2.bf16.msra.mxu0 %v7065
    %7785 = vmatprep.mubr.bf16.mxu0 %v5968
    %7786 = vmatmul.mubr.bf16.gmra.mxu0 %v5967
    %v7787 = vpop.f32.mrf.mxu0
    %v7788 = vadd.f32 0.0, %v7787
    %v7789 = vpop.f32.mrf.mxu0
    %v7790 = vadd.f32 0.0, %v7789
    %v7791 = vpop.f32.mrf.mxu0
    %v7792 = vpop.f32.mrf.mxu0
    %7793 = vdwg.mxu0
    %7794 = vmatprep.subr.bf16.mxu0 %v7186
    %7795 = vmatpush1.bf16.msra.mxu0 %v7185
    %7796 = vmatprep.subr.bf16.mxu0 %v7178
    %7797 = vmatpush1.bf16.msra.mxu0 %v7177
    %7798 = vmatprep.subr.bf16.mxu0 %v7170
    %7799 = vmatpush1.bf16.msra.mxu0 %v7169
    %7800 = vmatprep.subr.bf16.mxu0 %v7162
    %7801 = vmatpush1.bf16.msra.mxu0 %v7161
    %7802 = vmatprep.subr.bf16.mxu0 %v7154
    %7803 = vmatpush1.bf16.msra.mxu0 %v7153
    %7804 = vmatprep.subr.bf16.mxu0 %v7146
    %7805 = vmatpush1.bf16.msra.mxu0 %v7145
    %7806 = vmatprep.subr.bf16.mxu0 %v7138
    %7807 = vmatpush1.bf16.msra.mxu0 %v7137
    %7808 = vmatprep.subr.bf16.mxu0 %v7130
    %7809 = vmatpush1.bf16.msra.mxu0 %v7129
    %7810 = vmatprep.subr.bf16.mxu0 %v7250
    %7811 = vmatpush2.bf16.msra.mxu0 %v7249
    %7812 = vmatprep.subr.bf16.mxu0 %v7242
    %7813 = vmatpush2.bf16.msra.mxu0 %v7241
    %7814 = vmatprep.subr.bf16.mxu0 %v7234
    %7815 = vmatpush2.bf16.msra.mxu0 %v7233
    %7816 = vmatprep.subr.bf16.mxu0 %v7226
    %7817 = vmatpush2.bf16.msra.mxu0 %v7225
    %7818 = vmatprep.subr.bf16.mxu0 %v7218
    %7819 = vmatpush2.bf16.msra.mxu0 %v7217
    %7820 = vmatprep.subr.bf16.mxu0 %v7210
    %7821 = vmatpush2.bf16.msra.mxu0 %v7209
    %7822 = vmatprep.subr.bf16.mxu0 %v7202
    %7823 = vmatpush2.bf16.msra.mxu0 %v7201
    %7824 = vmatprep.subr.bf16.mxu0 %v7194
    %7825 = vmatpush2.bf16.msra.mxu0 %v7193
    %7826 = vmatprep.mubr.bf16.mxu0 %v5970
    %7827 = vmatmul.mubr.bf16.gmra.mxu0 %v5969
    %v7828 = vpop.f32.mrf.mxu0
    %v7829 = vadd.f32 %v7788, %v7828
    %v7830 = vpop.f32.mrf.mxu0
    %v7831 = vadd.f32 %v7790, %v7830
    %v7832 = vpop.f32.mrf.mxu0
    %v7833 = vpop.f32.mrf.mxu0
    %7834 = vdwg.mxu0
    %v7835 = vld [vmem:[#allocation9] sm:$0xff]
    %v7837 = vlaneseq
    %v7838 = vshrl.u32 %v7837, 7
    %v7839 = vsub.s32 0, %v7838
    %v7840 = vrot.slane %v7835, %v7839
    %v7841 = vlaneseq
    %v7842 = vshrl.u32 %v7841, 7
    %v7843 = vsub.s32 1, %v7842
    %v7844 = vrot.slane %v7835, %v7843
    %v7845 = vlaneseq
    %v7846 = vshrl.u32 %v7845, 7
    %v7847 = vsub.s32 2, %v7846
    %v7848 = vrot.slane %v7835, %v7847
    %v7849 = vlaneseq
    %v7850 = vshrl.u32 %v7849, 7
    %v7851 = vsub.s32 3, %v7850
    %v7852 = vrot.slane %v7835, %v7851
    %v7853 = vlaneseq
    %v7854 = vshrl.u32 %v7853, 7
    %v7855 = vsub.s32 4, %v7854
    %v7856 = vrot.slane %v7835, %v7855
    %v7857 = vlaneseq
    %v7858 = vshrl.u32 %v7857, 7
    %v7859 = vsub.s32 5, %v7858
    %v7860 = vrot.slane %v7835, %v7859
    %v7861 = vlaneseq
    %v7862 = vshrl.u32 %v7861, 7
    %v7863 = vsub.s32 6, %v7862
    %v7864 = vrot.slane %v7835, %v7863
    %v7865 = vlaneseq
    %v7866 = vshrl.u32 %v7865, 7
    %v7867 = vsub.s32 7, %v7866
    %v7868 = vrot.slane %v7835, %v7867
    %v7877 = vmul.f32 %v7583, %v7840
    %v7878 = vmul.f32 %v7585, %v7844
    %v7879 = vmul.f32 %v7665, %v7848
    %v7880 = vmul.f32 %v7667, %v7852
    %v7881 = vmul.f32 %v7747, %v7856
    %v7882 = vmul.f32 %v7749, %v7860
    %v7883 = vmul.f32 %v7829, %v7864
    %v7884 = vmul.f32 %v7831, %v7868
    %v7885 = vld [vmem:[#allocation10] sm:$0xff]
    %v7887 = vlaneseq
    %v7888 = vshrl.u32 %v7887, 7
    %v7889 = vsub.s32 0, %v7888
    %v7890 = vrot.slane %v7885, %v7889
    %v7891 = vlaneseq
    %v7892 = vshrl.u32 %v7891, 7
    %v7893 = vsub.s32 1, %v7892
    %v7894 = vrot.slane %v7885, %v7893
    %v7895 = vlaneseq
    %v7896 = vshrl.u32 %v7895, 7
    %v7897 = vsub.s32 2, %v7896
    %v7898 = vrot.slane %v7885, %v7897
    %v7899 = vlaneseq
    %v7900 = vshrl.u32 %v7899, 7
    %v7901 = vsub.s32 3, %v7900
    %v7902 = vrot.slane %v7885, %v7901
    %v7903 = vlaneseq
    %v7904 = vshrl.u32 %v7903, 7
    %v7905 = vsub.s32 4, %v7904
    %v7906 = vrot.slane %v7885, %v7905
    %v7907 = vlaneseq
    %v7908 = vshrl.u32 %v7907, 7
    %v7909 = vsub.s32 5, %v7908
    %v7910 = vrot.slane %v7885, %v7909
    %v7911 = vlaneseq
    %v7912 = vshrl.u32 %v7911, 7
    %v7913 = vsub.s32 6, %v7912
    %v7914 = vrot.slane %v7885, %v7913
    %v7915 = vlaneseq
    %v7916 = vshrl.u32 %v7915, 7
    %v7917 = vsub.s32 7, %v7916
    %v7918 = vrot.slane %v7885, %v7917
    %v7927 = vadd.f32 %v7877, %v7890
    %v7928 = vadd.f32 %v7878, %v7894
    %v7929 = vadd.f32 %v7879, %v7898
    %v7930 = vadd.f32 %v7880, %v7902
    %v7931 = vadd.f32 %v7881, %v7906
    %v7932 = vadd.f32 %v7882, %v7910
    %v7933 = vadd.f32 %v7883, %v7914
    %v7934 = vadd.f32 %v7884, %v7918
    %v7935 = vmax.f32 %v7927, 0.0
    %v7936 = vmax.f32 %v7928, 0.0
    %v7937 = vmax.f32 %v7929, 0.0
    %v7938 = vmax.f32 %v7930, 0.0
    %v7939 = vmax.f32 %v7931, 0.0
    %v7940 = vmax.f32 %v7932, 0.0
    %v7941 = vmax.f32 %v7933, 0.0
    %v7942 = vmax.f32 %v7934, 0.0
    %v7943 = vld [vmem:[%s7] sm:$0xff]
    %v7944 = vld [vmem:[%s7 + $0x8] sm:$0xff]
    %v7945 = vld [vmem:[%s7 + $0x10] sm:$0xff]
    %v7946 = vld [vmem:[%s7 + $0x18] sm:$0xff]
    %v7947 = vld [vmem:[%s7 + $0x20] sm:$0xff]
    %v7948 = vld [vmem:[%s7 + $0x28] sm:$0xff]
    %v7949 = vld [vmem:[%s7 + $0x30] sm:$0xff]
    %v7950 = vld [vmem:[%s7 + $0x38] sm:$0xff]
    %v7951 = vld [vmem:[%s7 + $0x40] sm:$0xff]
    %v7952 = vld [vmem:[%s7 + $0x48] sm:$0xff]
    %v7953 = vld [vmem:[%s7 + $0x50] sm:$0xff]
    %v7954 = vld [vmem:[%s7 + $0x58] sm:$0xff]
    %v7955 = vld [vmem:[%s7 + $0x60] sm:$0xff]
    %v7956 = vld [vmem:[%s7 + $0x68] sm:$0xff]
    %v7957 = vld [vmem:[%s7 + $0x70] sm:$0xff]
    %v7958 = vld [vmem:[%s7 + $0x78] sm:$0xff]
    %v7959 = vld [vmem:[%s7 + $0x80] sm:$0xff]
    %v7960 = vld [vmem:[%s7 + $0x88] sm:$0xff]
    %v7961 = vld [vmem:[%s7 + $0x90] sm:$0xff]
    %v7962 = vld [vmem:[%s7 + $0x98] sm:$0xff]
    %v7963 = vld [vmem:[%s7 + $0xa0] sm:$0xff]
    %v7964 = vld [vmem:[%s7 + $0xa8] sm:$0xff]
    %v7965 = vld [vmem:[%s7 + $0xb0] sm:$0xff]
    %v7966 = vld [vmem:[%s7 + $0xb8] sm:$0xff]
    %v7967 = vld [vmem:[%s7 + $0xc0] sm:$0xff]
    %v7968 = vld [vmem:[%s7 + $0xc8] sm:$0xff]
    %v7969 = vld [vmem:[%s7 + $0xd0] sm:$0xff]
    %v7970 = vld [vmem:[%s7 + $0xd8] sm:$0xff]
    %v7971 = vld [vmem:[%s7 + $0xe0] sm:$0xff]
    %v7972 = vld [vmem:[%s7 + $0xe8] sm:$0xff]
    %v7973 = vld [vmem:[%s7 + $0xf0] sm:$0xff]
    %v7974 = vld [vmem:[%s7 + $0xf8] sm:$0xff]
    %v7975 = vld [vmem:[%s7 + $0x100] sm:$0xff]
    %v7976 = vld [vmem:[%s7 + $0x108] sm:$0xff]
    %v7977 = vld [vmem:[%s7 + $0x110] sm:$0xff]
    %v7978 = vld [vmem:[%s7 + $0x118] sm:$0xff]
    %v7979 = vld [vmem:[%s7 + $0x120] sm:$0xff]
    %v7980 = vld [vmem:[%s7 + $0x128] sm:$0xff]
    %v7981 = vld [vmem:[%s7 + $0x130] sm:$0xff]
    %v7982 = vld [vmem:[%s7 + $0x138] sm:$0xff]
    %v7983 = vld [vmem:[%s7 + $0x140] sm:$0xff]
    %v7984 = vld [vmem:[%s7 + $0x148] sm:$0xff]
    %v7985 = vld [vmem:[%s7 + $0x150] sm:$0xff]
    %v7986 = vld [vmem:[%s7 + $0x158] sm:$0xff]
    %v7987 = vld [vmem:[%s7 + $0x160] sm:$0xff]
    %v7988 = vld [vmem:[%s7 + $0x168] sm:$0xff]
    %v7989 = vld [vmem:[%s7 + $0x170] sm:$0xff]
    %v7990 = vld [vmem:[%s7 + $0x178] sm:$0xff]
    %v7991 = vld [vmem:[%s7 + $0x180] sm:$0xff]
    %v7992 = vld [vmem:[%s7 + $0x188] sm:$0xff]
    %v7993 = vld [vmem:[%s7 + $0x190] sm:$0xff]
    %v7994 = vld [vmem:[%s7 + $0x198] sm:$0xff]
    %v7995 = vld [vmem:[%s7 + $0x1a0] sm:$0xff]
    %v7996 = vld [vmem:[%s7 + $0x1a8] sm:$0xff]
    %v7997 = vld [vmem:[%s7 + $0x1b0] sm:$0xff]
    %v7998 = vld [vmem:[%s7 + $0x1b8] sm:$0xff]
    %v7999 = vld [vmem:[%s7 + $0x1c0] sm:$0xff]
    %v8000 = vld [vmem:[%s7 + $0x1c8] sm:$0xff]
    %v8001 = vld [vmem:[%s7 + $0x1d0] sm:$0xff]
    %v8002 = vld [vmem:[%s7 + $0x1d8] sm:$0xff]
    %v8003 = vld [vmem:[%s7 + $0x1e0] sm:$0xff]
    %v8004 = vld [vmem:[%s7 + $0x1e8] sm:$0xff]
    %v8005 = vld [vmem:[%s7 + $0x1f0] sm:$0xff]
    %v8006 = vld [vmem:[%s7 + $0x1f8] sm:$0xff]
    %v8007 = vld [vmem:[%s7 + $0x200] sm:$0xff]
    %v8008 = vld [vmem:[%s7 + $0x208] sm:$0xff]
    %v8009 = vld [vmem:[%s7 + $0x210] sm:$0xff]
    %v8010 = vld [vmem:[%s7 + $0x218] sm:$0xff]
    %v8011 = vld [vmem:[%s7 + $0x220] sm:$0xff]
    %v8012 = vld [vmem:[%s7 + $0x228] sm:$0xff]
    %v8013 = vld [vmem:[%s7 + $0x230] sm:$0xff]
    %v8014 = vld [vmem:[%s7 + $0x238] sm:$0xff]
    %v8015 = vld [vmem:[%s7 + $0x240] sm:$0xff]
    %v8016 = vld [vmem:[%s7 + $0x248] sm:$0xff]
    %v8017 = vld [vmem:[%s7 + $0x250] sm:$0xff]
    %v8018 = vld [vmem:[%s7 + $0x258] sm:$0xff]
    %v8019 = vld [vmem:[%s7 + $0x260] sm:$0xff]
    %v8020 = vld [vmem:[%s7 + $0x268] sm:$0xff]
    %v8021 = vld [vmem:[%s7 + $0x270] sm:$0xff]
    %v8022 = vld [vmem:[%s7 + $0x278] sm:$0xff]
    %v8023 = vld [vmem:[%s7 + $0x280] sm:$0xff]
    %v8024 = vld [vmem:[%s7 + $0x288] sm:$0xff]
    %v8025 = vld [vmem:[%s7 + $0x290] sm:$0xff]
    %v8026 = vld [vmem:[%s7 + $0x298] sm:$0xff]
    %v8027 = vld [vmem:[%s7 + $0x2a0] sm:$0xff]
    %v8028 = vld [vmem:[%s7 + $0x2a8] sm:$0xff]
    %v8029 = vld [vmem:[%s7 + $0x2b0] sm:$0xff]
    %v8030 = vld [vmem:[%s7 + $0x2b8] sm:$0xff]
    %v8031 = vld [vmem:[%s7 + $0x2c0] sm:$0xff]
    %v8032 = vld [vmem:[%s7 + $0x2c8] sm:$0xff]
    %v8033 = vld [vmem:[%s7 + $0x2d0] sm:$0xff]
    %v8034 = vld [vmem:[%s7 + $0x2d8] sm:$0xff]
    %v8035 = vld [vmem:[%s7 + $0x2e0] sm:$0xff]
    %v8036 = vld [vmem:[%s7 + $0x2e8] sm:$0xff]
    %v8037 = vld [vmem:[%s7 + $0x2f0] sm:$0xff]
    %v8038 = vld [vmem:[%s7 + $0x2f8] sm:$0xff]
    %v8039 = vld [vmem:[%s7 + $0x300] sm:$0xff]
    %v8040 = vld [vmem:[%s7 + $0x308] sm:$0xff]
    %v8041 = vld [vmem:[%s7 + $0x310] sm:$0xff]
    %v8042 = vld [vmem:[%s7 + $0x318] sm:$0xff]
    %v8043 = vld [vmem:[%s7 + $0x320] sm:$0xff]
    %v8044 = vld [vmem:[%s7 + $0x328] sm:$0xff]
    %v8045 = vld [vmem:[%s7 + $0x330] sm:$0xff]
    %v8046 = vld [vmem:[%s7 + $0x338] sm:$0xff]
    %v8047 = vld [vmem:[%s7 + $0x340] sm:$0xff]
    %v8048 = vld [vmem:[%s7 + $0x348] sm:$0xff]
    %v8049 = vld [vmem:[%s7 + $0x350] sm:$0xff]
    %v8050 = vld [vmem:[%s7 + $0x358] sm:$0xff]
    %v8051 = vld [vmem:[%s7 + $0x360] sm:$0xff]
    %v8052 = vld [vmem:[%s7 + $0x368] sm:$0xff]
    %v8053 = vld [vmem:[%s7 + $0x370] sm:$0xff]
    %v8054 = vld [vmem:[%s7 + $0x378] sm:$0xff]
    %v8055 = vld [vmem:[%s7 + $0x380] sm:$0xff]
    %v8056 = vld [vmem:[%s7 + $0x388] sm:$0xff]
    %v8057 = vld [vmem:[%s7 + $0x390] sm:$0xff]
    %v8058 = vld [vmem:[%s7 + $0x398] sm:$0xff]
    %v8059 = vld [vmem:[%s7 + $0x3a0] sm:$0xff]
    %v8060 = vld [vmem:[%s7 + $0x3a8] sm:$0xff]
    %v8061 = vld [vmem:[%s7 + $0x3b0] sm:$0xff]
    %v8062 = vld [vmem:[%s7 + $0x3b8] sm:$0xff]
    %v8063 = vld [vmem:[%s7 + $0x3c0] sm:$0xff]
    %v8064 = vld [vmem:[%s7 + $0x3c8] sm:$0xff]
    %v8065 = vld [vmem:[%s7 + $0x3d0] sm:$0xff]
    %v8066 = vld [vmem:[%s7 + $0x3d8] sm:$0xff]
    %v8067 = vld [vmem:[%s7 + $0x3e0] sm:$0xff]
    %v8068 = vld [vmem:[%s7 + $0x3e8] sm:$0xff]
    %v8069 = vld [vmem:[%s7 + $0x3f0] sm:$0xff]
    %v8070 = vld [vmem:[%s7 + $0x3f8] sm:$0xff]
    %v8071 = vld [vmem:[#allocation12] sm:$0x1]
    %v8073 = vlaneseq
    %v8074 = vshrl.u32 %v8073, 7
    %v8075 = vsub.s32 0, %v8074
    %v8076 = vrot.slane %v8071, %v8075
    %8078 = vmatprep.subr.mxu0 0.0
    %8079 = vmatpush1.msra.mxu0 %v7958
    %8080 = vmatprep.subr.mxu0 0.0
    %8081 = vmatpush1.msra.mxu0 %v7957
    %8082 = vmatprep.subr.mxu0 0.0
    %8083 = vmatpush1.msra.mxu0 %v7956
    %8084 = vmatprep.subr.mxu0 0.0
    %8085 = vmatpush1.msra.mxu0 %v7955
    %8086 = vmatprep.subr.mxu0 0.0
    %8087 = vmatpush1.msra.mxu0 %v7954
    %8088 = vmatprep.subr.mxu0 0.0
    %8089 = vmatpush1.msra.mxu0 %v7953
    %8090 = vmatprep.subr.mxu0 0.0
    %8091 = vmatpush1.msra.mxu0 %v7952
    %8092 = vmatprep.subr.mxu0 0.0
    %8093 = vmatpush1.msra.mxu0 %v7951
    %8094 = vmatprep.subr.mxu0 0.0
    %8095 = vmatpush1.msra.mxu0 %v7950
    %8096 = vmatprep.subr.mxu0 0.0
    %8097 = vmatpush1.msra.mxu0 %v7949
    %8098 = vmatprep.subr.mxu0 0.0
    %8099 = vmatpush1.msra.mxu0 %v7948
    %8100 = vmatprep.subr.mxu0 0.0
    %8101 = vmatpush1.msra.mxu0 %v7947
    %8102 = vmatprep.subr.mxu0 0.0
    %8103 = vmatpush1.msra.mxu0 %v7946
    %8104 = vmatprep.subr.mxu0 0.0
    %8105 = vmatpush1.msra.mxu0 %v7945
    %8106 = vmatprep.subr.mxu0 0.0
    %8107 = vmatpush1.msra.mxu0 %v7944
    %8108 = vmatprep.subr.mxu0 0.0
    %8109 = vmatpush1.msra.mxu0 %v7943
    %8110 = vmatprep.subr.mxu0 0.0
    %8111 = vmatpush2.msra.mxu0 %v7974
    %8112 = vmatprep.subr.mxu0 0.0
    %8113 = vmatpush2.msra.mxu0 %v7973
    %8114 = vmatprep.subr.mxu0 0.0
    %8115 = vmatpush2.msra.mxu0 %v7972
    %8116 = vmatprep.subr.mxu0 0.0
    %8117 = vmatpush2.msra.mxu0 %v7971
    %8118 = vmatprep.subr.mxu0 0.0
    %8119 = vmatpush2.msra.mxu0 %v7970
    %8120 = vmatprep.subr.mxu0 0.0
    %8121 = vmatpush2.msra.mxu0 %v7969
    %8122 = vmatprep.subr.mxu0 0.0
    %8123 = vmatpush2.msra.mxu0 %v7968
    %8124 = vmatprep.subr.mxu0 0.0
    %8125 = vmatpush2.msra.mxu0 %v7967
    %8126 = vmatprep.subr.mxu0 0.0
    %8127 = vmatpush2.msra.mxu0 %v7966
    %8128 = vmatprep.subr.mxu0 0.0
    %8129 = vmatpush2.msra.mxu0 %v7965
    %8130 = vmatprep.subr.mxu0 0.0
    %8131 = vmatpush2.msra.mxu0 %v7964
    %8132 = vmatprep.subr.mxu0 0.0
    %8133 = vmatpush2.msra.mxu0 %v7963
    %8134 = vmatprep.subr.mxu0 0.0
    %8135 = vmatpush2.msra.mxu0 %v7962
    %8136 = vmatprep.subr.mxu0 0.0
    %8137 = vmatpush2.msra.mxu0 %v7961
    %8138 = vmatprep.subr.mxu0 0.0
    %8139 = vmatpush2.msra.mxu0 %v7960
    %8140 = vmatprep.subr.mxu0 0.0
    %8141 = vmatpush2.msra.mxu0 %v7959
    %8142 = vmatprep.mubr.f32.mxu0 %v7936
    %8143 = vmatmul.mubr.f32.gmra.mxu0 %v7935
    %v8144 = vpop.f32.mrf.mxu0
    %v8145 = vadd.f32 %v8076, %v8144
    %v8146 = vpop.f32.mrf.mxu0
    %8147 = vdwg.mxu0
    %8148 = vmatprep.subr.mxu0 0.0
    %8149 = vmatpush1.msra.mxu0 %v7990
    %8150 = vmatprep.subr.mxu0 0.0
    %8151 = vmatpush1.msra.mxu0 %v7989
    %8152 = vmatprep.subr.mxu0 0.0
    %8153 = vmatpush1.msra.mxu0 %v7988
    %8154 = vmatprep.subr.mxu0 0.0
    %8155 = vmatpush1.msra.mxu0 %v7987
    %8156 = vmatprep.subr.mxu0 0.0
    %8157 = vmatpush1.msra.mxu0 %v7986
    %8158 = vmatprep.subr.mxu0 0.0
    %8159 = vmatpush1.msra.mxu0 %v7985
    %8160 = vmatprep.subr.mxu0 0.0
    %8161 = vmatpush1.msra.mxu0 %v7984
    %8162 = vmatprep.subr.mxu0 0.0
    %8163 = vmatpush1.msra.mxu0 %v7983
    %8164 = vmatprep.subr.mxu0 0.0
    %8165 = vmatpush1.msra.mxu0 %v7982
    %8166 = vmatprep.subr.mxu0 0.0
    %8167 = vmatpush1.msra.mxu0 %v7981
    %8168 = vmatprep.subr.mxu0 0.0
    %8169 = vmatpush1.msra.mxu0 %v7980
    %8170 = vmatprep.subr.mxu0 0.0
    %8171 = vmatpush1.msra.mxu0 %v7979
    %8172 = vmatprep.subr.mxu0 0.0
    %8173 = vmatpush1.msra.mxu0 %v7978
    %8174 = vmatprep.subr.mxu0 0.0
    %8175 = vmatpush1.msra.mxu0 %v7977
    %8176 = vmatprep.subr.mxu0 0.0
    %8177 = vmatpush1.msra.mxu0 %v7976
    %8178 = vmatprep.subr.mxu0 0.0
    %8179 = vmatpush1.msra.mxu0 %v7975
    %8180 = vmatprep.subr.mxu0 0.0
    %8181 = vmatpush2.msra.mxu0 %v8006
    %8182 = vmatprep.subr.mxu0 0.0
    %8183 = vmatpush2.msra.mxu0 %v8005
    %8184 = vmatprep.subr.mxu0 0.0
    %8185 = vmatpush2.msra.mxu0 %v8004
    %8186 = vmatprep.subr.mxu0 0.0
    %8187 = vmatpush2.msra.mxu0 %v8003
    %8188 = vmatprep.subr.mxu0 0.0
    %8189 = vmatpush2.msra.mxu0 %v8002
    %8190 = vmatprep.subr.mxu0 0.0
    %8191 = vmatpush2.msra.mxu0 %v8001
    %8192 = vmatprep.subr.mxu0 0.0
    %8193 = vmatpush2.msra.mxu0 %v8000
    %8194 = vmatprep.subr.mxu0 0.0
    %8195 = vmatpush2.msra.mxu0 %v7999
    %8196 = vmatprep.subr.mxu0 0.0
    %8197 = vmatpush2.msra.mxu0 %v7998
    %8198 = vmatprep.subr.mxu0 0.0
    %8199 = vmatpush2.msra.mxu0 %v7997
    %8200 = vmatprep.subr.mxu0 0.0
    %8201 = vmatpush2.msra.mxu0 %v7996
    %8202 = vmatprep.subr.mxu0 0.0
    %8203 = vmatpush2.msra.mxu0 %v7995
    %8204 = vmatprep.subr.mxu0 0.0
    %8205 = vmatpush2.msra.mxu0 %v7994
    %8206 = vmatprep.subr.mxu0 0.0
    %8207 = vmatpush2.msra.mxu0 %v7993
    %8208 = vmatprep.subr.mxu0 0.0
    %8209 = vmatpush2.msra.mxu0 %v7992
    %8210 = vmatprep.subr.mxu0 0.0
    %8211 = vmatpush2.msra.mxu0 %v7991
    %8212 = vmatprep.mubr.f32.mxu0 %v7938
    %8213 = vmatmul.mubr.f32.gmra.mxu0 %v7937
    %v8214 = vpop.f32.mrf.mxu0
    %v8215 = vadd.f32 %v8145, %v8214
    %v8216 = vpop.f32.mrf.mxu0
    %8217 = vdwg.mxu0
    %8218 = vmatprep.subr.mxu0 0.0
    %8219 = vmatpush1.msra.mxu0 %v8022
    %8220 = vmatprep.subr.mxu0 0.0
    %8221 = vmatpush1.msra.mxu0 %v8021
    %8222 = vmatprep.subr.mxu0 0.0
    %8223 = vmatpush1.msra.mxu0 %v8020
    %8224 = vmatprep.subr.mxu0 0.0
    %8225 = vmatpush1.msra.mxu0 %v8019
    %8226 = vmatprep.subr.mxu0 0.0
    %8227 = vmatpush1.msra.mxu0 %v8018
    %8228 = vmatprep.subr.mxu0 0.0
    %8229 = vmatpush1.msra.mxu0 %v8017
    %8230 = vmatprep.subr.mxu0 0.0
    %8231 = vmatpush1.msra.mxu0 %v8016
    %8232 = vmatprep.subr.mxu0 0.0
    %8233 = vmatpush1.msra.mxu0 %v8015
    %8234 = vmatprep.subr.mxu0 0.0
    %8235 = vmatpush1.msra.mxu0 %v8014
    %8236 = vmatprep.subr.mxu0 0.0
    %8237 = vmatpush1.msra.mxu0 %v8013
    %8238 = vmatprep.subr.mxu0 0.0
    %8239 = vmatpush1.msra.mxu0 %v8012
    %8240 = vmatprep.subr.mxu0 0.0
    %8241 = vmatpush1.msra.mxu0 %v8011
    %8242 = vmatprep.subr.mxu0 0.0
    %8243 = vmatpush1.msra.mxu0 %v8010
    %8244 = vmatprep.subr.mxu0 0.0
    %8245 = vmatpush1.msra.mxu0 %v8009
    %8246 = vmatprep.subr.mxu0 0.0
    %8247 = vmatpush1.msra.mxu0 %v8008
    %8248 = vmatprep.subr.mxu0 0.0
    %8249 = vmatpush1.msra.mxu0 %v8007
    %8250 = vmatprep.subr.mxu0 0.0
    %8251 = vmatpush2.msra.mxu0 %v8038
    %8252 = vmatprep.subr.mxu0 0.0
    %8253 = vmatpush2.msra.mxu0 %v8037
    %8254 = vmatprep.subr.mxu0 0.0
    %8255 = vmatpush2.msra.mxu0 %v8036
    %8256 = vmatprep.subr.mxu0 0.0
    %8257 = vmatpush2.msra.mxu0 %v8035
    %8258 = vmatprep.subr.mxu0 0.0
    %8259 = vmatpush2.msra.mxu0 %v8034
    %8260 = vmatprep.subr.mxu0 0.0
    %8261 = vmatpush2.msra.mxu0 %v8033
    %8262 = vmatprep.subr.mxu0 0.0
    %8263 = vmatpush2.msra.mxu0 %v8032
    %8264 = vmatprep.subr.mxu0 0.0
    %8265 = vmatpush2.msra.mxu0 %v8031
    %8266 = vmatprep.subr.mxu0 0.0
    %8267 = vmatpush2.msra.mxu0 %v8030
    %8268 = vmatprep.subr.mxu0 0.0
    %8269 = vmatpush2.msra.mxu0 %v8029
    %8270 = vmatprep.subr.mxu0 0.0
    %8271 = vmatpush2.msra.mxu0 %v8028
    %8272 = vmatprep.subr.mxu0 0.0
    %8273 = vmatpush2.msra.mxu0 %v8027
    %8274 = vmatprep.subr.mxu0 0.0
    %8275 = vmatpush2.msra.mxu0 %v8026
    %8276 = vmatprep.subr.mxu0 0.0
    %8277 = vmatpush2.msra.mxu0 %v8025
    %8278 = vmatprep.subr.mxu0 0.0
    %8279 = vmatpush2.msra.mxu0 %v8024
    %8280 = vmatprep.subr.mxu0 0.0
    %8281 = vmatpush2.msra.mxu0 %v8023
    %8282 = vmatprep.mubr.f32.mxu0 %v7940
    %8283 = vmatmul.mubr.f32.gmra.mxu0 %v7939
    %v8284 = vpop.f32.mrf.mxu0
    %v8285 = vadd.f32 %v8215, %v8284
    %v8286 = vpop.f32.mrf.mxu0
    %8287 = vdwg.mxu0
    %8288 = vmatprep.subr.mxu0 0.0
    %8289 = vmatpush1.msra.mxu0 %v8054
    %8290 = vmatprep.subr.mxu0 0.0
    %8291 = vmatpush1.msra.mxu0 %v8053
    %8292 = vmatprep.subr.mxu0 0.0
    %8293 = vmatpush1.msra.mxu0 %v8052
    %8294 = vmatprep.subr.mxu0 0.0
    %8295 = vmatpush1.msra.mxu0 %v8051
    %8296 = vmatprep.subr.mxu0 0.0
    %8297 = vmatpush1.msra.mxu0 %v8050
    %8298 = vmatprep.subr.mxu0 0.0
    %8299 = vmatpush1.msra.mxu0 %v8049
    %8300 = vmatprep.subr.mxu0 0.0
    %8301 = vmatpush1.msra.mxu0 %v8048
    %8302 = vmatprep.subr.mxu0 0.0
    %8303 = vmatpush1.msra.mxu0 %v8047
    %8304 = vmatprep.subr.mxu0 0.0
    %8305 = vmatpush1.msra.mxu0 %v8046
    %8306 = vmatprep.subr.mxu0 0.0
    %8307 = vmatpush1.msra.mxu0 %v8045
    %8308 = vmatprep.subr.mxu0 0.0
    %8309 = vmatpush1.msra.mxu0 %v8044
    %8310 = vmatprep.subr.mxu0 0.0
    %8311 = vmatpush1.msra.mxu0 %v8043
    %8312 = vmatprep.subr.mxu0 0.0
    %8313 = vmatpush1.msra.mxu0 %v8042
    %8314 = vmatprep.subr.mxu0 0.0
    %8315 = vmatpush1.msra.mxu0 %v8041
    %8316 = vmatprep.subr.mxu0 0.0
    %8317 = vmatpush1.msra.mxu0 %v8040
    %8318 = vmatprep.subr.mxu0 0.0
    %8319 = vmatpush1.msra.mxu0 %v8039
    %8320 = vmatprep.subr.mxu0 0.0
    %8321 = vmatpush2.msra.mxu0 %v8070
    %8322 = vmatprep.subr.mxu0 0.0
    %8323 = vmatpush2.msra.mxu0 %v8069
    %8324 = vmatprep.subr.mxu0 0.0
    %8325 = vmatpush2.msra.mxu0 %v8068
    %8326 = vmatprep.subr.mxu0 0.0
    %8327 = vmatpush2.msra.mxu0 %v8067
    %8328 = vmatprep.subr.mxu0 0.0
    %8329 = vmatpush2.msra.mxu0 %v8066
    %8330 = vmatprep.subr.mxu0 0.0
    %8331 = vmatpush2.msra.mxu0 %v8065
    %8332 = vmatprep.subr.mxu0 0.0
    %8333 = vmatpush2.msra.mxu0 %v8064
    %8334 = vmatprep.subr.mxu0 0.0
    %8335 = vmatpush2.msra.mxu0 %v8063
    %8336 = vmatprep.subr.mxu0 0.0
    %8337 = vmatpush2.msra.mxu0 %v8062
    %8338 = vmatprep.subr.mxu0 0.0
    %8339 = vmatpush2.msra.mxu0 %v8061
    %8340 = vmatprep.subr.mxu0 0.0
    %8341 = vmatpush2.msra.mxu0 %v8060
    %8342 = vmatprep.subr.mxu0 0.0
    %8343 = vmatpush2.msra.mxu0 %v8059
    %8344 = vmatprep.subr.mxu0 0.0
    %8345 = vmatpush2.msra.mxu0 %v8058
    %8346 = vmatprep.subr.mxu0 0.0
    %8347 = vmatpush2.msra.mxu0 %v8057
    %8348 = vmatprep.subr.mxu0 0.0
    %8349 = vmatpush2.msra.mxu0 %v8056
    %8350 = vmatprep.subr.mxu0 0.0
    %8351 = vmatpush2.msra.mxu0 %v8055
    %8352 = vmatprep.mubr.f32.mxu0 %v7942
    %8353 = vmatmul.mubr.f32.gmra.mxu0 %v7941
    %v8354 = vpop.f32.mrf.mxu0
    %v8355 = vadd.f32 %v8285, %v8354
    %v8356 = vpop.f32.mrf.mxu0
    %8357 = vdwg.mxu0
    %v8358 = vmax.f32 %v8355, 0.0
    %v8359 = vld [vmem:[#allocation13] sm:$0xff]
    %v8360 = vld [vmem:[%s10] sm:$0xff]
    %8362 = vset.pattern.permute.xlu0 0
    %8363 = vperm.xlu0 %8362, %v8360
    %v8364 = vpop.permute.xlu0 %8363
    %vm8366 = vcmask 261120
    %v8368 = vsel %vm8366, %v8359, 0
    %v8371 = vsel %vm8366, %v8358, 0
    %8373 = vmatprep.subr.mxu0 0.0
    %8374 = vmatpush1.xpose.msra.mxu0 0.0
    %8375 = vmatprep.subr.mxu0 0.0
    %8376 = vmatpush1.xpose.msra.mxu0 0.0
    %8377 = vmatprep.subr.mxu0 0.0
    %8378 = vmatpush1.xpose.msra.mxu0 0.0
    %8379 = vmatprep.subr.mxu0 0.0
    %8380 = vmatpush1.xpose.msra.mxu0 0.0
    %8381 = vmatprep.subr.mxu0 0.0
    %8382 = vmatpush1.xpose.msra.mxu0 0.0
    %8383 = vmatprep.subr.mxu0 0.0
    %8384 = vmatpush1.xpose.msra.mxu0 0.0
    %8385 = vmatprep.subr.mxu0 0.0
    %8386 = vmatpush1.xpose.msra.mxu0 0.0
    %8387 = vmatprep.subr.mxu0 0.0
    %8388 = vmatpush1.xpose.msra.mxu0 0.0
    %8389 = vmatprep.subr.mxu0 0.0
    %8390 = vmatpush1.xpose.msra.mxu0 0.0
    %8391 = vmatprep.subr.mxu0 0.0
    %8392 = vmatpush1.xpose.msra.mxu0 0.0
    %8393 = vmatprep.subr.mxu0 0.0
    %8394 = vmatpush1.xpose.msra.mxu0 0.0
    %8395 = vmatprep.subr.mxu0 0.0
    %8396 = vmatpush1.xpose.msra.mxu0 0.0
    %8397 = vmatprep.subr.mxu0 0.0
    %8398 = vmatpush1.xpose.msra.mxu0 0.0
    %8399 = vmatprep.subr.mxu0 0.0
    %8400 = vmatpush1.xpose.msra.mxu0 0.0
    %8401 = vmatprep.subr.mxu0 0.0
    %8402 = vmatpush1.xpose.msra.mxu0 0.0
    %8403 = vmatprep.subr.mxu0 0.0
    %8404 = vmatpush1.xpose.msra.mxu0 %v8371
    %8405 = vmatprep.subr.mxu0 0.0
    %8406 = vmatpush2.xpose.msra.mxu0 0.0
    %8407 = vmatprep.subr.mxu0 0.0
    %8408 = vmatpush2.xpose.msra.mxu0 0.0
    %8409 = vmatprep.subr.mxu0 0.0
    %8410 = vmatpush2.xpose.msra.mxu0 0.0
    %8411 = vmatprep.subr.mxu0 0.0
    %8412 = vmatpush2.xpose.msra.mxu0 0.0
    %8413 = vmatprep.subr.mxu0 0.0
    %8414 = vmatpush2.xpose.msra.mxu0 0.0
    %8415 = vmatprep.subr.mxu0 0.0
    %8416 = vmatpush2.xpose.msra.mxu0 0.0
    %8417 = vmatprep.subr.mxu0 0.0
    %8418 = vmatpush2.xpose.msra.mxu0 0.0
    %8419 = vmatprep.subr.mxu0 0.0
    %8420 = vmatpush2.xpose.msra.mxu0 0.0
    %8421 = vmatprep.subr.mxu0 0.0
    %8422 = vmatpush2.xpose.msra.mxu0 0.0
    %8423 = vmatprep.subr.mxu0 0.0
    %8424 = vmatpush2.xpose.msra.mxu0 0.0
    %8425 = vmatprep.subr.mxu0 0.0
    %8426 = vmatpush2.xpose.msra.mxu0 0.0
    %8427 = vmatprep.subr.mxu0 0.0
    %8428 = vmatpush2.xpose.msra.mxu0 0.0
    %8429 = vmatprep.subr.mxu0 0.0
    %8430 = vmatpush2.xpose.msra.mxu0 0.0
    %8431 = vmatprep.subr.mxu0 0.0
    %8432 = vmatpush2.xpose.msra.mxu0 0.0
    %8433 = vmatprep.subr.mxu0 0.0
    %8434 = vmatpush2.xpose.msra.mxu0 0.0
    %8435 = vmatprep.subr.mxu0 0.0
    %8436 = vmatpush2.xpose.msra.mxu0 0.0
    %8437 = vmatprep.mubr.f32.mxu0 0.0
    %8438 = vmatmul.mubr.f32.gmra.mxu0 %v8368
    %v8439 = vpop.f32.mrf.mxu0
    %v8440 = vadd.f32 %v8364, %v8439
    %v8441 = vpop.f32.mrf.mxu0
    %8442 = vdwg.mxu0
    %v8443 = vand.u32 2147483647, %v8440
    %v8444 = vsub.f32 0.0, %v8443
    %v8445 = vmul.f32 %v8444, 1.442695
    %v8446 = vpow.pop %v8445
    %vm8447 = vcmp.ge.f32.partialorder %v8440, 0.0
    %v8448 = vadd.f32 %v8446, 1.0
    %v8449 = vrcp.pop %v8448
    %v8450 = vmul.f32 1.0, %v8449
    %v8451 = vmul.f32 %v8446, %v8449
    %v8452 = vsel %vm8447, %v8450, %v8451
    %vm8453 = vcmask 57344
    %8454 = vst.msk [vmem:[%s11] sm:$0x1] %vm8453, %v8452
    // Predicated region
    $region78: #{critic_forward.1} parent=1 // pred_check
      _
    $region79: #{critic_forward.1} parent=1 // pred_check_branch
      %8456 = sbr.rel (0) target = $region81
    $region80: #{critic_forward.1} parent=1 // pred_region
      _
    $region81: #{critic_forward.1} parent=1 // pred_fallthru
      _
    // Predicated region
    $region82: #{critic_forward.1} parent=1 // pred_check
      _
    $region83: #{critic_forward.1} parent=1 // pred_check_branch
      %8458 = sbr.rel (0) target = $region85
    $region84: #{critic_forward.1} parent=1 // pred_region
      _
    $region85: #{critic_forward.1} parent=1 // pred_fallthru
      _
    %8459 = vsyncpa [#allocation3], 1
    %8460 = vsyncpa [#allocation5], 1
    %8461 = vsyncpa [#allocation8], 1
    %8462 = vsyncpa [#allocation11], 1
    %8463 = vsyncpa [#allocation14], 1

</llo_original>
